<compile_context>
chip_gen: v7x
topology: tpu7x:2x2x1
jax: 0.10.0
libtpu: 0.0.40
codegen_flags: <defaults>
</compile_context>

<pallas_src>
import functools
from collections import namedtuple

import jax
import jax.numpy as jnp
from jax.experimental import pallas as pl
from jax.experimental.pallas import tpu as pltpu


# ----------------------------------------------------------------------------
# Helpers
# ----------------------------------------------------------------------------
def _round_up(x, m):
    return (x + m - 1) // m * m


def _largest_tile(dim, cap, unit=128):
    """Largest multiple of `unit` that divides `dim` and is <= cap (else dim)."""
    best = None
    t = unit
    while t <= min(dim, cap):
        if dim % t == 0:
            best = t
        t += unit
    return best if best is not None else dim


# ----------------------------------------------------------------------------
# Conv 3x3 (stride 1, pad 1): 9 shifted-tap matmuls, weight-resident, fused
# bias + ReLU epilogue.  Input is halo-padded and spatially flattened so every
# tap is a contiguous 2-D slab -> plain 2-D MXU matmuls, no in-kernel reshape.
# ----------------------------------------------------------------------------
def _conv_pre_activation(x_ref, w_ref, b_ref, *, wp, n_rows):
    """x_ref: (1, Hp*Wp, Cin) bf16; w_ref: (9, Cin, Cout) bf16; b: (1, Cout) f32."""
    acc = None
    for dy in range(3):
        for dx in range(3):
            t = dy * 3 + dx
            off = dy * wp + dx
            tap = jnp.dot(
                x_ref[0, off:off + n_rows, :], w_ref[t],
                preferred_element_type=jnp.float32,
            )
            acc = tap if acc is None else acc + tap
    return acc + b_ref[...]


def _conv3x3_kernel(x_ref, w_ref, b_ref, o_ref, *, wp, n_rows, apply_relu):
    pre = _conv_pre_activation(x_ref, w_ref, b_ref, wp=wp, n_rows=n_rows)
    out = jnp.maximum(pre, 0.0) if apply_relu else pre
    o_ref[0, :, :] = out.astype(o_ref.dtype)


def _conv3x3_dual_kernel(x_ref, w_ref, b_ref, o_pre_ref, o_post_ref, *,
                         wp, n_rows):
    """Emit pre-activation AND ReLU output from one pass (feature index 7/8)."""
    pre = _conv_pre_activation(x_ref, w_ref, b_ref, wp=wp, n_rows=n_rows)
    o_pre_ref[0, :, :] = pre.astype(o_pre_ref.dtype)
    o_post_ref[0, :, :] = jnp.maximum(pre, 0.0).astype(o_post_ref.dtype)


@functools.partial(jax.jit, static_argnames=("cout", "apply_relu", "dual_output"))
def _conv3x3(x_nhwc, w, b, *, cout, apply_relu, dual_output=False):
    n, oh, ow, cin = x_nhwc.shape
    cin_w = w.shape[1]               # channel count the weights were padded to
    wp = ow + 2                      # halo-padded width
    hp = oh + 3                      # halo-padded height (+1 extra zero row so
                                     # the (dy=2,dx=2) tap's junk lanes stay in-bounds)
    n_rows = oh * wp                 # rows of the flattened conv GEMM

    xp = jnp.pad(
        x_nhwc.astype(jnp.bfloat16),
        ((0, 0), (1, 2), (1, 1), (0, cin_w - cin)),
    )
    x_flat = xp.reshape(n, hp * wp, cin_w)

    out_struct = jax.ShapeDtypeStruct((n, n_rows, cout), jnp.bfloat16)
    out_spec = pl.BlockSpec((1, n_rows, cout), lambda i: (i, 0, 0))
    if dual_output:
        kernel = functools.partial(_conv3x3_dual_kernel, wp=wp, n_rows=n_rows)
        out_shape, out_specs = (out_struct, out_struct), (out_spec, out_spec)
    else:
        kernel = functools.partial(_conv3x3_kernel, wp=wp, n_rows=n_rows,
                                   apply_relu=apply_relu)
        out_shape, out_specs = out_struct, out_spec

    n_outs = 2 if dual_output else 1
    vmem_bytes = (2 * (hp * wp * cin_w * 2          # double-buffered input
                       + 9 * cin_w * cout * 2       # resident weights
                       + cout * 4                   # bias
                       + n_outs * n_rows * cout * 2)  # output(s)
                  + n_rows * cout * 4               # f32 accumulator value
                  + (8 << 20))                      # headroom
    vmem_bytes = int(min(vmem_bytes, 64 << 20))

    outs = pl.pallas_call(
        kernel,
        out_shape=out_shape,
        grid_spec=pltpu.PrefetchScalarGridSpec(
            num_scalar_prefetch=0,
            grid=(n,),                                          # one image / step
            in_specs=[
                pl.BlockSpec((1, hp * wp, cin_w), lambda i: (i, 0, 0)),
                pl.BlockSpec((9, cin_w, cout), lambda i: (0, 0, 0)),  # resident
                pl.BlockSpec((1, cout), lambda i: (0, 0)),            # resident
            ],
            out_specs=out_specs,
        ),
        compiler_params=pltpu.CompilerParams(
            dimension_semantics=("parallel",),
            vmem_limit_bytes=vmem_bytes,
        ),
    )(x_flat, w, b)

    def unflatten(o):
        # Valid output pixels live in columns [0, ow) of every wp-wide row.
        return o.reshape(n, oh, wp, cout)[:, :, :ow, :]

    if dual_output:
        return unflatten(outs[0]), unflatten(outs[1])
    return unflatten(outs)


# ----------------------------------------------------------------------------
# Linear: K-tiled GEMM, f32 accumulator, fused bias + ReLU
# ----------------------------------------------------------------------------
def _gemm_bias_act_kernel(x_ref, w_ref, b_ref, o_ref, acc_ref, *, apply_relu):
    k = pl.program_id(2)
    prod = jnp.dot(x_ref[...], w_ref[...], preferred_element_type=jnp.float32)

    @pl.when(k == 0)
    def _init():
        acc_ref[...] = prod            # direct write, no zero-then-add RMW

    @pl.when(k > 0)
    def _accum():
        acc_ref[...] += prod

    @pl.when(k == pl.num_programs(2) - 1)
    def _finalize():
        out = acc_ref[...] + b_ref[...]
        if apply_relu:
            out = jnp.maximum(out, 0.0)
        o_ref[...] = out.astype(o_ref.dtype)


@functools.partial(jax.jit, static_argnames=("n_out", "apply_relu"))
def _linear(x, w_pad, b_pad, *, n_out, apply_relu):
    m, k = x.shape
    kp, npad = w_pad.shape
    x = x.astype(jnp.bfloat16)
    if kp != k:                       # classifier Ks are already 128-multiples
        x = jnp.pad(x, ((0, 0), (0, kp - k)))

    tile_m = m                        # batch-sized (small) M tile
    tile_k = _largest_tile(kp, 2048)
    tile_n = _largest_tile(npad, 512)
    grid = (m // tile_m, npad // tile_n, kp // tile_k)

    vmem_bytes = (2 * (tile_m * tile_k * 2 + tile_k * tile_n * 2
                       + tile_n * 4 + tile_m * tile_n * 4)
                  + tile_m * tile_n * 4 + (8 << 20))
    vmem_bytes = int(min(vmem_bytes, 64 << 20))

    out = pl.pallas_call(
        functools.partial(_gemm_bias_act_kernel, apply_relu=apply_relu),
        out_shape=jax.ShapeDtypeStruct((m, npad), jnp.float32),
        grid_spec=pltpu.PrefetchScalarGridSpec(
            num_scalar_prefetch=0,
            grid=grid,
            in_specs=[
                pl.BlockSpec((tile_m, tile_k), lambda i, j, kk: (i, kk)),
                pl.BlockSpec((tile_k, tile_n), lambda i, j, kk: (kk, j)),
                pl.BlockSpec((1, tile_n), lambda i, j, kk: (0, j)),
            ],
            out_specs=pl.BlockSpec((tile_m, tile_n), lambda i, j, kk: (i, j)),
            scratch_shapes=[pltpu.VMEM((tile_m, tile_n), jnp.float32)],
        ),
        compiler_params=pltpu.CompilerParams(
            dimension_semantics=("parallel", "parallel", "arbitrary"),
            vmem_limit_bytes=vmem_bytes,
        ),
    )(x, w_pad, b_pad)

    if npad != n_out:
        out = out[:, :n_out]
    return out


def _maxpool2x2(x_nhwc):
    # TODO(synk): left to XLA (memory-bound reshuffle, fuses with the re-pad).
    n, h, w, c = x_nhwc.shape
    return x_nhwc.reshape(n, h // 2, 2, w // 2, 2, c).max(axis=(2, 4))


# ----------------------------------------------------------------------------
# Parameter init (PyTorch-default uniform init; GEMM layouts built once)
# ----------------------------------------------------------------------------
VGG19_CFG = [64, 64, 'M', 128, 128, 'M', 256, 256, 256, 256, 'M',
             512, 512, 512, 512, 'M', 512, 512, 512, 512, 'M']
_FEATURE_IDS = (3, 7, 8, 15, 22)
VggOutputs = namedtuple(
    "VggOutputs", ["relu1_2", "relu2_1", "relu2_2", "relu3_3", "relu4_3"]
)


def _init_conv(key, cin, cout):
    wk, bk = jax.random.split(key)
    fan_in = cin * 9
    bound = 1.0 / float(fan_in) ** 0.5
    w = jax.random.uniform(wk, (cout, cin, 3, 3), jnp.float32, -bound, bound)
    b = jax.random.uniform(bk, (cout,), jnp.float32, -bound, bound)
    # (cout, cin, ky, kx) -> (ky*3 + kx, cin, cout): tap-major GEMM layout.
    w_taps = jnp.transpose(w, (2, 3, 1, 0)).reshape(9, cin, cout)
    cin_pad = _round_up(cin, 8)                 # only the 3-channel first layer
    if cin_pad != cin:
        w_taps = jnp.pad(w_taps, ((0, 0), (0, cin_pad - cin), (0, 0)))
    return {"w": w_taps.astype(jnp.bfloat16),
            "b": b.reshape(1, cout).astype(jnp.float32),
            "cout": cout}


def _init_linear(key, nin, nout):
    wk, bk = jax.random.split(key)
    bound = 1.0 / float(nin) ** 0.5
    w = jax.random.uniform(wk, (nin, nout), jnp.float32, -bound, bound)
    b = jax.random.uniform(bk, (nout,), jnp.float32, -bound, bound)
    kp, npad = _round_up(nin, 128), _round_up(nout, 128)
    w_pad = jnp.pad(w, ((0, kp - nin), (0, npad - nout))).astype(jnp.bfloat16)
    b_pad = jnp.pad(b, (0, npad - nout)).reshape(1, npad).astype(jnp.float32)
    return {"w": w_pad, "b": b_pad, "nout": nout}


def init_vgg19_params(key, num_classes=1000, n_feature_layers=33):
    features = []
    in_c = 3
    for v in VGG19_CFG:
        if v == 'M':
            features.append(("pool", None))
        else:
            key, sub = jax.random.split(key)
            features.append(("conv", _init_conv(sub, in_c, v)))
            features.append(("relu", None))
            in_c = v
    features = features[:n_feature_layers]       # == vgg19(...).features[:33]

    key, k1, k2, k3 = jax.random.split(key, 4)
    classifier = [
        (_init_linear(k1, 512 * 7 * 7, 4096), True),   # Linear + ReLU (+Dropout)
        (_init_linear(k2, 4096, 4096), True),          # Linear + ReLU (+Dropout)
        (_init_linear(k3, 4096, num_classes), False),  # Linear
    ]
    return {"features": features, "classifier": classifier}


# ----------------------------------------------------------------------------
# Forward pass (mirrors VGG19.forward)
# ----------------------------------------------------------------------------
def vgg19_forward(params, x_nchw, feature_mode=False):
    if feature_mode:
        x = jnp.transpose(x_nchw, (0, 2, 3, 1)).astype(jnp.bfloat16)   # NHWC
        feats = params["features"]
        collect = set(_FEATURE_IDS)
        last_needed = max(collect)
        results = {}
        ii, n_layers = 0, len(feats)
        # Layers beyond the last collected index do not affect the returned
        # namedtuple, so we stop there (identical outputs, less work).
        while ii < n_layers and ii <= last_needed:
            kind, p = feats[ii]
            if kind == "conv":
                fuse_relu = ii + 1 < n_layers and feats[ii + 1][0] == "relu"
                if fuse_relu and ii in collect:
                    # Pre-activation collected (index 7): one pallas_call emits
                    # both the pre-act and the ReLU'd tensor (index 8).
                    pre, post = _conv3x3(x, p["w"], p["b"], cout=p["cout"],
                                         apply_relu=True, dual_output=True)
                    results[ii] = pre
                    if ii + 1 in collect:
                        results[ii + 1] = post
                    x = post
                    ii += 2
                    continue
                if fuse_relu:
                    x = _conv3x3(x, p["w"], p["b"], cout=p["cout"],
                                 apply_relu=True)
                    if ii + 1 in collect:
                        results[ii + 1] = x
                    ii += 2
                    continue
                x = _conv3x3(x, p["w"], p["b"], cout=p["cout"], apply_relu=False)
            elif kind == "relu":
                x = jnp.maximum(x, 0.0)
            else:  # "pool"
                x = _maxpool2x2(x)
            if ii in collect:
                results[ii] = x
            ii += 1
        return VggOutputs(*[
            jnp.transpose(results[i], (0, 3, 1, 2)).astype(jnp.float32)
            for i in _FEATURE_IDS
        ])

    # feature_mode == False: flatten + classifier (features not applied,
    # exactly as in the reference forward()).  Dropout == inference identity.
    x = x_nchw.reshape(x_nchw.shape[0], -1)
    for p, relu in params["classifier"]:
        x = _linear(x, p["w"], p["b"], n_out=p["nout"], apply_relu=relu)
    return x


# ----------------------------------------------------------------------------
# Demo
# ----------------------------------------------------------------------------
if __name__ == "__main__":
    key = jax.random.PRNGKey(0)
    pkey, xkey, ckey = jax.random.split(key, 3)

    params = init_vgg19_params(pkey, num_classes=1000)

    # feature_mode=True path: batch=2, 3x32x32.
    x_img = jax.random.normal(xkey, (2, 3, 32, 32), jnp.float32)
    feats = jax.block_until_ready(vgg19_forward(params, x_img, feature_mode=True))
    assert feats.relu1_2.shape == (2, 64, 32, 32), feats.relu1_2.shape
    assert feats.relu2_1.shape == (2, 128, 16, 16), feats.relu2_1.shape
    assert feats.relu2_2.shape == (2, 128, 16, 16), feats.relu2_2.shape
    assert feats.relu3_3.shape == (2, 256, 8, 8), feats.relu3_3.shape
    assert feats.relu4_3.shape == (2, 512, 4, 4), feats.relu4_3.shape
    for f in feats:
        assert bool(jnp.all(jnp.isfinite(f)))

    # feature_mode=False path: flatten + classifier (input implies 512x7x7).
    x_cls = jax.random.normal(ckey, (2, 512, 7, 7), jnp.float32)
    logits = jax.block_until_ready(vgg19_forward(params, x_cls, feature_mode=False))
    assert logits.shape == (2, 1000), logits.shape
    assert bool(jnp.all(jnp.isfinite(logits)))

    print("KERNEL_OK")
</pallas_src>

<mosaic_0001>
module attributes {stable_mosaic.version = 11 : i64} {
  func.func @_conv3x3_kernel(%arg0: i32, %arg1: memref<1x1190x8xbf16, #tpu.memory_space<vmem>>, %arg2: memref<9x8x64xbf16, #tpu.memory_space<vmem>>, %arg3: memref<1x64xf32, #tpu.memory_space<vmem>>, %arg4: memref<1x1088x64xbf16, #tpu.memory_space<vmem>>) attributes {dimension_semantics = [#tpu.dimension_semantics<parallel>], iteration_bounds = array<i64: 2>, scalar_prefetch = 0 : i64, scratch_operands = 0 : i64, tpu.core_type = #tpu.core_type<tc>, window_params = [{transform_indices = @transform_0, window_bounds = array<i64: 1, 1190, 8>}, {pipeline_mode = #tpu.pipeline_mode<synchronous>, transform_indices = @transform_1, window_bounds = array<i64: 9, 8, 64>}, {pipeline_mode = #tpu.pipeline_mode<synchronous>, transform_indices = @transform_2, window_bounds = array<i64: 1, 64>}, {transform_indices = @transform_3, window_bounds = array<i64: 1, 1088, 64>}]} {
    %c0 = arith.constant 0 : index
    %c0_0 = arith.constant 0 : index
    %c0_1 = arith.constant 0 : index
    %0 = vector.load %arg1[%c0, %c0_0, %c0_1] : memref<1x1190x8xbf16, #tpu.memory_space<vmem>>, vector<1x1088x8xbf16>
    %1 = vector.shape_cast %0 : vector<1x1088x8xbf16> to vector<1088x8xbf16>
    %c0_2 = arith.constant 0 : index
    %c0_3 = arith.constant 0 : index
    %c0_4 = arith.constant 0 : index
    %2 = vector.load %arg2[%c0_2, %c0_3, %c0_4] : memref<9x8x64xbf16, #tpu.memory_space<vmem>>, vector<1x8x64xbf16>
    %3 = vector.shape_cast %2 : vector<1x8x64xbf16> to vector<8x64xbf16>
    %cst = arith.constant dense<0.000000e+00> : vector<1088x64xf32>
    %4 = tpu.matmul %1, %3, %cst {dimension_numbers = #tpu.dot_dimension_numbers<[1], [0], [0], [1], [0, 0, 1, 1], [], []>} : vector<1088x8xbf16>, vector<8x64xbf16>, vector<1088x64xf32> -> vector<1088x64xf32>
    %c0_5 = arith.constant 0 : index
    %c1 = arith.constant 1 : index
    %c0_6 = arith.constant 0 : index
    %5 = vector.load %arg1[%c0_5, %c1, %c0_6] : memref<1x1190x8xbf16, #tpu.memory_space<vmem>>, vector<1x1088x8xbf16>
    %6 = vector.shape_cast %5 : vector<1x1088x8xbf16> to vector<1088x8xbf16>
    %c1_7 = arith.constant 1 : index
    %c0_8 = arith.constant 0 : index
    %c0_9 = arith.constant 0 : index
    %7 = vector.load %arg2[%c1_7, %c0_8, %c0_9] : memref<9x8x64xbf16, #tpu.memory_space<vmem>>, vector<1x8x64xbf16>
    %8 = vector.shape_cast %7 : vector<1x8x64xbf16> to vector<8x64xbf16>
    %cst_10 = arith.constant dense<0.000000e+00> : vector<1088x64xf32>
    %9 = tpu.matmul %6, %8, %cst_10 {dimension_numbers = #tpu.dot_dimension_numbers<[1], [0], [0], [1], [0, 0, 1, 1], [], []>} : vector<1088x8xbf16>, vector<8x64xbf16>, vector<1088x64xf32> -> vector<1088x64xf32>
    %10 = arith.addf %4, %9 : vector<1088x64xf32>
    %c0_11 = arith.constant 0 : index
    %c2 = arith.constant 2 : index
    %c0_12 = arith.constant 0 : index
    %11 = vector.load %arg1[%c0_11, %c2, %c0_12] : memref<1x1190x8xbf16, #tpu.memory_space<vmem>>, vector<1x1088x8xbf16>
    %12 = vector.shape_cast %11 : vector<1x1088x8xbf16> to vector<1088x8xbf16>
    %c2_13 = arith.constant 2 : index
    %c0_14 = arith.constant 0 : index
    %c0_15 = arith.constant 0 : index
    %13 = vector.load %arg2[%c2_13, %c0_14, %c0_15] : memref<9x8x64xbf16, #tpu.memory_space<vmem>>, vector<1x8x64xbf16>
    %14 = vector.shape_cast %13 : vector<1x8x64xbf16> to vector<8x64xbf16>
    %cst_16 = arith.constant dense<0.000000e+00> : vector<1088x64xf32>
    %15 = tpu.matmul %12, %14, %cst_16 {dimension_numbers = #tpu.dot_dimension_numbers<[1], [0], [0], [1], [0, 0, 1, 1], [], []>} : vector<1088x8xbf16>, vector<8x64xbf16>, vector<1088x64xf32> -> vector<1088x64xf32>
    %16 = arith.addf %10, %15 : vector<1088x64xf32>
    %c0_17 = arith.constant 0 : index
    %c34 = arith.constant 34 : index
    %c0_18 = arith.constant 0 : index
    %17 = vector.load %arg1[%c0_17, %c34, %c0_18] : memref<1x1190x8xbf16, #tpu.memory_space<vmem>>, vector<1x1088x8xbf16>
    %18 = vector.shape_cast %17 : vector<1x1088x8xbf16> to vector<1088x8xbf16>
    %c3 = arith.constant 3 : index
    %c0_19 = arith.constant 0 : index
    %c0_20 = arith.constant 0 : index
    %19 = vector.load %arg2[%c3, %c0_19, %c0_20] : memref<9x8x64xbf16, #tpu.memory_space<vmem>>, vector<1x8x64xbf16>
    %20 = vector.shape_cast %19 : vector<1x8x64xbf16> to vector<8x64xbf16>
    %cst_21 = arith.constant dense<0.000000e+00> : vector<1088x64xf32>
    %21 = tpu.matmul %18, %20, %cst_21 {dimension_numbers = #tpu.dot_dimension_numbers<[1], [0], [0], [1], [0, 0, 1, 1], [], []>} : vector<1088x8xbf16>, vector<8x64xbf16>, vector<1088x64xf32> -> vector<1088x64xf32>
    %22 = arith.addf %16, %21 : vector<1088x64xf32>
    %c0_22 = arith.constant 0 : index
    %c35 = arith.constant 35 : index
    %c0_23 = arith.constant 0 : index
    %23 = vector.load %arg1[%c0_22, %c35, %c0_23] : memref<1x1190x8xbf16, #tpu.memory_space<vmem>>, vector<1x1088x8xbf16>
    %24 = vector.shape_cast %23 : vector<1x1088x8xbf16> to vector<1088x8xbf16>
    %c4 = arith.constant 4 : index
    %c0_24 = arith.constant 0 : index
    %c0_25 = arith.constant 0 : index
    %25 = vector.load %arg2[%c4, %c0_24, %c0_25] : memref<9x8x64xbf16, #tpu.memory_space<vmem>>, vector<1x8x64xbf16>
    %26 = vector.shape_cast %25 : vector<1x8x64xbf16> to vector<8x64xbf16>
    %cst_26 = arith.constant dense<0.000000e+00> : vector<1088x64xf32>
    %27 = tpu.matmul %24, %26, %cst_26 {dimension_numbers = #tpu.dot_dimension_numbers<[1], [0], [0], [1], [0, 0, 1, 1], [], []>} : vector<1088x8xbf16>, vector<8x64xbf16>, vector<1088x64xf32> -> vector<1088x64xf32>
    %28 = arith.addf %22, %27 : vector<1088x64xf32>
    %c0_27 = arith.constant 0 : index
    %c36 = arith.constant 36 : index
    %c0_28 = arith.constant 0 : index
    %29 = vector.load %arg1[%c0_27, %c36, %c0_28] : memref<1x1190x8xbf16, #tpu.memory_space<vmem>>, vector<1x1088x8xbf16>
    %30 = vector.shape_cast %29 : vector<1x1088x8xbf16> to vector<1088x8xbf16>
    %c5 = arith.constant 5 : index
    %c0_29 = arith.constant 0 : index
    %c0_30 = arith.constant 0 : index
    %31 = vector.load %arg2[%c5, %c0_29, %c0_30] : memref<9x8x64xbf16, #tpu.memory_space<vmem>>, vector<1x8x64xbf16>
    %32 = vector.shape_cast %31 : vector<1x8x64xbf16> to vector<8x64xbf16>
    %cst_31 = arith.constant dense<0.000000e+00> : vector<1088x64xf32>
    %33 = tpu.matmul %30, %32, %cst_31 {dimension_numbers = #tpu.dot_dimension_numbers<[1], [0], [0], [1], [0, 0, 1, 1], [], []>} : vector<1088x8xbf16>, vector<8x64xbf16>, vector<1088x64xf32> -> vector<1088x64xf32>
    %34 = arith.addf %28, %33 : vector<1088x64xf32>
    %c0_32 = arith.constant 0 : index
    %c68 = arith.constant 68 : index
    %c0_33 = arith.constant 0 : index
    %35 = vector.load %arg1[%c0_32, %c68, %c0_33] : memref<1x1190x8xbf16, #tpu.memory_space<vmem>>, vector<1x1088x8xbf16>
    %36 = vector.shape_cast %35 : vector<1x1088x8xbf16> to vector<1088x8xbf16>
    %c6 = arith.constant 6 : index
    %c0_34 = arith.constant 0 : index
    %c0_35 = arith.constant 0 : index
    %37 = vector.load %arg2[%c6, %c0_34, %c0_35] : memref<9x8x64xbf16, #tpu.memory_space<vmem>>, vector<1x8x64xbf16>
    %38 = vector.shape_cast %37 : vector<1x8x64xbf16> to vector<8x64xbf16>
    %cst_36 = arith.constant dense<0.000000e+00> : vector<1088x64xf32>
    %39 = tpu.matmul %36, %38, %cst_36 {dimension_numbers = #tpu.dot_dimension_numbers<[1], [0], [0], [1], [0, 0, 1, 1], [], []>} : vector<1088x8xbf16>, vector<8x64xbf16>, vector<1088x64xf32> -> vector<1088x64xf32>
    %40 = arith.addf %34, %39 : vector<1088x64xf32>
    %c0_37 = arith.constant 0 : index
    %c69 = arith.constant 69 : index
    %c0_38 = arith.constant 0 : index
    %41 = vector.load %arg1[%c0_37, %c69, %c0_38] : memref<1x1190x8xbf16, #tpu.memory_space<vmem>>, vector<1x1088x8xbf16>
    %42 = vector.shape_cast %41 : vector<1x1088x8xbf16> to vector<1088x8xbf16>
    %c7 = arith.constant 7 : index
    %c0_39 = arith.constant 0 : index
    %c0_40 = arith.constant 0 : index
    %43 = vector.load %arg2[%c7, %c0_39, %c0_40] : memref<9x8x64xbf16, #tpu.memory_space<vmem>>, vector<1x8x64xbf16>
    %44 = vector.shape_cast %43 : vector<1x8x64xbf16> to vector<8x64xbf16>
    %cst_41 = arith.constant dense<0.000000e+00> : vector<1088x64xf32>
    %45 = tpu.matmul %42, %44, %cst_41 {dimension_numbers = #tpu.dot_dimension_numbers<[1], [0], [0], [1], [0, 0, 1, 1], [], []>} : vector<1088x8xbf16>, vector<8x64xbf16>, vector<1088x64xf32> -> vector<1088x64xf32>
    %46 = arith.addf %40, %45 : vector<1088x64xf32>
    %c0_42 = arith.constant 0 : index
    %c70 = arith.constant 70 : index
    %c0_43 = arith.constant 0 : index
    %47 = vector.load %arg1[%c0_42, %c70, %c0_43] : memref<1x1190x8xbf16, #tpu.memory_space<vmem>>, vector<1x1088x8xbf16>
    %48 = vector.shape_cast %47 : vector<1x1088x8xbf16> to vector<1088x8xbf16>
    %c8 = arith.constant 8 : index
    %c0_44 = arith.constant 0 : index
    %c0_45 = arith.constant 0 : index
    %49 = vector.load %arg2[%c8, %c0_44, %c0_45] : memref<9x8x64xbf16, #tpu.memory_space<vmem>>, vector<1x8x64xbf16>
    %50 = vector.shape_cast %49 : vector<1x8x64xbf16> to vector<8x64xbf16>
    %cst_46 = arith.constant dense<0.000000e+00> : vector<1088x64xf32>
    %51 = tpu.matmul %48, %50, %cst_46 {dimension_numbers = #tpu.dot_dimension_numbers<[1], [0], [0], [1], [0, 0, 1, 1], [], []>} : vector<1088x8xbf16>, vector<8x64xbf16>, vector<1088x64xf32> -> vector<1088x64xf32>
    %52 = arith.addf %46, %51 : vector<1088x64xf32>
    %c0_47 = arith.constant 0 : index
    %c0_48 = arith.constant 0 : index
    %53 = vector.load %arg3[%c0_47, %c0_48] : memref<1x64xf32, #tpu.memory_space<vmem>>, vector<1x64xf32>
    %54 = vector.broadcast %53 : vector<1x64xf32> to vector<1088x64xf32>
    %55 = arith.addf %52, %54 : vector<1088x64xf32>
    %cst_49 = arith.constant 0.000000e+00 : f32
    %56 = vector.broadcast %cst_49 : f32 to vector<1088x64xf32>
    %57 = arith.maximumf %55, %56 : vector<1088x64xf32>
    %58 = arith.truncf %57 : vector<1088x64xf32> to vector<1088x64xbf16>
    %c0_50 = arith.constant 0 : index
    %c0_51 = arith.constant 0 : index
    %c0_52 = arith.constant 0 : index
    %59 = vector.load %arg4[%c0_50, %c0_51, %c0_52] : memref<1x1088x64xbf16, #tpu.memory_space<vmem>>, vector<1x1088x64xbf16>
    %60 = vector.shape_cast %59 : vector<1x1088x64xbf16> to vector<1088x64xbf16>
    %61 = vector.shape_cast %58 : vector<1088x64xbf16> to vector<1x1088x64xbf16>
    tpu.vector_store %arg4[%c0_50, %c0_51, %c0_52], %61 {strides = array<i32>} : memref<1x1088x64xbf16, #tpu.memory_space<vmem>>, vector<1x1088x64xbf16>,
    return
  }
  func.func @transform_0(%arg0: i32) -> (i32, i32, i32) {
    %c0_i32 = arith.constant 0 : i32
    %c0_i32_0 = arith.constant 0 : i32
    %c0_i32_1 = arith.constant 0 : i32
    return %arg0, %c0_i32, %c0_i32_0 : i32, i32, i32
  }
  func.func @transform_1(%arg0: i32) -> (i32, i32, i32) {
    %c0_i32 = arith.constant 0 : i32
    %c0_i32_0 = arith.constant 0 : i32
    %c0_i32_1 = arith.constant 0 : i32
    %c0_i32_2 = arith.constant 0 : i32
    return %c0_i32, %c0_i32_0, %c0_i32_1 : i32, i32, i32
  }
  func.func @transform_2(%arg0: i32) -> (i32, i32) {
    %c0_i32 = arith.constant 0 : i32
    %c0_i32_0 = arith.constant 0 : i32
    %c0_i32_1 = arith.constant 0 : i32
    return %c0_i32, %c0_i32_0 : i32, i32
  }
  func.func @transform_3(%arg0: i32) -> (i32, i32, i32) {
    %c0_i32 = arith.constant 0 : i32
    %c0_i32_0 = arith.constant 0 : i32
    %c0_i32_1 = arith.constant 0 : i32
    return %arg0, %c0_i32, %c0_i32_0 : i32, i32, i32
  }
}

</mosaic_0001>

<llo_original>
// kernel: _conv3x3.1
$region0: #{_conv3x3.1}
  #allocation0 [shape = 'u32[]', space=smem, size = 0x4, offset = 0x4, fixed_abs, tag = 'smem constant byte address 0x4 - core index']
  #allocation1 [shape = 'u32[144,128]{1,0:T(1,128)}', space=vmem, size = 0x12000, scoped, tag = 'internal scratch']
  %s0 = inlined_call_operand.vmem [shape: bf16[2,1190,8], index: 0, kind: input, shape index: {}]
  %s1 = inlined_call_operand.vmem [shape: bf16[9,8,64], index: 1, kind: input, shape index: {}]
  %s2 = inlined_call_operand.vmem [shape: f32[1,64], index: 2, kind: input, shape index: {}]
  %s3 = inlined_call_operand.vmem [shape: bf16[2,1088,64], index: 3, kind: output, shape index: {}]
  %s4 = sld [smem:[#allocation0]]
  $region45: #{_conv3x3.1} parent=0
    _
  %s6 = ssub.s32 1, %s4
  %s7 = scalar_select 0, %s6, %s4
  loop: start=0, step=1, limit=4
  $region2: #{_conv3x3.1} parent=0 // loop_pre_header
    _
  $region3: #{_conv3x3.1} parent=0 // loop_header
    %s9 = sphi 0, %s13
    %p10 = scmp.ge.s32.totalorder %s9, 4
    %s19 = sphi 0, %s21
    %s22 = sphi 0, %s19
    %s23 = sphi 0, %s22
    %s39 = sphi 0, %s23
    %s43 = sphi 0, %s43
    %s45 = sphi 0, %s43
    %s46 = sphi 0, %s45
    %s60 = sphi 0, %s46
    %s64 = sphi 0, %s64
    %s66 = sphi 0, %s64
    %s67 = sphi 0, %s66
    %s81 = sphi 0, %s67
    %s87 = sphi 0, %s89
    %s90 = sphi 0, %s87
    %s91 = sphi 0, %s90
    %s107 = sphi 0, %s91
  $region4: #{_conv3x3.1} parent=0 // loop_header_branch
    %12 = sbr.rel (%p10) target = $region8
  $region5: #{_conv3x3.1} parent=0 // loop_body
    %s14 = ssub.s32 %s9, 1
    %s15 = ssub.s32 %s9, 2
    %s16 = sadd.s32 %s9, 1
    %s17 = ssub.s32 %s9, %s16
    %p18 = scmp.eq.s32.totalorder %s17, 0
    %s20 = sadd.s32 %s19, 1
    %s21 = scalar_select %p18, %s19, %s20
    %p24 = pneg %p18
    %p25 = scmp.eq.s32.totalorder %s9, 1
    %p26 = por %p24, %p25
    %p27 = scmp.ne.s32.totalorder %s19, %s22
    %p28 = scmp.eq.s32.totalorder %s9, 0
    %p29 = por %p27, %p28
    %p30 = scmp.ne.s32.totalorder %s19, %s22
    %p31 = scmp.eq.s32.totalorder %s14, 1
    %p32 = por %p30, %p31
    %p33 = scmp.ne.s32.totalorder %s22, %s23
    %p34 = scmp.eq.s32.totalorder %s14, 0
    %p35 = por %p33, %p34
    %p36 = scmp.ne.s32.totalorder %s22, %s23
    %p37 = scmp.eq.s32.totalorder %s15, 1
    %p38 = por %p36, %p37
    %p40 = scmp.ne.s32.totalorder %s23, %s39
    %p41 = scmp.eq.s32.totalorder %s15, 0
    %p42 = por %p40, %p41
    %s44 = sadd.s32 %s43, 1
    %p47 = scmp.eq.s32.totalorder %s9, 1
    %p48 = scmp.ne.s32.totalorder %s43, %s45
    %p49 = scmp.eq.s32.totalorder %s9, 0
    %p50 = por %p48, %p49
    %p51 = scmp.ne.s32.totalorder %s43, %s45
    %p52 = scmp.eq.s32.totalorder %s14, 1
    %p53 = por %p51, %p52
    %p54 = scmp.ne.s32.totalorder %s45, %s46
    %p55 = scmp.eq.s32.totalorder %s14, 0
    %p56 = por %p54, %p55
    %p57 = scmp.ne.s32.totalorder %s45, %s46
    %p58 = scmp.eq.s32.totalorder %s15, 1
    %p59 = por %p57, %p58
    %p61 = scmp.ne.s32.totalorder %s46, %s60
    %p62 = scmp.eq.s32.totalorder %s15, 0
    %p63 = por %p61, %p62
    %s65 = sadd.s32 %s64, 1
    %p68 = scmp.eq.s32.totalorder %s9, 1
    %p69 = scmp.ne.s32.totalorder %s64, %s66
    %p70 = scmp.eq.s32.totalorder %s9, 0
    %p71 = por %p69, %p70
    %p72 = scmp.ne.s32.totalorder %s64, %s66
    %p73 = scmp.eq.s32.totalorder %s14, 1
    %p74 = por %p72, %p73
    %p75 = scmp.ne.s32.totalorder %s66, %s67
    %p76 = scmp.eq.s32.totalorder %s14, 0
    %p77 = por %p75, %p76
    %p78 = scmp.ne.s32.totalorder %s66, %s67
    %p79 = scmp.eq.s32.totalorder %s15, 1
    %p80 = por %p78, %p79
    %p82 = scmp.ne.s32.totalorder %s67, %s81
    %p83 = scmp.eq.s32.totalorder %s15, 0
    %p84 = por %p82, %p83
    %s85 = ssub.s32 %s9, %s16
    %p86 = scmp.eq.s32.totalorder %s85, 0
    %s88 = sadd.s32 %s87, 1
    %s89 = scalar_select %p86, %s87, %s88
    %p92 = pneg %p86
    %p93 = scmp.eq.s32.totalorder %s9, 1
    %p94 = por %p92, %p93
    %p95 = scmp.ne.s32.totalorder %s87, %s90
    %p96 = scmp.eq.s32.totalorder %s9, 0
    %p97 = por %p95, %p96
    %p98 = scmp.ne.s32.totalorder %s87, %s90
    %p99 = scmp.eq.s32.totalorder %s14, 1
    %p100 = por %p98, %p99
    %p101 = scmp.ne.s32.totalorder %s90, %s91
    %p102 = scmp.eq.s32.totalorder %s14, 0
    %p103 = por %p101, %p102
    %p104 = scmp.ne.s32.totalorder %s90, %s91
    %p105 = scmp.eq.s32.totalorder %s15, 1
    %p106 = por %p104, %p105
    %p108 = scmp.ne.s32.totalorder %s91, %s107
    %p109 = scmp.eq.s32.totalorder %s15, 0
    %p110 = por %p108, %p109
    %p111 = scmp.le.s32.totalorder 1, %s9
    %p112 = scmp.lt.s32.totalorder %s9, 3
    %p113 = pnand %p111, %p112
    %p114 = pneg %p113
    // Predicated region
    $region9: #{_conv3x3.1} parent=5 // pred_check
      _
    $region10: #{_conv3x3.1} parent=5 // pred_check_branch
      %116 = sbr.rel (%p113) target = $region12
    $region11: #{_conv3x3.1} parent=5 // pred_region
      %s117 = ssub.s32 %s9, 1
      // Predicated region
      $region13: #{_conv3x3.1} parent=11 // pred_check
        %p118 = pneg %p56
      $region14: #{_conv3x3.1} parent=11 // pred_check_branch
        %120 = sbr.rel (%p118) target = $region16
      $region15: #{_conv3x3.1} parent=11 // pred_region
        _
      $region16: #{_conv3x3.1} parent=11 // pred_fallthru
        _
      // Predicated region
      $region17: #{_conv3x3.1} parent=11 // pred_check
        %p121 = pneg %p77
      $region18: #{_conv3x3.1} parent=11 // pred_check_branch
        %123 = sbr.rel (%p121) target = $region20
      $region19: #{_conv3x3.1} parent=11 // pred_region
        _
      $region20: #{_conv3x3.1} parent=11 // pred_fallthru
        _
    $region12: #{_conv3x3.1} parent=5 // pred_fallthru
      _
    %p124 = scmp.lt.s32.totalorder %s9, 2
    // Predicated region
    $region21: #{_conv3x3.1} parent=5 // pred_check
      %p125 = pneg %p124
    $region22: #{_conv3x3.1} parent=5 // pred_check_branch
      %127 = sbr.rel (%p125) target = $region24
    $region23: #{_conv3x3.1} parent=5 // pred_region
      // Predicated region
      $region25: #{_conv3x3.1} parent=23 // pred_check
        %p128 = pneg %p29
      $region26: #{_conv3x3.1} parent=23 // pred_check_branch
        %130 = sbr.rel (%p128) target = $region28
      $region27: #{_conv3x3.1} parent=23 // pred_region
        %p131 = scmp.lt.s32.totalorder %s9, 1
        %s132 = scalar_select %p131, %s9, 1
        %s133 = smul.addr %s132, 149
        %s134 = smul.addr %s133, 4
        %s135 = scalar_lea.vmem %s0, %s134
      $region28: #{_conv3x3.1} parent=23 // pred_fallthru
        _
    $region24: #{_conv3x3.1} parent=5 // pred_fallthru
      _
    %p136 = scmp.le.s32.totalorder 1, %s9
    %p137 = scmp.lt.s32.totalorder %s9, 3
    %p138 = pnand %p136, %p137
    %p139 = pneg %p138
    // Predicated region
    $region29: #{_conv3x3.1} parent=5 // pred_check
      _
    $region30: #{_conv3x3.1} parent=5 // pred_check_branch
      %141 = sbr.rel (%p138) target = $region32
    $region31: #{_conv3x3.1} parent=5 // pred_region
      %s142 = ssub.s32 %s9, 1
      %p143 = scmp.lt.s32.totalorder %s14, 1
      %s144 = scalar_select %p143, %s14, 1
      %s145 = smul.addr %s144, 149
      %s146 = smul.addr %s145, 4
      %s147 = scalar_lea.vmem %s0, %s146
      %p148 = pneg %p35
      %p149 = pneg %p32
      %p150 = pneg %p56
      %p151 = pneg %p53
      %p152 = pneg %p77
      %p153 = pneg %p74
      %p154 = pneg %p103
      %p155 = pneg %p100
      %p156 = scmp.lt.s32.totalorder %s14, 1
      %s157 = scalar_select %p156, %s14, 1
      %s158 = smul.addr %s157, 136
      %s159 = smul.addr %s158, 4
      %s160 = scalar_lea.vmem %s3, %s159
      %p161 = scmp.lt.s32.totalorder %s14, 1
      %s162 = scalar_select %p161, %s14, 1
      %s163 = smul.addr %s162, 149
      %s164 = smul.addr %s163, 4
      %s165 = scalar_lea.vmem %s0, %s164
      %p166 = scmp.lt.s32.totalorder %s14, 1
      %s167 = scalar_select %p166, %s14, 1
      %s168 = smul.addr %s167, 136
      %s169 = smul.addr %s168, 4
      %s170 = scalar_lea.vmem %s3, %s169
      %v172 = vld [vmem:[%s165] sm:$0xf]
      %v173 = vld [vmem:[%s165 + $0x4] sm:$0xf]
      %v174 = vld [vmem:[%s165 + $0x8] sm:$0xf]
      %v175 = vld [vmem:[%s165 + $0xc] sm:$0xf]
      %v176 = vld [vmem:[%s165 + $0x10] sm:$0xf]
      %v177 = vld [vmem:[%s165 + $0x14] sm:$0xf]
      %v178 = vld [vmem:[%s165 + $0x18] sm:$0xf]
      %v179 = vld [vmem:[%s165 + $0x1c] sm:$0xf]
      %v180 = vld [vmem:[%s165 + $0x20] sm:$0xf]
      %v181 = vld [vmem:[%s165 + $0x24] sm:$0xf]
      %v182 = vld [vmem:[%s165 + $0x28] sm:$0xf]
      %v183 = vld [vmem:[%s165 + $0x2c] sm:$0xf]
      %v184 = vld [vmem:[%s165 + $0x30] sm:$0xf]
      %v185 = vld [vmem:[%s165 + $0x34] sm:$0xf]
      %v186 = vld [vmem:[%s165 + $0x38] sm:$0xf]
      %v187 = vld [vmem:[%s165 + $0x3c] sm:$0xf]
      %v188 = vld [vmem:[%s165 + $0x40] sm:$0xf]
      %v189 = vld [vmem:[%s165 + $0x44] sm:$0xf]
      %v190 = vld [vmem:[%s165 + $0x48] sm:$0xf]
      %v191 = vld [vmem:[%s165 + $0x4c] sm:$0xf]
      %v192 = vld [vmem:[%s165 + $0x50] sm:$0xf]
      %v193 = vld [vmem:[%s165 + $0x54] sm:$0xf]
      %v194 = vld [vmem:[%s165 + $0x58] sm:$0xf]
      %v195 = vld [vmem:[%s165 + $0x5c] sm:$0xf]
      %v196 = vld [vmem:[%s165 + $0x60] sm:$0xf]
      %v197 = vld [vmem:[%s165 + $0x64] sm:$0xf]
      %v198 = vld [vmem:[%s165 + $0x68] sm:$0xf]
      %v199 = vld [vmem:[%s165 + $0x6c] sm:$0xf]
      %v200 = vld [vmem:[%s165 + $0x70] sm:$0xf]
      %v201 = vld [vmem:[%s165 + $0x74] sm:$0xf]
      %v202 = vld [vmem:[%s165 + $0x78] sm:$0xf]
      %v203 = vld [vmem:[%s165 + $0x7c] sm:$0xf]
      %v204 = vld [vmem:[%s165 + $0x80] sm:$0xf]
      %v205 = vld [vmem:[%s165 + $0x84] sm:$0xf]
      %v206 = vld [vmem:[%s165 + $0x88] sm:$0xf]
      %v207 = vld [vmem:[%s165 + $0x8c] sm:$0xf]
      %v208 = vld [vmem:[%s165 + $0x90] sm:$0xf]
      %v209 = vld [vmem:[%s165 + $0x94] sm:$0xf]
      %v210 = vld [vmem:[%s165 + $0x98] sm:$0xf]
      %v211 = vld [vmem:[%s165 + $0x9c] sm:$0xf]
      %v212 = vld [vmem:[%s165 + $0xa0] sm:$0xf]
      %v213 = vld [vmem:[%s165 + $0xa4] sm:$0xf]
      %v214 = vld [vmem:[%s165 + $0xa8] sm:$0xf]
      %v215 = vld [vmem:[%s165 + $0xac] sm:$0xf]
      %v216 = vld [vmem:[%s165 + $0xb0] sm:$0xf]
      %v217 = vld [vmem:[%s165 + $0xb4] sm:$0xf]
      %v218 = vld [vmem:[%s165 + $0xb8] sm:$0xf]
      %v219 = vld [vmem:[%s165 + $0xbc] sm:$0xf]
      %v220 = vld [vmem:[%s165 + $0xc0] sm:$0xf]
      %v221 = vld [vmem:[%s165 + $0xc4] sm:$0xf]
      %v222 = vld [vmem:[%s165 + $0xc8] sm:$0xf]
      %v223 = vld [vmem:[%s165 + $0xcc] sm:$0xf]
      %v224 = vld [vmem:[%s165 + $0xd0] sm:$0xf]
      %v225 = vld [vmem:[%s165 + $0xd4] sm:$0xf]
      %v226 = vld [vmem:[%s165 + $0xd8] sm:$0xf]
      %v227 = vld [vmem:[%s165 + $0xdc] sm:$0xf]
      %v228 = vld [vmem:[%s165 + $0xe0] sm:$0xf]
      %v229 = vld [vmem:[%s165 + $0xe4] sm:$0xf]
      %v230 = vld [vmem:[%s165 + $0xe8] sm:$0xf]
      %v231 = vld [vmem:[%s165 + $0xec] sm:$0xf]
      %v232 = vld [vmem:[%s165 + $0xf0] sm:$0xf]
      %v233 = vld [vmem:[%s165 + $0xf4] sm:$0xf]
      %v234 = vld [vmem:[%s165 + $0xf8] sm:$0xf]
      %v235 = vld [vmem:[%s165 + $0xfc] sm:$0xf]
      %v236 = vld [vmem:[%s165 + $0x100] sm:$0xf]
      %v237 = vld [vmem:[%s165 + $0x104] sm:$0xf]
      %v238 = vld [vmem:[%s165 + $0x108] sm:$0xf]
      %v239 = vld [vmem:[%s165 + $0x10c] sm:$0xf]
      %v240 = vld [vmem:[%s165 + $0x110] sm:$0xf]
      %v241 = vld [vmem:[%s165 + $0x114] sm:$0xf]
      %v242 = vld [vmem:[%s165 + $0x118] sm:$0xf]
      %v243 = vld [vmem:[%s165 + $0x11c] sm:$0xf]
      %v244 = vld [vmem:[%s165 + $0x120] sm:$0xf]
      %v245 = vld [vmem:[%s165 + $0x124] sm:$0xf]
      %v246 = vld [vmem:[%s165 + $0x128] sm:$0xf]
      %v247 = vld [vmem:[%s165 + $0x12c] sm:$0xf]
      %v248 = vld [vmem:[%s165 + $0x130] sm:$0xf]
      %v249 = vld [vmem:[%s165 + $0x134] sm:$0xf]
      %v250 = vld [vmem:[%s165 + $0x138] sm:$0xf]
      %v251 = vld [vmem:[%s165 + $0x13c] sm:$0xf]
      %v252 = vld [vmem:[%s165 + $0x140] sm:$0xf]
      %v253 = vld [vmem:[%s165 + $0x144] sm:$0xf]
      %v254 = vld [vmem:[%s165 + $0x148] sm:$0xf]
      %v255 = vld [vmem:[%s165 + $0x14c] sm:$0xf]
      %v256 = vld [vmem:[%s165 + $0x150] sm:$0xf]
      %v257 = vld [vmem:[%s165 + $0x154] sm:$0xf]
      %v258 = vld [vmem:[%s165 + $0x158] sm:$0xf]
      %v259 = vld [vmem:[%s165 + $0x15c] sm:$0xf]
      %v260 = vld [vmem:[%s165 + $0x160] sm:$0xf]
      %v261 = vld [vmem:[%s165 + $0x164] sm:$0xf]
      %v262 = vld [vmem:[%s165 + $0x168] sm:$0xf]
      %v263 = vld [vmem:[%s165 + $0x16c] sm:$0xf]
      %v264 = vld [vmem:[%s165 + $0x170] sm:$0xf]
      %v265 = vld [vmem:[%s165 + $0x174] sm:$0xf]
      %v266 = vld [vmem:[%s165 + $0x178] sm:$0xf]
      %v267 = vld [vmem:[%s165 + $0x17c] sm:$0xf]
      %v268 = vld [vmem:[%s165 + $0x180] sm:$0xf]
      %v269 = vld [vmem:[%s165 + $0x184] sm:$0xf]
      %v270 = vld [vmem:[%s165 + $0x188] sm:$0xf]
      %v271 = vld [vmem:[%s165 + $0x18c] sm:$0xf]
      %v272 = vld [vmem:[%s165 + $0x190] sm:$0xf]
      %v273 = vld [vmem:[%s165 + $0x194] sm:$0xf]
      %v274 = vld [vmem:[%s165 + $0x198] sm:$0xf]
      %v275 = vld [vmem:[%s165 + $0x19c] sm:$0xf]
      %v276 = vld [vmem:[%s165 + $0x1a0] sm:$0xf]
      %v277 = vld [vmem:[%s165 + $0x1a4] sm:$0xf]
      %v278 = vld [vmem:[%s165 + $0x1a8] sm:$0xf]
      %v279 = vld [vmem:[%s165 + $0x1ac] sm:$0xf]
      %v280 = vld [vmem:[%s165 + $0x1b0] sm:$0xf]
      %v281 = vld [vmem:[%s165 + $0x1b4] sm:$0xf]
      %v282 = vld [vmem:[%s165 + $0x1b8] sm:$0xf]
      %v283 = vld [vmem:[%s165 + $0x1bc] sm:$0xf]
      %v284 = vld [vmem:[%s165 + $0x1c0] sm:$0xf]
      %v285 = vld [vmem:[%s165 + $0x1c4] sm:$0xf]
      %v286 = vld [vmem:[%s165 + $0x1c8] sm:$0xf]
      %v287 = vld [vmem:[%s165 + $0x1cc] sm:$0xf]
      %v288 = vld [vmem:[%s165 + $0x1d0] sm:$0xf]
      %v289 = vld [vmem:[%s165 + $0x1d4] sm:$0xf]
      %v290 = vld [vmem:[%s165 + $0x1d8] sm:$0xf]
      %v291 = vld [vmem:[%s165 + $0x1dc] sm:$0xf]
      %v292 = vld [vmem:[%s165 + $0x1e0] sm:$0xf]
      %v293 = vld [vmem:[%s165 + $0x1e4] sm:$0xf]
      %v294 = vld [vmem:[%s165 + $0x1e8] sm:$0xf]
      %v295 = vld [vmem:[%s165 + $0x1ec] sm:$0xf]
      %v296 = vld [vmem:[%s165 + $0x1f0] sm:$0xf]
      %v297 = vld [vmem:[%s165 + $0x1f4] sm:$0xf]
      %v298 = vld [vmem:[%s165 + $0x1f8] sm:$0xf]
      %v299 = vld [vmem:[%s165 + $0x1fc] sm:$0xf]
      %v300 = vld [vmem:[%s165 + $0x200] sm:$0xf]
      %v301 = vld [vmem:[%s165 + $0x204] sm:$0xf]
      %v302 = vld [vmem:[%s165 + $0x208] sm:$0xf]
      %v303 = vld [vmem:[%s165 + $0x20c] sm:$0xf]
      %v304 = vld [vmem:[%s165 + $0x210] sm:$0xf]
      %v305 = vld [vmem:[%s165 + $0x214] sm:$0xf]
      %v306 = vld [vmem:[%s165 + $0x218] sm:$0xf]
      %v307 = vld [vmem:[%s165 + $0x21c] sm:$0xf]
      %v308 = vld [vmem:[%s1] sm:$0xf]
      %v309 = vld [vmem:[%s165 + $0x220] sm:$0x1]
      %s310 = scalar_lea.vmem %s1, 4
      %v311 = vld [vmem:[%s310] sm:$0xf]
      %v449 = vunpack.c.l.b16 %v172
      %v450 = vunpack.c.l.b16 %v173
      %v451 = vunpack.c.l.b16 %v174
      %v452 = vunpack.c.l.b16 %v175
      %v453 = vunpack.c.l.b16 %v176
      %v454 = vunpack.c.l.b16 %v177
      %v455 = vunpack.c.l.b16 %v178
      %v456 = vunpack.c.l.b16 %v179
      %v457 = vunpack.c.l.b16 %v180
      %v458 = vunpack.c.l.b16 %v181
      %v459 = vunpack.c.l.b16 %v182
      %v460 = vunpack.c.l.b16 %v183
      %v461 = vunpack.c.l.b16 %v184
      %v462 = vunpack.c.l.b16 %v185
      %v463 = vunpack.c.l.b16 %v186
      %v464 = vunpack.c.l.b16 %v187
      %v465 = vunpack.c.l.b16 %v188
      %v466 = vunpack.c.l.b16 %v189
      %v467 = vunpack.c.l.b16 %v190
      %v468 = vunpack.c.l.b16 %v191
      %v469 = vunpack.c.l.b16 %v192
      %v470 = vunpack.c.l.b16 %v193
      %v471 = vunpack.c.l.b16 %v194
      %v472 = vunpack.c.l.b16 %v195
      %v473 = vunpack.c.l.b16 %v196
      %v474 = vunpack.c.l.b16 %v197
      %v475 = vunpack.c.l.b16 %v198
      %v476 = vunpack.c.l.b16 %v199
      %v477 = vunpack.c.l.b16 %v200
      %v478 = vunpack.c.l.b16 %v201
      %v479 = vunpack.c.l.b16 %v202
      %v480 = vunpack.c.l.b16 %v203
      %v481 = vunpack.c.l.b16 %v204
      %v482 = vunpack.c.l.b16 %v205
      %v483 = vunpack.c.l.b16 %v206
      %v484 = vunpack.c.l.b16 %v207
      %v485 = vunpack.c.l.b16 %v208
      %v486 = vunpack.c.l.b16 %v209
      %v487 = vunpack.c.l.b16 %v210
      %v488 = vunpack.c.l.b16 %v211
      %v489 = vunpack.c.l.b16 %v212
      %v490 = vunpack.c.l.b16 %v213
      %v491 = vunpack.c.l.b16 %v214
      %v492 = vunpack.c.l.b16 %v215
      %v493 = vunpack.c.l.b16 %v216
      %v494 = vunpack.c.l.b16 %v217
      %v495 = vunpack.c.l.b16 %v218
      %v496 = vunpack.c.l.b16 %v219
      %v497 = vunpack.c.l.b16 %v220
      %v498 = vunpack.c.l.b16 %v221
      %v499 = vunpack.c.l.b16 %v222
      %v500 = vunpack.c.l.b16 %v223
      %v501 = vunpack.c.l.b16 %v224
      %v502 = vunpack.c.l.b16 %v225
      %v503 = vunpack.c.l.b16 %v226
      %v504 = vunpack.c.l.b16 %v227
      %v505 = vunpack.c.l.b16 %v228
      %v506 = vunpack.c.l.b16 %v229
      %v507 = vunpack.c.l.b16 %v230
      %v508 = vunpack.c.l.b16 %v231
      %v509 = vunpack.c.l.b16 %v232
      %v510 = vunpack.c.l.b16 %v233
      %v511 = vunpack.c.l.b16 %v234
      %v512 = vunpack.c.l.b16 %v235
      %v513 = vunpack.c.l.b16 %v236
      %v514 = vunpack.c.l.b16 %v237
      %v515 = vunpack.c.l.b16 %v238
      %v516 = vunpack.c.l.b16 %v239
      %v517 = vunpack.c.l.b16 %v240
      %v518 = vunpack.c.l.b16 %v241
      %v519 = vunpack.c.l.b16 %v242
      %v520 = vunpack.c.l.b16 %v243
      %v521 = vunpack.c.l.b16 %v244
      %v522 = vunpack.c.l.b16 %v245
      %v523 = vunpack.c.l.b16 %v246
      %v524 = vunpack.c.l.b16 %v247
      %v525 = vunpack.c.l.b16 %v248
      %v526 = vunpack.c.l.b16 %v249
      %v527 = vunpack.c.l.b16 %v250
      %v528 = vunpack.c.l.b16 %v251
      %v529 = vunpack.c.l.b16 %v252
      %v530 = vunpack.c.l.b16 %v253
      %v531 = vunpack.c.l.b16 %v254
      %v532 = vunpack.c.l.b16 %v255
      %v533 = vunpack.c.l.b16 %v256
      %v534 = vunpack.c.l.b16 %v257
      %v535 = vunpack.c.l.b16 %v258
      %v536 = vunpack.c.l.b16 %v259
      %v537 = vunpack.c.l.b16 %v260
      %v538 = vunpack.c.l.b16 %v261
      %v539 = vunpack.c.l.b16 %v262
      %v540 = vunpack.c.l.b16 %v263
      %v541 = vunpack.c.l.b16 %v264
      %v542 = vunpack.c.l.b16 %v265
      %v543 = vunpack.c.l.b16 %v266
      %v544 = vunpack.c.l.b16 %v267
      %v545 = vunpack.c.l.b16 %v268
      %v546 = vunpack.c.l.b16 %v269
      %v547 = vunpack.c.l.b16 %v270
      %v548 = vunpack.c.l.b16 %v271
      %v549 = vunpack.c.l.b16 %v272
      %v550 = vunpack.c.l.b16 %v273
      %v551 = vunpack.c.l.b16 %v274
      %v552 = vunpack.c.l.b16 %v275
      %v553 = vunpack.c.l.b16 %v276
      %v554 = vunpack.c.l.b16 %v277
      %v555 = vunpack.c.l.b16 %v278
      %v556 = vunpack.c.l.b16 %v279
      %v557 = vunpack.c.l.b16 %v280
      %v558 = vunpack.c.l.b16 %v281
      %v559 = vunpack.c.l.b16 %v282
      %v560 = vunpack.c.l.b16 %v283
      %v561 = vunpack.c.l.b16 %v284
      %v562 = vunpack.c.l.b16 %v285
      %v563 = vunpack.c.l.b16 %v286
      %v564 = vunpack.c.l.b16 %v287
      %v565 = vunpack.c.l.b16 %v288
      %v566 = vunpack.c.l.b16 %v289
      %v567 = vunpack.c.l.b16 %v290
      %v568 = vunpack.c.l.b16 %v291
      %v569 = vunpack.c.l.b16 %v292
      %v570 = vunpack.c.l.b16 %v293
      %v571 = vunpack.c.l.b16 %v294
      %v572 = vunpack.c.l.b16 %v295
      %v573 = vunpack.c.l.b16 %v296
      %v574 = vunpack.c.l.b16 %v297
      %v575 = vunpack.c.l.b16 %v298
      %v576 = vunpack.c.l.b16 %v299
      %v577 = vunpack.c.l.b16 %v300
      %v578 = vunpack.c.l.b16 %v301
      %v579 = vunpack.c.l.b16 %v302
      %v580 = vunpack.c.l.b16 %v303
      %v581 = vunpack.c.l.b16 %v304
      %v582 = vunpack.c.l.b16 %v305
      %v583 = vunpack.c.l.b16 %v306
      %v584 = vunpack.c.l.b16 %v307
      %v585 = vunpack.c.l.b16 %v309
      %v586 = vpack.c.b16 %v450, %v449
      %v587 = vpack.c.b16 %v452, %v451
      %v588 = vpack.c.b16 %v454, %v453
      %v589 = vpack.c.b16 %v456, %v455
      %v590 = vpack.c.b16 %v458, %v457
      %v591 = vpack.c.b16 %v460, %v459
      %v592 = vpack.c.b16 %v462, %v461
      %v593 = vpack.c.b16 %v464, %v463
      %v594 = vpack.c.b16 %v466, %v465
      %v595 = vpack.c.b16 %v468, %v467
      %v596 = vpack.c.b16 %v470, %v469
      %v597 = vpack.c.b16 %v472, %v471
      %v598 = vpack.c.b16 %v474, %v473
      %v599 = vpack.c.b16 %v476, %v475
      %v600 = vpack.c.b16 %v478, %v477
      %v601 = vpack.c.b16 %v480, %v479
      %v602 = vpack.c.b16 %v482, %v481
      %v603 = vpack.c.b16 %v484, %v483
      %v604 = vpack.c.b16 %v486, %v485
      %v605 = vpack.c.b16 %v488, %v487
      %v606 = vpack.c.b16 %v490, %v489
      %v607 = vpack.c.b16 %v492, %v491
      %v608 = vpack.c.b16 %v494, %v493
      %v609 = vpack.c.b16 %v496, %v495
      %v610 = vpack.c.b16 %v498, %v497
      %v611 = vpack.c.b16 %v500, %v499
      %v612 = vpack.c.b16 %v502, %v501
      %v613 = vpack.c.b16 %v504, %v503
      %v614 = vpack.c.b16 %v506, %v505
      %v615 = vpack.c.b16 %v508, %v507
      %v616 = vpack.c.b16 %v510, %v509
      %v617 = vpack.c.b16 %v512, %v511
      %v618 = vpack.c.b16 %v514, %v513
      %v619 = vpack.c.b16 %v516, %v515
      %v620 = vpack.c.b16 %v518, %v517
      %v621 = vpack.c.b16 %v520, %v519
      %v622 = vpack.c.b16 %v522, %v521
      %v623 = vpack.c.b16 %v524, %v523
      %v624 = vpack.c.b16 %v526, %v525
      %v625 = vpack.c.b16 %v528, %v527
      %v626 = vpack.c.b16 %v530, %v529
      %v627 = vpack.c.b16 %v532, %v531
      %v628 = vpack.c.b16 %v534, %v533
      %v629 = vpack.c.b16 %v536, %v535
      %v630 = vpack.c.b16 %v538, %v537
      %v631 = vpack.c.b16 %v540, %v539
      %v632 = vpack.c.b16 %v542, %v541
      %v633 = vpack.c.b16 %v544, %v543
      %v634 = vpack.c.b16 %v546, %v545
      %v635 = vpack.c.b16 %v548, %v547
      %v636 = vpack.c.b16 %v550, %v549
      %v637 = vpack.c.b16 %v552, %v551
      %v638 = vpack.c.b16 %v554, %v553
      %v639 = vpack.c.b16 %v556, %v555
      %v640 = vpack.c.b16 %v558, %v557
      %v641 = vpack.c.b16 %v560, %v559
      %v642 = vpack.c.b16 %v562, %v561
      %v643 = vpack.c.b16 %v564, %v563
      %v644 = vpack.c.b16 %v566, %v565
      %v645 = vpack.c.b16 %v568, %v567
      %v646 = vpack.c.b16 %v570, %v569
      %v647 = vpack.c.b16 %v572, %v571
      %v648 = vpack.c.b16 %v574, %v573
      %v649 = vpack.c.b16 %v576, %v575
      %v650 = vpack.c.b16 %v578, %v577
      %v651 = vpack.c.b16 %v580, %v579
      %v652 = vpack.c.b16 %v582, %v581
      %v653 = vpack.c.b16 %v584, %v583
      %v654 = vpack.c.b16 %v585, %v585
      %vm655 = vsmask.f32 7424
      %v657 = vshrl.u32 %v586, 16
      %v659 = vshll.u32 %v586, 16
      %v661 = vrot.slane %v659, 1
      %v662 = vor.u32 %v657, %v661
      %v664 = vshll.u32 %v587, 16
      %v666 = vrot.slane %v664, 1
      %v667 = vsel %vm655, %v662, %v666
      %v668 = vshrl.u32 %v587, 16
      %v670 = vor.u32 %v668, %v666
      %v672 = vshll.u32 %v588, 16
      %v674 = vrot.slane %v672, 1
      %v675 = vsel %vm655, %v670, %v674
      %v676 = vshrl.u32 %v588, 16
      %v678 = vor.u32 %v676, %v674
      %v680 = vshll.u32 %v589, 16
      %v682 = vrot.slane %v680, 1
      %v683 = vsel %vm655, %v678, %v682
      %v684 = vshrl.u32 %v589, 16
      %v686 = vor.u32 %v684, %v682
      %v688 = vshll.u32 %v590, 16
      %v690 = vrot.slane %v688, 1
      %v691 = vsel %vm655, %v686, %v690
      %v692 = vshrl.u32 %v590, 16
      %v694 = vor.u32 %v692, %v690
      %v696 = vshll.u32 %v591, 16
      %v698 = vrot.slane %v696, 1
      %v699 = vsel %vm655, %v694, %v698
      %v700 = vshrl.u32 %v591, 16
      %v702 = vor.u32 %v700, %v698
      %v704 = vshll.u32 %v592, 16
      %v706 = vrot.slane %v704, 1
      %v707 = vsel %vm655, %v702, %v706
      %v708 = vshrl.u32 %v592, 16
      %v710 = vor.u32 %v708, %v706
      %v712 = vshll.u32 %v593, 16
      %v714 = vrot.slane %v712, 1
      %v715 = vsel %vm655, %v710, %v714
      %v716 = vshrl.u32 %v593, 16
      %v718 = vor.u32 %v716, %v714
      %v720 = vshll.u32 %v594, 16
      %v722 = vrot.slane %v720, 1
      %v723 = vsel %vm655, %v718, %v722
      %v724 = vshrl.u32 %v594, 16
      %v726 = vor.u32 %v724, %v722
      %v728 = vshll.u32 %v595, 16
      %v730 = vrot.slane %v728, 1
      %v731 = vsel %vm655, %v726, %v730
      %v732 = vshrl.u32 %v595, 16
      %v734 = vor.u32 %v732, %v730
      %v736 = vshll.u32 %v596, 16
      %v738 = vrot.slane %v736, 1
      %v739 = vsel %vm655, %v734, %v738
      %v740 = vshrl.u32 %v596, 16
      %v742 = vor.u32 %v740, %v738
      %v744 = vshll.u32 %v597, 16
      %v746 = vrot.slane %v744, 1
      %v747 = vsel %vm655, %v742, %v746
      %v748 = vshrl.u32 %v597, 16
      %v750 = vor.u32 %v748, %v746
      %v752 = vshll.u32 %v598, 16
      %v754 = vrot.slane %v752, 1
      %v755 = vsel %vm655, %v750, %v754
      %v756 = vshrl.u32 %v598, 16
      %v758 = vor.u32 %v756, %v754
      %v760 = vshll.u32 %v599, 16
      %v762 = vrot.slane %v760, 1
      %v763 = vsel %vm655, %v758, %v762
      %v764 = vshrl.u32 %v599, 16
      %v766 = vor.u32 %v764, %v762
      %v768 = vshll.u32 %v600, 16
      %v770 = vrot.slane %v768, 1
      %v771 = vsel %vm655, %v766, %v770
      %v772 = vshrl.u32 %v600, 16
      %v774 = vor.u32 %v772, %v770
      %v776 = vshll.u32 %v601, 16
      %v778 = vrot.slane %v776, 1
      %v779 = vsel %vm655, %v774, %v778
      %v780 = vshrl.u32 %v601, 16
      %v782 = vor.u32 %v780, %v778
      %v784 = vshll.u32 %v602, 16
      %v786 = vrot.slane %v784, 1
      %v787 = vsel %vm655, %v782, %v786
      %v788 = vshrl.u32 %v602, 16
      %v790 = vor.u32 %v788, %v786
      %v792 = vshll.u32 %v603, 16
      %v794 = vrot.slane %v792, 1
      %v795 = vsel %vm655, %v790, %v794
      %v796 = vshrl.u32 %v603, 16
      %v798 = vor.u32 %v796, %v794
      %v800 = vshll.u32 %v604, 16
      %v802 = vrot.slane %v800, 1
      %v803 = vsel %vm655, %v798, %v802
      %v804 = vshrl.u32 %v604, 16
      %v806 = vor.u32 %v804, %v802
      %v808 = vshll.u32 %v605, 16
      %v810 = vrot.slane %v808, 1
      %v811 = vsel %vm655, %v806, %v810
      %v812 = vshrl.u32 %v605, 16
      %v814 = vor.u32 %v812, %v810
      %v816 = vshll.u32 %v606, 16
      %v818 = vrot.slane %v816, 1
      %v819 = vsel %vm655, %v814, %v818
      %v820 = vshrl.u32 %v606, 16
      %v822 = vor.u32 %v820, %v818
      %v824 = vshll.u32 %v607, 16
      %v826 = vrot.slane %v824, 1
      %v827 = vsel %vm655, %v822, %v826
      %v828 = vshrl.u32 %v607, 16
      %v830 = vor.u32 %v828, %v826
      %v832 = vshll.u32 %v608, 16
      %v834 = vrot.slane %v832, 1
      %v835 = vsel %vm655, %v830, %v834
      %v836 = vshrl.u32 %v608, 16
      %v838 = vor.u32 %v836, %v834
      %v840 = vshll.u32 %v609, 16
      %v842 = vrot.slane %v840, 1
      %v843 = vsel %vm655, %v838, %v842
      %v844 = vshrl.u32 %v609, 16
      %v846 = vor.u32 %v844, %v842
      %v848 = vshll.u32 %v610, 16
      %v850 = vrot.slane %v848, 1
      %v851 = vsel %vm655, %v846, %v850
      %v852 = vshrl.u32 %v610, 16
      %v854 = vor.u32 %v852, %v850
      %v856 = vshll.u32 %v611, 16
      %v858 = vrot.slane %v856, 1
      %v859 = vsel %vm655, %v854, %v858
      %v860 = vshrl.u32 %v611, 16
      %v862 = vor.u32 %v860, %v858
      %v864 = vshll.u32 %v612, 16
      %v866 = vrot.slane %v864, 1
      %v867 = vsel %vm655, %v862, %v866
      %v868 = vshrl.u32 %v612, 16
      %v870 = vor.u32 %v868, %v866
      %v872 = vshll.u32 %v613, 16
      %v874 = vrot.slane %v872, 1
      %v875 = vsel %vm655, %v870, %v874
      %v876 = vshrl.u32 %v613, 16
      %v878 = vor.u32 %v876, %v874
      %v880 = vshll.u32 %v614, 16
      %v882 = vrot.slane %v880, 1
      %v883 = vsel %vm655, %v878, %v882
      %v884 = vshrl.u32 %v614, 16
      %v886 = vor.u32 %v884, %v882
      %v888 = vshll.u32 %v615, 16
      %v890 = vrot.slane %v888, 1
      %v891 = vsel %vm655, %v886, %v890
      %v892 = vshrl.u32 %v615, 16
      %v894 = vor.u32 %v892, %v890
      %v896 = vshll.u32 %v616, 16
      %v898 = vrot.slane %v896, 1
      %v899 = vsel %vm655, %v894, %v898
      %v900 = vshrl.u32 %v616, 16
      %v902 = vor.u32 %v900, %v898
      %v904 = vshll.u32 %v617, 16
      %v906 = vrot.slane %v904, 1
      %v907 = vsel %vm655, %v902, %v906
      %v908 = vshrl.u32 %v617, 16
      %v910 = vor.u32 %v908, %v906
      %v912 = vshll.u32 %v618, 16
      %v914 = vrot.slane %v912, 1
      %v915 = vsel %vm655, %v910, %v914
      %v916 = vshrl.u32 %v618, 16
      %v918 = vor.u32 %v916, %v914
      %v920 = vshll.u32 %v619, 16
      %v922 = vrot.slane %v920, 1
      %v923 = vsel %vm655, %v918, %v922
      %v924 = vshrl.u32 %v619, 16
      %v926 = vor.u32 %v924, %v922
      %v928 = vshll.u32 %v620, 16
      %v930 = vrot.slane %v928, 1
      %v931 = vsel %vm655, %v926, %v930
      %v932 = vshrl.u32 %v620, 16
      %v934 = vor.u32 %v932, %v930
      %v936 = vshll.u32 %v621, 16
      %v938 = vrot.slane %v936, 1
      %v939 = vsel %vm655, %v934, %v938
      %v940 = vshrl.u32 %v621, 16
      %v942 = vor.u32 %v940, %v938
      %v944 = vshll.u32 %v622, 16
      %v946 = vrot.slane %v944, 1
      %v947 = vsel %vm655, %v942, %v946
      %v948 = vshrl.u32 %v622, 16
      %v950 = vor.u32 %v948, %v946
      %v952 = vshll.u32 %v623, 16
      %v954 = vrot.slane %v952, 1
      %v955 = vsel %vm655, %v950, %v954
      %v956 = vshrl.u32 %v623, 16
      %v958 = vor.u32 %v956, %v954
      %v960 = vshll.u32 %v624, 16
      %v962 = vrot.slane %v960, 1
      %v963 = vsel %vm655, %v958, %v962
      %v964 = vshrl.u32 %v624, 16
      %v966 = vor.u32 %v964, %v962
      %v968 = vshll.u32 %v625, 16
      %v970 = vrot.slane %v968, 1
      %v971 = vsel %vm655, %v966, %v970
      %v972 = vshrl.u32 %v625, 16
      %v974 = vor.u32 %v972, %v970
      %v976 = vshll.u32 %v626, 16
      %v978 = vrot.slane %v976, 1
      %v979 = vsel %vm655, %v974, %v978
      %v980 = vshrl.u32 %v626, 16
      %v982 = vor.u32 %v980, %v978
      %v984 = vshll.u32 %v627, 16
      %v986 = vrot.slane %v984, 1
      %v987 = vsel %vm655, %v982, %v986
      %v988 = vshrl.u32 %v627, 16
      %v990 = vor.u32 %v988, %v986
      %v992 = vshll.u32 %v628, 16
      %v994 = vrot.slane %v992, 1
      %v995 = vsel %vm655, %v990, %v994
      %v996 = vshrl.u32 %v628, 16
      %v998 = vor.u32 %v996, %v994
      %v1000 = vshll.u32 %v629, 16
      %v1002 = vrot.slane %v1000, 1
      %v1003 = vsel %vm655, %v998, %v1002
      %v1004 = vshrl.u32 %v629, 16
      %v1006 = vor.u32 %v1004, %v1002
      %v1008 = vshll.u32 %v630, 16
      %v1010 = vrot.slane %v1008, 1
      %v1011 = vsel %vm655, %v1006, %v1010
      %v1012 = vshrl.u32 %v630, 16
      %v1014 = vor.u32 %v1012, %v1010
      %v1016 = vshll.u32 %v631, 16
      %v1018 = vrot.slane %v1016, 1
      %v1019 = vsel %vm655, %v1014, %v1018
      %v1020 = vshrl.u32 %v631, 16
      %v1022 = vor.u32 %v1020, %v1018
      %v1024 = vshll.u32 %v632, 16
      %v1026 = vrot.slane %v1024, 1
      %v1027 = vsel %vm655, %v1022, %v1026
      %v1028 = vshrl.u32 %v632, 16
      %v1030 = vor.u32 %v1028, %v1026
      %v1032 = vshll.u32 %v633, 16
      %v1034 = vrot.slane %v1032, 1
      %v1035 = vsel %vm655, %v1030, %v1034
      %v1036 = vshrl.u32 %v633, 16
      %v1038 = vor.u32 %v1036, %v1034
      %v1040 = vshll.u32 %v634, 16
      %v1042 = vrot.slane %v1040, 1
      %v1043 = vsel %vm655, %v1038, %v1042
      %v1044 = vshrl.u32 %v634, 16
      %v1046 = vor.u32 %v1044, %v1042
      %v1048 = vshll.u32 %v635, 16
      %v1050 = vrot.slane %v1048, 1
      %v1051 = vsel %vm655, %v1046, %v1050
      %v1052 = vshrl.u32 %v635, 16
      %v1054 = vor.u32 %v1052, %v1050
      %v1056 = vshll.u32 %v636, 16
      %v1058 = vrot.slane %v1056, 1
      %v1059 = vsel %vm655, %v1054, %v1058
      %v1060 = vshrl.u32 %v636, 16
      %v1062 = vor.u32 %v1060, %v1058
      %v1064 = vshll.u32 %v637, 16
      %v1066 = vrot.slane %v1064, 1
      %v1067 = vsel %vm655, %v1062, %v1066
      %v1068 = vshrl.u32 %v637, 16
      %v1070 = vor.u32 %v1068, %v1066
      %v1072 = vshll.u32 %v638, 16
      %v1074 = vrot.slane %v1072, 1
      %v1075 = vsel %vm655, %v1070, %v1074
      %v1076 = vshrl.u32 %v638, 16
      %v1078 = vor.u32 %v1076, %v1074
      %v1080 = vshll.u32 %v639, 16
      %v1082 = vrot.slane %v1080, 1
      %v1083 = vsel %vm655, %v1078, %v1082
      %v1084 = vshrl.u32 %v639, 16
      %v1086 = vor.u32 %v1084, %v1082
      %v1088 = vshll.u32 %v640, 16
      %v1090 = vrot.slane %v1088, 1
      %v1091 = vsel %vm655, %v1086, %v1090
      %v1092 = vshrl.u32 %v640, 16
      %v1094 = vor.u32 %v1092, %v1090
      %v1096 = vshll.u32 %v641, 16
      %v1098 = vrot.slane %v1096, 1
      %v1099 = vsel %vm655, %v1094, %v1098
      %v1100 = vshrl.u32 %v641, 16
      %v1102 = vor.u32 %v1100, %v1098
      %v1104 = vshll.u32 %v642, 16
      %v1106 = vrot.slane %v1104, 1
      %v1107 = vsel %vm655, %v1102, %v1106
      %v1108 = vshrl.u32 %v642, 16
      %v1110 = vor.u32 %v1108, %v1106
      %v1112 = vshll.u32 %v643, 16
      %v1114 = vrot.slane %v1112, 1
      %v1115 = vsel %vm655, %v1110, %v1114
      %v1116 = vshrl.u32 %v643, 16
      %v1118 = vor.u32 %v1116, %v1114
      %v1120 = vshll.u32 %v644, 16
      %v1122 = vrot.slane %v1120, 1
      %v1123 = vsel %vm655, %v1118, %v1122
      %v1124 = vshrl.u32 %v644, 16
      %v1126 = vor.u32 %v1124, %v1122
      %v1128 = vshll.u32 %v645, 16
      %v1130 = vrot.slane %v1128, 1
      %v1131 = vsel %vm655, %v1126, %v1130
      %v1132 = vshrl.u32 %v645, 16
      %v1134 = vor.u32 %v1132, %v1130
      %v1136 = vshll.u32 %v646, 16
      %v1138 = vrot.slane %v1136, 1
      %v1139 = vsel %vm655, %v1134, %v1138
      %v1140 = vshrl.u32 %v646, 16
      %v1142 = vor.u32 %v1140, %v1138
      %v1144 = vshll.u32 %v647, 16
      %v1146 = vrot.slane %v1144, 1
      %v1147 = vsel %vm655, %v1142, %v1146
      %v1148 = vshrl.u32 %v647, 16
      %v1150 = vor.u32 %v1148, %v1146
      %v1152 = vshll.u32 %v648, 16
      %v1154 = vrot.slane %v1152, 1
      %v1155 = vsel %vm655, %v1150, %v1154
      %v1156 = vshrl.u32 %v648, 16
      %v1158 = vor.u32 %v1156, %v1154
      %v1160 = vshll.u32 %v649, 16
      %v1162 = vrot.slane %v1160, 1
      %v1163 = vsel %vm655, %v1158, %v1162
      %v1164 = vshrl.u32 %v649, 16
      %v1166 = vor.u32 %v1164, %v1162
      %v1168 = vshll.u32 %v650, 16
      %v1170 = vrot.slane %v1168, 1
      %v1171 = vsel %vm655, %v1166, %v1170
      %v1172 = vshrl.u32 %v650, 16
      %v1174 = vor.u32 %v1172, %v1170
      %v1176 = vshll.u32 %v651, 16
      %v1178 = vrot.slane %v1176, 1
      %v1179 = vsel %vm655, %v1174, %v1178
      %v1180 = vshrl.u32 %v651, 16
      %v1182 = vor.u32 %v1180, %v1178
      %v1184 = vshll.u32 %v652, 16
      %v1186 = vrot.slane %v1184, 1
      %v1187 = vsel %vm655, %v1182, %v1186
      %v1188 = vshrl.u32 %v652, 16
      %v1190 = vor.u32 %v1188, %v1186
      %v1192 = vshll.u32 %v653, 16
      %v1194 = vrot.slane %v1192, 1
      %v1195 = vsel %vm655, %v1190, %v1194
      %v1196 = vshrl.u32 %v653, 16
      %v1198 = vor.u32 %v1196, %v1194
      %v1200 = vshll.u32 %v654, 16
      %v1202 = vrot.slane %v1200, 1
      %v1203 = vsel %vm655, %v1198, %v1202
      %vm1204 = vcmask 64512
      %v1206 = vsel %vm1204, %v667, 0
      %v1209 = vsel %vm1204, %v675, 0
      %v1212 = vsel %vm1204, %v683, 0
      %v1215 = vsel %vm1204, %v691, 0
      %v1218 = vsel %vm1204, %v699, 0
      %v1221 = vsel %vm1204, %v707, 0
      %v1224 = vsel %vm1204, %v715, 0
      %v1227 = vsel %vm1204, %v723, 0
      %v1230 = vsel %vm1204, %v731, 0
      %v1233 = vsel %vm1204, %v739, 0
      %v1236 = vsel %vm1204, %v747, 0
      %v1239 = vsel %vm1204, %v755, 0
      %v1242 = vsel %vm1204, %v763, 0
      %v1245 = vsel %vm1204, %v771, 0
      %v1248 = vsel %vm1204, %v779, 0
      %v1251 = vsel %vm1204, %v787, 0
      %v1254 = vsel %vm1204, %v795, 0
      %v1257 = vsel %vm1204, %v803, 0
      %v1260 = vsel %vm1204, %v811, 0
      %v1263 = vsel %vm1204, %v819, 0
      %v1266 = vsel %vm1204, %v827, 0
      %v1269 = vsel %vm1204, %v835, 0
      %v1272 = vsel %vm1204, %v843, 0
      %v1275 = vsel %vm1204, %v851, 0
      %v1278 = vsel %vm1204, %v859, 0
      %v1281 = vsel %vm1204, %v867, 0
      %v1284 = vsel %vm1204, %v875, 0
      %v1287 = vsel %vm1204, %v883, 0
      %v1290 = vsel %vm1204, %v891, 0
      %v1293 = vsel %vm1204, %v899, 0
      %v1296 = vsel %vm1204, %v907, 0
      %v1299 = vsel %vm1204, %v915, 0
      %v1302 = vsel %vm1204, %v923, 0
      %v1305 = vsel %vm1204, %v931, 0
      %v1308 = vsel %vm1204, %v939, 0
      %v1311 = vsel %vm1204, %v947, 0
      %v1314 = vsel %vm1204, %v955, 0
      %v1317 = vsel %vm1204, %v963, 0
      %v1320 = vsel %vm1204, %v971, 0
      %v1323 = vsel %vm1204, %v979, 0
      %v1326 = vsel %vm1204, %v987, 0
      %v1329 = vsel %vm1204, %v995, 0
      %v1332 = vsel %vm1204, %v1003, 0
      %v1335 = vsel %vm1204, %v1011, 0
      %v1338 = vsel %vm1204, %v1019, 0
      %v1341 = vsel %vm1204, %v1027, 0
      %v1344 = vsel %vm1204, %v1035, 0
      %v1347 = vsel %vm1204, %v1043, 0
      %v1350 = vsel %vm1204, %v1051, 0
      %v1353 = vsel %vm1204, %v1059, 0
      %v1356 = vsel %vm1204, %v1067, 0
      %v1359 = vsel %vm1204, %v1075, 0
      %v1362 = vsel %vm1204, %v1083, 0
      %v1365 = vsel %vm1204, %v1091, 0
      %v1368 = vsel %vm1204, %v1099, 0
      %v1371 = vsel %vm1204, %v1107, 0
      %v1374 = vsel %vm1204, %v1115, 0
      %v1377 = vsel %vm1204, %v1123, 0
      %v1380 = vsel %vm1204, %v1131, 0
      %v1383 = vsel %vm1204, %v1139, 0
      %v1386 = vsel %vm1204, %v1147, 0
      %v1389 = vsel %vm1204, %v1155, 0
      %v1392 = vsel %vm1204, %v1163, 0
      %v1395 = vsel %vm1204, %v1171, 0
      %v1398 = vsel %vm1204, %v1179, 0
      %v1401 = vsel %vm1204, %v1187, 0
      %v1404 = vsel %vm1204, %v1195, 0
      %v1407 = vsel %vm1204, %v1203, 0
      %vm1409 = vcmask 1043456
      %v1411 = vsel %vm1409, %v311, 0
      %1413 = vmatprep.subr.bf16.mxu0 0
      %1414 = vmatpush1.bf16.msra.mxu0 %v1411
      %1415 = vmatprep.subr.bf16.mxu0 0
      %1416 = vmatpush1.bf16.msra.mxu0 0
      %1417 = vmatprep.subr.bf16.mxu0 0
      %1418 = vmatpush1.bf16.msra.mxu0 0
      %1419 = vmatprep.subr.bf16.mxu0 0
      %1420 = vmatpush1.bf16.msra.mxu0 0
      %1421 = vmatprep.subr.bf16.mxu0 0
      %1422 = vmatpush1.bf16.msra.mxu0 0
      %1423 = vmatprep.subr.bf16.mxu0 0
      %1424 = vmatpush1.bf16.msra.mxu0 0
      %1425 = vmatprep.subr.bf16.mxu0 0
      %1426 = vmatpush1.bf16.msra.mxu0 0
      %1427 = vmatprep.subr.bf16.mxu0 0
      %1428 = vmatpush1.bf16.msra.mxu0 0
      %1429 = vmatprep.subr.bf16.mxu0 0
      %1430 = vmatpush1.bf16.msra.mxu0 0
      %1431 = vmatprep.subr.bf16.mxu0 0
      %1432 = vmatpush1.bf16.msra.mxu0 0
      %1433 = vmatprep.subr.bf16.mxu0 0
      %1434 = vmatpush1.bf16.msra.mxu0 0
      %1435 = vmatprep.subr.bf16.mxu0 0
      %1436 = vmatpush1.bf16.msra.mxu0 0
      %1437 = vmatprep.subr.bf16.mxu0 0
      %1438 = vmatpush1.bf16.msra.mxu0 0
      %1439 = vmatprep.subr.bf16.mxu0 0
      %1440 = vmatpush1.bf16.msra.mxu0 0
      %1441 = vmatprep.subr.bf16.mxu0 0
      %1442 = vmatpush1.bf16.msra.mxu0 0
      %1443 = vmatprep.subr.bf16.mxu0 0
      %1444 = vmatpush1.bf16.msra.mxu0 0
      %1445 = vmatprep.mubr.bf16.mxu0 0
      %1446 = vmatmul.mubr.bf16.gmra.mrb[0].mxu0 %v1206
      %v1447 = vpop.f32.mrb[0].mxu0
      %v1448 = vadd.f32 0.0, %v1447
      %v1449 = vpop.f32.mrb[0].mxu0
      %v1450 = vpop.f32.mrb[0].mxu0
      %v1451 = vadd.f32 0.0, %v1450
      %v1452 = vpop.f32.mrb[0].mxu0
      %1453 = vmatprep.mubr.bf16.mxu0 0
      %1454 = vmatmul.mubr.bf16.gmra.mrb[0].mxu0 %v1209
      %v1455 = vpop.f32.mrb[0].mxu0
      %v1456 = vadd.f32 0.0, %v1455
      %v1457 = vpop.f32.mrb[0].mxu0
      %v1458 = vpop.f32.mrb[0].mxu0
      %v1459 = vadd.f32 0.0, %v1458
      %v1460 = vpop.f32.mrb[0].mxu0
      %1461 = vmatprep.mubr.bf16.mxu0 0
      %1462 = vmatmul.mubr.bf16.gmra.mrb[0].mxu0 %v1212
      %v1463 = vpop.f32.mrb[0].mxu0
      %v1464 = vadd.f32 0.0, %v1463
      %v1465 = vpop.f32.mrb[0].mxu0
      %v1466 = vpop.f32.mrb[0].mxu0
      %v1467 = vadd.f32 0.0, %v1466
      %v1468 = vpop.f32.mrb[0].mxu0
      %1469 = vmatprep.mubr.bf16.mxu0 0
      %1470 = vmatmul.mubr.bf16.gmra.mrb[0].mxu0 %v1215
      %v1471 = vpop.f32.mrb[0].mxu0
      %v1472 = vadd.f32 0.0, %v1471
      %v1473 = vpop.f32.mrb[0].mxu0
      %v1474 = vpop.f32.mrb[0].mxu0
      %v1475 = vadd.f32 0.0, %v1474
      %v1476 = vpop.f32.mrb[0].mxu0
      %1477 = vmatprep.mubr.bf16.mxu0 0
      %1478 = vmatmul.mubr.bf16.gmra.mrb[0].mxu0 %v1218
      %v1479 = vpop.f32.mrb[0].mxu0
      %v1480 = vadd.f32 0.0, %v1479
      %v1481 = vpop.f32.mrb[0].mxu0
      %v1482 = vpop.f32.mrb[0].mxu0
      %v1483 = vadd.f32 0.0, %v1482
      %v1484 = vpop.f32.mrb[0].mxu0
      %1485 = vmatprep.mubr.bf16.mxu0 0
      %1486 = vmatmul.mubr.bf16.gmra.mrb[0].mxu0 %v1221
      %v1487 = vpop.f32.mrb[0].mxu0
      %v1488 = vadd.f32 0.0, %v1487
      %v1489 = vpop.f32.mrb[0].mxu0
      %v1490 = vpop.f32.mrb[0].mxu0
      %v1491 = vadd.f32 0.0, %v1490
      %v1492 = vpop.f32.mrb[0].mxu0
      %1493 = vmatprep.mubr.bf16.mxu0 0
      %1494 = vmatmul.mubr.bf16.gmra.mrb[0].mxu0 %v1224
      %v1495 = vpop.f32.mrb[0].mxu0
      %v1496 = vadd.f32 0.0, %v1495
      %v1497 = vpop.f32.mrb[0].mxu0
      %v1498 = vpop.f32.mrb[0].mxu0
      %v1499 = vadd.f32 0.0, %v1498
      %v1500 = vpop.f32.mrb[0].mxu0
      %1501 = vmatprep.mubr.bf16.mxu0 0
      %1502 = vmatmul.mubr.bf16.gmra.mrb[0].mxu0 %v1227
      %v1503 = vpop.f32.mrb[0].mxu0
      %v1504 = vadd.f32 0.0, %v1503
      %v1505 = vpop.f32.mrb[0].mxu0
      %v1506 = vpop.f32.mrb[0].mxu0
      %v1507 = vadd.f32 0.0, %v1506
      %v1508 = vpop.f32.mrb[0].mxu0
      %1509 = vmatprep.mubr.bf16.mxu0 0
      %1510 = vmatmul.mubr.bf16.gmra.mrb[0].mxu0 %v1230
      %v1511 = vpop.f32.mrb[0].mxu0
      %v1512 = vadd.f32 0.0, %v1511
      %v1513 = vpop.f32.mrb[0].mxu0
      %v1514 = vpop.f32.mrb[0].mxu0
      %v1515 = vadd.f32 0.0, %v1514
      %v1516 = vpop.f32.mrb[0].mxu0
      %1517 = vmatprep.mubr.bf16.mxu0 0
      %1518 = vmatmul.mubr.bf16.gmra.mrb[0].mxu0 %v1233
      %v1519 = vpop.f32.mrb[0].mxu0
      %v1520 = vadd.f32 0.0, %v1519
      %v1521 = vpop.f32.mrb[0].mxu0
      %v1522 = vpop.f32.mrb[0].mxu0
      %v1523 = vadd.f32 0.0, %v1522
      %v1524 = vpop.f32.mrb[0].mxu0
      %1525 = vmatprep.mubr.bf16.mxu0 0
      %1526 = vmatmul.mubr.bf16.gmra.mrb[0].mxu0 %v1236
      %v1527 = vpop.f32.mrb[0].mxu0
      %v1528 = vadd.f32 0.0, %v1527
      %v1529 = vpop.f32.mrb[0].mxu0
      %v1530 = vpop.f32.mrb[0].mxu0
      %v1531 = vadd.f32 0.0, %v1530
      %v1532 = vpop.f32.mrb[0].mxu0
      %1533 = vmatprep.mubr.bf16.mxu0 0
      %1534 = vmatmul.mubr.bf16.gmra.mrb[0].mxu0 %v1239
      %v1535 = vpop.f32.mrb[0].mxu0
      %v1536 = vadd.f32 0.0, %v1535
      %v1537 = vpop.f32.mrb[0].mxu0
      %v1538 = vpop.f32.mrb[0].mxu0
      %v1539 = vadd.f32 0.0, %v1538
      %v1540 = vpop.f32.mrb[0].mxu0
      %1541 = vmatprep.mubr.bf16.mxu0 0
      %1542 = vmatmul.mubr.bf16.gmra.mrb[0].mxu0 %v1242
      %v1543 = vpop.f32.mrb[0].mxu0
      %v1544 = vadd.f32 0.0, %v1543
      %v1545 = vpop.f32.mrb[0].mxu0
      %v1546 = vpop.f32.mrb[0].mxu0
      %v1547 = vadd.f32 0.0, %v1546
      %v1548 = vpop.f32.mrb[0].mxu0
      %1549 = vmatprep.mubr.bf16.mxu0 0
      %1550 = vmatmul.mubr.bf16.gmra.mrb[0].mxu0 %v1245
      %v1551 = vpop.f32.mrb[0].mxu0
      %v1552 = vadd.f32 0.0, %v1551
      %v1553 = vpop.f32.mrb[0].mxu0
      %v1554 = vpop.f32.mrb[0].mxu0
      %v1555 = vadd.f32 0.0, %v1554
      %v1556 = vpop.f32.mrb[0].mxu0
      %1557 = vmatprep.mubr.bf16.mxu0 0
      %1558 = vmatmul.mubr.bf16.gmra.mrb[0].mxu0 %v1248
      %v1559 = vpop.f32.mrb[0].mxu0
      %v1560 = vadd.f32 0.0, %v1559
      %v1561 = vpop.f32.mrb[0].mxu0
      %v1562 = vpop.f32.mrb[0].mxu0
      %v1563 = vadd.f32 0.0, %v1562
      %v1564 = vpop.f32.mrb[0].mxu0
      %1565 = vmatprep.mubr.bf16.mxu0 0
      %1566 = vmatmul.mubr.bf16.gmra.mrb[0].mxu0 %v1251
      %v1567 = vpop.f32.mrb[0].mxu0
      %v1568 = vadd.f32 0.0, %v1567
      %v1569 = vpop.f32.mrb[0].mxu0
      %v1570 = vpop.f32.mrb[0].mxu0
      %v1571 = vadd.f32 0.0, %v1570
      %v1572 = vpop.f32.mrb[0].mxu0
      %1573 = vmatprep.mubr.bf16.mxu0 0
      %1574 = vmatmul.mubr.bf16.gmra.mrb[0].mxu0 %v1254
      %v1575 = vpop.f32.mrb[0].mxu0
      %v1576 = vadd.f32 0.0, %v1575
      %v1577 = vpop.f32.mrb[0].mxu0
      %v1578 = vpop.f32.mrb[0].mxu0
      %v1579 = vadd.f32 0.0, %v1578
      %v1580 = vpop.f32.mrb[0].mxu0
      %1581 = vmatprep.mubr.bf16.mxu0 0
      %1582 = vmatmul.mubr.bf16.gmra.mrb[0].mxu0 %v1257
      %v1583 = vpop.f32.mrb[0].mxu0
      %v1584 = vadd.f32 0.0, %v1583
      %v1585 = vpop.f32.mrb[0].mxu0
      %v1586 = vpop.f32.mrb[0].mxu0
      %v1587 = vadd.f32 0.0, %v1586
      %v1588 = vpop.f32.mrb[0].mxu0
      %1589 = vmatprep.mubr.bf16.mxu0 0
      %1590 = vmatmul.mubr.bf16.gmra.mrb[0].mxu0 %v1260
      %v1591 = vpop.f32.mrb[0].mxu0
      %v1592 = vadd.f32 0.0, %v1591
      %v1593 = vpop.f32.mrb[0].mxu0
      %v1594 = vpop.f32.mrb[0].mxu0
      %v1595 = vadd.f32 0.0, %v1594
      %v1596 = vpop.f32.mrb[0].mxu0
      %1597 = vmatprep.mubr.bf16.mxu0 0
      %1598 = vmatmul.mubr.bf16.gmra.mrb[0].mxu0 %v1263
      %v1599 = vpop.f32.mrb[0].mxu0
      %v1600 = vadd.f32 0.0, %v1599
      %v1601 = vpop.f32.mrb[0].mxu0
      %v1602 = vpop.f32.mrb[0].mxu0
      %v1603 = vadd.f32 0.0, %v1602
      %v1604 = vpop.f32.mrb[0].mxu0
      %1605 = vmatprep.mubr.bf16.mxu0 0
      %1606 = vmatmul.mubr.bf16.gmra.mrb[0].mxu0 %v1266
      %v1607 = vpop.f32.mrb[0].mxu0
      %v1608 = vadd.f32 0.0, %v1607
      %v1609 = vpop.f32.mrb[0].mxu0
      %v1610 = vpop.f32.mrb[0].mxu0
      %v1611 = vadd.f32 0.0, %v1610
      %v1612 = vpop.f32.mrb[0].mxu0
      %1613 = vmatprep.mubr.bf16.mxu0 0
      %1614 = vmatmul.mubr.bf16.gmra.mrb[0].mxu0 %v1269
      %v1615 = vpop.f32.mrb[0].mxu0
      %v1616 = vadd.f32 0.0, %v1615
      %v1617 = vpop.f32.mrb[0].mxu0
      %v1618 = vpop.f32.mrb[0].mxu0
      %v1619 = vadd.f32 0.0, %v1618
      %v1620 = vpop.f32.mrb[0].mxu0
      %1621 = vmatprep.mubr.bf16.mxu0 0
      %1622 = vmatmul.mubr.bf16.gmra.mrb[0].mxu0 %v1272
      %v1623 = vpop.f32.mrb[0].mxu0
      %v1624 = vadd.f32 0.0, %v1623
      %v1625 = vpop.f32.mrb[0].mxu0
      %v1626 = vpop.f32.mrb[0].mxu0
      %v1627 = vadd.f32 0.0, %v1626
      %v1628 = vpop.f32.mrb[0].mxu0
      %1629 = vmatprep.mubr.bf16.mxu0 0
      %1630 = vmatmul.mubr.bf16.gmra.mrb[0].mxu0 %v1275
      %v1631 = vpop.f32.mrb[0].mxu0
      %v1632 = vadd.f32 0.0, %v1631
      %v1633 = vpop.f32.mrb[0].mxu0
      %v1634 = vpop.f32.mrb[0].mxu0
      %v1635 = vadd.f32 0.0, %v1634
      %v1636 = vpop.f32.mrb[0].mxu0
      %1637 = vmatprep.mubr.bf16.mxu0 0
      %1638 = vmatmul.mubr.bf16.gmra.mrb[0].mxu0 %v1278
      %v1639 = vpop.f32.mrb[0].mxu0
      %v1640 = vadd.f32 0.0, %v1639
      %v1641 = vpop.f32.mrb[0].mxu0
      %v1642 = vpop.f32.mrb[0].mxu0
      %v1643 = vadd.f32 0.0, %v1642
      %v1644 = vpop.f32.mrb[0].mxu0
      %1645 = vmatprep.mubr.bf16.mxu0 0
      %1646 = vmatmul.mubr.bf16.gmra.mrb[0].mxu0 %v1281
      %v1647 = vpop.f32.mrb[0].mxu0
      %v1648 = vadd.f32 0.0, %v1647
      %v1649 = vpop.f32.mrb[0].mxu0
      %v1650 = vpop.f32.mrb[0].mxu0
      %v1651 = vadd.f32 0.0, %v1650
      %v1652 = vpop.f32.mrb[0].mxu0
      %1653 = vmatprep.mubr.bf16.mxu0 0
      %1654 = vmatmul.mubr.bf16.gmra.mrb[0].mxu0 %v1284
      %v1655 = vpop.f32.mrb[0].mxu0
      %v1656 = vadd.f32 0.0, %v1655
      %v1657 = vpop.f32.mrb[0].mxu0
      %v1658 = vpop.f32.mrb[0].mxu0
      %v1659 = vadd.f32 0.0, %v1658
      %v1660 = vpop.f32.mrb[0].mxu0
      %1661 = vmatprep.mubr.bf16.mxu0 0
      %1662 = vmatmul.mubr.bf16.gmra.mrb[0].mxu0 %v1287
      %v1663 = vpop.f32.mrb[0].mxu0
      %v1664 = vadd.f32 0.0, %v1663
      %v1665 = vpop.f32.mrb[0].mxu0
      %v1666 = vpop.f32.mrb[0].mxu0
      %v1667 = vadd.f32 0.0, %v1666
      %v1668 = vpop.f32.mrb[0].mxu0
      %1669 = vmatprep.mubr.bf16.mxu0 0
      %1670 = vmatmul.mubr.bf16.gmra.mrb[0].mxu0 %v1290
      %v1671 = vpop.f32.mrb[0].mxu0
      %v1672 = vadd.f32 0.0, %v1671
      %v1673 = vpop.f32.mrb[0].mxu0
      %v1674 = vpop.f32.mrb[0].mxu0
      %v1675 = vadd.f32 0.0, %v1674
      %v1676 = vpop.f32.mrb[0].mxu0
      %1677 = vmatprep.mubr.bf16.mxu0 0
      %1678 = vmatmul.mubr.bf16.gmra.mrb[0].mxu0 %v1293
      %v1679 = vpop.f32.mrb[0].mxu0
      %v1680 = vadd.f32 0.0, %v1679
      %v1681 = vpop.f32.mrb[0].mxu0
      %v1682 = vpop.f32.mrb[0].mxu0
      %v1683 = vadd.f32 0.0, %v1682
      %v1684 = vpop.f32.mrb[0].mxu0
      %1685 = vmatprep.mubr.bf16.mxu0 0
      %1686 = vmatmul.mubr.bf16.gmra.mrb[0].mxu0 %v1296
      %v1687 = vpop.f32.mrb[0].mxu0
      %v1688 = vadd.f32 0.0, %v1687
      %v1689 = vpop.f32.mrb[0].mxu0
      %v1690 = vpop.f32.mrb[0].mxu0
      %v1691 = vadd.f32 0.0, %v1690
      %v1692 = vpop.f32.mrb[0].mxu0
      %1693 = vmatprep.mubr.bf16.mxu0 0
      %1694 = vmatmul.mubr.bf16.gmra.mrb[0].mxu0 %v1299
      %v1695 = vpop.f32.mrb[0].mxu0
      %v1696 = vadd.f32 0.0, %v1695
      %v1697 = vpop.f32.mrb[0].mxu0
      %v1698 = vpop.f32.mrb[0].mxu0
      %v1699 = vadd.f32 0.0, %v1698
      %v1700 = vpop.f32.mrb[0].mxu0
      %1701 = vmatprep.mubr.bf16.mxu0 0
      %1702 = vmatmul.mubr.bf16.gmra.mrb[0].mxu0 %v1302
      %v1703 = vpop.f32.mrb[0].mxu0
      %v1704 = vadd.f32 0.0, %v1703
      %v1705 = vpop.f32.mrb[0].mxu0
      %v1706 = vpop.f32.mrb[0].mxu0
      %v1707 = vadd.f32 0.0, %v1706
      %v1708 = vpop.f32.mrb[0].mxu0
      %1709 = vmatprep.mubr.bf16.mxu0 0
      %1710 = vmatmul.mubr.bf16.gmra.mrb[0].mxu0 %v1305
      %v1711 = vpop.f32.mrb[0].mxu0
      %v1712 = vadd.f32 0.0, %v1711
      %v1713 = vpop.f32.mrb[0].mxu0
      %v1714 = vpop.f32.mrb[0].mxu0
      %v1715 = vadd.f32 0.0, %v1714
      %v1716 = vpop.f32.mrb[0].mxu0
      %1717 = vmatprep.mubr.bf16.mxu0 0
      %1718 = vmatmul.mubr.bf16.gmra.mrb[0].mxu0 %v1308
      %v1719 = vpop.f32.mrb[0].mxu0
      %v1720 = vadd.f32 0.0, %v1719
      %v1721 = vpop.f32.mrb[0].mxu0
      %v1722 = vpop.f32.mrb[0].mxu0
      %v1723 = vadd.f32 0.0, %v1722
      %v1724 = vpop.f32.mrb[0].mxu0
      %1725 = vmatprep.mubr.bf16.mxu0 0
      %1726 = vmatmul.mubr.bf16.gmra.mrb[0].mxu0 %v1311
      %v1727 = vpop.f32.mrb[0].mxu0
      %v1728 = vadd.f32 0.0, %v1727
      %v1729 = vpop.f32.mrb[0].mxu0
      %v1730 = vpop.f32.mrb[0].mxu0
      %v1731 = vadd.f32 0.0, %v1730
      %v1732 = vpop.f32.mrb[0].mxu0
      %1733 = vmatprep.mubr.bf16.mxu0 0
      %1734 = vmatmul.mubr.bf16.gmra.mrb[0].mxu0 %v1314
      %v1735 = vpop.f32.mrb[0].mxu0
      %v1736 = vadd.f32 0.0, %v1735
      %v1737 = vpop.f32.mrb[0].mxu0
      %v1738 = vpop.f32.mrb[0].mxu0
      %v1739 = vadd.f32 0.0, %v1738
      %v1740 = vpop.f32.mrb[0].mxu0
      %1741 = vmatprep.mubr.bf16.mxu0 0
      %1742 = vmatmul.mubr.bf16.gmra.mrb[0].mxu0 %v1317
      %v1743 = vpop.f32.mrb[0].mxu0
      %v1744 = vadd.f32 0.0, %v1743
      %v1745 = vpop.f32.mrb[0].mxu0
      %v1746 = vpop.f32.mrb[0].mxu0
      %v1747 = vadd.f32 0.0, %v1746
      %v1748 = vpop.f32.mrb[0].mxu0
      %1749 = vmatprep.mubr.bf16.mxu0 0
      %1750 = vmatmul.mubr.bf16.gmra.mrb[0].mxu0 %v1320
      %v1751 = vpop.f32.mrb[0].mxu0
      %v1752 = vadd.f32 0.0, %v1751
      %v1753 = vpop.f32.mrb[0].mxu0
      %v1754 = vpop.f32.mrb[0].mxu0
      %v1755 = vadd.f32 0.0, %v1754
      %v1756 = vpop.f32.mrb[0].mxu0
      %1757 = vmatprep.mubr.bf16.mxu0 0
      %1758 = vmatmul.mubr.bf16.gmra.mrb[0].mxu0 %v1323
      %v1759 = vpop.f32.mrb[0].mxu0
      %v1760 = vadd.f32 0.0, %v1759
      %v1761 = vpop.f32.mrb[0].mxu0
      %v1762 = vpop.f32.mrb[0].mxu0
      %v1763 = vadd.f32 0.0, %v1762
      %v1764 = vpop.f32.mrb[0].mxu0
      %1765 = vmatprep.mubr.bf16.mxu0 0
      %1766 = vmatmul.mubr.bf16.gmra.mrb[0].mxu0 %v1326
      %v1767 = vpop.f32.mrb[0].mxu0
      %v1768 = vadd.f32 0.0, %v1767
      %v1769 = vpop.f32.mrb[0].mxu0
      %v1770 = vpop.f32.mrb[0].mxu0
      %v1771 = vadd.f32 0.0, %v1770
      %v1772 = vpop.f32.mrb[0].mxu0
      %1773 = vmatprep.mubr.bf16.mxu0 0
      %1774 = vmatmul.mubr.bf16.gmra.mrb[0].mxu0 %v1329
      %v1775 = vpop.f32.mrb[0].mxu0
      %v1776 = vadd.f32 0.0, %v1775
      %v1777 = vpop.f32.mrb[0].mxu0
      %v1778 = vpop.f32.mrb[0].mxu0
      %v1779 = vadd.f32 0.0, %v1778
      %v1780 = vpop.f32.mrb[0].mxu0
      %1781 = vmatprep.mubr.bf16.mxu0 0
      %1782 = vmatmul.mubr.bf16.gmra.mrb[0].mxu0 %v1332
      %v1783 = vpop.f32.mrb[0].mxu0
      %v1784 = vadd.f32 0.0, %v1783
      %v1785 = vpop.f32.mrb[0].mxu0
      %v1786 = vpop.f32.mrb[0].mxu0
      %v1787 = vadd.f32 0.0, %v1786
      %v1788 = vpop.f32.mrb[0].mxu0
      %1789 = vmatprep.mubr.bf16.mxu0 0
      %1790 = vmatmul.mubr.bf16.gmra.mrb[0].mxu0 %v1335
      %v1791 = vpop.f32.mrb[0].mxu0
      %v1792 = vadd.f32 0.0, %v1791
      %v1793 = vpop.f32.mrb[0].mxu0
      %v1794 = vpop.f32.mrb[0].mxu0
      %v1795 = vadd.f32 0.0, %v1794
      %v1796 = vpop.f32.mrb[0].mxu0
      %1797 = vmatprep.mubr.bf16.mxu0 0
      %1798 = vmatmul.mubr.bf16.gmra.mrb[0].mxu0 %v1338
      %v1799 = vpop.f32.mrb[0].mxu0
      %v1800 = vadd.f32 0.0, %v1799
      %v1801 = vpop.f32.mrb[0].mxu0
      %v1802 = vpop.f32.mrb[0].mxu0
      %v1803 = vadd.f32 0.0, %v1802
      %v1804 = vpop.f32.mrb[0].mxu0
      %1805 = vmatprep.mubr.bf16.mxu0 0
      %1806 = vmatmul.mubr.bf16.gmra.mrb[0].mxu0 %v1341
      %v1807 = vpop.f32.mrb[0].mxu0
      %v1808 = vadd.f32 0.0, %v1807
      %v1809 = vpop.f32.mrb[0].mxu0
      %v1810 = vpop.f32.mrb[0].mxu0
      %v1811 = vadd.f32 0.0, %v1810
      %v1812 = vpop.f32.mrb[0].mxu0
      %1813 = vmatprep.mubr.bf16.mxu0 0
      %1814 = vmatmul.mubr.bf16.gmra.mrb[0].mxu0 %v1344
      %v1815 = vpop.f32.mrb[0].mxu0
      %v1816 = vadd.f32 0.0, %v1815
      %v1817 = vpop.f32.mrb[0].mxu0
      %v1818 = vpop.f32.mrb[0].mxu0
      %v1819 = vadd.f32 0.0, %v1818
      %v1820 = vpop.f32.mrb[0].mxu0
      %1821 = vmatprep.mubr.bf16.mxu0 0
      %1822 = vmatmul.mubr.bf16.gmra.mrb[0].mxu0 %v1347
      %v1823 = vpop.f32.mrb[0].mxu0
      %v1824 = vadd.f32 0.0, %v1823
      %v1825 = vpop.f32.mrb[0].mxu0
      %v1826 = vpop.f32.mrb[0].mxu0
      %v1827 = vadd.f32 0.0, %v1826
      %v1828 = vpop.f32.mrb[0].mxu0
      %1829 = vmatprep.mubr.bf16.mxu0 0
      %1830 = vmatmul.mubr.bf16.gmra.mrb[0].mxu0 %v1350
      %v1831 = vpop.f32.mrb[0].mxu0
      %v1832 = vadd.f32 0.0, %v1831
      %v1833 = vpop.f32.mrb[0].mxu0
      %v1834 = vpop.f32.mrb[0].mxu0
      %v1835 = vadd.f32 0.0, %v1834
      %v1836 = vpop.f32.mrb[0].mxu0
      %1837 = vmatprep.mubr.bf16.mxu0 0
      %1838 = vmatmul.mubr.bf16.gmra.mrb[0].mxu0 %v1353
      %v1839 = vpop.f32.mrb[0].mxu0
      %v1840 = vadd.f32 0.0, %v1839
      %v1841 = vpop.f32.mrb[0].mxu0
      %v1842 = vpop.f32.mrb[0].mxu0
      %v1843 = vadd.f32 0.0, %v1842
      %v1844 = vpop.f32.mrb[0].mxu0
      %1845 = vmatprep.mubr.bf16.mxu0 0
      %1846 = vmatmul.mubr.bf16.gmra.mrb[0].mxu0 %v1356
      %v1847 = vpop.f32.mrb[0].mxu0
      %v1848 = vadd.f32 0.0, %v1847
      %v1849 = vpop.f32.mrb[0].mxu0
      %v1850 = vpop.f32.mrb[0].mxu0
      %v1851 = vadd.f32 0.0, %v1850
      %v1852 = vpop.f32.mrb[0].mxu0
      %1853 = vmatprep.mubr.bf16.mxu0 0
      %1854 = vmatmul.mubr.bf16.gmra.mrb[0].mxu0 %v1359
      %v1855 = vpop.f32.mrb[0].mxu0
      %v1856 = vadd.f32 0.0, %v1855
      %v1857 = vpop.f32.mrb[0].mxu0
      %v1858 = vpop.f32.mrb[0].mxu0
      %v1859 = vadd.f32 0.0, %v1858
      %v1860 = vpop.f32.mrb[0].mxu0
      %1861 = vmatprep.mubr.bf16.mxu0 0
      %1862 = vmatmul.mubr.bf16.gmra.mrb[0].mxu0 %v1362
      %v1863 = vpop.f32.mrb[0].mxu0
      %v1864 = vadd.f32 0.0, %v1863
      %v1865 = vpop.f32.mrb[0].mxu0
      %v1866 = vpop.f32.mrb[0].mxu0
      %v1867 = vadd.f32 0.0, %v1866
      %v1868 = vpop.f32.mrb[0].mxu0
      %1869 = vmatprep.mubr.bf16.mxu0 0
      %1870 = vmatmul.mubr.bf16.gmra.mrb[0].mxu0 %v1365
      %v1871 = vpop.f32.mrb[0].mxu0
      %v1872 = vadd.f32 0.0, %v1871
      %v1873 = vpop.f32.mrb[0].mxu0
      %v1874 = vpop.f32.mrb[0].mxu0
      %v1875 = vadd.f32 0.0, %v1874
      %v1876 = vpop.f32.mrb[0].mxu0
      %1877 = vmatprep.mubr.bf16.mxu0 0
      %1878 = vmatmul.mubr.bf16.gmra.mrb[0].mxu0 %v1368
      %v1879 = vpop.f32.mrb[0].mxu0
      %v1880 = vadd.f32 0.0, %v1879
      %v1881 = vpop.f32.mrb[0].mxu0
      %v1882 = vpop.f32.mrb[0].mxu0
      %v1883 = vadd.f32 0.0, %v1882
      %v1884 = vpop.f32.mrb[0].mxu0
      %1885 = vmatprep.mubr.bf16.mxu0 0
      %1886 = vmatmul.mubr.bf16.gmra.mrb[0].mxu0 %v1371
      %v1887 = vpop.f32.mrb[0].mxu0
      %v1888 = vadd.f32 0.0, %v1887
      %v1889 = vpop.f32.mrb[0].mxu0
      %v1890 = vpop.f32.mrb[0].mxu0
      %v1891 = vadd.f32 0.0, %v1890
      %v1892 = vpop.f32.mrb[0].mxu0
      %1893 = vmatprep.mubr.bf16.mxu0 0
      %1894 = vmatmul.mubr.bf16.gmra.mrb[0].mxu0 %v1374
      %v1895 = vpop.f32.mrb[0].mxu0
      %v1896 = vadd.f32 0.0, %v1895
      %v1897 = vpop.f32.mrb[0].mxu0
      %v1898 = vpop.f32.mrb[0].mxu0
      %v1899 = vadd.f32 0.0, %v1898
      %v1900 = vpop.f32.mrb[0].mxu0
      %1901 = vmatprep.mubr.bf16.mxu0 0
      %1902 = vmatmul.mubr.bf16.gmra.mrb[0].mxu0 %v1377
      %v1903 = vpop.f32.mrb[0].mxu0
      %v1904 = vadd.f32 0.0, %v1903
      %v1905 = vpop.f32.mrb[0].mxu0
      %v1906 = vpop.f32.mrb[0].mxu0
      %v1907 = vadd.f32 0.0, %v1906
      %v1908 = vpop.f32.mrb[0].mxu0
      %1909 = vmatprep.mubr.bf16.mxu0 0
      %1910 = vmatmul.mubr.bf16.gmra.mrb[0].mxu0 %v1380
      %v1911 = vpop.f32.mrb[0].mxu0
      %v1912 = vadd.f32 0.0, %v1911
      %v1913 = vpop.f32.mrb[0].mxu0
      %v1914 = vpop.f32.mrb[0].mxu0
      %v1915 = vadd.f32 0.0, %v1914
      %v1916 = vpop.f32.mrb[0].mxu0
      %1917 = vmatprep.mubr.bf16.mxu0 0
      %1918 = vmatmul.mubr.bf16.gmra.mrb[0].mxu0 %v1383
      %v1919 = vpop.f32.mrb[0].mxu0
      %v1920 = vadd.f32 0.0, %v1919
      %v1921 = vpop.f32.mrb[0].mxu0
      %v1922 = vpop.f32.mrb[0].mxu0
      %v1923 = vadd.f32 0.0, %v1922
      %v1924 = vpop.f32.mrb[0].mxu0
      %1925 = vmatprep.mubr.bf16.mxu0 0
      %1926 = vmatmul.mubr.bf16.gmra.mrb[0].mxu0 %v1386
      %v1927 = vpop.f32.mrb[0].mxu0
      %v1928 = vadd.f32 0.0, %v1927
      %v1929 = vpop.f32.mrb[0].mxu0
      %v1930 = vpop.f32.mrb[0].mxu0
      %v1931 = vadd.f32 0.0, %v1930
      %v1932 = vpop.f32.mrb[0].mxu0
      %1933 = vmatprep.mubr.bf16.mxu0 0
      %1934 = vmatmul.mubr.bf16.gmra.mrb[0].mxu0 %v1389
      %v1935 = vpop.f32.mrb[0].mxu0
      %v1936 = vadd.f32 0.0, %v1935
      %v1937 = vpop.f32.mrb[0].mxu0
      %v1938 = vpop.f32.mrb[0].mxu0
      %v1939 = vadd.f32 0.0, %v1938
      %v1940 = vpop.f32.mrb[0].mxu0
      %1941 = vmatprep.mubr.bf16.mxu0 0
      %1942 = vmatmul.mubr.bf16.gmra.mrb[0].mxu0 %v1392
      %v1943 = vpop.f32.mrb[0].mxu0
      %v1944 = vadd.f32 0.0, %v1943
      %v1945 = vpop.f32.mrb[0].mxu0
      %v1946 = vpop.f32.mrb[0].mxu0
      %v1947 = vadd.f32 0.0, %v1946
      %v1948 = vpop.f32.mrb[0].mxu0
      %1949 = vmatprep.mubr.bf16.mxu0 0
      %1950 = vmatmul.mubr.bf16.gmra.mrb[0].mxu0 %v1395
      %v1951 = vpop.f32.mrb[0].mxu0
      %v1952 = vadd.f32 0.0, %v1951
      %v1953 = vpop.f32.mrb[0].mxu0
      %v1954 = vpop.f32.mrb[0].mxu0
      %v1955 = vadd.f32 0.0, %v1954
      %v1956 = vpop.f32.mrb[0].mxu0
      %1957 = vmatprep.mubr.bf16.mxu0 0
      %1958 = vmatmul.mubr.bf16.gmra.mrb[0].mxu0 %v1398
      %v1959 = vpop.f32.mrb[0].mxu0
      %v1960 = vadd.f32 0.0, %v1959
      %v1961 = vpop.f32.mrb[0].mxu0
      %v1962 = vpop.f32.mrb[0].mxu0
      %v1963 = vadd.f32 0.0, %v1962
      %v1964 = vpop.f32.mrb[0].mxu0
      %1965 = vmatprep.mubr.bf16.mxu0 0
      %1966 = vmatmul.mubr.bf16.gmra.mrb[0].mxu0 %v1401
      %v1967 = vpop.f32.mrb[0].mxu0
      %v1968 = vadd.f32 0.0, %v1967
      %v1969 = vpop.f32.mrb[0].mxu0
      %v1970 = vpop.f32.mrb[0].mxu0
      %v1971 = vadd.f32 0.0, %v1970
      %v1972 = vpop.f32.mrb[0].mxu0
      %1973 = vmatprep.mubr.bf16.mxu0 0
      %1974 = vmatmul.mubr.bf16.gmra.mrb[0].mxu0 %v1404
      %v1975 = vpop.f32.mrb[0].mxu0
      %v1976 = vadd.f32 0.0, %v1975
      %v1977 = vpop.f32.mrb[0].mxu0
      %v1978 = vpop.f32.mrb[0].mxu0
      %v1979 = vadd.f32 0.0, %v1978
      %v1980 = vpop.f32.mrb[0].mxu0
      %1981 = vmatprep.mubr.bf16.mxu0 0
      %1982 = vmatmul.mubr.bf16.gmra.mrb[0].mxu0 %v1407
      %v1983 = vpop.f32.mrb[0].mxu0
      %v1984 = vadd.f32 0.0, %v1983
      %v1985 = vpop.f32.mrb[0].mxu0
      %v1986 = vpop.f32.mrb[0].mxu0
      %v1987 = vadd.f32 0.0, %v1986
      %v1988 = vpop.f32.mrb[0].mxu0
      %1989 = vdwg.mxu0
      %v1990 = vsel %vm1204, %v586, 0
      %v1992 = vsel %vm1204, %v587, 0
      %v1994 = vsel %vm1204, %v588, 0
      %v1996 = vsel %vm1204, %v589, 0
      %v1998 = vsel %vm1204, %v590, 0
      %v2000 = vsel %vm1204, %v591, 0
      %v2002 = vsel %vm1204, %v592, 0
      %v2004 = vsel %vm1204, %v593, 0
      %v2006 = vsel %vm1204, %v594, 0
      %v2008 = vsel %vm1204, %v595, 0
      %v2010 = vsel %vm1204, %v596, 0
      %v2012 = vsel %vm1204, %v597, 0
      %v2014 = vsel %vm1204, %v598, 0
      %v2016 = vsel %vm1204, %v599, 0
      %v2018 = vsel %vm1204, %v600, 0
      %v2020 = vsel %vm1204, %v601, 0
      %v2022 = vsel %vm1204, %v602, 0
      %v2024 = vsel %vm1204, %v603, 0
      %v2026 = vsel %vm1204, %v604, 0
      %v2028 = vsel %vm1204, %v605, 0
      %v2030 = vsel %vm1204, %v606, 0
      %v2032 = vsel %vm1204, %v607, 0
      %v2034 = vsel %vm1204, %v608, 0
      %v2036 = vsel %vm1204, %v609, 0
      %v2038 = vsel %vm1204, %v610, 0
      %v2040 = vsel %vm1204, %v611, 0
      %v2042 = vsel %vm1204, %v612, 0
      %v2044 = vsel %vm1204, %v613, 0
      %v2046 = vsel %vm1204, %v614, 0
      %v2048 = vsel %vm1204, %v615, 0
      %v2050 = vsel %vm1204, %v616, 0
      %v2052 = vsel %vm1204, %v617, 0
      %v2054 = vsel %vm1204, %v618, 0
      %v2056 = vsel %vm1204, %v619, 0
      %v2058 = vsel %vm1204, %v620, 0
      %v2060 = vsel %vm1204, %v621, 0
      %v2062 = vsel %vm1204, %v622, 0
      %v2064 = vsel %vm1204, %v623, 0
      %v2066 = vsel %vm1204, %v624, 0
      %v2068 = vsel %vm1204, %v625, 0
      %v2070 = vsel %vm1204, %v626, 0
      %v2072 = vsel %vm1204, %v627, 0
      %v2074 = vsel %vm1204, %v628, 0
      %v2076 = vsel %vm1204, %v629, 0
      %v2078 = vsel %vm1204, %v630, 0
      %v2080 = vsel %vm1204, %v631, 0
      %v2082 = vsel %vm1204, %v632, 0
      %v2084 = vsel %vm1204, %v633, 0
      %v2086 = vsel %vm1204, %v634, 0
      %v2088 = vsel %vm1204, %v635, 0
      %v2090 = vsel %vm1204, %v636, 0
      %v2092 = vsel %vm1204, %v637, 0
      %v2094 = vsel %vm1204, %v638, 0
      %v2096 = vsel %vm1204, %v639, 0
      %v2098 = vsel %vm1204, %v640, 0
      %v2100 = vsel %vm1204, %v641, 0
      %v2102 = vsel %vm1204, %v642, 0
      %v2104 = vsel %vm1204, %v643, 0
      %v2106 = vsel %vm1204, %v644, 0
      %v2108 = vsel %vm1204, %v645, 0
      %v2110 = vsel %vm1204, %v646, 0
      %v2112 = vsel %vm1204, %v647, 0
      %v2114 = vsel %vm1204, %v648, 0
      %v2116 = vsel %vm1204, %v649, 0
      %v2118 = vsel %vm1204, %v650, 0
      %v2120 = vsel %vm1204, %v651, 0
      %v2122 = vsel %vm1204, %v652, 0
      %v2124 = vsel %vm1204, %v653, 0
      %v2127 = vsel %vm1409, %v308, 0
      %2129 = vmatprep.subr.bf16.mxu0 0
      %2130 = vmatpush1.bf16.msra.mxu0 %v2127
      %2131 = vmatprep.subr.bf16.mxu0 0
      %2132 = vmatpush1.bf16.msra.mxu0 0
      %2133 = vmatprep.subr.bf16.mxu0 0
      %2134 = vmatpush1.bf16.msra.mxu0 0
      %2135 = vmatprep.subr.bf16.mxu0 0
      %2136 = vmatpush1.bf16.msra.mxu0 0
      %2137 = vmatprep.subr.bf16.mxu0 0
      %2138 = vmatpush1.bf16.msra.mxu0 0
      %2139 = vmatprep.subr.bf16.mxu0 0
      %2140 = vmatpush1.bf16.msra.mxu0 0
      %2141 = vmatprep.subr.bf16.mxu0 0
      %2142 = vmatpush1.bf16.msra.mxu0 0
      %2143 = vmatprep.subr.bf16.mxu0 0
      %2144 = vmatpush1.bf16.msra.mxu0 0
      %2145 = vmatprep.subr.bf16.mxu0 0
      %2146 = vmatpush1.bf16.msra.mxu0 0
      %2147 = vmatprep.subr.bf16.mxu0 0
      %2148 = vmatpush1.bf16.msra.mxu0 0
      %2149 = vmatprep.subr.bf16.mxu0 0
      %2150 = vmatpush1.bf16.msra.mxu0 0
      %2151 = vmatprep.subr.bf16.mxu0 0
      %2152 = vmatpush1.bf16.msra.mxu0 0
      %2153 = vmatprep.subr.bf16.mxu0 0
      %2154 = vmatpush1.bf16.msra.mxu0 0
      %2155 = vmatprep.subr.bf16.mxu0 0
      %2156 = vmatpush1.bf16.msra.mxu0 0
      %2157 = vmatprep.subr.bf16.mxu0 0
      %2158 = vmatpush1.bf16.msra.mxu0 0
      %2159 = vmatprep.subr.bf16.mxu0 0
      %2160 = vmatpush1.bf16.msra.mxu0 0
      %2161 = vmatprep.mubr.bf16.mxu0 0
      %2162 = vmatmul.mubr.bf16.gmra.mrb[0].mxu0 %v1990
      %v2163 = vpop.f32.mrb[0].mxu0
      %v2164 = vadd.f32 %v1448, %v2163
      %v2165 = vpop.f32.mrb[0].mxu0
      %v2166 = vpop.f32.mrb[0].mxu0
      %v2167 = vadd.f32 %v1451, %v2166
      %v2168 = vpop.f32.mrb[0].mxu0
      %2169 = vmatprep.mubr.bf16.mxu0 0
      %2170 = vmatmul.mubr.bf16.gmra.mrb[0].mxu0 %v1992
      %v2171 = vpop.f32.mrb[0].mxu0
      %v2172 = vadd.f32 %v1456, %v2171
      %v2173 = vpop.f32.mrb[0].mxu0
      %v2174 = vpop.f32.mrb[0].mxu0
      %v2175 = vadd.f32 %v1459, %v2174
      %v2176 = vpop.f32.mrb[0].mxu0
      %2177 = vmatprep.mubr.bf16.mxu0 0
      %2178 = vmatmul.mubr.bf16.gmra.mrb[0].mxu0 %v1994
      %v2179 = vpop.f32.mrb[0].mxu0
      %v2180 = vadd.f32 %v1464, %v2179
      %v2181 = vpop.f32.mrb[0].mxu0
      %v2182 = vpop.f32.mrb[0].mxu0
      %v2183 = vadd.f32 %v1467, %v2182
      %v2184 = vpop.f32.mrb[0].mxu0
      %2185 = vmatprep.mubr.bf16.mxu0 0
      %2186 = vmatmul.mubr.bf16.gmra.mrb[0].mxu0 %v1996
      %v2187 = vpop.f32.mrb[0].mxu0
      %v2188 = vadd.f32 %v1472, %v2187
      %v2189 = vpop.f32.mrb[0].mxu0
      %v2190 = vpop.f32.mrb[0].mxu0
      %v2191 = vadd.f32 %v1475, %v2190
      %v2192 = vpop.f32.mrb[0].mxu0
      %2193 = vmatprep.mubr.bf16.mxu0 0
      %2194 = vmatmul.mubr.bf16.gmra.mrb[0].mxu0 %v1998
      %v2195 = vpop.f32.mrb[0].mxu0
      %v2196 = vadd.f32 %v1480, %v2195
      %v2197 = vpop.f32.mrb[0].mxu0
      %v2198 = vpop.f32.mrb[0].mxu0
      %v2199 = vadd.f32 %v1483, %v2198
      %v2200 = vpop.f32.mrb[0].mxu0
      %2201 = vmatprep.mubr.bf16.mxu0 0
      %2202 = vmatmul.mubr.bf16.gmra.mrb[0].mxu0 %v2000
      %v2203 = vpop.f32.mrb[0].mxu0
      %v2204 = vadd.f32 %v1488, %v2203
      %v2205 = vpop.f32.mrb[0].mxu0
      %v2206 = vpop.f32.mrb[0].mxu0
      %v2207 = vadd.f32 %v1491, %v2206
      %v2208 = vpop.f32.mrb[0].mxu0
      %2209 = vmatprep.mubr.bf16.mxu0 0
      %2210 = vmatmul.mubr.bf16.gmra.mrb[0].mxu0 %v2002
      %v2211 = vpop.f32.mrb[0].mxu0
      %v2212 = vadd.f32 %v1496, %v2211
      %v2213 = vpop.f32.mrb[0].mxu0
      %v2214 = vpop.f32.mrb[0].mxu0
      %v2215 = vadd.f32 %v1499, %v2214
      %v2216 = vpop.f32.mrb[0].mxu0
      %2217 = vmatprep.mubr.bf16.mxu0 0
      %2218 = vmatmul.mubr.bf16.gmra.mrb[0].mxu0 %v2004
      %v2219 = vpop.f32.mrb[0].mxu0
      %v2220 = vadd.f32 %v1504, %v2219
      %v2221 = vpop.f32.mrb[0].mxu0
      %v2222 = vpop.f32.mrb[0].mxu0
      %v2223 = vadd.f32 %v1507, %v2222
      %v2224 = vpop.f32.mrb[0].mxu0
      %2225 = vmatprep.mubr.bf16.mxu0 0
      %2226 = vmatmul.mubr.bf16.gmra.mrb[0].mxu0 %v2006
      %v2227 = vpop.f32.mrb[0].mxu0
      %v2228 = vadd.f32 %v1512, %v2227
      %v2229 = vpop.f32.mrb[0].mxu0
      %v2230 = vpop.f32.mrb[0].mxu0
      %v2231 = vadd.f32 %v1515, %v2230
      %v2232 = vpop.f32.mrb[0].mxu0
      %2233 = vmatprep.mubr.bf16.mxu0 0
      %2234 = vmatmul.mubr.bf16.gmra.mrb[0].mxu0 %v2008
      %v2235 = vpop.f32.mrb[0].mxu0
      %v2236 = vadd.f32 %v1520, %v2235
      %v2237 = vpop.f32.mrb[0].mxu0
      %v2238 = vpop.f32.mrb[0].mxu0
      %v2239 = vadd.f32 %v1523, %v2238
      %v2240 = vpop.f32.mrb[0].mxu0
      %2241 = vmatprep.mubr.bf16.mxu0 0
      %2242 = vmatmul.mubr.bf16.gmra.mrb[0].mxu0 %v2010
      %v2243 = vpop.f32.mrb[0].mxu0
      %v2244 = vadd.f32 %v1528, %v2243
      %v2245 = vpop.f32.mrb[0].mxu0
      %v2246 = vpop.f32.mrb[0].mxu0
      %v2247 = vadd.f32 %v1531, %v2246
      %v2248 = vpop.f32.mrb[0].mxu0
      %2249 = vmatprep.mubr.bf16.mxu0 0
      %2250 = vmatmul.mubr.bf16.gmra.mrb[0].mxu0 %v2012
      %v2251 = vpop.f32.mrb[0].mxu0
      %v2252 = vadd.f32 %v1536, %v2251
      %v2253 = vpop.f32.mrb[0].mxu0
      %v2254 = vpop.f32.mrb[0].mxu0
      %v2255 = vadd.f32 %v1539, %v2254
      %v2256 = vpop.f32.mrb[0].mxu0
      %2257 = vmatprep.mubr.bf16.mxu0 0
      %2258 = vmatmul.mubr.bf16.gmra.mrb[0].mxu0 %v2014
      %v2259 = vpop.f32.mrb[0].mxu0
      %v2260 = vadd.f32 %v1544, %v2259
      %v2261 = vpop.f32.mrb[0].mxu0
      %v2262 = vpop.f32.mrb[0].mxu0
      %v2263 = vadd.f32 %v1547, %v2262
      %v2264 = vpop.f32.mrb[0].mxu0
      %2265 = vmatprep.mubr.bf16.mxu0 0
      %2266 = vmatmul.mubr.bf16.gmra.mrb[0].mxu0 %v2016
      %v2267 = vpop.f32.mrb[0].mxu0
      %v2268 = vadd.f32 %v1552, %v2267
      %v2269 = vpop.f32.mrb[0].mxu0
      %v2270 = vpop.f32.mrb[0].mxu0
      %v2271 = vadd.f32 %v1555, %v2270
      %v2272 = vpop.f32.mrb[0].mxu0
      %2273 = vmatprep.mubr.bf16.mxu0 0
      %2274 = vmatmul.mubr.bf16.gmra.mrb[0].mxu0 %v2018
      %v2275 = vpop.f32.mrb[0].mxu0
      %v2276 = vadd.f32 %v1560, %v2275
      %v2277 = vpop.f32.mrb[0].mxu0
      %v2278 = vpop.f32.mrb[0].mxu0
      %v2279 = vadd.f32 %v1563, %v2278
      %v2280 = vpop.f32.mrb[0].mxu0
      %2281 = vmatprep.mubr.bf16.mxu0 0
      %2282 = vmatmul.mubr.bf16.gmra.mrb[0].mxu0 %v2020
      %v2283 = vpop.f32.mrb[0].mxu0
      %v2284 = vadd.f32 %v1568, %v2283
      %v2285 = vpop.f32.mrb[0].mxu0
      %v2286 = vpop.f32.mrb[0].mxu0
      %v2287 = vadd.f32 %v1571, %v2286
      %v2288 = vpop.f32.mrb[0].mxu0
      %2289 = vmatprep.mubr.bf16.mxu0 0
      %2290 = vmatmul.mubr.bf16.gmra.mrb[0].mxu0 %v2022
      %v2291 = vpop.f32.mrb[0].mxu0
      %v2292 = vadd.f32 %v1576, %v2291
      %v2293 = vpop.f32.mrb[0].mxu0
      %v2294 = vpop.f32.mrb[0].mxu0
      %v2295 = vadd.f32 %v1579, %v2294
      %v2296 = vpop.f32.mrb[0].mxu0
      %2297 = vmatprep.mubr.bf16.mxu0 0
      %2298 = vmatmul.mubr.bf16.gmra.mrb[0].mxu0 %v2024
      %v2299 = vpop.f32.mrb[0].mxu0
      %v2300 = vadd.f32 %v1584, %v2299
      %v2301 = vpop.f32.mrb[0].mxu0
      %v2302 = vpop.f32.mrb[0].mxu0
      %v2303 = vadd.f32 %v1587, %v2302
      %v2304 = vpop.f32.mrb[0].mxu0
      %2305 = vmatprep.mubr.bf16.mxu0 0
      %2306 = vmatmul.mubr.bf16.gmra.mrb[0].mxu0 %v2026
      %v2307 = vpop.f32.mrb[0].mxu0
      %v2308 = vadd.f32 %v1592, %v2307
      %v2309 = vpop.f32.mrb[0].mxu0
      %v2310 = vpop.f32.mrb[0].mxu0
      %v2311 = vadd.f32 %v1595, %v2310
      %v2312 = vpop.f32.mrb[0].mxu0
      %2313 = vmatprep.mubr.bf16.mxu0 0
      %2314 = vmatmul.mubr.bf16.gmra.mrb[0].mxu0 %v2028
      %v2315 = vpop.f32.mrb[0].mxu0
      %v2316 = vadd.f32 %v1600, %v2315
      %v2317 = vpop.f32.mrb[0].mxu0
      %v2318 = vpop.f32.mrb[0].mxu0
      %v2319 = vadd.f32 %v1603, %v2318
      %v2320 = vpop.f32.mrb[0].mxu0
      %2321 = vmatprep.mubr.bf16.mxu0 0
      %2322 = vmatmul.mubr.bf16.gmra.mrb[0].mxu0 %v2030
      %v2323 = vpop.f32.mrb[0].mxu0
      %v2324 = vadd.f32 %v1608, %v2323
      %v2325 = vpop.f32.mrb[0].mxu0
      %v2326 = vpop.f32.mrb[0].mxu0
      %v2327 = vadd.f32 %v1611, %v2326
      %v2328 = vpop.f32.mrb[0].mxu0
      %2329 = vmatprep.mubr.bf16.mxu0 0
      %2330 = vmatmul.mubr.bf16.gmra.mrb[0].mxu0 %v2032
      %v2331 = vpop.f32.mrb[0].mxu0
      %v2332 = vadd.f32 %v1616, %v2331
      %v2333 = vpop.f32.mrb[0].mxu0
      %v2334 = vpop.f32.mrb[0].mxu0
      %v2335 = vadd.f32 %v1619, %v2334
      %v2336 = vpop.f32.mrb[0].mxu0
      %2337 = vmatprep.mubr.bf16.mxu0 0
      %2338 = vmatmul.mubr.bf16.gmra.mrb[0].mxu0 %v2034
      %v2339 = vpop.f32.mrb[0].mxu0
      %v2340 = vadd.f32 %v1624, %v2339
      %v2341 = vpop.f32.mrb[0].mxu0
      %v2342 = vpop.f32.mrb[0].mxu0
      %v2343 = vadd.f32 %v1627, %v2342
      %v2344 = vpop.f32.mrb[0].mxu0
      %2345 = vmatprep.mubr.bf16.mxu0 0
      %2346 = vmatmul.mubr.bf16.gmra.mrb[0].mxu0 %v2036
      %v2347 = vpop.f32.mrb[0].mxu0
      %v2348 = vadd.f32 %v1632, %v2347
      %v2349 = vpop.f32.mrb[0].mxu0
      %v2350 = vpop.f32.mrb[0].mxu0
      %v2351 = vadd.f32 %v1635, %v2350
      %v2352 = vpop.f32.mrb[0].mxu0
      %2353 = vmatprep.mubr.bf16.mxu0 0
      %2354 = vmatmul.mubr.bf16.gmra.mrb[0].mxu0 %v2038
      %v2355 = vpop.f32.mrb[0].mxu0
      %v2356 = vadd.f32 %v1640, %v2355
      %v2357 = vpop.f32.mrb[0].mxu0
      %v2358 = vpop.f32.mrb[0].mxu0
      %v2359 = vadd.f32 %v1643, %v2358
      %v2360 = vpop.f32.mrb[0].mxu0
      %2361 = vmatprep.mubr.bf16.mxu0 0
      %2362 = vmatmul.mubr.bf16.gmra.mrb[0].mxu0 %v2040
      %v2363 = vpop.f32.mrb[0].mxu0
      %v2364 = vadd.f32 %v1648, %v2363
      %v2365 = vpop.f32.mrb[0].mxu0
      %v2366 = vpop.f32.mrb[0].mxu0
      %v2367 = vadd.f32 %v1651, %v2366
      %v2368 = vpop.f32.mrb[0].mxu0
      %2369 = vmatprep.mubr.bf16.mxu0 0
      %2370 = vmatmul.mubr.bf16.gmra.mrb[0].mxu0 %v2042
      %v2371 = vpop.f32.mrb[0].mxu0
      %v2372 = vadd.f32 %v1656, %v2371
      %v2373 = vpop.f32.mrb[0].mxu0
      %v2374 = vpop.f32.mrb[0].mxu0
      %v2375 = vadd.f32 %v1659, %v2374
      %v2376 = vpop.f32.mrb[0].mxu0
      %2377 = vmatprep.mubr.bf16.mxu0 0
      %2378 = vmatmul.mubr.bf16.gmra.mrb[0].mxu0 %v2044
      %v2379 = vpop.f32.mrb[0].mxu0
      %v2380 = vadd.f32 %v1664, %v2379
      %v2381 = vpop.f32.mrb[0].mxu0
      %v2382 = vpop.f32.mrb[0].mxu0
      %v2383 = vadd.f32 %v1667, %v2382
      %v2384 = vpop.f32.mrb[0].mxu0
      %2385 = vmatprep.mubr.bf16.mxu0 0
      %2386 = vmatmul.mubr.bf16.gmra.mrb[0].mxu0 %v2046
      %v2387 = vpop.f32.mrb[0].mxu0
      %v2388 = vadd.f32 %v1672, %v2387
      %v2389 = vpop.f32.mrb[0].mxu0
      %v2390 = vpop.f32.mrb[0].mxu0
      %v2391 = vadd.f32 %v1675, %v2390
      %v2392 = vpop.f32.mrb[0].mxu0
      %2393 = vmatprep.mubr.bf16.mxu0 0
      %2394 = vmatmul.mubr.bf16.gmra.mrb[0].mxu0 %v2048
      %v2395 = vpop.f32.mrb[0].mxu0
      %v2396 = vadd.f32 %v1680, %v2395
      %v2397 = vpop.f32.mrb[0].mxu0
      %v2398 = vpop.f32.mrb[0].mxu0
      %v2399 = vadd.f32 %v1683, %v2398
      %v2400 = vpop.f32.mrb[0].mxu0
      %2401 = vmatprep.mubr.bf16.mxu0 0
      %2402 = vmatmul.mubr.bf16.gmra.mrb[0].mxu0 %v2050
      %v2403 = vpop.f32.mrb[0].mxu0
      %v2404 = vadd.f32 %v1688, %v2403
      %v2405 = vpop.f32.mrb[0].mxu0
      %v2406 = vpop.f32.mrb[0].mxu0
      %v2407 = vadd.f32 %v1691, %v2406
      %v2408 = vpop.f32.mrb[0].mxu0
      %2409 = vmatprep.mubr.bf16.mxu0 0
      %2410 = vmatmul.mubr.bf16.gmra.mrb[0].mxu0 %v2052
      %v2411 = vpop.f32.mrb[0].mxu0
      %v2412 = vadd.f32 %v1696, %v2411
      %v2413 = vpop.f32.mrb[0].mxu0
      %v2414 = vpop.f32.mrb[0].mxu0
      %v2415 = vadd.f32 %v1699, %v2414
      %v2416 = vpop.f32.mrb[0].mxu0
      %2417 = vmatprep.mubr.bf16.mxu0 0
      %2418 = vmatmul.mubr.bf16.gmra.mrb[0].mxu0 %v2054
      %v2419 = vpop.f32.mrb[0].mxu0
      %v2420 = vadd.f32 %v1704, %v2419
      %v2421 = vpop.f32.mrb[0].mxu0
      %v2422 = vpop.f32.mrb[0].mxu0
      %v2423 = vadd.f32 %v1707, %v2422
      %v2424 = vpop.f32.mrb[0].mxu0
      %2425 = vmatprep.mubr.bf16.mxu0 0
      %2426 = vmatmul.mubr.bf16.gmra.mrb[0].mxu0 %v2056
      %v2427 = vpop.f32.mrb[0].mxu0
      %v2428 = vadd.f32 %v1712, %v2427
      %v2429 = vpop.f32.mrb[0].mxu0
      %v2430 = vpop.f32.mrb[0].mxu0
      %v2431 = vadd.f32 %v1715, %v2430
      %v2432 = vpop.f32.mrb[0].mxu0
      %2433 = vmatprep.mubr.bf16.mxu0 0
      %2434 = vmatmul.mubr.bf16.gmra.mrb[0].mxu0 %v2058
      %v2435 = vpop.f32.mrb[0].mxu0
      %v2436 = vadd.f32 %v1720, %v2435
      %v2437 = vpop.f32.mrb[0].mxu0
      %v2438 = vpop.f32.mrb[0].mxu0
      %v2439 = vadd.f32 %v1723, %v2438
      %v2440 = vpop.f32.mrb[0].mxu0
      %2441 = vmatprep.mubr.bf16.mxu0 0
      %2442 = vmatmul.mubr.bf16.gmra.mrb[0].mxu0 %v2060
      %v2443 = vpop.f32.mrb[0].mxu0
      %v2444 = vadd.f32 %v1728, %v2443
      %v2445 = vpop.f32.mrb[0].mxu0
      %v2446 = vpop.f32.mrb[0].mxu0
      %v2447 = vadd.f32 %v1731, %v2446
      %v2448 = vpop.f32.mrb[0].mxu0
      %2449 = vmatprep.mubr.bf16.mxu0 0
      %2450 = vmatmul.mubr.bf16.gmra.mrb[0].mxu0 %v2062
      %v2451 = vpop.f32.mrb[0].mxu0
      %v2452 = vadd.f32 %v1736, %v2451
      %v2453 = vpop.f32.mrb[0].mxu0
      %v2454 = vpop.f32.mrb[0].mxu0
      %v2455 = vadd.f32 %v1739, %v2454
      %v2456 = vpop.f32.mrb[0].mxu0
      %2457 = vmatprep.mubr.bf16.mxu0 0
      %2458 = vmatmul.mubr.bf16.gmra.mrb[0].mxu0 %v2064
      %v2459 = vpop.f32.mrb[0].mxu0
      %v2460 = vadd.f32 %v1744, %v2459
      %v2461 = vpop.f32.mrb[0].mxu0
      %v2462 = vpop.f32.mrb[0].mxu0
      %v2463 = vadd.f32 %v1747, %v2462
      %v2464 = vpop.f32.mrb[0].mxu0
      %2465 = vmatprep.mubr.bf16.mxu0 0
      %2466 = vmatmul.mubr.bf16.gmra.mrb[0].mxu0 %v2066
      %v2467 = vpop.f32.mrb[0].mxu0
      %v2468 = vadd.f32 %v1752, %v2467
      %v2469 = vpop.f32.mrb[0].mxu0
      %v2470 = vpop.f32.mrb[0].mxu0
      %v2471 = vadd.f32 %v1755, %v2470
      %v2472 = vpop.f32.mrb[0].mxu0
      %2473 = vmatprep.mubr.bf16.mxu0 0
      %2474 = vmatmul.mubr.bf16.gmra.mrb[0].mxu0 %v2068
      %v2475 = vpop.f32.mrb[0].mxu0
      %v2476 = vadd.f32 %v1760, %v2475
      %v2477 = vpop.f32.mrb[0].mxu0
      %v2478 = vpop.f32.mrb[0].mxu0
      %v2479 = vadd.f32 %v1763, %v2478
      %v2480 = vpop.f32.mrb[0].mxu0
      %2481 = vmatprep.mubr.bf16.mxu0 0
      %2482 = vmatmul.mubr.bf16.gmra.mrb[0].mxu0 %v2070
      %v2483 = vpop.f32.mrb[0].mxu0
      %v2484 = vadd.f32 %v1768, %v2483
      %v2485 = vpop.f32.mrb[0].mxu0
      %v2486 = vpop.f32.mrb[0].mxu0
      %v2487 = vadd.f32 %v1771, %v2486
      %v2488 = vpop.f32.mrb[0].mxu0
      %2489 = vmatprep.mubr.bf16.mxu0 0
      %2490 = vmatmul.mubr.bf16.gmra.mrb[0].mxu0 %v2072
      %v2491 = vpop.f32.mrb[0].mxu0
      %v2492 = vadd.f32 %v1776, %v2491
      %v2493 = vpop.f32.mrb[0].mxu0
      %v2494 = vpop.f32.mrb[0].mxu0
      %v2495 = vadd.f32 %v1779, %v2494
      %v2496 = vpop.f32.mrb[0].mxu0
      %2497 = vmatprep.mubr.bf16.mxu0 0
      %2498 = vmatmul.mubr.bf16.gmra.mrb[0].mxu0 %v2074
      %v2499 = vpop.f32.mrb[0].mxu0
      %v2500 = vadd.f32 %v1784, %v2499
      %v2501 = vpop.f32.mrb[0].mxu0
      %v2502 = vpop.f32.mrb[0].mxu0
      %v2503 = vadd.f32 %v1787, %v2502
      %v2504 = vpop.f32.mrb[0].mxu0
      %2505 = vmatprep.mubr.bf16.mxu0 0
      %2506 = vmatmul.mubr.bf16.gmra.mrb[0].mxu0 %v2076
      %v2507 = vpop.f32.mrb[0].mxu0
      %v2508 = vadd.f32 %v1792, %v2507
      %v2509 = vpop.f32.mrb[0].mxu0
      %v2510 = vpop.f32.mrb[0].mxu0
      %v2511 = vadd.f32 %v1795, %v2510
      %v2512 = vpop.f32.mrb[0].mxu0
      %2513 = vmatprep.mubr.bf16.mxu0 0
      %2514 = vmatmul.mubr.bf16.gmra.mrb[0].mxu0 %v2078
      %v2515 = vpop.f32.mrb[0].mxu0
      %v2516 = vadd.f32 %v1800, %v2515
      %v2517 = vpop.f32.mrb[0].mxu0
      %v2518 = vpop.f32.mrb[0].mxu0
      %v2519 = vadd.f32 %v1803, %v2518
      %v2520 = vpop.f32.mrb[0].mxu0
      %2521 = vmatprep.mubr.bf16.mxu0 0
      %2522 = vmatmul.mubr.bf16.gmra.mrb[0].mxu0 %v2080
      %v2523 = vpop.f32.mrb[0].mxu0
      %v2524 = vadd.f32 %v1808, %v2523
      %v2525 = vpop.f32.mrb[0].mxu0
      %v2526 = vpop.f32.mrb[0].mxu0
      %v2527 = vadd.f32 %v1811, %v2526
      %v2528 = vpop.f32.mrb[0].mxu0
      %2529 = vmatprep.mubr.bf16.mxu0 0
      %2530 = vmatmul.mubr.bf16.gmra.mrb[0].mxu0 %v2082
      %v2531 = vpop.f32.mrb[0].mxu0
      %v2532 = vadd.f32 %v1816, %v2531
      %v2533 = vpop.f32.mrb[0].mxu0
      %v2534 = vpop.f32.mrb[0].mxu0
      %v2535 = vadd.f32 %v1819, %v2534
      %v2536 = vpop.f32.mrb[0].mxu0
      %2537 = vmatprep.mubr.bf16.mxu0 0
      %2538 = vmatmul.mubr.bf16.gmra.mrb[0].mxu0 %v2084
      %v2539 = vpop.f32.mrb[0].mxu0
      %v2540 = vadd.f32 %v1824, %v2539
      %v2541 = vpop.f32.mrb[0].mxu0
      %v2542 = vpop.f32.mrb[0].mxu0
      %v2543 = vadd.f32 %v1827, %v2542
      %v2544 = vpop.f32.mrb[0].mxu0
      %2545 = vmatprep.mubr.bf16.mxu0 0
      %2546 = vmatmul.mubr.bf16.gmra.mrb[0].mxu0 %v2086
      %v2547 = vpop.f32.mrb[0].mxu0
      %v2548 = vadd.f32 %v1832, %v2547
      %v2549 = vpop.f32.mrb[0].mxu0
      %v2550 = vpop.f32.mrb[0].mxu0
      %v2551 = vadd.f32 %v1835, %v2550
      %v2552 = vpop.f32.mrb[0].mxu0
      %2553 = vmatprep.mubr.bf16.mxu0 0
      %2554 = vmatmul.mubr.bf16.gmra.mrb[0].mxu0 %v2088
      %v2555 = vpop.f32.mrb[0].mxu0
      %v2556 = vadd.f32 %v1840, %v2555
      %v2557 = vpop.f32.mrb[0].mxu0
      %v2558 = vpop.f32.mrb[0].mxu0
      %v2559 = vadd.f32 %v1843, %v2558
      %v2560 = vpop.f32.mrb[0].mxu0
      %2561 = vmatprep.mubr.bf16.mxu0 0
      %2562 = vmatmul.mubr.bf16.gmra.mrb[0].mxu0 %v2090
      %v2563 = vpop.f32.mrb[0].mxu0
      %v2564 = vadd.f32 %v1848, %v2563
      %v2565 = vpop.f32.mrb[0].mxu0
      %v2566 = vpop.f32.mrb[0].mxu0
      %v2567 = vadd.f32 %v1851, %v2566
      %v2568 = vpop.f32.mrb[0].mxu0
      %2569 = vmatprep.mubr.bf16.mxu0 0
      %2570 = vmatmul.mubr.bf16.gmra.mrb[0].mxu0 %v2092
      %v2571 = vpop.f32.mrb[0].mxu0
      %v2572 = vadd.f32 %v1856, %v2571
      %v2573 = vpop.f32.mrb[0].mxu0
      %v2574 = vpop.f32.mrb[0].mxu0
      %v2575 = vadd.f32 %v1859, %v2574
      %v2576 = vpop.f32.mrb[0].mxu0
      %2577 = vmatprep.mubr.bf16.mxu0 0
      %2578 = vmatmul.mubr.bf16.gmra.mrb[0].mxu0 %v2094
      %v2579 = vpop.f32.mrb[0].mxu0
      %v2580 = vadd.f32 %v1864, %v2579
      %v2581 = vpop.f32.mrb[0].mxu0
      %v2582 = vpop.f32.mrb[0].mxu0
      %v2583 = vadd.f32 %v1867, %v2582
      %v2584 = vpop.f32.mrb[0].mxu0
      %2585 = vmatprep.mubr.bf16.mxu0 0
      %2586 = vmatmul.mubr.bf16.gmra.mrb[0].mxu0 %v2096
      %v2587 = vpop.f32.mrb[0].mxu0
      %v2588 = vadd.f32 %v1872, %v2587
      %v2589 = vpop.f32.mrb[0].mxu0
      %v2590 = vpop.f32.mrb[0].mxu0
      %v2591 = vadd.f32 %v1875, %v2590
      %v2592 = vpop.f32.mrb[0].mxu0
      %2593 = vmatprep.mubr.bf16.mxu0 0
      %2594 = vmatmul.mubr.bf16.gmra.mrb[0].mxu0 %v2098
      %v2595 = vpop.f32.mrb[0].mxu0
      %v2596 = vadd.f32 %v1880, %v2595
      %v2597 = vpop.f32.mrb[0].mxu0
      %v2598 = vpop.f32.mrb[0].mxu0
      %v2599 = vadd.f32 %v1883, %v2598
      %v2600 = vpop.f32.mrb[0].mxu0
      %2601 = vmatprep.mubr.bf16.mxu0 0
      %2602 = vmatmul.mubr.bf16.gmra.mrb[0].mxu0 %v2100
      %v2603 = vpop.f32.mrb[0].mxu0
      %v2604 = vadd.f32 %v1888, %v2603
      %v2605 = vpop.f32.mrb[0].mxu0
      %v2606 = vpop.f32.mrb[0].mxu0
      %v2607 = vadd.f32 %v1891, %v2606
      %v2608 = vpop.f32.mrb[0].mxu0
      %2609 = vmatprep.mubr.bf16.mxu0 0
      %2610 = vmatmul.mubr.bf16.gmra.mrb[0].mxu0 %v2102
      %v2611 = vpop.f32.mrb[0].mxu0
      %v2612 = vadd.f32 %v1896, %v2611
      %v2613 = vpop.f32.mrb[0].mxu0
      %v2614 = vpop.f32.mrb[0].mxu0
      %v2615 = vadd.f32 %v1899, %v2614
      %v2616 = vpop.f32.mrb[0].mxu0
      %2617 = vmatprep.mubr.bf16.mxu0 0
      %2618 = vmatmul.mubr.bf16.gmra.mrb[0].mxu0 %v2104
      %v2619 = vpop.f32.mrb[0].mxu0
      %v2620 = vadd.f32 %v1904, %v2619
      %v2621 = vpop.f32.mrb[0].mxu0
      %v2622 = vpop.f32.mrb[0].mxu0
      %v2623 = vadd.f32 %v1907, %v2622
      %v2624 = vpop.f32.mrb[0].mxu0
      %2625 = vmatprep.mubr.bf16.mxu0 0
      %2626 = vmatmul.mubr.bf16.gmra.mrb[0].mxu0 %v2106
      %v2627 = vpop.f32.mrb[0].mxu0
      %v2628 = vadd.f32 %v1912, %v2627
      %v2629 = vpop.f32.mrb[0].mxu0
      %v2630 = vpop.f32.mrb[0].mxu0
      %v2631 = vadd.f32 %v1915, %v2630
      %v2632 = vpop.f32.mrb[0].mxu0
      %2633 = vmatprep.mubr.bf16.mxu0 0
      %2634 = vmatmul.mubr.bf16.gmra.mrb[0].mxu0 %v2108
      %v2635 = vpop.f32.mrb[0].mxu0
      %v2636 = vadd.f32 %v1920, %v2635
      %v2637 = vpop.f32.mrb[0].mxu0
      %v2638 = vpop.f32.mrb[0].mxu0
      %v2639 = vadd.f32 %v1923, %v2638
      %v2640 = vpop.f32.mrb[0].mxu0
      %2641 = vmatprep.mubr.bf16.mxu0 0
      %2642 = vmatmul.mubr.bf16.gmra.mrb[0].mxu0 %v2110
      %v2643 = vpop.f32.mrb[0].mxu0
      %v2644 = vadd.f32 %v1928, %v2643
      %v2645 = vpop.f32.mrb[0].mxu0
      %v2646 = vpop.f32.mrb[0].mxu0
      %v2647 = vadd.f32 %v1931, %v2646
      %v2648 = vpop.f32.mrb[0].mxu0
      %2649 = vmatprep.mubr.bf16.mxu0 0
      %2650 = vmatmul.mubr.bf16.gmra.mrb[0].mxu0 %v2112
      %v2651 = vpop.f32.mrb[0].mxu0
      %v2652 = vadd.f32 %v1936, %v2651
      %v2653 = vpop.f32.mrb[0].mxu0
      %v2654 = vpop.f32.mrb[0].mxu0
      %v2655 = vadd.f32 %v1939, %v2654
      %v2656 = vpop.f32.mrb[0].mxu0
      %2657 = vmatprep.mubr.bf16.mxu0 0
      %2658 = vmatmul.mubr.bf16.gmra.mrb[0].mxu0 %v2114
      %v2659 = vpop.f32.mrb[0].mxu0
      %v2660 = vadd.f32 %v1944, %v2659
      %v2661 = vpop.f32.mrb[0].mxu0
      %v2662 = vpop.f32.mrb[0].mxu0
      %v2663 = vadd.f32 %v1947, %v2662
      %v2664 = vpop.f32.mrb[0].mxu0
      %2665 = vmatprep.mubr.bf16.mxu0 0
      %2666 = vmatmul.mubr.bf16.gmra.mrb[0].mxu0 %v2116
      %v2667 = vpop.f32.mrb[0].mxu0
      %v2668 = vadd.f32 %v1952, %v2667
      %v2669 = vpop.f32.mrb[0].mxu0
      %v2670 = vpop.f32.mrb[0].mxu0
      %v2671 = vadd.f32 %v1955, %v2670
      %v2672 = vpop.f32.mrb[0].mxu0
      %2673 = vmatprep.mubr.bf16.mxu0 0
      %2674 = vmatmul.mubr.bf16.gmra.mrb[0].mxu0 %v2118
      %v2675 = vpop.f32.mrb[0].mxu0
      %v2676 = vadd.f32 %v1960, %v2675
      %v2677 = vpop.f32.mrb[0].mxu0
      %v2678 = vpop.f32.mrb[0].mxu0
      %v2679 = vadd.f32 %v1963, %v2678
      %v2680 = vpop.f32.mrb[0].mxu0
      %2681 = vmatprep.mubr.bf16.mxu0 0
      %2682 = vmatmul.mubr.bf16.gmra.mrb[0].mxu0 %v2120
      %v2683 = vpop.f32.mrb[0].mxu0
      %v2684 = vadd.f32 %v1968, %v2683
      %v2685 = vpop.f32.mrb[0].mxu0
      %v2686 = vpop.f32.mrb[0].mxu0
      %v2687 = vadd.f32 %v1971, %v2686
      %v2688 = vpop.f32.mrb[0].mxu0
      %2689 = vmatprep.mubr.bf16.mxu0 0
      %2690 = vmatmul.mubr.bf16.gmra.mrb[0].mxu0 %v2122
      %v2691 = vpop.f32.mrb[0].mxu0
      %v2692 = vadd.f32 %v1976, %v2691
      %v2693 = vpop.f32.mrb[0].mxu0
      %v2694 = vpop.f32.mrb[0].mxu0
      %v2695 = vadd.f32 %v1979, %v2694
      %v2696 = vpop.f32.mrb[0].mxu0
      %2697 = vmatprep.mubr.bf16.mxu0 0
      %2698 = vmatmul.mubr.bf16.gmra.mrb[0].mxu0 %v2124
      %v2699 = vpop.f32.mrb[0].mxu0
      %v2700 = vadd.f32 %v1984, %v2699
      %v2701 = vpop.f32.mrb[0].mxu0
      %v2702 = vpop.f32.mrb[0].mxu0
      %v2703 = vadd.f32 %v1987, %v2702
      %v2704 = vpop.f32.mrb[0].mxu0
      %2705 = vdwg.mxu0
      %v2706 = vld [vmem:[%s165] sm:$0xe]
      %s2707 = scalar_lea.vmem %s1, 8
      %v2708 = vld [vmem:[%s2707] sm:$0xf]
      %v2710 = vunpack.c.l.b16 %v2706
      %v2711 = vpack.c.b16 %v450, %v2710
      %vm2712 = vcmask 1046528
      %v2713 = vrot.slane %v2711, 1
      %v2714 = vrot.slane %v587, 1
      %v2715 = vsel %vm2712, %v2713, %v2714
      %v2716 = vrot.slane %v588, 1
      %v2717 = vsel %vm2712, %v2714, %v2716
      %v2718 = vrot.slane %v589, 1
      %v2719 = vsel %vm2712, %v2716, %v2718
      %v2720 = vrot.slane %v590, 1
      %v2721 = vsel %vm2712, %v2718, %v2720
      %v2722 = vrot.slane %v591, 1
      %v2723 = vsel %vm2712, %v2720, %v2722
      %v2724 = vrot.slane %v592, 1
      %v2725 = vsel %vm2712, %v2722, %v2724
      %v2726 = vrot.slane %v593, 1
      %v2727 = vsel %vm2712, %v2724, %v2726
      %v2728 = vrot.slane %v594, 1
      %v2729 = vsel %vm2712, %v2726, %v2728
      %v2730 = vrot.slane %v595, 1
      %v2731 = vsel %vm2712, %v2728, %v2730
      %v2732 = vrot.slane %v596, 1
      %v2733 = vsel %vm2712, %v2730, %v2732
      %v2734 = vrot.slane %v597, 1
      %v2735 = vsel %vm2712, %v2732, %v2734
      %v2736 = vrot.slane %v598, 1
      %v2737 = vsel %vm2712, %v2734, %v2736
      %v2738 = vrot.slane %v599, 1
      %v2739 = vsel %vm2712, %v2736, %v2738
      %v2740 = vrot.slane %v600, 1
      %v2741 = vsel %vm2712, %v2738, %v2740
      %v2742 = vrot.slane %v601, 1
      %v2743 = vsel %vm2712, %v2740, %v2742
      %v2744 = vrot.slane %v602, 1
      %v2745 = vsel %vm2712, %v2742, %v2744
      %v2746 = vrot.slane %v603, 1
      %v2747 = vsel %vm2712, %v2744, %v2746
      %v2748 = vrot.slane %v604, 1
      %v2749 = vsel %vm2712, %v2746, %v2748
      %v2750 = vrot.slane %v605, 1
      %v2751 = vsel %vm2712, %v2748, %v2750
      %v2752 = vrot.slane %v606, 1
      %v2753 = vsel %vm2712, %v2750, %v2752
      %v2754 = vrot.slane %v607, 1
      %v2755 = vsel %vm2712, %v2752, %v2754
      %v2756 = vrot.slane %v608, 1
      %v2757 = vsel %vm2712, %v2754, %v2756
      %v2758 = vrot.slane %v609, 1
      %v2759 = vsel %vm2712, %v2756, %v2758
      %v2760 = vrot.slane %v610, 1
      %v2761 = vsel %vm2712, %v2758, %v2760
      %v2762 = vrot.slane %v611, 1
      %v2763 = vsel %vm2712, %v2760, %v2762
      %v2764 = vrot.slane %v612, 1
      %v2765 = vsel %vm2712, %v2762, %v2764
      %v2766 = vrot.slane %v613, 1
      %v2767 = vsel %vm2712, %v2764, %v2766
      %v2768 = vrot.slane %v614, 1
      %v2769 = vsel %vm2712, %v2766, %v2768
      %v2770 = vrot.slane %v615, 1
      %v2771 = vsel %vm2712, %v2768, %v2770
      %v2772 = vrot.slane %v616, 1
      %v2773 = vsel %vm2712, %v2770, %v2772
      %v2774 = vrot.slane %v617, 1
      %v2775 = vsel %vm2712, %v2772, %v2774
      %v2776 = vrot.slane %v618, 1
      %v2777 = vsel %vm2712, %v2774, %v2776
      %v2778 = vrot.slane %v619, 1
      %v2779 = vsel %vm2712, %v2776, %v2778
      %v2780 = vrot.slane %v620, 1
      %v2781 = vsel %vm2712, %v2778, %v2780
      %v2782 = vrot.slane %v621, 1
      %v2783 = vsel %vm2712, %v2780, %v2782
      %v2784 = vrot.slane %v622, 1
      %v2785 = vsel %vm2712, %v2782, %v2784
      %v2786 = vrot.slane %v623, 1
      %v2787 = vsel %vm2712, %v2784, %v2786
      %v2788 = vrot.slane %v624, 1
      %v2789 = vsel %vm2712, %v2786, %v2788
      %v2790 = vrot.slane %v625, 1
      %v2791 = vsel %vm2712, %v2788, %v2790
      %v2792 = vrot.slane %v626, 1
      %v2793 = vsel %vm2712, %v2790, %v2792
      %v2794 = vrot.slane %v627, 1
      %v2795 = vsel %vm2712, %v2792, %v2794
      %v2796 = vrot.slane %v628, 1
      %v2797 = vsel %vm2712, %v2794, %v2796
      %v2798 = vrot.slane %v629, 1
      %v2799 = vsel %vm2712, %v2796, %v2798
      %v2800 = vrot.slane %v630, 1
      %v2801 = vsel %vm2712, %v2798, %v2800
      %v2802 = vrot.slane %v631, 1
      %v2803 = vsel %vm2712, %v2800, %v2802
      %v2804 = vrot.slane %v632, 1
      %v2805 = vsel %vm2712, %v2802, %v2804
      %v2806 = vrot.slane %v633, 1
      %v2807 = vsel %vm2712, %v2804, %v2806
      %v2808 = vrot.slane %v634, 1
      %v2809 = vsel %vm2712, %v2806, %v2808
      %v2810 = vrot.slane %v635, 1
      %v2811 = vsel %vm2712, %v2808, %v2810
      %v2812 = vrot.slane %v636, 1
      %v2813 = vsel %vm2712, %v2810, %v2812
      %v2814 = vrot.slane %v637, 1
      %v2815 = vsel %vm2712, %v2812, %v2814
      %v2816 = vrot.slane %v638, 1
      %v2817 = vsel %vm2712, %v2814, %v2816
      %v2818 = vrot.slane %v639, 1
      %v2819 = vsel %vm2712, %v2816, %v2818
      %v2820 = vrot.slane %v640, 1
      %v2821 = vsel %vm2712, %v2818, %v2820
      %v2822 = vrot.slane %v641, 1
      %v2823 = vsel %vm2712, %v2820, %v2822
      %v2824 = vrot.slane %v642, 1
      %v2825 = vsel %vm2712, %v2822, %v2824
      %v2826 = vrot.slane %v643, 1
      %v2827 = vsel %vm2712, %v2824, %v2826
      %v2828 = vrot.slane %v644, 1
      %v2829 = vsel %vm2712, %v2826, %v2828
      %v2830 = vrot.slane %v645, 1
      %v2831 = vsel %vm2712, %v2828, %v2830
      %v2832 = vrot.slane %v646, 1
      %v2833 = vsel %vm2712, %v2830, %v2832
      %v2834 = vrot.slane %v647, 1
      %v2835 = vsel %vm2712, %v2832, %v2834
      %v2836 = vrot.slane %v648, 1
      %v2837 = vsel %vm2712, %v2834, %v2836
      %v2838 = vrot.slane %v649, 1
      %v2839 = vsel %vm2712, %v2836, %v2838
      %v2840 = vrot.slane %v650, 1
      %v2841 = vsel %vm2712, %v2838, %v2840
      %v2842 = vrot.slane %v651, 1
      %v2843 = vsel %vm2712, %v2840, %v2842
      %v2844 = vrot.slane %v652, 1
      %v2845 = vsel %vm2712, %v2842, %v2844
      %v2846 = vrot.slane %v653, 1
      %v2847 = vsel %vm2712, %v2844, %v2846
      %v2848 = vrot.slane %v654, 1
      %v2849 = vsel %vm2712, %v2846, %v2848
      %v2851 = vsel %vm1204, %v2715, 0
      %v2854 = vsel %vm1204, %v2717, 0
      %v2857 = vsel %vm1204, %v2719, 0
      %v2860 = vsel %vm1204, %v2721, 0
      %v2863 = vsel %vm1204, %v2723, 0
      %v2866 = vsel %vm1204, %v2725, 0
      %v2869 = vsel %vm1204, %v2727, 0
      %v2872 = vsel %vm1204, %v2729, 0
      %v2875 = vsel %vm1204, %v2731, 0
      %v2878 = vsel %vm1204, %v2733, 0
      %v2881 = vsel %vm1204, %v2735, 0
      %v2884 = vsel %vm1204, %v2737, 0
      %v2887 = vsel %vm1204, %v2739, 0
      %v2890 = vsel %vm1204, %v2741, 0
      %v2893 = vsel %vm1204, %v2743, 0
      %v2896 = vsel %vm1204, %v2745, 0
      %v2899 = vsel %vm1204, %v2747, 0
      %v2902 = vsel %vm1204, %v2749, 0
      %v2905 = vsel %vm1204, %v2751, 0
      %v2908 = vsel %vm1204, %v2753, 0
      %v2911 = vsel %vm1204, %v2755, 0
      %v2914 = vsel %vm1204, %v2757, 0
      %v2917 = vsel %vm1204, %v2759, 0
      %v2920 = vsel %vm1204, %v2761, 0
      %v2923 = vsel %vm1204, %v2763, 0
      %v2926 = vsel %vm1204, %v2765, 0
      %v2929 = vsel %vm1204, %v2767, 0
      %v2932 = vsel %vm1204, %v2769, 0
      %v2935 = vsel %vm1204, %v2771, 0
      %v2938 = vsel %vm1204, %v2773, 0
      %v2941 = vsel %vm1204, %v2775, 0
      %v2944 = vsel %vm1204, %v2777, 0
      %v2947 = vsel %vm1204, %v2779, 0
      %v2950 = vsel %vm1204, %v2781, 0
      %v2953 = vsel %vm1204, %v2783, 0
      %v2956 = vsel %vm1204, %v2785, 0
      %v2959 = vsel %vm1204, %v2787, 0
      %v2962 = vsel %vm1204, %v2789, 0
      %v2965 = vsel %vm1204, %v2791, 0
      %v2968 = vsel %vm1204, %v2793, 0
      %v2971 = vsel %vm1204, %v2795, 0
      %v2974 = vsel %vm1204, %v2797, 0
      %v2977 = vsel %vm1204, %v2799, 0
      %v2980 = vsel %vm1204, %v2801, 0
      %v2983 = vsel %vm1204, %v2803, 0
      %v2986 = vsel %vm1204, %v2805, 0
      %v2989 = vsel %vm1204, %v2807, 0
      %v2992 = vsel %vm1204, %v2809, 0
      %v2995 = vsel %vm1204, %v2811, 0
      %v2998 = vsel %vm1204, %v2813, 0
      %v3001 = vsel %vm1204, %v2815, 0
      %v3004 = vsel %vm1204, %v2817, 0
      %v3007 = vsel %vm1204, %v2819, 0
      %v3010 = vsel %vm1204, %v2821, 0
      %v3013 = vsel %vm1204, %v2823, 0
      %v3016 = vsel %vm1204, %v2825, 0
      %v3019 = vsel %vm1204, %v2827, 0
      %v3022 = vsel %vm1204, %v2829, 0
      %v3025 = vsel %vm1204, %v2831, 0
      %v3028 = vsel %vm1204, %v2833, 0
      %v3031 = vsel %vm1204, %v2835, 0
      %v3034 = vsel %vm1204, %v2837, 0
      %v3037 = vsel %vm1204, %v2839, 0
      %v3040 = vsel %vm1204, %v2841, 0
      %v3043 = vsel %vm1204, %v2843, 0
      %v3046 = vsel %vm1204, %v2845, 0
      %v3049 = vsel %vm1204, %v2847, 0
      %v3052 = vsel %vm1204, %v2849, 0
      %v3055 = vsel %vm1409, %v2708, 0
      %3057 = vmatprep.subr.bf16.mxu0 0
      %3058 = vmatpush1.bf16.msra.mxu0 %v3055
      %3059 = vmatprep.subr.bf16.mxu0 0
      %3060 = vmatpush1.bf16.msra.mxu0 0
      %3061 = vmatprep.subr.bf16.mxu0 0
      %3062 = vmatpush1.bf16.msra.mxu0 0
      %3063 = vmatprep.subr.bf16.mxu0 0
      %3064 = vmatpush1.bf16.msra.mxu0 0
      %3065 = vmatprep.subr.bf16.mxu0 0
      %3066 = vmatpush1.bf16.msra.mxu0 0
      %3067 = vmatprep.subr.bf16.mxu0 0
      %3068 = vmatpush1.bf16.msra.mxu0 0
      %3069 = vmatprep.subr.bf16.mxu0 0
      %3070 = vmatpush1.bf16.msra.mxu0 0
      %3071 = vmatprep.subr.bf16.mxu0 0
      %3072 = vmatpush1.bf16.msra.mxu0 0
      %3073 = vmatprep.subr.bf16.mxu0 0
      %3074 = vmatpush1.bf16.msra.mxu0 0
      %3075 = vmatprep.subr.bf16.mxu0 0
      %3076 = vmatpush1.bf16.msra.mxu0 0
      %3077 = vmatprep.subr.bf16.mxu0 0
      %3078 = vmatpush1.bf16.msra.mxu0 0
      %3079 = vmatprep.subr.bf16.mxu0 0
      %3080 = vmatpush1.bf16.msra.mxu0 0
      %3081 = vmatprep.subr.bf16.mxu0 0
      %3082 = vmatpush1.bf16.msra.mxu0 0
      %3083 = vmatprep.subr.bf16.mxu0 0
      %3084 = vmatpush1.bf16.msra.mxu0 0
      %3085 = vmatprep.subr.bf16.mxu0 0
      %3086 = vmatpush1.bf16.msra.mxu0 0
      %3087 = vmatprep.subr.bf16.mxu0 0
      %3088 = vmatpush1.bf16.msra.mxu0 0
      %3089 = vmatprep.mubr.bf16.mxu0 0
      %3090 = vmatmul.mubr.bf16.gmra.mrb[0].mxu0 %v2851
      %v3091 = vpop.f32.mrb[0].mxu0
      %v3092 = vadd.f32 0.0, %v3091
      %v3093 = vpop.f32.mrb[0].mxu0
      %v3094 = vpop.f32.mrb[0].mxu0
      %v3095 = vadd.f32 0.0, %v3094
      %v3096 = vpop.f32.mrb[0].mxu0
      %3097 = vmatprep.mubr.bf16.mxu0 0
      %3098 = vmatmul.mubr.bf16.gmra.mrb[0].mxu0 %v2854
      %v3099 = vpop.f32.mrb[0].mxu0
      %v3100 = vadd.f32 0.0, %v3099
      %v3101 = vpop.f32.mrb[0].mxu0
      %v3102 = vpop.f32.mrb[0].mxu0
      %v3103 = vadd.f32 0.0, %v3102
      %v3104 = vpop.f32.mrb[0].mxu0
      %3105 = vmatprep.mubr.bf16.mxu0 0
      %3106 = vmatmul.mubr.bf16.gmra.mrb[0].mxu0 %v2857
      %v3107 = vpop.f32.mrb[0].mxu0
      %v3108 = vadd.f32 0.0, %v3107
      %v3109 = vpop.f32.mrb[0].mxu0
      %v3110 = vpop.f32.mrb[0].mxu0
      %v3111 = vadd.f32 0.0, %v3110
      %v3112 = vpop.f32.mrb[0].mxu0
      %3113 = vmatprep.mubr.bf16.mxu0 0
      %3114 = vmatmul.mubr.bf16.gmra.mrb[0].mxu0 %v2860
      %v3115 = vpop.f32.mrb[0].mxu0
      %v3116 = vadd.f32 0.0, %v3115
      %v3117 = vpop.f32.mrb[0].mxu0
      %v3118 = vpop.f32.mrb[0].mxu0
      %v3119 = vadd.f32 0.0, %v3118
      %v3120 = vpop.f32.mrb[0].mxu0
      %3121 = vmatprep.mubr.bf16.mxu0 0
      %3122 = vmatmul.mubr.bf16.gmra.mrb[0].mxu0 %v2863
      %v3123 = vpop.f32.mrb[0].mxu0
      %v3124 = vadd.f32 0.0, %v3123
      %v3125 = vpop.f32.mrb[0].mxu0
      %v3126 = vpop.f32.mrb[0].mxu0
      %v3127 = vadd.f32 0.0, %v3126
      %v3128 = vpop.f32.mrb[0].mxu0
      %3129 = vmatprep.mubr.bf16.mxu0 0
      %3130 = vmatmul.mubr.bf16.gmra.mrb[0].mxu0 %v2866
      %v3131 = vpop.f32.mrb[0].mxu0
      %v3132 = vadd.f32 0.0, %v3131
      %v3133 = vpop.f32.mrb[0].mxu0
      %v3134 = vpop.f32.mrb[0].mxu0
      %v3135 = vadd.f32 0.0, %v3134
      %v3136 = vpop.f32.mrb[0].mxu0
      %3137 = vmatprep.mubr.bf16.mxu0 0
      %3138 = vmatmul.mubr.bf16.gmra.mrb[0].mxu0 %v2869
      %v3139 = vpop.f32.mrb[0].mxu0
      %v3140 = vadd.f32 0.0, %v3139
      %v3141 = vpop.f32.mrb[0].mxu0
      %v3142 = vpop.f32.mrb[0].mxu0
      %v3143 = vadd.f32 0.0, %v3142
      %v3144 = vpop.f32.mrb[0].mxu0
      %3145 = vmatprep.mubr.bf16.mxu0 0
      %3146 = vmatmul.mubr.bf16.gmra.mrb[0].mxu0 %v2872
      %v3147 = vpop.f32.mrb[0].mxu0
      %v3148 = vadd.f32 0.0, %v3147
      %v3149 = vpop.f32.mrb[0].mxu0
      %v3150 = vpop.f32.mrb[0].mxu0
      %v3151 = vadd.f32 0.0, %v3150
      %v3152 = vpop.f32.mrb[0].mxu0
      %3153 = vmatprep.mubr.bf16.mxu0 0
      %3154 = vmatmul.mubr.bf16.gmra.mrb[0].mxu0 %v2875
      %v3155 = vpop.f32.mrb[0].mxu0
      %v3156 = vadd.f32 0.0, %v3155
      %v3157 = vpop.f32.mrb[0].mxu0
      %v3158 = vpop.f32.mrb[0].mxu0
      %v3159 = vadd.f32 0.0, %v3158
      %v3160 = vpop.f32.mrb[0].mxu0
      %3161 = vmatprep.mubr.bf16.mxu0 0
      %3162 = vmatmul.mubr.bf16.gmra.mrb[0].mxu0 %v2878
      %v3163 = vpop.f32.mrb[0].mxu0
      %v3164 = vadd.f32 0.0, %v3163
      %v3165 = vpop.f32.mrb[0].mxu0
      %v3166 = vpop.f32.mrb[0].mxu0
      %v3167 = vadd.f32 0.0, %v3166
      %v3168 = vpop.f32.mrb[0].mxu0
      %3169 = vmatprep.mubr.bf16.mxu0 0
      %3170 = vmatmul.mubr.bf16.gmra.mrb[0].mxu0 %v2881
      %v3171 = vpop.f32.mrb[0].mxu0
      %v3172 = vadd.f32 0.0, %v3171
      %v3173 = vpop.f32.mrb[0].mxu0
      %v3174 = vpop.f32.mrb[0].mxu0
      %v3175 = vadd.f32 0.0, %v3174
      %v3176 = vpop.f32.mrb[0].mxu0
      %3177 = vmatprep.mubr.bf16.mxu0 0
      %3178 = vmatmul.mubr.bf16.gmra.mrb[0].mxu0 %v2884
      %v3179 = vpop.f32.mrb[0].mxu0
      %v3180 = vadd.f32 0.0, %v3179
      %v3181 = vpop.f32.mrb[0].mxu0
      %v3182 = vpop.f32.mrb[0].mxu0
      %v3183 = vadd.f32 0.0, %v3182
      %v3184 = vpop.f32.mrb[0].mxu0
      %3185 = vmatprep.mubr.bf16.mxu0 0
      %3186 = vmatmul.mubr.bf16.gmra.mrb[0].mxu0 %v2887
      %v3187 = vpop.f32.mrb[0].mxu0
      %v3188 = vadd.f32 0.0, %v3187
      %v3189 = vpop.f32.mrb[0].mxu0
      %v3190 = vpop.f32.mrb[0].mxu0
      %v3191 = vadd.f32 0.0, %v3190
      %v3192 = vpop.f32.mrb[0].mxu0
      %3193 = vmatprep.mubr.bf16.mxu0 0
      %3194 = vmatmul.mubr.bf16.gmra.mrb[0].mxu0 %v2890
      %v3195 = vpop.f32.mrb[0].mxu0
      %v3196 = vadd.f32 0.0, %v3195
      %v3197 = vpop.f32.mrb[0].mxu0
      %v3198 = vpop.f32.mrb[0].mxu0
      %v3199 = vadd.f32 0.0, %v3198
      %v3200 = vpop.f32.mrb[0].mxu0
      %3201 = vmatprep.mubr.bf16.mxu0 0
      %3202 = vmatmul.mubr.bf16.gmra.mrb[0].mxu0 %v2893
      %v3203 = vpop.f32.mrb[0].mxu0
      %v3204 = vadd.f32 0.0, %v3203
      %v3205 = vpop.f32.mrb[0].mxu0
      %v3206 = vpop.f32.mrb[0].mxu0
      %v3207 = vadd.f32 0.0, %v3206
      %v3208 = vpop.f32.mrb[0].mxu0
      %3209 = vmatprep.mubr.bf16.mxu0 0
      %3210 = vmatmul.mubr.bf16.gmra.mrb[0].mxu0 %v2896
      %v3211 = vpop.f32.mrb[0].mxu0
      %v3212 = vadd.f32 0.0, %v3211
      %v3213 = vpop.f32.mrb[0].mxu0
      %v3214 = vpop.f32.mrb[0].mxu0
      %v3215 = vadd.f32 0.0, %v3214
      %v3216 = vpop.f32.mrb[0].mxu0
      %3217 = vmatprep.mubr.bf16.mxu0 0
      %3218 = vmatmul.mubr.bf16.gmra.mrb[0].mxu0 %v2899
      %v3219 = vpop.f32.mrb[0].mxu0
      %v3220 = vadd.f32 0.0, %v3219
      %v3221 = vpop.f32.mrb[0].mxu0
      %v3222 = vpop.f32.mrb[0].mxu0
      %v3223 = vadd.f32 0.0, %v3222
      %v3224 = vpop.f32.mrb[0].mxu0
      %3225 = vmatprep.mubr.bf16.mxu0 0
      %3226 = vmatmul.mubr.bf16.gmra.mrb[0].mxu0 %v2902
      %v3227 = vpop.f32.mrb[0].mxu0
      %v3228 = vadd.f32 0.0, %v3227
      %v3229 = vpop.f32.mrb[0].mxu0
      %v3230 = vpop.f32.mrb[0].mxu0
      %v3231 = vadd.f32 0.0, %v3230
      %v3232 = vpop.f32.mrb[0].mxu0
      %3233 = vmatprep.mubr.bf16.mxu0 0
      %3234 = vmatmul.mubr.bf16.gmra.mrb[0].mxu0 %v2905
      %v3235 = vpop.f32.mrb[0].mxu0
      %v3236 = vadd.f32 0.0, %v3235
      %v3237 = vpop.f32.mrb[0].mxu0
      %v3238 = vpop.f32.mrb[0].mxu0
      %v3239 = vadd.f32 0.0, %v3238
      %v3240 = vpop.f32.mrb[0].mxu0
      %3241 = vmatprep.mubr.bf16.mxu0 0
      %3242 = vmatmul.mubr.bf16.gmra.mrb[0].mxu0 %v2908
      %v3243 = vpop.f32.mrb[0].mxu0
      %v3244 = vadd.f32 0.0, %v3243
      %v3245 = vpop.f32.mrb[0].mxu0
      %v3246 = vpop.f32.mrb[0].mxu0
      %v3247 = vadd.f32 0.0, %v3246
      %v3248 = vpop.f32.mrb[0].mxu0
      %3249 = vmatprep.mubr.bf16.mxu0 0
      %3250 = vmatmul.mubr.bf16.gmra.mrb[0].mxu0 %v2911
      %v3251 = vpop.f32.mrb[0].mxu0
      %v3252 = vadd.f32 0.0, %v3251
      %v3253 = vpop.f32.mrb[0].mxu0
      %v3254 = vpop.f32.mrb[0].mxu0
      %v3255 = vadd.f32 0.0, %v3254
      %v3256 = vpop.f32.mrb[0].mxu0
      %3257 = vmatprep.mubr.bf16.mxu0 0
      %3258 = vmatmul.mubr.bf16.gmra.mrb[0].mxu0 %v2914
      %v3259 = vpop.f32.mrb[0].mxu0
      %v3260 = vadd.f32 0.0, %v3259
      %v3261 = vpop.f32.mrb[0].mxu0
      %v3262 = vpop.f32.mrb[0].mxu0
      %v3263 = vadd.f32 0.0, %v3262
      %v3264 = vpop.f32.mrb[0].mxu0
      %3265 = vmatprep.mubr.bf16.mxu0 0
      %3266 = vmatmul.mubr.bf16.gmra.mrb[0].mxu0 %v2917
      %v3267 = vpop.f32.mrb[0].mxu0
      %v3268 = vadd.f32 0.0, %v3267
      %v3269 = vpop.f32.mrb[0].mxu0
      %v3270 = vpop.f32.mrb[0].mxu0
      %v3271 = vadd.f32 0.0, %v3270
      %v3272 = vpop.f32.mrb[0].mxu0
      %3273 = vmatprep.mubr.bf16.mxu0 0
      %3274 = vmatmul.mubr.bf16.gmra.mrb[0].mxu0 %v2920
      %v3275 = vpop.f32.mrb[0].mxu0
      %v3276 = vadd.f32 0.0, %v3275
      %v3277 = vpop.f32.mrb[0].mxu0
      %v3278 = vpop.f32.mrb[0].mxu0
      %v3279 = vadd.f32 0.0, %v3278
      %v3280 = vpop.f32.mrb[0].mxu0
      %3281 = vmatprep.mubr.bf16.mxu0 0
      %3282 = vmatmul.mubr.bf16.gmra.mrb[0].mxu0 %v2923
      %v3283 = vpop.f32.mrb[0].mxu0
      %v3284 = vadd.f32 0.0, %v3283
      %v3285 = vpop.f32.mrb[0].mxu0
      %v3286 = vpop.f32.mrb[0].mxu0
      %v3287 = vadd.f32 0.0, %v3286
      %v3288 = vpop.f32.mrb[0].mxu0
      %3289 = vmatprep.mubr.bf16.mxu0 0
      %3290 = vmatmul.mubr.bf16.gmra.mrb[0].mxu0 %v2926
      %v3291 = vpop.f32.mrb[0].mxu0
      %v3292 = vadd.f32 0.0, %v3291
      %v3293 = vpop.f32.mrb[0].mxu0
      %v3294 = vpop.f32.mrb[0].mxu0
      %v3295 = vadd.f32 0.0, %v3294
      %v3296 = vpop.f32.mrb[0].mxu0
      %3297 = vmatprep.mubr.bf16.mxu0 0
      %3298 = vmatmul.mubr.bf16.gmra.mrb[0].mxu0 %v2929
      %v3299 = vpop.f32.mrb[0].mxu0
      %v3300 = vadd.f32 0.0, %v3299
      %v3301 = vpop.f32.mrb[0].mxu0
      %v3302 = vpop.f32.mrb[0].mxu0
      %v3303 = vadd.f32 0.0, %v3302
      %v3304 = vpop.f32.mrb[0].mxu0
      %3305 = vmatprep.mubr.bf16.mxu0 0
      %3306 = vmatmul.mubr.bf16.gmra.mrb[0].mxu0 %v2932
      %v3307 = vpop.f32.mrb[0].mxu0
      %v3308 = vadd.f32 0.0, %v3307
      %v3309 = vpop.f32.mrb[0].mxu0
      %v3310 = vpop.f32.mrb[0].mxu0
      %v3311 = vadd.f32 0.0, %v3310
      %v3312 = vpop.f32.mrb[0].mxu0
      %3313 = vmatprep.mubr.bf16.mxu0 0
      %3314 = vmatmul.mubr.bf16.gmra.mrb[0].mxu0 %v2935
      %v3315 = vpop.f32.mrb[0].mxu0
      %v3316 = vadd.f32 0.0, %v3315
      %v3317 = vpop.f32.mrb[0].mxu0
      %v3318 = vpop.f32.mrb[0].mxu0
      %v3319 = vadd.f32 0.0, %v3318
      %v3320 = vpop.f32.mrb[0].mxu0
      %3321 = vmatprep.mubr.bf16.mxu0 0
      %3322 = vmatmul.mubr.bf16.gmra.mrb[0].mxu0 %v2938
      %v3323 = vpop.f32.mrb[0].mxu0
      %v3324 = vadd.f32 0.0, %v3323
      %v3325 = vpop.f32.mrb[0].mxu0
      %v3326 = vpop.f32.mrb[0].mxu0
      %v3327 = vadd.f32 0.0, %v3326
      %v3328 = vpop.f32.mrb[0].mxu0
      %3329 = vmatprep.mubr.bf16.mxu0 0
      %3330 = vmatmul.mubr.bf16.gmra.mrb[0].mxu0 %v2941
      %v3331 = vpop.f32.mrb[0].mxu0
      %v3332 = vadd.f32 0.0, %v3331
      %v3333 = vpop.f32.mrb[0].mxu0
      %v3334 = vpop.f32.mrb[0].mxu0
      %v3335 = vadd.f32 0.0, %v3334
      %v3336 = vpop.f32.mrb[0].mxu0
      %3337 = vmatprep.mubr.bf16.mxu0 0
      %3338 = vmatmul.mubr.bf16.gmra.mrb[0].mxu0 %v2944
      %v3339 = vpop.f32.mrb[0].mxu0
      %v3340 = vadd.f32 0.0, %v3339
      %v3341 = vpop.f32.mrb[0].mxu0
      %v3342 = vpop.f32.mrb[0].mxu0
      %v3343 = vadd.f32 0.0, %v3342
      %v3344 = vpop.f32.mrb[0].mxu0
      %3345 = vmatprep.mubr.bf16.mxu0 0
      %3346 = vmatmul.mubr.bf16.gmra.mrb[0].mxu0 %v2947
      %v3347 = vpop.f32.mrb[0].mxu0
      %v3348 = vadd.f32 0.0, %v3347
      %v3349 = vpop.f32.mrb[0].mxu0
      %v3350 = vpop.f32.mrb[0].mxu0
      %v3351 = vadd.f32 0.0, %v3350
      %v3352 = vpop.f32.mrb[0].mxu0
      %3353 = vmatprep.mubr.bf16.mxu0 0
      %3354 = vmatmul.mubr.bf16.gmra.mrb[0].mxu0 %v2950
      %v3355 = vpop.f32.mrb[0].mxu0
      %v3356 = vadd.f32 0.0, %v3355
      %v3357 = vpop.f32.mrb[0].mxu0
      %v3358 = vpop.f32.mrb[0].mxu0
      %v3359 = vadd.f32 0.0, %v3358
      %v3360 = vpop.f32.mrb[0].mxu0
      %3361 = vmatprep.mubr.bf16.mxu0 0
      %3362 = vmatmul.mubr.bf16.gmra.mrb[0].mxu0 %v2953
      %v3363 = vpop.f32.mrb[0].mxu0
      %v3364 = vadd.f32 0.0, %v3363
      %v3365 = vpop.f32.mrb[0].mxu0
      %v3366 = vpop.f32.mrb[0].mxu0
      %v3367 = vadd.f32 0.0, %v3366
      %v3368 = vpop.f32.mrb[0].mxu0
      %3369 = vmatprep.mubr.bf16.mxu0 0
      %3370 = vmatmul.mubr.bf16.gmra.mrb[0].mxu0 %v2956
      %v3371 = vpop.f32.mrb[0].mxu0
      %v3372 = vadd.f32 0.0, %v3371
      %v3373 = vpop.f32.mrb[0].mxu0
      %v3374 = vpop.f32.mrb[0].mxu0
      %v3375 = vadd.f32 0.0, %v3374
      %v3376 = vpop.f32.mrb[0].mxu0
      %3377 = vmatprep.mubr.bf16.mxu0 0
      %3378 = vmatmul.mubr.bf16.gmra.mrb[0].mxu0 %v2959
      %v3379 = vpop.f32.mrb[0].mxu0
      %v3380 = vadd.f32 0.0, %v3379
      %v3381 = vpop.f32.mrb[0].mxu0
      %v3382 = vpop.f32.mrb[0].mxu0
      %v3383 = vadd.f32 0.0, %v3382
      %v3384 = vpop.f32.mrb[0].mxu0
      %3385 = vmatprep.mubr.bf16.mxu0 0
      %3386 = vmatmul.mubr.bf16.gmra.mrb[0].mxu0 %v2962
      %v3387 = vpop.f32.mrb[0].mxu0
      %v3388 = vadd.f32 0.0, %v3387
      %v3389 = vpop.f32.mrb[0].mxu0
      %v3390 = vpop.f32.mrb[0].mxu0
      %v3391 = vadd.f32 0.0, %v3390
      %v3392 = vpop.f32.mrb[0].mxu0
      %3393 = vmatprep.mubr.bf16.mxu0 0
      %3394 = vmatmul.mubr.bf16.gmra.mrb[0].mxu0 %v2965
      %v3395 = vpop.f32.mrb[0].mxu0
      %v3396 = vadd.f32 0.0, %v3395
      %v3397 = vpop.f32.mrb[0].mxu0
      %v3398 = vpop.f32.mrb[0].mxu0
      %v3399 = vadd.f32 0.0, %v3398
      %v3400 = vpop.f32.mrb[0].mxu0
      %3401 = vmatprep.mubr.bf16.mxu0 0
      %3402 = vmatmul.mubr.bf16.gmra.mrb[0].mxu0 %v2968
      %v3403 = vpop.f32.mrb[0].mxu0
      %v3404 = vadd.f32 0.0, %v3403
      %v3405 = vpop.f32.mrb[0].mxu0
      %v3406 = vpop.f32.mrb[0].mxu0
      %v3407 = vadd.f32 0.0, %v3406
      %v3408 = vpop.f32.mrb[0].mxu0
      %3409 = vmatprep.mubr.bf16.mxu0 0
      %3410 = vmatmul.mubr.bf16.gmra.mrb[0].mxu0 %v2971
      %v3411 = vpop.f32.mrb[0].mxu0
      %v3412 = vadd.f32 0.0, %v3411
      %v3413 = vpop.f32.mrb[0].mxu0
      %v3414 = vpop.f32.mrb[0].mxu0
      %v3415 = vadd.f32 0.0, %v3414
      %v3416 = vpop.f32.mrb[0].mxu0
      %3417 = vmatprep.mubr.bf16.mxu0 0
      %3418 = vmatmul.mubr.bf16.gmra.mrb[0].mxu0 %v2974
      %v3419 = vpop.f32.mrb[0].mxu0
      %v3420 = vadd.f32 0.0, %v3419
      %v3421 = vpop.f32.mrb[0].mxu0
      %v3422 = vpop.f32.mrb[0].mxu0
      %v3423 = vadd.f32 0.0, %v3422
      %v3424 = vpop.f32.mrb[0].mxu0
      %3425 = vmatprep.mubr.bf16.mxu0 0
      %3426 = vmatmul.mubr.bf16.gmra.mrb[0].mxu0 %v2977
      %v3427 = vpop.f32.mrb[0].mxu0
      %v3428 = vadd.f32 0.0, %v3427
      %v3429 = vpop.f32.mrb[0].mxu0
      %v3430 = vpop.f32.mrb[0].mxu0
      %v3431 = vadd.f32 0.0, %v3430
      %v3432 = vpop.f32.mrb[0].mxu0
      %3433 = vmatprep.mubr.bf16.mxu0 0
      %3434 = vmatmul.mubr.bf16.gmra.mrb[0].mxu0 %v2980
      %v3435 = vpop.f32.mrb[0].mxu0
      %v3436 = vadd.f32 0.0, %v3435
      %v3437 = vpop.f32.mrb[0].mxu0
      %v3438 = vpop.f32.mrb[0].mxu0
      %v3439 = vadd.f32 0.0, %v3438
      %v3440 = vpop.f32.mrb[0].mxu0
      %3441 = vmatprep.mubr.bf16.mxu0 0
      %3442 = vmatmul.mubr.bf16.gmra.mrb[0].mxu0 %v2983
      %v3443 = vpop.f32.mrb[0].mxu0
      %v3444 = vadd.f32 0.0, %v3443
      %v3445 = vpop.f32.mrb[0].mxu0
      %v3446 = vpop.f32.mrb[0].mxu0
      %v3447 = vadd.f32 0.0, %v3446
      %v3448 = vpop.f32.mrb[0].mxu0
      %3449 = vmatprep.mubr.bf16.mxu0 0
      %3450 = vmatmul.mubr.bf16.gmra.mrb[0].mxu0 %v2986
      %v3451 = vpop.f32.mrb[0].mxu0
      %v3452 = vadd.f32 0.0, %v3451
      %v3453 = vpop.f32.mrb[0].mxu0
      %v3454 = vpop.f32.mrb[0].mxu0
      %v3455 = vadd.f32 0.0, %v3454
      %v3456 = vpop.f32.mrb[0].mxu0
      %3457 = vmatprep.mubr.bf16.mxu0 0
      %3458 = vmatmul.mubr.bf16.gmra.mrb[0].mxu0 %v2989
      %v3459 = vpop.f32.mrb[0].mxu0
      %v3460 = vadd.f32 0.0, %v3459
      %v3461 = vpop.f32.mrb[0].mxu0
      %v3462 = vpop.f32.mrb[0].mxu0
      %v3463 = vadd.f32 0.0, %v3462
      %v3464 = vpop.f32.mrb[0].mxu0
      %3465 = vmatprep.mubr.bf16.mxu0 0
      %3466 = vmatmul.mubr.bf16.gmra.mrb[0].mxu0 %v2992
      %v3467 = vpop.f32.mrb[0].mxu0
      %v3468 = vadd.f32 0.0, %v3467
      %v3469 = vpop.f32.mrb[0].mxu0
      %v3470 = vpop.f32.mrb[0].mxu0
      %v3471 = vadd.f32 0.0, %v3470
      %v3472 = vpop.f32.mrb[0].mxu0
      %3473 = vmatprep.mubr.bf16.mxu0 0
      %3474 = vmatmul.mubr.bf16.gmra.mrb[0].mxu0 %v2995
      %v3475 = vpop.f32.mrb[0].mxu0
      %v3476 = vadd.f32 0.0, %v3475
      %v3477 = vpop.f32.mrb[0].mxu0
      %v3478 = vpop.f32.mrb[0].mxu0
      %v3479 = vadd.f32 0.0, %v3478
      %v3480 = vpop.f32.mrb[0].mxu0
      %3481 = vmatprep.mubr.bf16.mxu0 0
      %3482 = vmatmul.mubr.bf16.gmra.mrb[0].mxu0 %v2998
      %v3483 = vpop.f32.mrb[0].mxu0
      %v3484 = vadd.f32 0.0, %v3483
      %v3485 = vpop.f32.mrb[0].mxu0
      %v3486 = vpop.f32.mrb[0].mxu0
      %v3487 = vadd.f32 0.0, %v3486
      %v3488 = vpop.f32.mrb[0].mxu0
      %3489 = vmatprep.mubr.bf16.mxu0 0
      %3490 = vmatmul.mubr.bf16.gmra.mrb[0].mxu0 %v3001
      %v3491 = vpop.f32.mrb[0].mxu0
      %v3492 = vadd.f32 0.0, %v3491
      %v3493 = vpop.f32.mrb[0].mxu0
      %v3494 = vpop.f32.mrb[0].mxu0
      %v3495 = vadd.f32 0.0, %v3494
      %v3496 = vpop.f32.mrb[0].mxu0
      %3497 = vmatprep.mubr.bf16.mxu0 0
      %3498 = vmatmul.mubr.bf16.gmra.mrb[0].mxu0 %v3004
      %v3499 = vpop.f32.mrb[0].mxu0
      %v3500 = vadd.f32 0.0, %v3499
      %v3501 = vpop.f32.mrb[0].mxu0
      %v3502 = vpop.f32.mrb[0].mxu0
      %v3503 = vadd.f32 0.0, %v3502
      %v3504 = vpop.f32.mrb[0].mxu0
      %3505 = vmatprep.mubr.bf16.mxu0 0
      %3506 = vmatmul.mubr.bf16.gmra.mrb[0].mxu0 %v3007
      %v3507 = vpop.f32.mrb[0].mxu0
      %v3508 = vadd.f32 0.0, %v3507
      %v3509 = vpop.f32.mrb[0].mxu0
      %v3510 = vpop.f32.mrb[0].mxu0
      %v3511 = vadd.f32 0.0, %v3510
      %v3512 = vpop.f32.mrb[0].mxu0
      %3513 = vmatprep.mubr.bf16.mxu0 0
      %3514 = vmatmul.mubr.bf16.gmra.mrb[0].mxu0 %v3010
      %v3515 = vpop.f32.mrb[0].mxu0
      %v3516 = vadd.f32 0.0, %v3515
      %v3517 = vpop.f32.mrb[0].mxu0
      %v3518 = vpop.f32.mrb[0].mxu0
      %v3519 = vadd.f32 0.0, %v3518
      %v3520 = vpop.f32.mrb[0].mxu0
      %3521 = vmatprep.mubr.bf16.mxu0 0
      %3522 = vmatmul.mubr.bf16.gmra.mrb[0].mxu0 %v3013
      %v3523 = vpop.f32.mrb[0].mxu0
      %v3524 = vadd.f32 0.0, %v3523
      %v3525 = vpop.f32.mrb[0].mxu0
      %v3526 = vpop.f32.mrb[0].mxu0
      %v3527 = vadd.f32 0.0, %v3526
      %v3528 = vpop.f32.mrb[0].mxu0
      %3529 = vmatprep.mubr.bf16.mxu0 0
      %3530 = vmatmul.mubr.bf16.gmra.mrb[0].mxu0 %v3016
      %v3531 = vpop.f32.mrb[0].mxu0
      %v3532 = vadd.f32 0.0, %v3531
      %v3533 = vpop.f32.mrb[0].mxu0
      %v3534 = vpop.f32.mrb[0].mxu0
      %v3535 = vadd.f32 0.0, %v3534
      %v3536 = vpop.f32.mrb[0].mxu0
      %3537 = vmatprep.mubr.bf16.mxu0 0
      %3538 = vmatmul.mubr.bf16.gmra.mrb[0].mxu0 %v3019
      %v3539 = vpop.f32.mrb[0].mxu0
      %v3540 = vadd.f32 0.0, %v3539
      %v3541 = vpop.f32.mrb[0].mxu0
      %v3542 = vpop.f32.mrb[0].mxu0
      %v3543 = vadd.f32 0.0, %v3542
      %v3544 = vpop.f32.mrb[0].mxu0
      %3545 = vmatprep.mubr.bf16.mxu0 0
      %3546 = vmatmul.mubr.bf16.gmra.mrb[0].mxu0 %v3022
      %v3547 = vpop.f32.mrb[0].mxu0
      %v3548 = vadd.f32 0.0, %v3547
      %v3549 = vpop.f32.mrb[0].mxu0
      %v3550 = vpop.f32.mrb[0].mxu0
      %v3551 = vadd.f32 0.0, %v3550
      %v3552 = vpop.f32.mrb[0].mxu0
      %3553 = vmatprep.mubr.bf16.mxu0 0
      %3554 = vmatmul.mubr.bf16.gmra.mrb[0].mxu0 %v3025
      %v3555 = vpop.f32.mrb[0].mxu0
      %v3556 = vadd.f32 0.0, %v3555
      %v3557 = vpop.f32.mrb[0].mxu0
      %v3558 = vpop.f32.mrb[0].mxu0
      %v3559 = vadd.f32 0.0, %v3558
      %v3560 = vpop.f32.mrb[0].mxu0
      %3561 = vmatprep.mubr.bf16.mxu0 0
      %3562 = vmatmul.mubr.bf16.gmra.mrb[0].mxu0 %v3028
      %v3563 = vpop.f32.mrb[0].mxu0
      %v3564 = vadd.f32 0.0, %v3563
      %v3565 = vpop.f32.mrb[0].mxu0
      %v3566 = vpop.f32.mrb[0].mxu0
      %v3567 = vadd.f32 0.0, %v3566
      %v3568 = vpop.f32.mrb[0].mxu0
      %3569 = vmatprep.mubr.bf16.mxu0 0
      %3570 = vmatmul.mubr.bf16.gmra.mrb[0].mxu0 %v3031
      %v3571 = vpop.f32.mrb[0].mxu0
      %v3572 = vadd.f32 0.0, %v3571
      %v3573 = vpop.f32.mrb[0].mxu0
      %v3574 = vpop.f32.mrb[0].mxu0
      %v3575 = vadd.f32 0.0, %v3574
      %v3576 = vpop.f32.mrb[0].mxu0
      %3577 = vmatprep.mubr.bf16.mxu0 0
      %3578 = vmatmul.mubr.bf16.gmra.mrb[0].mxu0 %v3034
      %v3579 = vpop.f32.mrb[0].mxu0
      %v3580 = vadd.f32 0.0, %v3579
      %v3581 = vpop.f32.mrb[0].mxu0
      %v3582 = vpop.f32.mrb[0].mxu0
      %v3583 = vadd.f32 0.0, %v3582
      %v3584 = vpop.f32.mrb[0].mxu0
      %3585 = vmatprep.mubr.bf16.mxu0 0
      %3586 = vmatmul.mubr.bf16.gmra.mrb[0].mxu0 %v3037
      %v3587 = vpop.f32.mrb[0].mxu0
      %v3588 = vadd.f32 0.0, %v3587
      %v3589 = vpop.f32.mrb[0].mxu0
      %v3590 = vpop.f32.mrb[0].mxu0
      %v3591 = vadd.f32 0.0, %v3590
      %v3592 = vpop.f32.mrb[0].mxu0
      %3593 = vmatprep.mubr.bf16.mxu0 0
      %3594 = vmatmul.mubr.bf16.gmra.mrb[0].mxu0 %v3040
      %v3595 = vpop.f32.mrb[0].mxu0
      %v3596 = vadd.f32 0.0, %v3595
      %v3597 = vpop.f32.mrb[0].mxu0
      %v3598 = vpop.f32.mrb[0].mxu0
      %v3599 = vadd.f32 0.0, %v3598
      %v3600 = vpop.f32.mrb[0].mxu0
      %3601 = vmatprep.mubr.bf16.mxu0 0
      %3602 = vmatmul.mubr.bf16.gmra.mrb[0].mxu0 %v3043
      %v3603 = vpop.f32.mrb[0].mxu0
      %v3604 = vadd.f32 0.0, %v3603
      %v3605 = vpop.f32.mrb[0].mxu0
      %v3606 = vpop.f32.mrb[0].mxu0
      %v3607 = vadd.f32 0.0, %v3606
      %v3608 = vpop.f32.mrb[0].mxu0
      %3609 = vmatprep.mubr.bf16.mxu0 0
      %3610 = vmatmul.mubr.bf16.gmra.mrb[0].mxu0 %v3046
      %v3611 = vpop.f32.mrb[0].mxu0
      %v3612 = vadd.f32 0.0, %v3611
      %v3613 = vpop.f32.mrb[0].mxu0
      %v3614 = vpop.f32.mrb[0].mxu0
      %v3615 = vadd.f32 0.0, %v3614
      %v3616 = vpop.f32.mrb[0].mxu0
      %3617 = vmatprep.mubr.bf16.mxu0 0
      %3618 = vmatmul.mubr.bf16.gmra.mrb[0].mxu0 %v3049
      %v3619 = vpop.f32.mrb[0].mxu0
      %v3620 = vadd.f32 0.0, %v3619
      %v3621 = vpop.f32.mrb[0].mxu0
      %v3622 = vpop.f32.mrb[0].mxu0
      %v3623 = vadd.f32 0.0, %v3622
      %v3624 = vpop.f32.mrb[0].mxu0
      %3625 = vmatprep.mubr.bf16.mxu0 0
      %3626 = vmatmul.mubr.bf16.gmra.mrb[0].mxu0 %v3052
      %v3627 = vpop.f32.mrb[0].mxu0
      %v3628 = vadd.f32 0.0, %v3627
      %v3629 = vpop.f32.mrb[0].mxu0
      %v3630 = vpop.f32.mrb[0].mxu0
      %v3631 = vadd.f32 0.0, %v3630
      %v3632 = vpop.f32.mrb[0].mxu0
      %3633 = vdwg.mxu0
      %v3634 = vadd.f32 %v2164, %v3092
      %v3635 = vadd.f32 %v2167, %v3095
      %v3636 = vadd.f32 %v2172, %v3100
      %v3637 = vadd.f32 %v2175, %v3103
      %v3638 = vadd.f32 %v2180, %v3108
      %v3639 = vadd.f32 %v2183, %v3111
      %v3640 = vadd.f32 %v2188, %v3116
      %v3641 = vadd.f32 %v2191, %v3119
      %v3642 = vadd.f32 %v2196, %v3124
      %v3643 = vadd.f32 %v2199, %v3127
      %v3644 = vadd.f32 %v2204, %v3132
      %v3645 = vadd.f32 %v2207, %v3135
      %v3646 = vadd.f32 %v2212, %v3140
      %v3647 = vadd.f32 %v2215, %v3143
      %v3648 = vadd.f32 %v2220, %v3148
      %v3649 = vadd.f32 %v2223, %v3151
      %v3650 = vadd.f32 %v2228, %v3156
      %v3651 = vadd.f32 %v2231, %v3159
      %v3652 = vadd.f32 %v2236, %v3164
      %v3653 = vadd.f32 %v2239, %v3167
      %v3654 = vadd.f32 %v2244, %v3172
      %v3655 = vadd.f32 %v2247, %v3175
      %v3656 = vadd.f32 %v2252, %v3180
      %v3657 = vadd.f32 %v2255, %v3183
      %v3658 = vadd.f32 %v2260, %v3188
      %v3659 = vadd.f32 %v2263, %v3191
      %v3660 = vadd.f32 %v2268, %v3196
      %v3661 = vadd.f32 %v2271, %v3199
      %v3662 = vadd.f32 %v2276, %v3204
      %v3663 = vadd.f32 %v2279, %v3207
      %v3664 = vadd.f32 %v2284, %v3212
      %v3665 = vadd.f32 %v2287, %v3215
      %v3666 = vadd.f32 %v2292, %v3220
      %v3667 = vadd.f32 %v2295, %v3223
      %v3668 = vadd.f32 %v2300, %v3228
      %v3669 = vadd.f32 %v2303, %v3231
      %v3670 = vadd.f32 %v2308, %v3236
      %v3671 = vadd.f32 %v2311, %v3239
      %v3672 = vadd.f32 %v2316, %v3244
      %v3673 = vadd.f32 %v2319, %v3247
      %v3674 = vadd.f32 %v2324, %v3252
      %v3675 = vadd.f32 %v2327, %v3255
      %v3676 = vadd.f32 %v2332, %v3260
      %v3677 = vadd.f32 %v2335, %v3263
      %v3678 = vadd.f32 %v2340, %v3268
      %v3679 = vadd.f32 %v2343, %v3271
      %v3680 = vadd.f32 %v2348, %v3276
      %v3681 = vadd.f32 %v2351, %v3279
      %v3682 = vadd.f32 %v2356, %v3284
      %v3683 = vadd.f32 %v2359, %v3287
      %v3684 = vadd.f32 %v2364, %v3292
      %v3685 = vadd.f32 %v2367, %v3295
      %v3686 = vadd.f32 %v2372, %v3300
      %v3687 = vadd.f32 %v2375, %v3303
      %v3688 = vadd.f32 %v2380, %v3308
      %v3689 = vadd.f32 %v2383, %v3311
      %v3690 = vadd.f32 %v2388, %v3316
      %v3691 = vadd.f32 %v2391, %v3319
      %v3692 = vadd.f32 %v2396, %v3324
      %v3693 = vadd.f32 %v2399, %v3327
      %v3694 = vadd.f32 %v2404, %v3332
      %v3695 = vadd.f32 %v2407, %v3335
      %v3696 = vadd.f32 %v2412, %v3340
      %v3697 = vadd.f32 %v2415, %v3343
      %v3698 = vadd.f32 %v2420, %v3348
      %v3699 = vadd.f32 %v2423, %v3351
      %v3700 = vadd.f32 %v2428, %v3356
      %v3701 = vadd.f32 %v2431, %v3359
      %v3702 = vadd.f32 %v2436, %v3364
      %v3703 = vadd.f32 %v2439, %v3367
      %v3704 = vadd.f32 %v2444, %v3372
      %v3705 = vadd.f32 %v2447, %v3375
      %v3706 = vadd.f32 %v2452, %v3380
      %v3707 = vadd.f32 %v2455, %v3383
      %v3708 = vadd.f32 %v2460, %v3388
      %v3709 = vadd.f32 %v2463, %v3391
      %v3710 = vadd.f32 %v2468, %v3396
      %v3711 = vadd.f32 %v2471, %v3399
      %v3712 = vadd.f32 %v2476, %v3404
      %v3713 = vadd.f32 %v2479, %v3407
      %v3714 = vadd.f32 %v2484, %v3412
      %v3715 = vadd.f32 %v2487, %v3415
      %v3716 = vadd.f32 %v2492, %v3420
      %v3717 = vadd.f32 %v2495, %v3423
      %v3718 = vadd.f32 %v2500, %v3428
      %v3719 = vadd.f32 %v2503, %v3431
      %v3720 = vadd.f32 %v2508, %v3436
      %v3721 = vadd.f32 %v2511, %v3439
      %v3722 = vadd.f32 %v2516, %v3444
      %v3723 = vadd.f32 %v2519, %v3447
      %v3724 = vadd.f32 %v2524, %v3452
      %v3725 = vadd.f32 %v2527, %v3455
      %v3726 = vadd.f32 %v2532, %v3460
      %v3727 = vadd.f32 %v2535, %v3463
      %v3728 = vadd.f32 %v2540, %v3468
      %v3729 = vadd.f32 %v2543, %v3471
      %v3730 = vadd.f32 %v2548, %v3476
      %v3731 = vadd.f32 %v2551, %v3479
      %v3732 = vadd.f32 %v2556, %v3484
      %v3733 = vadd.f32 %v2559, %v3487
      %v3734 = vadd.f32 %v2564, %v3492
      %v3735 = vadd.f32 %v2567, %v3495
      %v3736 = vadd.f32 %v2572, %v3500
      %v3737 = vadd.f32 %v2575, %v3503
      %v3738 = vadd.f32 %v2580, %v3508
      %v3739 = vadd.f32 %v2583, %v3511
      %v3740 = vadd.f32 %v2588, %v3516
      %v3741 = vadd.f32 %v2591, %v3519
      %v3742 = vadd.f32 %v2596, %v3524
      %v3743 = vadd.f32 %v2599, %v3527
      %v3744 = vadd.f32 %v2604, %v3532
      %v3745 = vadd.f32 %v2607, %v3535
      %v3746 = vadd.f32 %v2612, %v3540
      %v3747 = vadd.f32 %v2615, %v3543
      %v3748 = vadd.f32 %v2620, %v3548
      %v3749 = vadd.f32 %v2623, %v3551
      %v3750 = vadd.f32 %v2628, %v3556
      %v3751 = vadd.f32 %v2631, %v3559
      %v3752 = vadd.f32 %v2636, %v3564
      %v3753 = vadd.f32 %v2639, %v3567
      %v3754 = vadd.f32 %v2644, %v3572
      %v3755 = vadd.f32 %v2647, %v3575
      %v3756 = vadd.f32 %v2652, %v3580
      %v3757 = vadd.f32 %v2655, %v3583
      %v3758 = vadd.f32 %v2660, %v3588
      %v3759 = vadd.f32 %v2663, %v3591
      %v3760 = vadd.f32 %v2668, %v3596
      %v3761 = vadd.f32 %v2671, %v3599
      %v3762 = vadd.f32 %v2676, %v3604
      %v3763 = vadd.f32 %v2679, %v3607
      %v3764 = vadd.f32 %v2684, %v3612
      %v3765 = vadd.f32 %v2687, %v3615
      %v3766 = vadd.f32 %v2692, %v3620
      %v3767 = vadd.f32 %v2695, %v3623
      %v3768 = vadd.f32 %v2700, %v3628
      %v3769 = vadd.f32 %v2703, %v3631
      %v3770 = vld [vmem:[%s165 + $0x10] sm:$0xe]
      %v3771 = vld [vmem:[%s165 + $0x14] sm:$0xf]
      %v3772 = vld [vmem:[%s165 + $0x18] sm:$0xf]
      %v3773 = vld [vmem:[%s165 + $0x1c] sm:$0xf]
      %v3774 = vld [vmem:[%s165 + $0x20] sm:$0xf]
      %v3775 = vld [vmem:[%s165 + $0x24] sm:$0xf]
      %v3776 = vld [vmem:[%s165 + $0x28] sm:$0xf]
      %v3777 = vld [vmem:[%s165 + $0x2c] sm:$0xf]
      %v3778 = vld [vmem:[%s165 + $0x30] sm:$0xf]
      %v3779 = vld [vmem:[%s165 + $0x34] sm:$0xf]
      %v3780 = vld [vmem:[%s165 + $0x38] sm:$0xf]
      %v3781 = vld [vmem:[%s165 + $0x3c] sm:$0xf]
      %v3782 = vld [vmem:[%s165 + $0x40] sm:$0xf]
      %v3783 = vld [vmem:[%s165 + $0x44] sm:$0xf]
      %v3784 = vld [vmem:[%s165 + $0x48] sm:$0xf]
      %v3785 = vld [vmem:[%s165 + $0x4c] sm:$0xf]
      %v3786 = vld [vmem:[%s165 + $0x50] sm:$0xf]
      %v3787 = vld [vmem:[%s165 + $0x54] sm:$0xf]
      %v3788 = vld [vmem:[%s165 + $0x58] sm:$0xf]
      %v3789 = vld [vmem:[%s165 + $0x5c] sm:$0xf]
      %v3790 = vld [vmem:[%s165 + $0x60] sm:$0xf]
      %v3791 = vld [vmem:[%s165 + $0x64] sm:$0xf]
      %v3792 = vld [vmem:[%s165 + $0x68] sm:$0xf]
      %v3793 = vld [vmem:[%s165 + $0x6c] sm:$0xf]
      %v3794 = vld [vmem:[%s165 + $0x70] sm:$0xf]
      %v3795 = vld [vmem:[%s165 + $0x74] sm:$0xf]
      %v3796 = vld [vmem:[%s165 + $0x78] sm:$0xf]
      %v3797 = vld [vmem:[%s165 + $0x7c] sm:$0xf]
      %v3798 = vld [vmem:[%s165 + $0x80] sm:$0xf]
      %v3799 = vld [vmem:[%s165 + $0x84] sm:$0xf]
      %v3800 = vld [vmem:[%s165 + $0x88] sm:$0xf]
      %v3801 = vld [vmem:[%s165 + $0x8c] sm:$0xf]
      %v3802 = vld [vmem:[%s165 + $0x90] sm:$0xf]
      %v3803 = vld [vmem:[%s165 + $0x94] sm:$0xf]
      %v3804 = vld [vmem:[%s165 + $0x98] sm:$0xf]
      %v3805 = vld [vmem:[%s165 + $0x9c] sm:$0xf]
      %v3806 = vld [vmem:[%s165 + $0xa0] sm:$0xf]
      %v3807 = vld [vmem:[%s165 + $0xa4] sm:$0xf]
      %v3808 = vld [vmem:[%s165 + $0xa8] sm:$0xf]
      %v3809 = vld [vmem:[%s165 + $0xac] sm:$0xf]
      %v3810 = vld [vmem:[%s165 + $0xb0] sm:$0xf]
      %v3811 = vld [vmem:[%s165 + $0xb4] sm:$0xf]
      %v3812 = vld [vmem:[%s165 + $0xb8] sm:$0xf]
      %v3813 = vld [vmem:[%s165 + $0xbc] sm:$0xf]
      %v3814 = vld [vmem:[%s165 + $0xc0] sm:$0xf]
      %v3815 = vld [vmem:[%s165 + $0xc4] sm:$0xf]
      %v3816 = vld [vmem:[%s165 + $0xc8] sm:$0xf]
      %v3817 = vld [vmem:[%s165 + $0xcc] sm:$0xf]
      %v3818 = vld [vmem:[%s165 + $0xd0] sm:$0xf]
      %v3819 = vld [vmem:[%s165 + $0xd4] sm:$0xf]
      %v3820 = vld [vmem:[%s165 + $0xd8] sm:$0xf]
      %v3821 = vld [vmem:[%s165 + $0xdc] sm:$0xf]
      %v3822 = vld [vmem:[%s165 + $0xe0] sm:$0xf]
      %v3823 = vld [vmem:[%s165 + $0xe4] sm:$0xf]
      %v3824 = vld [vmem:[%s165 + $0xe8] sm:$0xf]
      %v3825 = vld [vmem:[%s165 + $0xec] sm:$0xf]
      %v3826 = vld [vmem:[%s165 + $0xf0] sm:$0xf]
      %v3827 = vld [vmem:[%s165 + $0xf4] sm:$0xf]
      %v3828 = vld [vmem:[%s165 + $0xf8] sm:$0xf]
      %v3829 = vld [vmem:[%s165 + $0xfc] sm:$0xf]
      %v3830 = vld [vmem:[%s165 + $0x100] sm:$0xf]
      %v3831 = vld [vmem:[%s165 + $0x104] sm:$0xf]
      %v3832 = vld [vmem:[%s165 + $0x108] sm:$0xf]
      %v3833 = vld [vmem:[%s165 + $0x10c] sm:$0xf]
      %v3834 = vld [vmem:[%s165 + $0x110] sm:$0xf]
      %v3835 = vld [vmem:[%s165 + $0x114] sm:$0xf]
      %v3836 = vld [vmem:[%s165 + $0x118] sm:$0xf]
      %v3837 = vld [vmem:[%s165 + $0x11c] sm:$0xf]
      %v3838 = vld [vmem:[%s165 + $0x120] sm:$0xf]
      %v3839 = vld [vmem:[%s165 + $0x124] sm:$0xf]
      %v3840 = vld [vmem:[%s165 + $0x128] sm:$0xf]
      %v3841 = vld [vmem:[%s165 + $0x12c] sm:$0xf]
      %v3842 = vld [vmem:[%s165 + $0x130] sm:$0xf]
      %v3843 = vld [vmem:[%s165 + $0x134] sm:$0xf]
      %v3844 = vld [vmem:[%s165 + $0x138] sm:$0xf]
      %v3845 = vld [vmem:[%s165 + $0x13c] sm:$0xf]
      %v3846 = vld [vmem:[%s165 + $0x140] sm:$0xf]
      %v3847 = vld [vmem:[%s165 + $0x144] sm:$0xf]
      %v3848 = vld [vmem:[%s165 + $0x148] sm:$0xf]
      %v3849 = vld [vmem:[%s165 + $0x14c] sm:$0xf]
      %v3850 = vld [vmem:[%s165 + $0x150] sm:$0xf]
      %v3851 = vld [vmem:[%s165 + $0x154] sm:$0xf]
      %v3852 = vld [vmem:[%s165 + $0x158] sm:$0xf]
      %v3853 = vld [vmem:[%s165 + $0x15c] sm:$0xf]
      %v3854 = vld [vmem:[%s165 + $0x160] sm:$0xf]
      %v3855 = vld [vmem:[%s165 + $0x164] sm:$0xf]
      %v3856 = vld [vmem:[%s165 + $0x168] sm:$0xf]
      %v3857 = vld [vmem:[%s165 + $0x16c] sm:$0xf]
      %v3858 = vld [vmem:[%s165 + $0x170] sm:$0xf]
      %v3859 = vld [vmem:[%s165 + $0x174] sm:$0xf]
      %v3860 = vld [vmem:[%s165 + $0x178] sm:$0xf]
      %v3861 = vld [vmem:[%s165 + $0x17c] sm:$0xf]
      %v3862 = vld [vmem:[%s165 + $0x180] sm:$0xf]
      %v3863 = vld [vmem:[%s165 + $0x184] sm:$0xf]
      %v3864 = vld [vmem:[%s165 + $0x188] sm:$0xf]
      %v3865 = vld [vmem:[%s165 + $0x18c] sm:$0xf]
      %v3866 = vld [vmem:[%s165 + $0x190] sm:$0xf]
      %v3867 = vld [vmem:[%s165 + $0x194] sm:$0xf]
      %v3868 = vld [vmem:[%s165 + $0x198] sm:$0xf]
      %v3869 = vld [vmem:[%s165 + $0x19c] sm:$0xf]
      %v3870 = vld [vmem:[%s165 + $0x1a0] sm:$0xf]
      %v3871 = vld [vmem:[%s165 + $0x1a4] sm:$0xf]
      %v3872 = vld [vmem:[%s165 + $0x1a8] sm:$0xf]
      %v3873 = vld [vmem:[%s165 + $0x1ac] sm:$0xf]
      %v3874 = vld [vmem:[%s165 + $0x1b0] sm:$0xf]
      %v3875 = vld [vmem:[%s165 + $0x1b4] sm:$0xf]
      %v3876 = vld [vmem:[%s165 + $0x1b8] sm:$0xf]
      %v3877 = vld [vmem:[%s165 + $0x1bc] sm:$0xf]
      %v3878 = vld [vmem:[%s165 + $0x1c0] sm:$0xf]
      %v3879 = vld [vmem:[%s165 + $0x1c4] sm:$0xf]
      %v3880 = vld [vmem:[%s165 + $0x1c8] sm:$0xf]
      %v3881 = vld [vmem:[%s165 + $0x1cc] sm:$0xf]
      %v3882 = vld [vmem:[%s165 + $0x1d0] sm:$0xf]
      %v3883 = vld [vmem:[%s165 + $0x1d4] sm:$0xf]
      %v3884 = vld [vmem:[%s165 + $0x1d8] sm:$0xf]
      %v3885 = vld [vmem:[%s165 + $0x1dc] sm:$0xf]
      %v3886 = vld [vmem:[%s165 + $0x1e0] sm:$0xf]
      %v3887 = vld [vmem:[%s165 + $0x1e4] sm:$0xf]
      %v3888 = vld [vmem:[%s165 + $0x1e8] sm:$0xf]
      %v3889 = vld [vmem:[%s165 + $0x1ec] sm:$0xf]
      %v3890 = vld [vmem:[%s165 + $0x1f0] sm:$0xf]
      %v3891 = vld [vmem:[%s165 + $0x1f4] sm:$0xf]
      %v3892 = vld [vmem:[%s165 + $0x1f8] sm:$0xf]
      %v3893 = vld [vmem:[%s165 + $0x1fc] sm:$0xf]
      %v3894 = vld [vmem:[%s165 + $0x200] sm:$0xf]
      %v3895 = vld [vmem:[%s165 + $0x204] sm:$0xf]
      %v3896 = vld [vmem:[%s165 + $0x208] sm:$0xf]
      %v3897 = vld [vmem:[%s165 + $0x20c] sm:$0xf]
      %v3898 = vld [vmem:[%s165 + $0x210] sm:$0xf]
      %v3899 = vld [vmem:[%s165 + $0x214] sm:$0xf]
      %v3900 = vld [vmem:[%s165 + $0x218] sm:$0xf]
      %v3901 = vld [vmem:[%s165 + $0x21c] sm:$0xf]
      %v3902 = vld [vmem:[%s165 + $0x220] sm:$0xf]
      %v3903 = vld [vmem:[%s165 + $0x224] sm:$0xf]
      %v3904 = vld [vmem:[%s165 + $0x228] sm:$0xf]
      %v3905 = vld [vmem:[%s165 + $0x22c] sm:$0xf]
      %v3906 = vld [vmem:[%s165 + $0x230] sm:$0x1]
      %s3907 = scalar_lea.vmem %s1, 12
      %v3908 = vld [vmem:[%s3907] sm:$0xf]
      %v4046 = vunpack.c.l.b16 %v3770
      %v4047 = vunpack.c.l.b16 %v3771
      %v4048 = vunpack.c.l.b16 %v3772
      %v4049 = vunpack.c.l.b16 %v3773
      %v4050 = vunpack.c.l.b16 %v3774
      %v4051 = vunpack.c.l.b16 %v3775
      %v4052 = vunpack.c.l.b16 %v3776
      %v4053 = vunpack.c.l.b16 %v3777
      %v4054 = vunpack.c.l.b16 %v3778
      %v4055 = vunpack.c.l.b16 %v3779
      %v4056 = vunpack.c.l.b16 %v3780
      %v4057 = vunpack.c.l.b16 %v3781
      %v4058 = vunpack.c.l.b16 %v3782
      %v4059 = vunpack.c.l.b16 %v3783
      %v4060 = vunpack.c.l.b16 %v3784
      %v4061 = vunpack.c.l.b16 %v3785
      %v4062 = vunpack.c.l.b16 %v3786
      %v4063 = vunpack.c.l.b16 %v3787
      %v4064 = vunpack.c.l.b16 %v3788
      %v4065 = vunpack.c.l.b16 %v3789
      %v4066 = vunpack.c.l.b16 %v3790
      %v4067 = vunpack.c.l.b16 %v3791
      %v4068 = vunpack.c.l.b16 %v3792
      %v4069 = vunpack.c.l.b16 %v3793
      %v4070 = vunpack.c.l.b16 %v3794
      %v4071 = vunpack.c.l.b16 %v3795
      %v4072 = vunpack.c.l.b16 %v3796
      %v4073 = vunpack.c.l.b16 %v3797
      %v4074 = vunpack.c.l.b16 %v3798
      %v4075 = vunpack.c.l.b16 %v3799
      %v4076 = vunpack.c.l.b16 %v3800
      %v4077 = vunpack.c.l.b16 %v3801
      %v4078 = vunpack.c.l.b16 %v3802
      %v4079 = vunpack.c.l.b16 %v3803
      %v4080 = vunpack.c.l.b16 %v3804
      %v4081 = vunpack.c.l.b16 %v3805
      %v4082 = vunpack.c.l.b16 %v3806
      %v4083 = vunpack.c.l.b16 %v3807
      %v4084 = vunpack.c.l.b16 %v3808
      %v4085 = vunpack.c.l.b16 %v3809
      %v4086 = vunpack.c.l.b16 %v3810
      %v4087 = vunpack.c.l.b16 %v3811
      %v4088 = vunpack.c.l.b16 %v3812
      %v4089 = vunpack.c.l.b16 %v3813
      %v4090 = vunpack.c.l.b16 %v3814
      %v4091 = vunpack.c.l.b16 %v3815
      %v4092 = vunpack.c.l.b16 %v3816
      %v4093 = vunpack.c.l.b16 %v3817
      %v4094 = vunpack.c.l.b16 %v3818
      %v4095 = vunpack.c.l.b16 %v3819
      %v4096 = vunpack.c.l.b16 %v3820
      %v4097 = vunpack.c.l.b16 %v3821
      %v4098 = vunpack.c.l.b16 %v3822
      %v4099 = vunpack.c.l.b16 %v3823
      %v4100 = vunpack.c.l.b16 %v3824
      %v4101 = vunpack.c.l.b16 %v3825
      %v4102 = vunpack.c.l.b16 %v3826
      %v4103 = vunpack.c.l.b16 %v3827
      %v4104 = vunpack.c.l.b16 %v3828
      %v4105 = vunpack.c.l.b16 %v3829
      %v4106 = vunpack.c.l.b16 %v3830
      %v4107 = vunpack.c.l.b16 %v3831
      %v4108 = vunpack.c.l.b16 %v3832
      %v4109 = vunpack.c.l.b16 %v3833
      %v4110 = vunpack.c.l.b16 %v3834
      %v4111 = vunpack.c.l.b16 %v3835
      %v4112 = vunpack.c.l.b16 %v3836
      %v4113 = vunpack.c.l.b16 %v3837
      %v4114 = vunpack.c.l.b16 %v3838
      %v4115 = vunpack.c.l.b16 %v3839
      %v4116 = vunpack.c.l.b16 %v3840
      %v4117 = vunpack.c.l.b16 %v3841
      %v4118 = vunpack.c.l.b16 %v3842
      %v4119 = vunpack.c.l.b16 %v3843
      %v4120 = vunpack.c.l.b16 %v3844
      %v4121 = vunpack.c.l.b16 %v3845
      %v4122 = vunpack.c.l.b16 %v3846
      %v4123 = vunpack.c.l.b16 %v3847
      %v4124 = vunpack.c.l.b16 %v3848
      %v4125 = vunpack.c.l.b16 %v3849
      %v4126 = vunpack.c.l.b16 %v3850
      %v4127 = vunpack.c.l.b16 %v3851
      %v4128 = vunpack.c.l.b16 %v3852
      %v4129 = vunpack.c.l.b16 %v3853
      %v4130 = vunpack.c.l.b16 %v3854
      %v4131 = vunpack.c.l.b16 %v3855
      %v4132 = vunpack.c.l.b16 %v3856
      %v4133 = vunpack.c.l.b16 %v3857
      %v4134 = vunpack.c.l.b16 %v3858
      %v4135 = vunpack.c.l.b16 %v3859
      %v4136 = vunpack.c.l.b16 %v3860
      %v4137 = vunpack.c.l.b16 %v3861
      %v4138 = vunpack.c.l.b16 %v3862
      %v4139 = vunpack.c.l.b16 %v3863
      %v4140 = vunpack.c.l.b16 %v3864
      %v4141 = vunpack.c.l.b16 %v3865
      %v4142 = vunpack.c.l.b16 %v3866
      %v4143 = vunpack.c.l.b16 %v3867
      %v4144 = vunpack.c.l.b16 %v3868
      %v4145 = vunpack.c.l.b16 %v3869
      %v4146 = vunpack.c.l.b16 %v3870
      %v4147 = vunpack.c.l.b16 %v3871
      %v4148 = vunpack.c.l.b16 %v3872
      %v4149 = vunpack.c.l.b16 %v3873
      %v4150 = vunpack.c.l.b16 %v3874
      %v4151 = vunpack.c.l.b16 %v3875
      %v4152 = vunpack.c.l.b16 %v3876
      %v4153 = vunpack.c.l.b16 %v3877
      %v4154 = vunpack.c.l.b16 %v3878
      %v4155 = vunpack.c.l.b16 %v3879
      %v4156 = vunpack.c.l.b16 %v3880
      %v4157 = vunpack.c.l.b16 %v3881
      %v4158 = vunpack.c.l.b16 %v3882
      %v4159 = vunpack.c.l.b16 %v3883
      %v4160 = vunpack.c.l.b16 %v3884
      %v4161 = vunpack.c.l.b16 %v3885
      %v4162 = vunpack.c.l.b16 %v3886
      %v4163 = vunpack.c.l.b16 %v3887
      %v4164 = vunpack.c.l.b16 %v3888
      %v4165 = vunpack.c.l.b16 %v3889
      %v4166 = vunpack.c.l.b16 %v3890
      %v4167 = vunpack.c.l.b16 %v3891
      %v4168 = vunpack.c.l.b16 %v3892
      %v4169 = vunpack.c.l.b16 %v3893
      %v4170 = vunpack.c.l.b16 %v3894
      %v4171 = vunpack.c.l.b16 %v3895
      %v4172 = vunpack.c.l.b16 %v3896
      %v4173 = vunpack.c.l.b16 %v3897
      %v4174 = vunpack.c.l.b16 %v3898
      %v4175 = vunpack.c.l.b16 %v3899
      %v4176 = vunpack.c.l.b16 %v3900
      %v4177 = vunpack.c.l.b16 %v3901
      %v4178 = vunpack.c.l.b16 %v3902
      %v4179 = vunpack.c.l.b16 %v3903
      %v4180 = vunpack.c.l.b16 %v3904
      %v4181 = vunpack.c.l.b16 %v3905
      %v4182 = vunpack.c.l.b16 %v3906
      %v4183 = vpack.c.b16 %v4047, %v4046
      %v4184 = vpack.c.b16 %v4049, %v4048
      %v4185 = vpack.c.b16 %v4051, %v4050
      %v4186 = vpack.c.b16 %v4053, %v4052
      %v4187 = vpack.c.b16 %v4055, %v4054
      %v4188 = vpack.c.b16 %v4057, %v4056
      %v4189 = vpack.c.b16 %v4059, %v4058
      %v4190 = vpack.c.b16 %v4061, %v4060
      %v4191 = vpack.c.b16 %v4063, %v4062
      %v4192 = vpack.c.b16 %v4065, %v4064
      %v4193 = vpack.c.b16 %v4067, %v4066
      %v4194 = vpack.c.b16 %v4069, %v4068
      %v4195 = vpack.c.b16 %v4071, %v4070
      %v4196 = vpack.c.b16 %v4073, %v4072
      %v4197 = vpack.c.b16 %v4075, %v4074
      %v4198 = vpack.c.b16 %v4077, %v4076
      %v4199 = vpack.c.b16 %v4079, %v4078
      %v4200 = vpack.c.b16 %v4081, %v4080
      %v4201 = vpack.c.b16 %v4083, %v4082
      %v4202 = vpack.c.b16 %v4085, %v4084
      %v4203 = vpack.c.b16 %v4087, %v4086
      %v4204 = vpack.c.b16 %v4089, %v4088
      %v4205 = vpack.c.b16 %v4091, %v4090
      %v4206 = vpack.c.b16 %v4093, %v4092
      %v4207 = vpack.c.b16 %v4095, %v4094
      %v4208 = vpack.c.b16 %v4097, %v4096
      %v4209 = vpack.c.b16 %v4099, %v4098
      %v4210 = vpack.c.b16 %v4101, %v4100
      %v4211 = vpack.c.b16 %v4103, %v4102
      %v4212 = vpack.c.b16 %v4105, %v4104
      %v4213 = vpack.c.b16 %v4107, %v4106
      %v4214 = vpack.c.b16 %v4109, %v4108
      %v4215 = vpack.c.b16 %v4111, %v4110
      %v4216 = vpack.c.b16 %v4113, %v4112
      %v4217 = vpack.c.b16 %v4115, %v4114
      %v4218 = vpack.c.b16 %v4117, %v4116
      %v4219 = vpack.c.b16 %v4119, %v4118
      %v4220 = vpack.c.b16 %v4121, %v4120
      %v4221 = vpack.c.b16 %v4123, %v4122
      %v4222 = vpack.c.b16 %v4125, %v4124
      %v4223 = vpack.c.b16 %v4127, %v4126
      %v4224 = vpack.c.b16 %v4129, %v4128
      %v4225 = vpack.c.b16 %v4131, %v4130
      %v4226 = vpack.c.b16 %v4133, %v4132
      %v4227 = vpack.c.b16 %v4135, %v4134
      %v4228 = vpack.c.b16 %v4137, %v4136
      %v4229 = vpack.c.b16 %v4139, %v4138
      %v4230 = vpack.c.b16 %v4141, %v4140
      %v4231 = vpack.c.b16 %v4143, %v4142
      %v4232 = vpack.c.b16 %v4145, %v4144
      %v4233 = vpack.c.b16 %v4147, %v4146
      %v4234 = vpack.c.b16 %v4149, %v4148
      %v4235 = vpack.c.b16 %v4151, %v4150
      %v4236 = vpack.c.b16 %v4153, %v4152
      %v4237 = vpack.c.b16 %v4155, %v4154
      %v4238 = vpack.c.b16 %v4157, %v4156
      %v4239 = vpack.c.b16 %v4159, %v4158
      %v4240 = vpack.c.b16 %v4161, %v4160
      %v4241 = vpack.c.b16 %v4163, %v4162
      %v4242 = vpack.c.b16 %v4165, %v4164
      %v4243 = vpack.c.b16 %v4167, %v4166
      %v4244 = vpack.c.b16 %v4169, %v4168
      %v4245 = vpack.c.b16 %v4171, %v4170
      %v4246 = vpack.c.b16 %v4173, %v4172
      %v4247 = vpack.c.b16 %v4175, %v4174
      %v4248 = vpack.c.b16 %v4177, %v4176
      %v4249 = vpack.c.b16 %v4179, %v4178
      %v4250 = vpack.c.b16 %v4181, %v4180
      %v4251 = vpack.c.b16 %v4182, %v4182
      %v4252 = vrot.slane %v4183, 1
      %v4253 = vrot.slane %v4184, 1
      %v4254 = vsel %vm2712, %v4252, %v4253
      %v4255 = vrot.slane %v4185, 1
      %v4256 = vsel %vm2712, %v4253, %v4255
      %v4257 = vrot.slane %v4186, 1
      %v4258 = vsel %vm2712, %v4255, %v4257
      %v4259 = vrot.slane %v4187, 1
      %v4260 = vsel %vm2712, %v4257, %v4259
      %v4261 = vrot.slane %v4188, 1
      %v4262 = vsel %vm2712, %v4259, %v4261
      %v4263 = vrot.slane %v4189, 1
      %v4264 = vsel %vm2712, %v4261, %v4263
      %v4265 = vrot.slane %v4190, 1
      %v4266 = vsel %vm2712, %v4263, %v4265
      %v4267 = vrot.slane %v4191, 1
      %v4268 = vsel %vm2712, %v4265, %v4267
      %v4269 = vrot.slane %v4192, 1
      %v4270 = vsel %vm2712, %v4267, %v4269
      %v4271 = vrot.slane %v4193, 1
      %v4272 = vsel %vm2712, %v4269, %v4271
      %v4273 = vrot.slane %v4194, 1
      %v4274 = vsel %vm2712, %v4271, %v4273
      %v4275 = vrot.slane %v4195, 1
      %v4276 = vsel %vm2712, %v4273, %v4275
      %v4277 = vrot.slane %v4196, 1
      %v4278 = vsel %vm2712, %v4275, %v4277
      %v4279 = vrot.slane %v4197, 1
      %v4280 = vsel %vm2712, %v4277, %v4279
      %v4281 = vrot.slane %v4198, 1
      %v4282 = vsel %vm2712, %v4279, %v4281
      %v4283 = vrot.slane %v4199, 1
      %v4284 = vsel %vm2712, %v4281, %v4283
      %v4285 = vrot.slane %v4200, 1
      %v4286 = vsel %vm2712, %v4283, %v4285
      %v4287 = vrot.slane %v4201, 1
      %v4288 = vsel %vm2712, %v4285, %v4287
      %v4289 = vrot.slane %v4202, 1
      %v4290 = vsel %vm2712, %v4287, %v4289
      %v4291 = vrot.slane %v4203, 1
      %v4292 = vsel %vm2712, %v4289, %v4291
      %v4293 = vrot.slane %v4204, 1
      %v4294 = vsel %vm2712, %v4291, %v4293
      %v4295 = vrot.slane %v4205, 1
      %v4296 = vsel %vm2712, %v4293, %v4295
      %v4297 = vrot.slane %v4206, 1
      %v4298 = vsel %vm2712, %v4295, %v4297
      %v4299 = vrot.slane %v4207, 1
      %v4300 = vsel %vm2712, %v4297, %v4299
      %v4301 = vrot.slane %v4208, 1
      %v4302 = vsel %vm2712, %v4299, %v4301
      %v4303 = vrot.slane %v4209, 1
      %v4304 = vsel %vm2712, %v4301, %v4303
      %v4305 = vrot.slane %v4210, 1
      %v4306 = vsel %vm2712, %v4303, %v4305
      %v4307 = vrot.slane %v4211, 1
      %v4308 = vsel %vm2712, %v4305, %v4307
      %v4309 = vrot.slane %v4212, 1
      %v4310 = vsel %vm2712, %v4307, %v4309
      %v4311 = vrot.slane %v4213, 1
      %v4312 = vsel %vm2712, %v4309, %v4311
      %v4313 = vrot.slane %v4214, 1
      %v4314 = vsel %vm2712, %v4311, %v4313
      %v4315 = vrot.slane %v4215, 1
      %v4316 = vsel %vm2712, %v4313, %v4315
      %v4317 = vrot.slane %v4216, 1
      %v4318 = vsel %vm2712, %v4315, %v4317
      %v4319 = vrot.slane %v4217, 1
      %v4320 = vsel %vm2712, %v4317, %v4319
      %v4321 = vrot.slane %v4218, 1
      %v4322 = vsel %vm2712, %v4319, %v4321
      %v4323 = vrot.slane %v4219, 1
      %v4324 = vsel %vm2712, %v4321, %v4323
      %v4325 = vrot.slane %v4220, 1
      %v4326 = vsel %vm2712, %v4323, %v4325
      %v4327 = vrot.slane %v4221, 1
      %v4328 = vsel %vm2712, %v4325, %v4327
      %v4329 = vrot.slane %v4222, 1
      %v4330 = vsel %vm2712, %v4327, %v4329
      %v4331 = vrot.slane %v4223, 1
      %v4332 = vsel %vm2712, %v4329, %v4331
      %v4333 = vrot.slane %v4224, 1
      %v4334 = vsel %vm2712, %v4331, %v4333
      %v4335 = vrot.slane %v4225, 1
      %v4336 = vsel %vm2712, %v4333, %v4335
      %v4337 = vrot.slane %v4226, 1
      %v4338 = vsel %vm2712, %v4335, %v4337
      %v4339 = vrot.slane %v4227, 1
      %v4340 = vsel %vm2712, %v4337, %v4339
      %v4341 = vrot.slane %v4228, 1
      %v4342 = vsel %vm2712, %v4339, %v4341
      %v4343 = vrot.slane %v4229, 1
      %v4344 = vsel %vm2712, %v4341, %v4343
      %v4345 = vrot.slane %v4230, 1
      %v4346 = vsel %vm2712, %v4343, %v4345
      %v4347 = vrot.slane %v4231, 1
      %v4348 = vsel %vm2712, %v4345, %v4347
      %v4349 = vrot.slane %v4232, 1
      %v4350 = vsel %vm2712, %v4347, %v4349
      %v4351 = vrot.slane %v4233, 1
      %v4352 = vsel %vm2712, %v4349, %v4351
      %v4353 = vrot.slane %v4234, 1
      %v4354 = vsel %vm2712, %v4351, %v4353
      %v4355 = vrot.slane %v4235, 1
      %v4356 = vsel %vm2712, %v4353, %v4355
      %v4357 = vrot.slane %v4236, 1
      %v4358 = vsel %vm2712, %v4355, %v4357
      %v4359 = vrot.slane %v4237, 1
      %v4360 = vsel %vm2712, %v4357, %v4359
      %v4361 = vrot.slane %v4238, 1
      %v4362 = vsel %vm2712, %v4359, %v4361
      %v4363 = vrot.slane %v4239, 1
      %v4364 = vsel %vm2712, %v4361, %v4363
      %v4365 = vrot.slane %v4240, 1
      %v4366 = vsel %vm2712, %v4363, %v4365
      %v4367 = vrot.slane %v4241, 1
      %v4368 = vsel %vm2712, %v4365, %v4367
      %v4369 = vrot.slane %v4242, 1
      %v4370 = vsel %vm2712, %v4367, %v4369
      %v4371 = vrot.slane %v4243, 1
      %v4372 = vsel %vm2712, %v4369, %v4371
      %v4373 = vrot.slane %v4244, 1
      %v4374 = vsel %vm2712, %v4371, %v4373
      %v4375 = vrot.slane %v4245, 1
      %v4376 = vsel %vm2712, %v4373, %v4375
      %v4377 = vrot.slane %v4246, 1
      %v4378 = vsel %vm2712, %v4375, %v4377
      %v4379 = vrot.slane %v4247, 1
      %v4380 = vsel %vm2712, %v4377, %v4379
      %v4381 = vrot.slane %v4248, 1
      %v4382 = vsel %vm2712, %v4379, %v4381
      %v4383 = vrot.slane %v4249, 1
      %v4384 = vsel %vm2712, %v4381, %v4383
      %v4385 = vrot.slane %v4250, 1
      %v4386 = vsel %vm2712, %v4383, %v4385
      %v4387 = vrot.slane %v4251, 1
      %v4388 = vsel %vm2712, %v4385, %v4387
      %v4390 = vsel %vm1204, %v4254, 0
      %v4393 = vsel %vm1204, %v4256, 0
      %v4396 = vsel %vm1204, %v4258, 0
      %v4399 = vsel %vm1204, %v4260, 0
      %v4402 = vsel %vm1204, %v4262, 0
      %v4405 = vsel %vm1204, %v4264, 0
      %v4408 = vsel %vm1204, %v4266, 0
      %v4411 = vsel %vm1204, %v4268, 0
      %v4414 = vsel %vm1204, %v4270, 0
      %v4417 = vsel %vm1204, %v4272, 0
      %v4420 = vsel %vm1204, %v4274, 0
      %v4423 = vsel %vm1204, %v4276, 0
      %v4426 = vsel %vm1204, %v4278, 0
      %v4429 = vsel %vm1204, %v4280, 0
      %v4432 = vsel %vm1204, %v4282, 0
      %v4435 = vsel %vm1204, %v4284, 0
      %v4438 = vsel %vm1204, %v4286, 0
      %v4441 = vsel %vm1204, %v4288, 0
      %v4444 = vsel %vm1204, %v4290, 0
      %v4447 = vsel %vm1204, %v4292, 0
      %v4450 = vsel %vm1204, %v4294, 0
      %v4453 = vsel %vm1204, %v4296, 0
      %v4456 = vsel %vm1204, %v4298, 0
      %v4459 = vsel %vm1204, %v4300, 0
      %v4462 = vsel %vm1204, %v4302, 0
      %v4465 = vsel %vm1204, %v4304, 0
      %v4468 = vsel %vm1204, %v4306, 0
      %v4471 = vsel %vm1204, %v4308, 0
      %v4474 = vsel %vm1204, %v4310, 0
      %v4477 = vsel %vm1204, %v4312, 0
      %v4480 = vsel %vm1204, %v4314, 0
      %v4483 = vsel %vm1204, %v4316, 0
      %v4486 = vsel %vm1204, %v4318, 0
      %v4489 = vsel %vm1204, %v4320, 0
      %v4492 = vsel %vm1204, %v4322, 0
      %v4495 = vsel %vm1204, %v4324, 0
      %v4498 = vsel %vm1204, %v4326, 0
      %v4501 = vsel %vm1204, %v4328, 0
      %v4504 = vsel %vm1204, %v4330, 0
      %v4507 = vsel %vm1204, %v4332, 0
      %v4510 = vsel %vm1204, %v4334, 0
      %v4513 = vsel %vm1204, %v4336, 0
      %v4516 = vsel %vm1204, %v4338, 0
      %v4519 = vsel %vm1204, %v4340, 0
      %v4522 = vsel %vm1204, %v4342, 0
      %v4525 = vsel %vm1204, %v4344, 0
      %v4528 = vsel %vm1204, %v4346, 0
      %v4531 = vsel %vm1204, %v4348, 0
      %v4534 = vsel %vm1204, %v4350, 0
      %v4537 = vsel %vm1204, %v4352, 0
      %v4540 = vsel %vm1204, %v4354, 0
      %v4543 = vsel %vm1204, %v4356, 0
      %v4546 = vsel %vm1204, %v4358, 0
      %v4549 = vsel %vm1204, %v4360, 0
      %v4552 = vsel %vm1204, %v4362, 0
      %v4555 = vsel %vm1204, %v4364, 0
      %v4558 = vsel %vm1204, %v4366, 0
      %v4561 = vsel %vm1204, %v4368, 0
      %v4564 = vsel %vm1204, %v4370, 0
      %v4567 = vsel %vm1204, %v4372, 0
      %v4570 = vsel %vm1204, %v4374, 0
      %v4573 = vsel %vm1204, %v4376, 0
      %v4576 = vsel %vm1204, %v4378, 0
      %v4579 = vsel %vm1204, %v4380, 0
      %v4582 = vsel %vm1204, %v4382, 0
      %v4585 = vsel %vm1204, %v4384, 0
      %v4588 = vsel %vm1204, %v4386, 0
      %v4591 = vsel %vm1204, %v4388, 0
      %v4594 = vsel %vm1409, %v3908, 0
      %4596 = vmatprep.subr.bf16.mxu0 0
      %4597 = vmatpush1.bf16.msra.mxu0 %v4594
      %4598 = vmatprep.subr.bf16.mxu0 0
      %4599 = vmatpush1.bf16.msra.mxu0 0
      %4600 = vmatprep.subr.bf16.mxu0 0
      %4601 = vmatpush1.bf16.msra.mxu0 0
      %4602 = vmatprep.subr.bf16.mxu0 0
      %4603 = vmatpush1.bf16.msra.mxu0 0
      %4604 = vmatprep.subr.bf16.mxu0 0
      %4605 = vmatpush1.bf16.msra.mxu0 0
      %4606 = vmatprep.subr.bf16.mxu0 0
      %4607 = vmatpush1.bf16.msra.mxu0 0
      %4608 = vmatprep.subr.bf16.mxu0 0
      %4609 = vmatpush1.bf16.msra.mxu0 0
      %4610 = vmatprep.subr.bf16.mxu0 0
      %4611 = vmatpush1.bf16.msra.mxu0 0
      %4612 = vmatprep.subr.bf16.mxu0 0
      %4613 = vmatpush1.bf16.msra.mxu0 0
      %4614 = vmatprep.subr.bf16.mxu0 0
      %4615 = vmatpush1.bf16.msra.mxu0 0
      %4616 = vmatprep.subr.bf16.mxu0 0
      %4617 = vmatpush1.bf16.msra.mxu0 0
      %4618 = vmatprep.subr.bf16.mxu0 0
      %4619 = vmatpush1.bf16.msra.mxu0 0
      %4620 = vmatprep.subr.bf16.mxu0 0
      %4621 = vmatpush1.bf16.msra.mxu0 0
      %4622 = vmatprep.subr.bf16.mxu0 0
      %4623 = vmatpush1.bf16.msra.mxu0 0
      %4624 = vmatprep.subr.bf16.mxu0 0
      %4625 = vmatpush1.bf16.msra.mxu0 0
      %4626 = vmatprep.subr.bf16.mxu0 0
      %4627 = vmatpush1.bf16.msra.mxu0 0
      %4628 = vmatprep.mubr.bf16.mxu0 0
      %4629 = vmatmul.mubr.bf16.gmra.mrb[0].mxu0 %v4390
      %v4630 = vpop.f32.mrb[0].mxu0
      %v4631 = vadd.f32 0.0, %v4630
      %v4632 = vpop.f32.mrb[0].mxu0
      %v4633 = vpop.f32.mrb[0].mxu0
      %v4634 = vadd.f32 0.0, %v4633
      %v4635 = vpop.f32.mrb[0].mxu0
      %4636 = vmatprep.mubr.bf16.mxu0 0
      %4637 = vmatmul.mubr.bf16.gmra.mrb[0].mxu0 %v4393
      %v4638 = vpop.f32.mrb[0].mxu0
      %v4639 = vadd.f32 0.0, %v4638
      %v4640 = vpop.f32.mrb[0].mxu0
      %v4641 = vpop.f32.mrb[0].mxu0
      %v4642 = vadd.f32 0.0, %v4641
      %v4643 = vpop.f32.mrb[0].mxu0
      %4644 = vmatprep.mubr.bf16.mxu0 0
      %4645 = vmatmul.mubr.bf16.gmra.mrb[0].mxu0 %v4396
      %v4646 = vpop.f32.mrb[0].mxu0
      %v4647 = vadd.f32 0.0, %v4646
      %v4648 = vpop.f32.mrb[0].mxu0
      %v4649 = vpop.f32.mrb[0].mxu0
      %v4650 = vadd.f32 0.0, %v4649
      %v4651 = vpop.f32.mrb[0].mxu0
      %4652 = vmatprep.mubr.bf16.mxu0 0
      %4653 = vmatmul.mubr.bf16.gmra.mrb[0].mxu0 %v4399
      %v4654 = vpop.f32.mrb[0].mxu0
      %v4655 = vadd.f32 0.0, %v4654
      %v4656 = vpop.f32.mrb[0].mxu0
      %v4657 = vpop.f32.mrb[0].mxu0
      %v4658 = vadd.f32 0.0, %v4657
      %v4659 = vpop.f32.mrb[0].mxu0
      %4660 = vmatprep.mubr.bf16.mxu0 0
      %4661 = vmatmul.mubr.bf16.gmra.mrb[0].mxu0 %v4402
      %v4662 = vpop.f32.mrb[0].mxu0
      %v4663 = vadd.f32 0.0, %v4662
      %v4664 = vpop.f32.mrb[0].mxu0
      %v4665 = vpop.f32.mrb[0].mxu0
      %v4666 = vadd.f32 0.0, %v4665
      %v4667 = vpop.f32.mrb[0].mxu0
      %4668 = vmatprep.mubr.bf16.mxu0 0
      %4669 = vmatmul.mubr.bf16.gmra.mrb[0].mxu0 %v4405
      %v4670 = vpop.f32.mrb[0].mxu0
      %v4671 = vadd.f32 0.0, %v4670
      %v4672 = vpop.f32.mrb[0].mxu0
      %v4673 = vpop.f32.mrb[0].mxu0
      %v4674 = vadd.f32 0.0, %v4673
      %v4675 = vpop.f32.mrb[0].mxu0
      %4676 = vmatprep.mubr.bf16.mxu0 0
      %4677 = vmatmul.mubr.bf16.gmra.mrb[0].mxu0 %v4408
      %v4678 = vpop.f32.mrb[0].mxu0
      %v4679 = vadd.f32 0.0, %v4678
      %v4680 = vpop.f32.mrb[0].mxu0
      %v4681 = vpop.f32.mrb[0].mxu0
      %v4682 = vadd.f32 0.0, %v4681
      %v4683 = vpop.f32.mrb[0].mxu0
      %4684 = vmatprep.mubr.bf16.mxu0 0
      %4685 = vmatmul.mubr.bf16.gmra.mrb[0].mxu0 %v4411
      %v4686 = vpop.f32.mrb[0].mxu0
      %v4687 = vadd.f32 0.0, %v4686
      %v4688 = vpop.f32.mrb[0].mxu0
      %v4689 = vpop.f32.mrb[0].mxu0
      %v4690 = vadd.f32 0.0, %v4689
      %v4691 = vpop.f32.mrb[0].mxu0
      %4692 = vmatprep.mubr.bf16.mxu0 0
      %4693 = vmatmul.mubr.bf16.gmra.mrb[0].mxu0 %v4414
      %v4694 = vpop.f32.mrb[0].mxu0
      %v4695 = vadd.f32 0.0, %v4694
      %v4696 = vpop.f32.mrb[0].mxu0
      %v4697 = vpop.f32.mrb[0].mxu0
      %v4698 = vadd.f32 0.0, %v4697
      %v4699 = vpop.f32.mrb[0].mxu0
      %4700 = vmatprep.mubr.bf16.mxu0 0
      %4701 = vmatmul.mubr.bf16.gmra.mrb[0].mxu0 %v4417
      %v4702 = vpop.f32.mrb[0].mxu0
      %v4703 = vadd.f32 0.0, %v4702
      %v4704 = vpop.f32.mrb[0].mxu0
      %v4705 = vpop.f32.mrb[0].mxu0
      %v4706 = vadd.f32 0.0, %v4705
      %v4707 = vpop.f32.mrb[0].mxu0
      %4708 = vmatprep.mubr.bf16.mxu0 0
      %4709 = vmatmul.mubr.bf16.gmra.mrb[0].mxu0 %v4420
      %v4710 = vpop.f32.mrb[0].mxu0
      %v4711 = vadd.f32 0.0, %v4710
      %v4712 = vpop.f32.mrb[0].mxu0
      %v4713 = vpop.f32.mrb[0].mxu0
      %v4714 = vadd.f32 0.0, %v4713
      %v4715 = vpop.f32.mrb[0].mxu0
      %4716 = vmatprep.mubr.bf16.mxu0 0
      %4717 = vmatmul.mubr.bf16.gmra.mrb[0].mxu0 %v4423
      %v4718 = vpop.f32.mrb[0].mxu0
      %v4719 = vadd.f32 0.0, %v4718
      %v4720 = vpop.f32.mrb[0].mxu0
      %v4721 = vpop.f32.mrb[0].mxu0
      %v4722 = vadd.f32 0.0, %v4721
      %v4723 = vpop.f32.mrb[0].mxu0
      %4724 = vmatprep.mubr.bf16.mxu0 0
      %4725 = vmatmul.mubr.bf16.gmra.mrb[0].mxu0 %v4426
      %v4726 = vpop.f32.mrb[0].mxu0
      %v4727 = vadd.f32 0.0, %v4726
      %v4728 = vpop.f32.mrb[0].mxu0
      %v4729 = vpop.f32.mrb[0].mxu0
      %v4730 = vadd.f32 0.0, %v4729
      %v4731 = vpop.f32.mrb[0].mxu0
      %4732 = vmatprep.mubr.bf16.mxu0 0
      %4733 = vmatmul.mubr.bf16.gmra.mrb[0].mxu0 %v4429
      %v4734 = vpop.f32.mrb[0].mxu0
      %v4735 = vadd.f32 0.0, %v4734
      %v4736 = vpop.f32.mrb[0].mxu0
      %v4737 = vpop.f32.mrb[0].mxu0
      %v4738 = vadd.f32 0.0, %v4737
      %v4739 = vpop.f32.mrb[0].mxu0
      %4740 = vmatprep.mubr.bf16.mxu0 0
      %4741 = vmatmul.mubr.bf16.gmra.mrb[0].mxu0 %v4432
      %v4742 = vpop.f32.mrb[0].mxu0
      %v4743 = vadd.f32 0.0, %v4742
      %v4744 = vpop.f32.mrb[0].mxu0
      %v4745 = vpop.f32.mrb[0].mxu0
      %v4746 = vadd.f32 0.0, %v4745
      %v4747 = vpop.f32.mrb[0].mxu0
      %4748 = vmatprep.mubr.bf16.mxu0 0
      %4749 = vmatmul.mubr.bf16.gmra.mrb[0].mxu0 %v4435
      %v4750 = vpop.f32.mrb[0].mxu0
      %v4751 = vadd.f32 0.0, %v4750
      %v4752 = vpop.f32.mrb[0].mxu0
      %v4753 = vpop.f32.mrb[0].mxu0
      %v4754 = vadd.f32 0.0, %v4753
      %v4755 = vpop.f32.mrb[0].mxu0
      %4756 = vmatprep.mubr.bf16.mxu0 0
      %4757 = vmatmul.mubr.bf16.gmra.mrb[0].mxu0 %v4438
      %v4758 = vpop.f32.mrb[0].mxu0
      %v4759 = vadd.f32 0.0, %v4758
      %v4760 = vpop.f32.mrb[0].mxu0
      %v4761 = vpop.f32.mrb[0].mxu0
      %v4762 = vadd.f32 0.0, %v4761
      %v4763 = vpop.f32.mrb[0].mxu0
      %4764 = vmatprep.mubr.bf16.mxu0 0
      %4765 = vmatmul.mubr.bf16.gmra.mrb[0].mxu0 %v4441
      %v4766 = vpop.f32.mrb[0].mxu0
      %v4767 = vadd.f32 0.0, %v4766
      %v4768 = vpop.f32.mrb[0].mxu0
      %v4769 = vpop.f32.mrb[0].mxu0
      %v4770 = vadd.f32 0.0, %v4769
      %v4771 = vpop.f32.mrb[0].mxu0
      %4772 = vmatprep.mubr.bf16.mxu0 0
      %4773 = vmatmul.mubr.bf16.gmra.mrb[0].mxu0 %v4444
      %v4774 = vpop.f32.mrb[0].mxu0
      %v4775 = vadd.f32 0.0, %v4774
      %v4776 = vpop.f32.mrb[0].mxu0
      %v4777 = vpop.f32.mrb[0].mxu0
      %v4778 = vadd.f32 0.0, %v4777
      %v4779 = vpop.f32.mrb[0].mxu0
      %4780 = vmatprep.mubr.bf16.mxu0 0
      %4781 = vmatmul.mubr.bf16.gmra.mrb[0].mxu0 %v4447
      %v4782 = vpop.f32.mrb[0].mxu0
      %v4783 = vadd.f32 0.0, %v4782
      %v4784 = vpop.f32.mrb[0].mxu0
      %v4785 = vpop.f32.mrb[0].mxu0
      %v4786 = vadd.f32 0.0, %v4785
      %v4787 = vpop.f32.mrb[0].mxu0
      %4788 = vmatprep.mubr.bf16.mxu0 0
      %4789 = vmatmul.mubr.bf16.gmra.mrb[0].mxu0 %v4450
      %v4790 = vpop.f32.mrb[0].mxu0
      %v4791 = vadd.f32 0.0, %v4790
      %v4792 = vpop.f32.mrb[0].mxu0
      %v4793 = vpop.f32.mrb[0].mxu0
      %v4794 = vadd.f32 0.0, %v4793
      %v4795 = vpop.f32.mrb[0].mxu0
      %4796 = vmatprep.mubr.bf16.mxu0 0
      %4797 = vmatmul.mubr.bf16.gmra.mrb[0].mxu0 %v4453
      %v4798 = vpop.f32.mrb[0].mxu0
      %v4799 = vadd.f32 0.0, %v4798
      %v4800 = vpop.f32.mrb[0].mxu0
      %v4801 = vpop.f32.mrb[0].mxu0
      %v4802 = vadd.f32 0.0, %v4801
      %v4803 = vpop.f32.mrb[0].mxu0
      %4804 = vmatprep.mubr.bf16.mxu0 0
      %4805 = vmatmul.mubr.bf16.gmra.mrb[0].mxu0 %v4456
      %v4806 = vpop.f32.mrb[0].mxu0
      %v4807 = vadd.f32 0.0, %v4806
      %v4808 = vpop.f32.mrb[0].mxu0
      %v4809 = vpop.f32.mrb[0].mxu0
      %v4810 = vadd.f32 0.0, %v4809
      %v4811 = vpop.f32.mrb[0].mxu0
      %4812 = vmatprep.mubr.bf16.mxu0 0
      %4813 = vmatmul.mubr.bf16.gmra.mrb[0].mxu0 %v4459
      %v4814 = vpop.f32.mrb[0].mxu0
      %v4815 = vadd.f32 0.0, %v4814
      %v4816 = vpop.f32.mrb[0].mxu0
      %v4817 = vpop.f32.mrb[0].mxu0
      %v4818 = vadd.f32 0.0, %v4817
      %v4819 = vpop.f32.mrb[0].mxu0
      %4820 = vmatprep.mubr.bf16.mxu0 0
      %4821 = vmatmul.mubr.bf16.gmra.mrb[0].mxu0 %v4462
      %v4822 = vpop.f32.mrb[0].mxu0
      %v4823 = vadd.f32 0.0, %v4822
      %v4824 = vpop.f32.mrb[0].mxu0
      %v4825 = vpop.f32.mrb[0].mxu0
      %v4826 = vadd.f32 0.0, %v4825
      %v4827 = vpop.f32.mrb[0].mxu0
      %4828 = vmatprep.mubr.bf16.mxu0 0
      %4829 = vmatmul.mubr.bf16.gmra.mrb[0].mxu0 %v4465
      %v4830 = vpop.f32.mrb[0].mxu0
      %v4831 = vadd.f32 0.0, %v4830
      %v4832 = vpop.f32.mrb[0].mxu0
      %v4833 = vpop.f32.mrb[0].mxu0
      %v4834 = vadd.f32 0.0, %v4833
      %v4835 = vpop.f32.mrb[0].mxu0
      %4836 = vmatprep.mubr.bf16.mxu0 0
      %4837 = vmatmul.mubr.bf16.gmra.mrb[0].mxu0 %v4468
      %v4838 = vpop.f32.mrb[0].mxu0
      %v4839 = vadd.f32 0.0, %v4838
      %v4840 = vpop.f32.mrb[0].mxu0
      %v4841 = vpop.f32.mrb[0].mxu0
      %v4842 = vadd.f32 0.0, %v4841
      %v4843 = vpop.f32.mrb[0].mxu0
      %4844 = vmatprep.mubr.bf16.mxu0 0
      %4845 = vmatmul.mubr.bf16.gmra.mrb[0].mxu0 %v4471
      %v4846 = vpop.f32.mrb[0].mxu0
      %v4847 = vadd.f32 0.0, %v4846
      %v4848 = vpop.f32.mrb[0].mxu0
      %v4849 = vpop.f32.mrb[0].mxu0
      %v4850 = vadd.f32 0.0, %v4849
      %v4851 = vpop.f32.mrb[0].mxu0
      %4852 = vmatprep.mubr.bf16.mxu0 0
      %4853 = vmatmul.mubr.bf16.gmra.mrb[0].mxu0 %v4474
      %v4854 = vpop.f32.mrb[0].mxu0
      %v4855 = vadd.f32 0.0, %v4854
      %v4856 = vpop.f32.mrb[0].mxu0
      %v4857 = vpop.f32.mrb[0].mxu0
      %v4858 = vadd.f32 0.0, %v4857
      %v4859 = vpop.f32.mrb[0].mxu0
      %4860 = vmatprep.mubr.bf16.mxu0 0
      %4861 = vmatmul.mubr.bf16.gmra.mrb[0].mxu0 %v4477
      %v4862 = vpop.f32.mrb[0].mxu0
      %v4863 = vadd.f32 0.0, %v4862
      %v4864 = vpop.f32.mrb[0].mxu0
      %v4865 = vpop.f32.mrb[0].mxu0
      %v4866 = vadd.f32 0.0, %v4865
      %v4867 = vpop.f32.mrb[0].mxu0
      %4868 = vmatprep.mubr.bf16.mxu0 0
      %4869 = vmatmul.mubr.bf16.gmra.mrb[0].mxu0 %v4480
      %v4870 = vpop.f32.mrb[0].mxu0
      %v4871 = vadd.f32 0.0, %v4870
      %v4872 = vpop.f32.mrb[0].mxu0
      %v4873 = vpop.f32.mrb[0].mxu0
      %v4874 = vadd.f32 0.0, %v4873
      %v4875 = vpop.f32.mrb[0].mxu0
      %4876 = vmatprep.mubr.bf16.mxu0 0
      %4877 = vmatmul.mubr.bf16.gmra.mrb[0].mxu0 %v4483
      %v4878 = vpop.f32.mrb[0].mxu0
      %v4879 = vadd.f32 0.0, %v4878
      %v4880 = vpop.f32.mrb[0].mxu0
      %v4881 = vpop.f32.mrb[0].mxu0
      %v4882 = vadd.f32 0.0, %v4881
      %v4883 = vpop.f32.mrb[0].mxu0
      %4884 = vmatprep.mubr.bf16.mxu0 0
      %4885 = vmatmul.mubr.bf16.gmra.mrb[0].mxu0 %v4486
      %v4886 = vpop.f32.mrb[0].mxu0
      %v4887 = vadd.f32 0.0, %v4886
      %v4888 = vpop.f32.mrb[0].mxu0
      %v4889 = vpop.f32.mrb[0].mxu0
      %v4890 = vadd.f32 0.0, %v4889
      %v4891 = vpop.f32.mrb[0].mxu0
      %4892 = vmatprep.mubr.bf16.mxu0 0
      %4893 = vmatmul.mubr.bf16.gmra.mrb[0].mxu0 %v4489
      %v4894 = vpop.f32.mrb[0].mxu0
      %v4895 = vadd.f32 0.0, %v4894
      %v4896 = vpop.f32.mrb[0].mxu0
      %v4897 = vpop.f32.mrb[0].mxu0
      %v4898 = vadd.f32 0.0, %v4897
      %v4899 = vpop.f32.mrb[0].mxu0
      %4900 = vmatprep.mubr.bf16.mxu0 0
      %4901 = vmatmul.mubr.bf16.gmra.mrb[0].mxu0 %v4492
      %v4902 = vpop.f32.mrb[0].mxu0
      %v4903 = vadd.f32 0.0, %v4902
      %v4904 = vpop.f32.mrb[0].mxu0
      %v4905 = vpop.f32.mrb[0].mxu0
      %v4906 = vadd.f32 0.0, %v4905
      %v4907 = vpop.f32.mrb[0].mxu0
      %4908 = vmatprep.mubr.bf16.mxu0 0
      %4909 = vmatmul.mubr.bf16.gmra.mrb[0].mxu0 %v4495
      %v4910 = vpop.f32.mrb[0].mxu0
      %v4911 = vadd.f32 0.0, %v4910
      %v4912 = vpop.f32.mrb[0].mxu0
      %v4913 = vpop.f32.mrb[0].mxu0
      %v4914 = vadd.f32 0.0, %v4913
      %v4915 = vpop.f32.mrb[0].mxu0
      %4916 = vmatprep.mubr.bf16.mxu0 0
      %4917 = vmatmul.mubr.bf16.gmra.mrb[0].mxu0 %v4498
      %v4918 = vpop.f32.mrb[0].mxu0
      %v4919 = vadd.f32 0.0, %v4918
      %v4920 = vpop.f32.mrb[0].mxu0
      %v4921 = vpop.f32.mrb[0].mxu0
      %v4922 = vadd.f32 0.0, %v4921
      %v4923 = vpop.f32.mrb[0].mxu0
      %4924 = vmatprep.mubr.bf16.mxu0 0
      %4925 = vmatmul.mubr.bf16.gmra.mrb[0].mxu0 %v4501
      %v4926 = vpop.f32.mrb[0].mxu0
      %v4927 = vadd.f32 0.0, %v4926
      %v4928 = vpop.f32.mrb[0].mxu0
      %v4929 = vpop.f32.mrb[0].mxu0
      %v4930 = vadd.f32 0.0, %v4929
      %v4931 = vpop.f32.mrb[0].mxu0
      %4932 = vmatprep.mubr.bf16.mxu0 0
      %4933 = vmatmul.mubr.bf16.gmra.mrb[0].mxu0 %v4504
      %v4934 = vpop.f32.mrb[0].mxu0
      %v4935 = vadd.f32 0.0, %v4934
      %v4936 = vpop.f32.mrb[0].mxu0
      %v4937 = vpop.f32.mrb[0].mxu0
      %v4938 = vadd.f32 0.0, %v4937
      %v4939 = vpop.f32.mrb[0].mxu0
      %4940 = vmatprep.mubr.bf16.mxu0 0
      %4941 = vmatmul.mubr.bf16.gmra.mrb[0].mxu0 %v4507
      %v4942 = vpop.f32.mrb[0].mxu0
      %v4943 = vadd.f32 0.0, %v4942
      %v4944 = vpop.f32.mrb[0].mxu0
      %v4945 = vpop.f32.mrb[0].mxu0
      %v4946 = vadd.f32 0.0, %v4945
      %v4947 = vpop.f32.mrb[0].mxu0
      %4948 = vmatprep.mubr.bf16.mxu0 0
      %4949 = vmatmul.mubr.bf16.gmra.mrb[0].mxu0 %v4510
      %v4950 = vpop.f32.mrb[0].mxu0
      %v4951 = vadd.f32 0.0, %v4950
      %v4952 = vpop.f32.mrb[0].mxu0
      %v4953 = vpop.f32.mrb[0].mxu0
      %v4954 = vadd.f32 0.0, %v4953
      %v4955 = vpop.f32.mrb[0].mxu0
      %4956 = vmatprep.mubr.bf16.mxu0 0
      %4957 = vmatmul.mubr.bf16.gmra.mrb[0].mxu0 %v4513
      %v4958 = vpop.f32.mrb[0].mxu0
      %v4959 = vadd.f32 0.0, %v4958
      %v4960 = vpop.f32.mrb[0].mxu0
      %v4961 = vpop.f32.mrb[0].mxu0
      %v4962 = vadd.f32 0.0, %v4961
      %v4963 = vpop.f32.mrb[0].mxu0
      %4964 = vmatprep.mubr.bf16.mxu0 0
      %4965 = vmatmul.mubr.bf16.gmra.mrb[0].mxu0 %v4516
      %v4966 = vpop.f32.mrb[0].mxu0
      %v4967 = vadd.f32 0.0, %v4966
      %v4968 = vpop.f32.mrb[0].mxu0
      %v4969 = vpop.f32.mrb[0].mxu0
      %v4970 = vadd.f32 0.0, %v4969
      %v4971 = vpop.f32.mrb[0].mxu0
      %4972 = vmatprep.mubr.bf16.mxu0 0
      %4973 = vmatmul.mubr.bf16.gmra.mrb[0].mxu0 %v4519
      %v4974 = vpop.f32.mrb[0].mxu0
      %v4975 = vadd.f32 0.0, %v4974
      %v4976 = vpop.f32.mrb[0].mxu0
      %v4977 = vpop.f32.mrb[0].mxu0
      %v4978 = vadd.f32 0.0, %v4977
      %v4979 = vpop.f32.mrb[0].mxu0
      %4980 = vmatprep.mubr.bf16.mxu0 0
      %4981 = vmatmul.mubr.bf16.gmra.mrb[0].mxu0 %v4522
      %v4982 = vpop.f32.mrb[0].mxu0
      %v4983 = vadd.f32 0.0, %v4982
      %v4984 = vpop.f32.mrb[0].mxu0
      %v4985 = vpop.f32.mrb[0].mxu0
      %v4986 = vadd.f32 0.0, %v4985
      %v4987 = vpop.f32.mrb[0].mxu0
      %4988 = vmatprep.mubr.bf16.mxu0 0
      %4989 = vmatmul.mubr.bf16.gmra.mrb[0].mxu0 %v4525
      %v4990 = vpop.f32.mrb[0].mxu0
      %v4991 = vadd.f32 0.0, %v4990
      %v4992 = vpop.f32.mrb[0].mxu0
      %v4993 = vpop.f32.mrb[0].mxu0
      %v4994 = vadd.f32 0.0, %v4993
      %v4995 = vpop.f32.mrb[0].mxu0
      %4996 = vmatprep.mubr.bf16.mxu0 0
      %4997 = vmatmul.mubr.bf16.gmra.mrb[0].mxu0 %v4528
      %v4998 = vpop.f32.mrb[0].mxu0
      %v4999 = vadd.f32 0.0, %v4998
      %v5000 = vpop.f32.mrb[0].mxu0
      %v5001 = vpop.f32.mrb[0].mxu0
      %v5002 = vadd.f32 0.0, %v5001
      %v5003 = vpop.f32.mrb[0].mxu0
      %5004 = vmatprep.mubr.bf16.mxu0 0
      %5005 = vmatmul.mubr.bf16.gmra.mrb[0].mxu0 %v4531
      %v5006 = vpop.f32.mrb[0].mxu0
      %v5007 = vadd.f32 0.0, %v5006
      %v5008 = vpop.f32.mrb[0].mxu0
      %v5009 = vpop.f32.mrb[0].mxu0
      %v5010 = vadd.f32 0.0, %v5009
      %v5011 = vpop.f32.mrb[0].mxu0
      %5012 = vmatprep.mubr.bf16.mxu0 0
      %5013 = vmatmul.mubr.bf16.gmra.mrb[0].mxu0 %v4534
      %v5014 = vpop.f32.mrb[0].mxu0
      %v5015 = vadd.f32 0.0, %v5014
      %v5016 = vpop.f32.mrb[0].mxu0
      %v5017 = vpop.f32.mrb[0].mxu0
      %v5018 = vadd.f32 0.0, %v5017
      %v5019 = vpop.f32.mrb[0].mxu0
      %5020 = vmatprep.mubr.bf16.mxu0 0
      %5021 = vmatmul.mubr.bf16.gmra.mrb[0].mxu0 %v4537
      %v5022 = vpop.f32.mrb[0].mxu0
      %v5023 = vadd.f32 0.0, %v5022
      %v5024 = vpop.f32.mrb[0].mxu0
      %v5025 = vpop.f32.mrb[0].mxu0
      %v5026 = vadd.f32 0.0, %v5025
      %v5027 = vpop.f32.mrb[0].mxu0
      %5028 = vmatprep.mubr.bf16.mxu0 0
      %5029 = vmatmul.mubr.bf16.gmra.mrb[0].mxu0 %v4540
      %v5030 = vpop.f32.mrb[0].mxu0
      %v5031 = vadd.f32 0.0, %v5030
      %v5032 = vpop.f32.mrb[0].mxu0
      %v5033 = vpop.f32.mrb[0].mxu0
      %v5034 = vadd.f32 0.0, %v5033
      %v5035 = vpop.f32.mrb[0].mxu0
      %5036 = vmatprep.mubr.bf16.mxu0 0
      %5037 = vmatmul.mubr.bf16.gmra.mrb[0].mxu0 %v4543
      %v5038 = vpop.f32.mrb[0].mxu0
      %v5039 = vadd.f32 0.0, %v5038
      %v5040 = vpop.f32.mrb[0].mxu0
      %v5041 = vpop.f32.mrb[0].mxu0
      %v5042 = vadd.f32 0.0, %v5041
      %v5043 = vpop.f32.mrb[0].mxu0
      %5044 = vmatprep.mubr.bf16.mxu0 0
      %5045 = vmatmul.mubr.bf16.gmra.mrb[0].mxu0 %v4546
      %v5046 = vpop.f32.mrb[0].mxu0
      %v5047 = vadd.f32 0.0, %v5046
      %v5048 = vpop.f32.mrb[0].mxu0
      %v5049 = vpop.f32.mrb[0].mxu0
      %v5050 = vadd.f32 0.0, %v5049
      %v5051 = vpop.f32.mrb[0].mxu0
      %5052 = vmatprep.mubr.bf16.mxu0 0
      %5053 = vmatmul.mubr.bf16.gmra.mrb[0].mxu0 %v4549
      %v5054 = vpop.f32.mrb[0].mxu0
      %v5055 = vadd.f32 0.0, %v5054
      %v5056 = vpop.f32.mrb[0].mxu0
      %v5057 = vpop.f32.mrb[0].mxu0
      %v5058 = vadd.f32 0.0, %v5057
      %v5059 = vpop.f32.mrb[0].mxu0
      %5060 = vmatprep.mubr.bf16.mxu0 0
      %5061 = vmatmul.mubr.bf16.gmra.mrb[0].mxu0 %v4552
      %v5062 = vpop.f32.mrb[0].mxu0
      %v5063 = vadd.f32 0.0, %v5062
      %v5064 = vpop.f32.mrb[0].mxu0
      %v5065 = vpop.f32.mrb[0].mxu0
      %v5066 = vadd.f32 0.0, %v5065
      %v5067 = vpop.f32.mrb[0].mxu0
      %5068 = vmatprep.mubr.bf16.mxu0 0
      %5069 = vmatmul.mubr.bf16.gmra.mrb[0].mxu0 %v4555
      %v5070 = vpop.f32.mrb[0].mxu0
      %v5071 = vadd.f32 0.0, %v5070
      %v5072 = vpop.f32.mrb[0].mxu0
      %v5073 = vpop.f32.mrb[0].mxu0
      %v5074 = vadd.f32 0.0, %v5073
      %v5075 = vpop.f32.mrb[0].mxu0
      %5076 = vmatprep.mubr.bf16.mxu0 0
      %5077 = vmatmul.mubr.bf16.gmra.mrb[0].mxu0 %v4558
      %v5078 = vpop.f32.mrb[0].mxu0
      %v5079 = vadd.f32 0.0, %v5078
      %v5080 = vpop.f32.mrb[0].mxu0
      %v5081 = vpop.f32.mrb[0].mxu0
      %v5082 = vadd.f32 0.0, %v5081
      %v5083 = vpop.f32.mrb[0].mxu0
      %5084 = vmatprep.mubr.bf16.mxu0 0
      %5085 = vmatmul.mubr.bf16.gmra.mrb[0].mxu0 %v4561
      %v5086 = vpop.f32.mrb[0].mxu0
      %v5087 = vadd.f32 0.0, %v5086
      %v5088 = vpop.f32.mrb[0].mxu0
      %v5089 = vpop.f32.mrb[0].mxu0
      %v5090 = vadd.f32 0.0, %v5089
      %v5091 = vpop.f32.mrb[0].mxu0
      %5092 = vmatprep.mubr.bf16.mxu0 0
      %5093 = vmatmul.mubr.bf16.gmra.mrb[0].mxu0 %v4564
      %v5094 = vpop.f32.mrb[0].mxu0
      %v5095 = vadd.f32 0.0, %v5094
      %v5096 = vpop.f32.mrb[0].mxu0
      %v5097 = vpop.f32.mrb[0].mxu0
      %v5098 = vadd.f32 0.0, %v5097
      %v5099 = vpop.f32.mrb[0].mxu0
      %5100 = vmatprep.mubr.bf16.mxu0 0
      %5101 = vmatmul.mubr.bf16.gmra.mrb[0].mxu0 %v4567
      %v5102 = vpop.f32.mrb[0].mxu0
      %v5103 = vadd.f32 0.0, %v5102
      %v5104 = vpop.f32.mrb[0].mxu0
      %v5105 = vpop.f32.mrb[0].mxu0
      %v5106 = vadd.f32 0.0, %v5105
      %v5107 = vpop.f32.mrb[0].mxu0
      %5108 = vmatprep.mubr.bf16.mxu0 0
      %5109 = vmatmul.mubr.bf16.gmra.mrb[0].mxu0 %v4570
      %v5110 = vpop.f32.mrb[0].mxu0
      %v5111 = vadd.f32 0.0, %v5110
      %v5112 = vpop.f32.mrb[0].mxu0
      %v5113 = vpop.f32.mrb[0].mxu0
      %v5114 = vadd.f32 0.0, %v5113
      %v5115 = vpop.f32.mrb[0].mxu0
      %5116 = vmatprep.mubr.bf16.mxu0 0
      %5117 = vmatmul.mubr.bf16.gmra.mrb[0].mxu0 %v4573
      %v5118 = vpop.f32.mrb[0].mxu0
      %v5119 = vadd.f32 0.0, %v5118
      %v5120 = vpop.f32.mrb[0].mxu0
      %v5121 = vpop.f32.mrb[0].mxu0
      %v5122 = vadd.f32 0.0, %v5121
      %v5123 = vpop.f32.mrb[0].mxu0
      %5124 = vmatprep.mubr.bf16.mxu0 0
      %5125 = vmatmul.mubr.bf16.gmra.mrb[0].mxu0 %v4576
      %v5126 = vpop.f32.mrb[0].mxu0
      %v5127 = vadd.f32 0.0, %v5126
      %v5128 = vpop.f32.mrb[0].mxu0
      %v5129 = vpop.f32.mrb[0].mxu0
      %v5130 = vadd.f32 0.0, %v5129
      %v5131 = vpop.f32.mrb[0].mxu0
      %5132 = vmatprep.mubr.bf16.mxu0 0
      %5133 = vmatmul.mubr.bf16.gmra.mrb[0].mxu0 %v4579
      %v5134 = vpop.f32.mrb[0].mxu0
      %v5135 = vadd.f32 0.0, %v5134
      %v5136 = vpop.f32.mrb[0].mxu0
      %v5137 = vpop.f32.mrb[0].mxu0
      %v5138 = vadd.f32 0.0, %v5137
      %v5139 = vpop.f32.mrb[0].mxu0
      %5140 = vmatprep.mubr.bf16.mxu0 0
      %5141 = vmatmul.mubr.bf16.gmra.mrb[0].mxu0 %v4582
      %v5142 = vpop.f32.mrb[0].mxu0
      %v5143 = vadd.f32 0.0, %v5142
      %v5144 = vpop.f32.mrb[0].mxu0
      %v5145 = vpop.f32.mrb[0].mxu0
      %v5146 = vadd.f32 0.0, %v5145
      %v5147 = vpop.f32.mrb[0].mxu0
      %5148 = vmatprep.mubr.bf16.mxu0 0
      %5149 = vmatmul.mubr.bf16.gmra.mrb[0].mxu0 %v4585
      %v5150 = vpop.f32.mrb[0].mxu0
      %v5151 = vadd.f32 0.0, %v5150
      %v5152 = vpop.f32.mrb[0].mxu0
      %v5153 = vpop.f32.mrb[0].mxu0
      %v5154 = vadd.f32 0.0, %v5153
      %v5155 = vpop.f32.mrb[0].mxu0
      %5156 = vmatprep.mubr.bf16.mxu0 0
      %5157 = vmatmul.mubr.bf16.gmra.mrb[0].mxu0 %v4588
      %v5158 = vpop.f32.mrb[0].mxu0
      %v5159 = vadd.f32 0.0, %v5158
      %v5160 = vpop.f32.mrb[0].mxu0
      %v5161 = vpop.f32.mrb[0].mxu0
      %v5162 = vadd.f32 0.0, %v5161
      %v5163 = vpop.f32.mrb[0].mxu0
      %5164 = vmatprep.mubr.bf16.mxu0 0
      %5165 = vmatmul.mubr.bf16.gmra.mrb[0].mxu0 %v4591
      %v5166 = vpop.f32.mrb[0].mxu0
      %v5167 = vadd.f32 0.0, %v5166
      %v5168 = vpop.f32.mrb[0].mxu0
      %v5169 = vpop.f32.mrb[0].mxu0
      %v5170 = vadd.f32 0.0, %v5169
      %v5171 = vpop.f32.mrb[0].mxu0
      %5172 = vdwg.mxu0
      %v5173 = vadd.f32 %v3634, %v4631
      %v5174 = vadd.f32 %v3635, %v4634
      %v5175 = vadd.f32 %v3636, %v4639
      %v5176 = vadd.f32 %v3637, %v4642
      %v5177 = vadd.f32 %v3638, %v4647
      %v5178 = vadd.f32 %v3639, %v4650
      %v5179 = vadd.f32 %v3640, %v4655
      %v5180 = vadd.f32 %v3641, %v4658
      %v5181 = vadd.f32 %v3642, %v4663
      %v5182 = vadd.f32 %v3643, %v4666
      %v5183 = vadd.f32 %v3644, %v4671
      %v5184 = vadd.f32 %v3645, %v4674
      %v5185 = vadd.f32 %v3646, %v4679
      %v5186 = vadd.f32 %v3647, %v4682
      %v5187 = vadd.f32 %v3648, %v4687
      %v5188 = vadd.f32 %v3649, %v4690
      %v5189 = vadd.f32 %v3650, %v4695
      %v5190 = vadd.f32 %v3651, %v4698
      %v5191 = vadd.f32 %v3652, %v4703
      %v5192 = vadd.f32 %v3653, %v4706
      %v5193 = vadd.f32 %v3654, %v4711
      %v5194 = vadd.f32 %v3655, %v4714
      %v5195 = vadd.f32 %v3656, %v4719
      %v5196 = vadd.f32 %v3657, %v4722
      %v5197 = vadd.f32 %v3658, %v4727
      %v5198 = vadd.f32 %v3659, %v4730
      %v5199 = vadd.f32 %v3660, %v4735
      %v5200 = vadd.f32 %v3661, %v4738
      %v5201 = vadd.f32 %v3662, %v4743
      %v5202 = vadd.f32 %v3663, %v4746
      %v5203 = vadd.f32 %v3664, %v4751
      %v5204 = vadd.f32 %v3665, %v4754
      %v5205 = vadd.f32 %v3666, %v4759
      %v5206 = vadd.f32 %v3667, %v4762
      %v5207 = vadd.f32 %v3668, %v4767
      %v5208 = vadd.f32 %v3669, %v4770
      %v5209 = vadd.f32 %v3670, %v4775
      %v5210 = vadd.f32 %v3671, %v4778
      %v5211 = vadd.f32 %v3672, %v4783
      %v5212 = vadd.f32 %v3673, %v4786
      %v5213 = vadd.f32 %v3674, %v4791
      %v5214 = vadd.f32 %v3675, %v4794
      %v5215 = vadd.f32 %v3676, %v4799
      %v5216 = vadd.f32 %v3677, %v4802
      %v5217 = vadd.f32 %v3678, %v4807
      %v5218 = vadd.f32 %v3679, %v4810
      %v5219 = vadd.f32 %v3680, %v4815
      %v5220 = vadd.f32 %v3681, %v4818
      %v5221 = vadd.f32 %v3682, %v4823
      %v5222 = vadd.f32 %v3683, %v4826
      %v5223 = vadd.f32 %v3684, %v4831
      %v5224 = vadd.f32 %v3685, %v4834
      %v5225 = vadd.f32 %v3686, %v4839
      %v5226 = vadd.f32 %v3687, %v4842
      %v5227 = vadd.f32 %v3688, %v4847
      %v5228 = vadd.f32 %v3689, %v4850
      %v5229 = vadd.f32 %v3690, %v4855
      %v5230 = vadd.f32 %v3691, %v4858
      %v5231 = vadd.f32 %v3692, %v4863
      %v5232 = vadd.f32 %v3693, %v4866
      %v5233 = vadd.f32 %v3694, %v4871
      %v5234 = vadd.f32 %v3695, %v4874
      %v5235 = vadd.f32 %v3696, %v4879
      %v5236 = vadd.f32 %v3697, %v4882
      %v5237 = vadd.f32 %v3698, %v4887
      %v5238 = vadd.f32 %v3699, %v4890
      %v5239 = vadd.f32 %v3700, %v4895
      %v5240 = vadd.f32 %v3701, %v4898
      %v5241 = vadd.f32 %v3702, %v4903
      %v5242 = vadd.f32 %v3703, %v4906
      %v5243 = vadd.f32 %v3704, %v4911
      %v5244 = vadd.f32 %v3705, %v4914
      %v5245 = vadd.f32 %v3706, %v4919
      %v5246 = vadd.f32 %v3707, %v4922
      %v5247 = vadd.f32 %v3708, %v4927
      %v5248 = vadd.f32 %v3709, %v4930
      %v5249 = vadd.f32 %v3710, %v4935
      %v5250 = vadd.f32 %v3711, %v4938
      %v5251 = vadd.f32 %v3712, %v4943
      %v5252 = vadd.f32 %v3713, %v4946
      %v5253 = vadd.f32 %v3714, %v4951
      %v5254 = vadd.f32 %v3715, %v4954
      %v5255 = vadd.f32 %v3716, %v4959
      %v5256 = vadd.f32 %v3717, %v4962
      %v5257 = vadd.f32 %v3718, %v4967
      %v5258 = vadd.f32 %v3719, %v4970
      %v5259 = vadd.f32 %v3720, %v4975
      %v5260 = vadd.f32 %v3721, %v4978
      %v5261 = vadd.f32 %v3722, %v4983
      %v5262 = vadd.f32 %v3723, %v4986
      %v5263 = vadd.f32 %v3724, %v4991
      %v5264 = vadd.f32 %v3725, %v4994
      %v5265 = vadd.f32 %v3726, %v4999
      %v5266 = vadd.f32 %v3727, %v5002
      %v5267 = vadd.f32 %v3728, %v5007
      %v5268 = vadd.f32 %v3729, %v5010
      %v5269 = vadd.f32 %v3730, %v5015
      %v5270 = vadd.f32 %v3731, %v5018
      %v5271 = vadd.f32 %v3732, %v5023
      %v5272 = vadd.f32 %v3733, %v5026
      %v5273 = vadd.f32 %v3734, %v5031
      %v5274 = vadd.f32 %v3735, %v5034
      %v5275 = vadd.f32 %v3736, %v5039
      %v5276 = vadd.f32 %v3737, %v5042
      %v5277 = vadd.f32 %v3738, %v5047
      %v5278 = vadd.f32 %v3739, %v5050
      %v5279 = vadd.f32 %v3740, %v5055
      %v5280 = vadd.f32 %v3741, %v5058
      %v5281 = vadd.f32 %v3742, %v5063
      %v5282 = vadd.f32 %v3743, %v5066
      %v5283 = vadd.f32 %v3744, %v5071
      %v5284 = vadd.f32 %v3745, %v5074
      %v5285 = vadd.f32 %v3746, %v5079
      %v5286 = vadd.f32 %v3747, %v5082
      %v5287 = vadd.f32 %v3748, %v5087
      %v5288 = vadd.f32 %v3749, %v5090
      %v5289 = vadd.f32 %v3750, %v5095
      %v5290 = vadd.f32 %v3751, %v5098
      %v5291 = vadd.f32 %v3752, %v5103
      %v5292 = vadd.f32 %v3753, %v5106
      %v5293 = vadd.f32 %v3754, %v5111
      %v5294 = vadd.f32 %v3755, %v5114
      %v5295 = vadd.f32 %v3756, %v5119
      %v5296 = vadd.f32 %v3757, %v5122
      %v5297 = vadd.f32 %v3758, %v5127
      %v5298 = vadd.f32 %v3759, %v5130
      %v5299 = vadd.f32 %v3760, %v5135
      %v5300 = vadd.f32 %v3761, %v5138
      %v5301 = vadd.f32 %v3762, %v5143
      %v5302 = vadd.f32 %v3763, %v5146
      %v5303 = vadd.f32 %v3764, %v5151
      %v5304 = vadd.f32 %v3765, %v5154
      %v5305 = vadd.f32 %v3766, %v5159
      %v5306 = vadd.f32 %v3767, %v5162
      %v5307 = vadd.f32 %v3768, %v5167
      %v5308 = vadd.f32 %v3769, %v5170
      %v5309 = vld [vmem:[%s165 + $0x230] sm:$0x3]
      %s5310 = scalar_lea.vmem %s1, 16
      %v5311 = vld [vmem:[%s5310] sm:$0xf]
      %v5313 = vunpack.c.l.b16 %v5309
      %v5314 = vpack.c.b16 %v5313, %v5313
      %vm5315 = vsmask.f32 6400
      %v5317 = vshrl.u32 %v4183, 16
      %v5319 = vrot.slane %v5317, 1
      %v5320 = vshll.u32 %v4183, 16
      %v5322 = vrot.slane %v5320, 2
      %v5323 = vor.u32 %v5319, %v5322
      %v5325 = vshrl.u32 %v4184, 16
      %v5327 = vrot.slane %v5325, 1
      %v5328 = vshll.u32 %v4184, 16
      %v5330 = vrot.slane %v5328, 2
      %v5331 = vor.u32 %v5327, %v5330
      %v5332 = vsel %vm5315, %v5323, %v5331
      %v5334 = vshrl.u32 %v4185, 16
      %v5336 = vrot.slane %v5334, 1
      %v5337 = vshll.u32 %v4185, 16
      %v5339 = vrot.slane %v5337, 2
      %v5340 = vor.u32 %v5336, %v5339
      %v5341 = vsel %vm5315, %v5331, %v5340
      %v5343 = vshrl.u32 %v4186, 16
      %v5345 = vrot.slane %v5343, 1
      %v5346 = vshll.u32 %v4186, 16
      %v5348 = vrot.slane %v5346, 2
      %v5349 = vor.u32 %v5345, %v5348
      %v5350 = vsel %vm5315, %v5340, %v5349
      %v5352 = vshrl.u32 %v4187, 16
      %v5354 = vrot.slane %v5352, 1
      %v5355 = vshll.u32 %v4187, 16
      %v5357 = vrot.slane %v5355, 2
      %v5358 = vor.u32 %v5354, %v5357
      %v5359 = vsel %vm5315, %v5349, %v5358
      %v5361 = vshrl.u32 %v4188, 16
      %v5363 = vrot.slane %v5361, 1
      %v5364 = vshll.u32 %v4188, 16
      %v5366 = vrot.slane %v5364, 2
      %v5367 = vor.u32 %v5363, %v5366
      %v5368 = vsel %vm5315, %v5358, %v5367
      %v5370 = vshrl.u32 %v4189, 16
      %v5372 = vrot.slane %v5370, 1
      %v5373 = vshll.u32 %v4189, 16
      %v5375 = vrot.slane %v5373, 2
      %v5376 = vor.u32 %v5372, %v5375
      %v5377 = vsel %vm5315, %v5367, %v5376
      %v5379 = vshrl.u32 %v4190, 16
      %v5381 = vrot.slane %v5379, 1
      %v5382 = vshll.u32 %v4190, 16
      %v5384 = vrot.slane %v5382, 2
      %v5385 = vor.u32 %v5381, %v5384
      %v5386 = vsel %vm5315, %v5376, %v5385
      %v5388 = vshrl.u32 %v4191, 16
      %v5390 = vrot.slane %v5388, 1
      %v5391 = vshll.u32 %v4191, 16
      %v5393 = vrot.slane %v5391, 2
      %v5394 = vor.u32 %v5390, %v5393
      %v5395 = vsel %vm5315, %v5385, %v5394
      %v5397 = vshrl.u32 %v4192, 16
      %v5399 = vrot.slane %v5397, 1
      %v5400 = vshll.u32 %v4192, 16
      %v5402 = vrot.slane %v5400, 2
      %v5403 = vor.u32 %v5399, %v5402
      %v5404 = vsel %vm5315, %v5394, %v5403
      %v5406 = vshrl.u32 %v4193, 16
      %v5408 = vrot.slane %v5406, 1
      %v5409 = vshll.u32 %v4193, 16
      %v5411 = vrot.slane %v5409, 2
      %v5412 = vor.u32 %v5408, %v5411
      %v5413 = vsel %vm5315, %v5403, %v5412
      %v5415 = vshrl.u32 %v4194, 16
      %v5417 = vrot.slane %v5415, 1
      %v5418 = vshll.u32 %v4194, 16
      %v5420 = vrot.slane %v5418, 2
      %v5421 = vor.u32 %v5417, %v5420
      %v5422 = vsel %vm5315, %v5412, %v5421
      %v5424 = vshrl.u32 %v4195, 16
      %v5426 = vrot.slane %v5424, 1
      %v5427 = vshll.u32 %v4195, 16
      %v5429 = vrot.slane %v5427, 2
      %v5430 = vor.u32 %v5426, %v5429
      %v5431 = vsel %vm5315, %v5421, %v5430
      %v5433 = vshrl.u32 %v4196, 16
      %v5435 = vrot.slane %v5433, 1
      %v5436 = vshll.u32 %v4196, 16
      %v5438 = vrot.slane %v5436, 2
      %v5439 = vor.u32 %v5435, %v5438
      %v5440 = vsel %vm5315, %v5430, %v5439
      %v5442 = vshrl.u32 %v4197, 16
      %v5444 = vrot.slane %v5442, 1
      %v5445 = vshll.u32 %v4197, 16
      %v5447 = vrot.slane %v5445, 2
      %v5448 = vor.u32 %v5444, %v5447
      %v5449 = vsel %vm5315, %v5439, %v5448
      %v5451 = vshrl.u32 %v4198, 16
      %v5453 = vrot.slane %v5451, 1
      %v5454 = vshll.u32 %v4198, 16
      %v5456 = vrot.slane %v5454, 2
      %v5457 = vor.u32 %v5453, %v5456
      %v5458 = vsel %vm5315, %v5448, %v5457
      %v5460 = vshrl.u32 %v4199, 16
      %v5462 = vrot.slane %v5460, 1
      %v5463 = vshll.u32 %v4199, 16
      %v5465 = vrot.slane %v5463, 2
      %v5466 = vor.u32 %v5462, %v5465
      %v5467 = vsel %vm5315, %v5457, %v5466
      %v5469 = vshrl.u32 %v4200, 16
      %v5471 = vrot.slane %v5469, 1
      %v5472 = vshll.u32 %v4200, 16
      %v5474 = vrot.slane %v5472, 2
      %v5475 = vor.u32 %v5471, %v5474
      %v5476 = vsel %vm5315, %v5466, %v5475
      %v5478 = vshrl.u32 %v4201, 16
      %v5480 = vrot.slane %v5478, 1
      %v5481 = vshll.u32 %v4201, 16
      %v5483 = vrot.slane %v5481, 2
      %v5484 = vor.u32 %v5480, %v5483
      %v5485 = vsel %vm5315, %v5475, %v5484
      %v5487 = vshrl.u32 %v4202, 16
      %v5489 = vrot.slane %v5487, 1
      %v5490 = vshll.u32 %v4202, 16
      %v5492 = vrot.slane %v5490, 2
      %v5493 = vor.u32 %v5489, %v5492
      %v5494 = vsel %vm5315, %v5484, %v5493
      %v5496 = vshrl.u32 %v4203, 16
      %v5498 = vrot.slane %v5496, 1
      %v5499 = vshll.u32 %v4203, 16
      %v5501 = vrot.slane %v5499, 2
      %v5502 = vor.u32 %v5498, %v5501
      %v5503 = vsel %vm5315, %v5493, %v5502
      %v5505 = vshrl.u32 %v4204, 16
      %v5507 = vrot.slane %v5505, 1
      %v5508 = vshll.u32 %v4204, 16
      %v5510 = vrot.slane %v5508, 2
      %v5511 = vor.u32 %v5507, %v5510
      %v5512 = vsel %vm5315, %v5502, %v5511
      %v5514 = vshrl.u32 %v4205, 16
      %v5516 = vrot.slane %v5514, 1
      %v5517 = vshll.u32 %v4205, 16
      %v5519 = vrot.slane %v5517, 2
      %v5520 = vor.u32 %v5516, %v5519
      %v5521 = vsel %vm5315, %v5511, %v5520
      %v5523 = vshrl.u32 %v4206, 16
      %v5525 = vrot.slane %v5523, 1
      %v5526 = vshll.u32 %v4206, 16
      %v5528 = vrot.slane %v5526, 2
      %v5529 = vor.u32 %v5525, %v5528
      %v5530 = vsel %vm5315, %v5520, %v5529
      %v5532 = vshrl.u32 %v4207, 16
      %v5534 = vrot.slane %v5532, 1
      %v5535 = vshll.u32 %v4207, 16
      %v5537 = vrot.slane %v5535, 2
      %v5538 = vor.u32 %v5534, %v5537
      %v5539 = vsel %vm5315, %v5529, %v5538
      %v5541 = vshrl.u32 %v4208, 16
      %v5543 = vrot.slane %v5541, 1
      %v5544 = vshll.u32 %v4208, 16
      %v5546 = vrot.slane %v5544, 2
      %v5547 = vor.u32 %v5543, %v5546
      %v5548 = vsel %vm5315, %v5538, %v5547
      %v5550 = vshrl.u32 %v4209, 16
      %v5552 = vrot.slane %v5550, 1
      %v5553 = vshll.u32 %v4209, 16
      %v5555 = vrot.slane %v5553, 2
      %v5556 = vor.u32 %v5552, %v5555
      %v5557 = vsel %vm5315, %v5547, %v5556
      %v5559 = vshrl.u32 %v4210, 16
      %v5561 = vrot.slane %v5559, 1
      %v5562 = vshll.u32 %v4210, 16
      %v5564 = vrot.slane %v5562, 2
      %v5565 = vor.u32 %v5561, %v5564
      %v5566 = vsel %vm5315, %v5556, %v5565
      %v5568 = vshrl.u32 %v4211, 16
      %v5570 = vrot.slane %v5568, 1
      %v5571 = vshll.u32 %v4211, 16
      %v5573 = vrot.slane %v5571, 2
      %v5574 = vor.u32 %v5570, %v5573
      %v5575 = vsel %vm5315, %v5565, %v5574
      %v5577 = vshrl.u32 %v4212, 16
      %v5579 = vrot.slane %v5577, 1
      %v5580 = vshll.u32 %v4212, 16
      %v5582 = vrot.slane %v5580, 2
      %v5583 = vor.u32 %v5579, %v5582
      %v5584 = vsel %vm5315, %v5574, %v5583
      %v5586 = vshrl.u32 %v4213, 16
      %v5588 = vrot.slane %v5586, 1
      %v5589 = vshll.u32 %v4213, 16
      %v5591 = vrot.slane %v5589, 2
      %v5592 = vor.u32 %v5588, %v5591
      %v5593 = vsel %vm5315, %v5583, %v5592
      %v5595 = vshrl.u32 %v4214, 16
      %v5597 = vrot.slane %v5595, 1
      %v5598 = vshll.u32 %v4214, 16
      %v5600 = vrot.slane %v5598, 2
      %v5601 = vor.u32 %v5597, %v5600
      %v5602 = vsel %vm5315, %v5592, %v5601
      %v5604 = vshrl.u32 %v4215, 16
      %v5606 = vrot.slane %v5604, 1
      %v5607 = vshll.u32 %v4215, 16
      %v5609 = vrot.slane %v5607, 2
      %v5610 = vor.u32 %v5606, %v5609
      %v5611 = vsel %vm5315, %v5601, %v5610
      %v5613 = vshrl.u32 %v4216, 16
      %v5615 = vrot.slane %v5613, 1
      %v5616 = vshll.u32 %v4216, 16
      %v5618 = vrot.slane %v5616, 2
      %v5619 = vor.u32 %v5615, %v5618
      %v5620 = vsel %vm5315, %v5610, %v5619
      %v5622 = vshrl.u32 %v4217, 16
      %v5624 = vrot.slane %v5622, 1
      %v5625 = vshll.u32 %v4217, 16
      %v5627 = vrot.slane %v5625, 2
      %v5628 = vor.u32 %v5624, %v5627
      %v5629 = vsel %vm5315, %v5619, %v5628
      %v5631 = vshrl.u32 %v4218, 16
      %v5633 = vrot.slane %v5631, 1
      %v5634 = vshll.u32 %v4218, 16
      %v5636 = vrot.slane %v5634, 2
      %v5637 = vor.u32 %v5633, %v5636
      %v5638 = vsel %vm5315, %v5628, %v5637
      %v5640 = vshrl.u32 %v4219, 16
      %v5642 = vrot.slane %v5640, 1
      %v5643 = vshll.u32 %v4219, 16
      %v5645 = vrot.slane %v5643, 2
      %v5646 = vor.u32 %v5642, %v5645
      %v5647 = vsel %vm5315, %v5637, %v5646
      %v5649 = vshrl.u32 %v4220, 16
      %v5651 = vrot.slane %v5649, 1
      %v5652 = vshll.u32 %v4220, 16
      %v5654 = vrot.slane %v5652, 2
      %v5655 = vor.u32 %v5651, %v5654
      %v5656 = vsel %vm5315, %v5646, %v5655
      %v5658 = vshrl.u32 %v4221, 16
      %v5660 = vrot.slane %v5658, 1
      %v5661 = vshll.u32 %v4221, 16
      %v5663 = vrot.slane %v5661, 2
      %v5664 = vor.u32 %v5660, %v5663
      %v5665 = vsel %vm5315, %v5655, %v5664
      %v5667 = vshrl.u32 %v4222, 16
      %v5669 = vrot.slane %v5667, 1
      %v5670 = vshll.u32 %v4222, 16
      %v5672 = vrot.slane %v5670, 2
      %v5673 = vor.u32 %v5669, %v5672
      %v5674 = vsel %vm5315, %v5664, %v5673
      %v5676 = vshrl.u32 %v4223, 16
      %v5678 = vrot.slane %v5676, 1
      %v5679 = vshll.u32 %v4223, 16
      %v5681 = vrot.slane %v5679, 2
      %v5682 = vor.u32 %v5678, %v5681
      %v5683 = vsel %vm5315, %v5673, %v5682
      %v5685 = vshrl.u32 %v4224, 16
      %v5687 = vrot.slane %v5685, 1
      %v5688 = vshll.u32 %v4224, 16
      %v5690 = vrot.slane %v5688, 2
      %v5691 = vor.u32 %v5687, %v5690
      %v5692 = vsel %vm5315, %v5682, %v5691
      %v5694 = vshrl.u32 %v4225, 16
      %v5696 = vrot.slane %v5694, 1
      %v5697 = vshll.u32 %v4225, 16
      %v5699 = vrot.slane %v5697, 2
      %v5700 = vor.u32 %v5696, %v5699
      %v5701 = vsel %vm5315, %v5691, %v5700
      %v5703 = vshrl.u32 %v4226, 16
      %v5705 = vrot.slane %v5703, 1
      %v5706 = vshll.u32 %v4226, 16
      %v5708 = vrot.slane %v5706, 2
      %v5709 = vor.u32 %v5705, %v5708
      %v5710 = vsel %vm5315, %v5700, %v5709
      %v5712 = vshrl.u32 %v4227, 16
      %v5714 = vrot.slane %v5712, 1
      %v5715 = vshll.u32 %v4227, 16
      %v5717 = vrot.slane %v5715, 2
      %v5718 = vor.u32 %v5714, %v5717
      %v5719 = vsel %vm5315, %v5709, %v5718
      %v5721 = vshrl.u32 %v4228, 16
      %v5723 = vrot.slane %v5721, 1
      %v5724 = vshll.u32 %v4228, 16
      %v5726 = vrot.slane %v5724, 2
      %v5727 = vor.u32 %v5723, %v5726
      %v5728 = vsel %vm5315, %v5718, %v5727
      %v5730 = vshrl.u32 %v4229, 16
      %v5732 = vrot.slane %v5730, 1
      %v5733 = vshll.u32 %v4229, 16
      %v5735 = vrot.slane %v5733, 2
      %v5736 = vor.u32 %v5732, %v5735
      %v5737 = vsel %vm5315, %v5727, %v5736
      %v5739 = vshrl.u32 %v4230, 16
      %v5741 = vrot.slane %v5739, 1
      %v5742 = vshll.u32 %v4230, 16
      %v5744 = vrot.slane %v5742, 2
      %v5745 = vor.u32 %v5741, %v5744
      %v5746 = vsel %vm5315, %v5736, %v5745
      %v5748 = vshrl.u32 %v4231, 16
      %v5750 = vrot.slane %v5748, 1
      %v5751 = vshll.u32 %v4231, 16
      %v5753 = vrot.slane %v5751, 2
      %v5754 = vor.u32 %v5750, %v5753
      %v5755 = vsel %vm5315, %v5745, %v5754
      %v5757 = vshrl.u32 %v4232, 16
      %v5759 = vrot.slane %v5757, 1
      %v5760 = vshll.u32 %v4232, 16
      %v5762 = vrot.slane %v5760, 2
      %v5763 = vor.u32 %v5759, %v5762
      %v5764 = vsel %vm5315, %v5754, %v5763
      %v5766 = vshrl.u32 %v4233, 16
      %v5768 = vrot.slane %v5766, 1
      %v5769 = vshll.u32 %v4233, 16
      %v5771 = vrot.slane %v5769, 2
      %v5772 = vor.u32 %v5768, %v5771
      %v5773 = vsel %vm5315, %v5763, %v5772
      %v5775 = vshrl.u32 %v4234, 16
      %v5777 = vrot.slane %v5775, 1
      %v5778 = vshll.u32 %v4234, 16
      %v5780 = vrot.slane %v5778, 2
      %v5781 = vor.u32 %v5777, %v5780
      %v5782 = vsel %vm5315, %v5772, %v5781
      %v5784 = vshrl.u32 %v4235, 16
      %v5786 = vrot.slane %v5784, 1
      %v5787 = vshll.u32 %v4235, 16
      %v5789 = vrot.slane %v5787, 2
      %v5790 = vor.u32 %v5786, %v5789
      %v5791 = vsel %vm5315, %v5781, %v5790
      %v5793 = vshrl.u32 %v4236, 16
      %v5795 = vrot.slane %v5793, 1
      %v5796 = vshll.u32 %v4236, 16
      %v5798 = vrot.slane %v5796, 2
      %v5799 = vor.u32 %v5795, %v5798
      %v5800 = vsel %vm5315, %v5790, %v5799
      %v5802 = vshrl.u32 %v4237, 16
      %v5804 = vrot.slane %v5802, 1
      %v5805 = vshll.u32 %v4237, 16
      %v5807 = vrot.slane %v5805, 2
      %v5808 = vor.u32 %v5804, %v5807
      %v5809 = vsel %vm5315, %v5799, %v5808
      %v5811 = vshrl.u32 %v4238, 16
      %v5813 = vrot.slane %v5811, 1
      %v5814 = vshll.u32 %v4238, 16
      %v5816 = vrot.slane %v5814, 2
      %v5817 = vor.u32 %v5813, %v5816
      %v5818 = vsel %vm5315, %v5808, %v5817
      %v5820 = vshrl.u32 %v4239, 16
      %v5822 = vrot.slane %v5820, 1
      %v5823 = vshll.u32 %v4239, 16
      %v5825 = vrot.slane %v5823, 2
      %v5826 = vor.u32 %v5822, %v5825
      %v5827 = vsel %vm5315, %v5817, %v5826
      %v5829 = vshrl.u32 %v4240, 16
      %v5831 = vrot.slane %v5829, 1
      %v5832 = vshll.u32 %v4240, 16
      %v5834 = vrot.slane %v5832, 2
      %v5835 = vor.u32 %v5831, %v5834
      %v5836 = vsel %vm5315, %v5826, %v5835
      %v5838 = vshrl.u32 %v4241, 16
      %v5840 = vrot.slane %v5838, 1
      %v5841 = vshll.u32 %v4241, 16
      %v5843 = vrot.slane %v5841, 2
      %v5844 = vor.u32 %v5840, %v5843
      %v5845 = vsel %vm5315, %v5835, %v5844
      %v5847 = vshrl.u32 %v4242, 16
      %v5849 = vrot.slane %v5847, 1
      %v5850 = vshll.u32 %v4242, 16
      %v5852 = vrot.slane %v5850, 2
      %v5853 = vor.u32 %v5849, %v5852
      %v5854 = vsel %vm5315, %v5844, %v5853
      %v5856 = vshrl.u32 %v4243, 16
      %v5858 = vrot.slane %v5856, 1
      %v5859 = vshll.u32 %v4243, 16
      %v5861 = vrot.slane %v5859, 2
      %v5862 = vor.u32 %v5858, %v5861
      %v5863 = vsel %vm5315, %v5853, %v5862
      %v5865 = vshrl.u32 %v4244, 16
      %v5867 = vrot.slane %v5865, 1
      %v5868 = vshll.u32 %v4244, 16
      %v5870 = vrot.slane %v5868, 2
      %v5871 = vor.u32 %v5867, %v5870
      %v5872 = vsel %vm5315, %v5862, %v5871
      %v5874 = vshrl.u32 %v4245, 16
      %v5876 = vrot.slane %v5874, 1
      %v5877 = vshll.u32 %v4245, 16
      %v5879 = vrot.slane %v5877, 2
      %v5880 = vor.u32 %v5876, %v5879
      %v5881 = vsel %vm5315, %v5871, %v5880
      %v5883 = vshrl.u32 %v4246, 16
      %v5885 = vrot.slane %v5883, 1
      %v5886 = vshll.u32 %v4246, 16
      %v5888 = vrot.slane %v5886, 2
      %v5889 = vor.u32 %v5885, %v5888
      %v5890 = vsel %vm5315, %v5880, %v5889
      %v5892 = vshrl.u32 %v4247, 16
      %v5894 = vrot.slane %v5892, 1
      %v5895 = vshll.u32 %v4247, 16
      %v5897 = vrot.slane %v5895, 2
      %v5898 = vor.u32 %v5894, %v5897
      %v5899 = vsel %vm5315, %v5889, %v5898
      %v5901 = vshrl.u32 %v4248, 16
      %v5903 = vrot.slane %v5901, 1
      %v5904 = vshll.u32 %v4248, 16
      %v5906 = vrot.slane %v5904, 2
      %v5907 = vor.u32 %v5903, %v5906
      %v5908 = vsel %vm5315, %v5898, %v5907
      %v5910 = vshrl.u32 %v4249, 16
      %v5912 = vrot.slane %v5910, 1
      %v5913 = vshll.u32 %v4249, 16
      %v5915 = vrot.slane %v5913, 2
      %v5916 = vor.u32 %v5912, %v5915
      %v5917 = vsel %vm5315, %v5907, %v5916
      %v5919 = vshrl.u32 %v4250, 16
      %v5921 = vrot.slane %v5919, 1
      %v5922 = vshll.u32 %v4250, 16
      %v5924 = vrot.slane %v5922, 2
      %v5925 = vor.u32 %v5921, %v5924
      %v5926 = vsel %vm5315, %v5916, %v5925
      %v5928 = vshrl.u32 %v5314, 16
      %v5930 = vrot.slane %v5928, 1
      %v5931 = vshll.u32 %v5314, 16
      %v5933 = vrot.slane %v5931, 2
      %v5934 = vor.u32 %v5930, %v5933
      %v5935 = vsel %vm5315, %v5925, %v5934
      %v5937 = vsel %vm1204, %v5332, 0
      %v5940 = vsel %vm1204, %v5341, 0
      %v5943 = vsel %vm1204, %v5350, 0
      %v5946 = vsel %vm1204, %v5359, 0
      %v5949 = vsel %vm1204, %v5368, 0
      %v5952 = vsel %vm1204, %v5377, 0
      %v5955 = vsel %vm1204, %v5386, 0
      %v5958 = vsel %vm1204, %v5395, 0
      %v5961 = vsel %vm1204, %v5404, 0
      %v5964 = vsel %vm1204, %v5413, 0
      %v5967 = vsel %vm1204, %v5422, 0
      %v5970 = vsel %vm1204, %v5431, 0
      %v5973 = vsel %vm1204, %v5440, 0
      %v5976 = vsel %vm1204, %v5449, 0
      %v5979 = vsel %vm1204, %v5458, 0
      %v5982 = vsel %vm1204, %v5467, 0
      %v5985 = vsel %vm1204, %v5476, 0
      %v5988 = vsel %vm1204, %v5485, 0
      %v5991 = vsel %vm1204, %v5494, 0
      %v5994 = vsel %vm1204, %v5503, 0
      %v5997 = vsel %vm1204, %v5512, 0
      %v6000 = vsel %vm1204, %v5521, 0
      %v6003 = vsel %vm1204, %v5530, 0
      %v6006 = vsel %vm1204, %v5539, 0
      %v6009 = vsel %vm1204, %v5548, 0
      %v6012 = vsel %vm1204, %v5557, 0
      %v6015 = vsel %vm1204, %v5566, 0
      %v6018 = vsel %vm1204, %v5575, 0
      %v6021 = vsel %vm1204, %v5584, 0
      %v6024 = vsel %vm1204, %v5593, 0
      %v6027 = vsel %vm1204, %v5602, 0
      %v6030 = vsel %vm1204, %v5611, 0
      %v6033 = vsel %vm1204, %v5620, 0
      %v6036 = vsel %vm1204, %v5629, 0
      %v6039 = vsel %vm1204, %v5638, 0
      %v6042 = vsel %vm1204, %v5647, 0
      %v6045 = vsel %vm1204, %v5656, 0
      %v6048 = vsel %vm1204, %v5665, 0
      %v6051 = vsel %vm1204, %v5674, 0
      %v6054 = vsel %vm1204, %v5683, 0
      %v6057 = vsel %vm1204, %v5692, 0
      %v6060 = vsel %vm1204, %v5701, 0
      %v6063 = vsel %vm1204, %v5710, 0
      %v6066 = vsel %vm1204, %v5719, 0
      %v6069 = vsel %vm1204, %v5728, 0
      %v6072 = vsel %vm1204, %v5737, 0
      %v6075 = vsel %vm1204, %v5746, 0
      %v6078 = vsel %vm1204, %v5755, 0
      %v6081 = vsel %vm1204, %v5764, 0
      %v6084 = vsel %vm1204, %v5773, 0
      %v6087 = vsel %vm1204, %v5782, 0
      %v6090 = vsel %vm1204, %v5791, 0
      %v6093 = vsel %vm1204, %v5800, 0
      %v6096 = vsel %vm1204, %v5809, 0
      %v6099 = vsel %vm1204, %v5818, 0
      %v6102 = vsel %vm1204, %v5827, 0
      %v6105 = vsel %vm1204, %v5836, 0
      %v6108 = vsel %vm1204, %v5845, 0
      %v6111 = vsel %vm1204, %v5854, 0
      %v6114 = vsel %vm1204, %v5863, 0
      %v6117 = vsel %vm1204, %v5872, 0
      %v6120 = vsel %vm1204, %v5881, 0
      %v6123 = vsel %vm1204, %v5890, 0
      %v6126 = vsel %vm1204, %v5899, 0
      %v6129 = vsel %vm1204, %v5908, 0
      %v6132 = vsel %vm1204, %v5917, 0
      %v6135 = vsel %vm1204, %v5926, 0
      %v6138 = vsel %vm1204, %v5935, 0
      %v6141 = vsel %vm1409, %v5311, 0
      %6143 = vmatprep.subr.bf16.mxu0 0
      %6144 = vmatpush1.bf16.msra.mxu0 %v6141
      %6145 = vmatprep.subr.bf16.mxu0 0
      %6146 = vmatpush1.bf16.msra.mxu0 0
      %6147 = vmatprep.subr.bf16.mxu0 0
      %6148 = vmatpush1.bf16.msra.mxu0 0
      %6149 = vmatprep.subr.bf16.mxu0 0
      %6150 = vmatpush1.bf16.msra.mxu0 0
      %6151 = vmatprep.subr.bf16.mxu0 0
      %6152 = vmatpush1.bf16.msra.mxu0 0
      %6153 = vmatprep.subr.bf16.mxu0 0
      %6154 = vmatpush1.bf16.msra.mxu0 0
      %6155 = vmatprep.subr.bf16.mxu0 0
      %6156 = vmatpush1.bf16.msra.mxu0 0
      %6157 = vmatprep.subr.bf16.mxu0 0
      %6158 = vmatpush1.bf16.msra.mxu0 0
      %6159 = vmatprep.subr.bf16.mxu0 0
      %6160 = vmatpush1.bf16.msra.mxu0 0
      %6161 = vmatprep.subr.bf16.mxu0 0
      %6162 = vmatpush1.bf16.msra.mxu0 0
      %6163 = vmatprep.subr.bf16.mxu0 0
      %6164 = vmatpush1.bf16.msra.mxu0 0
      %6165 = vmatprep.subr.bf16.mxu0 0
      %6166 = vmatpush1.bf16.msra.mxu0 0
      %6167 = vmatprep.subr.bf16.mxu0 0
      %6168 = vmatpush1.bf16.msra.mxu0 0
      %6169 = vmatprep.subr.bf16.mxu0 0
      %6170 = vmatpush1.bf16.msra.mxu0 0
      %6171 = vmatprep.subr.bf16.mxu0 0
      %6172 = vmatpush1.bf16.msra.mxu0 0
      %6173 = vmatprep.subr.bf16.mxu0 0
      %6174 = vmatpush1.bf16.msra.mxu0 0
      %6175 = vmatprep.mubr.bf16.mxu0 0
      %6176 = vmatmul.mubr.bf16.gmra.mrb[0].mxu0 %v5937
      %v6177 = vpop.f32.mrb[0].mxu0
      %v6178 = vadd.f32 0.0, %v6177
      %v6179 = vpop.f32.mrb[0].mxu0
      %v6180 = vpop.f32.mrb[0].mxu0
      %v6181 = vadd.f32 0.0, %v6180
      %v6182 = vpop.f32.mrb[0].mxu0
      %6183 = vmatprep.mubr.bf16.mxu0 0
      %6184 = vmatmul.mubr.bf16.gmra.mrb[0].mxu0 %v5940
      %v6185 = vpop.f32.mrb[0].mxu0
      %v6186 = vadd.f32 0.0, %v6185
      %v6187 = vpop.f32.mrb[0].mxu0
      %v6188 = vpop.f32.mrb[0].mxu0
      %v6189 = vadd.f32 0.0, %v6188
      %v6190 = vpop.f32.mrb[0].mxu0
      %6191 = vmatprep.mubr.bf16.mxu0 0
      %6192 = vmatmul.mubr.bf16.gmra.mrb[0].mxu0 %v5943
      %v6193 = vpop.f32.mrb[0].mxu0
      %v6194 = vadd.f32 0.0, %v6193
      %v6195 = vpop.f32.mrb[0].mxu0
      %v6196 = vpop.f32.mrb[0].mxu0
      %v6197 = vadd.f32 0.0, %v6196
      %v6198 = vpop.f32.mrb[0].mxu0
      %6199 = vmatprep.mubr.bf16.mxu0 0
      %6200 = vmatmul.mubr.bf16.gmra.mrb[0].mxu0 %v5946
      %v6201 = vpop.f32.mrb[0].mxu0
      %v6202 = vadd.f32 0.0, %v6201
      %v6203 = vpop.f32.mrb[0].mxu0
      %v6204 = vpop.f32.mrb[0].mxu0
      %v6205 = vadd.f32 0.0, %v6204
      %v6206 = vpop.f32.mrb[0].mxu0
      %6207 = vmatprep.mubr.bf16.mxu0 0
      %6208 = vmatmul.mubr.bf16.gmra.mrb[0].mxu0 %v5949
      %v6209 = vpop.f32.mrb[0].mxu0
      %v6210 = vadd.f32 0.0, %v6209
      %v6211 = vpop.f32.mrb[0].mxu0
      %v6212 = vpop.f32.mrb[0].mxu0
      %v6213 = vadd.f32 0.0, %v6212
      %v6214 = vpop.f32.mrb[0].mxu0
      %6215 = vmatprep.mubr.bf16.mxu0 0
      %6216 = vmatmul.mubr.bf16.gmra.mrb[0].mxu0 %v5952
      %v6217 = vpop.f32.mrb[0].mxu0
      %v6218 = vadd.f32 0.0, %v6217
      %v6219 = vpop.f32.mrb[0].mxu0
      %v6220 = vpop.f32.mrb[0].mxu0
      %v6221 = vadd.f32 0.0, %v6220
      %v6222 = vpop.f32.mrb[0].mxu0
      %6223 = vmatprep.mubr.bf16.mxu0 0
      %6224 = vmatmul.mubr.bf16.gmra.mrb[0].mxu0 %v5955
      %v6225 = vpop.f32.mrb[0].mxu0
      %v6226 = vadd.f32 0.0, %v6225
      %v6227 = vpop.f32.mrb[0].mxu0
      %v6228 = vpop.f32.mrb[0].mxu0
      %v6229 = vadd.f32 0.0, %v6228
      %v6230 = vpop.f32.mrb[0].mxu0
      %6231 = vmatprep.mubr.bf16.mxu0 0
      %6232 = vmatmul.mubr.bf16.gmra.mrb[0].mxu0 %v5958
      %v6233 = vpop.f32.mrb[0].mxu0
      %v6234 = vadd.f32 0.0, %v6233
      %v6235 = vpop.f32.mrb[0].mxu0
      %v6236 = vpop.f32.mrb[0].mxu0
      %v6237 = vadd.f32 0.0, %v6236
      %v6238 = vpop.f32.mrb[0].mxu0
      %6239 = vmatprep.mubr.bf16.mxu0 0
      %6240 = vmatmul.mubr.bf16.gmra.mrb[0].mxu0 %v5961
      %v6241 = vpop.f32.mrb[0].mxu0
      %v6242 = vadd.f32 0.0, %v6241
      %v6243 = vpop.f32.mrb[0].mxu0
      %v6244 = vpop.f32.mrb[0].mxu0
      %v6245 = vadd.f32 0.0, %v6244
      %v6246 = vpop.f32.mrb[0].mxu0
      %6247 = vmatprep.mubr.bf16.mxu0 0
      %6248 = vmatmul.mubr.bf16.gmra.mrb[0].mxu0 %v5964
      %v6249 = vpop.f32.mrb[0].mxu0
      %v6250 = vadd.f32 0.0, %v6249
      %v6251 = vpop.f32.mrb[0].mxu0
      %v6252 = vpop.f32.mrb[0].mxu0
      %v6253 = vadd.f32 0.0, %v6252
      %v6254 = vpop.f32.mrb[0].mxu0
      %6255 = vmatprep.mubr.bf16.mxu0 0
      %6256 = vmatmul.mubr.bf16.gmra.mrb[0].mxu0 %v5967
      %v6257 = vpop.f32.mrb[0].mxu0
      %v6258 = vadd.f32 0.0, %v6257
      %v6259 = vpop.f32.mrb[0].mxu0
      %v6260 = vpop.f32.mrb[0].mxu0
      %v6261 = vadd.f32 0.0, %v6260
      %v6262 = vpop.f32.mrb[0].mxu0
      %6263 = vmatprep.mubr.bf16.mxu0 0
      %6264 = vmatmul.mubr.bf16.gmra.mrb[0].mxu0 %v5970
      %v6265 = vpop.f32.mrb[0].mxu0
      %v6266 = vadd.f32 0.0, %v6265
      %v6267 = vpop.f32.mrb[0].mxu0
      %v6268 = vpop.f32.mrb[0].mxu0
      %v6269 = vadd.f32 0.0, %v6268
      %v6270 = vpop.f32.mrb[0].mxu0
      %6271 = vmatprep.mubr.bf16.mxu0 0
      %6272 = vmatmul.mubr.bf16.gmra.mrb[0].mxu0 %v5973
      %v6273 = vpop.f32.mrb[0].mxu0
      %v6274 = vadd.f32 0.0, %v6273
      %v6275 = vpop.f32.mrb[0].mxu0
      %v6276 = vpop.f32.mrb[0].mxu0
      %v6277 = vadd.f32 0.0, %v6276
      %v6278 = vpop.f32.mrb[0].mxu0
      %6279 = vmatprep.mubr.bf16.mxu0 0
      %6280 = vmatmul.mubr.bf16.gmra.mrb[0].mxu0 %v5976
      %v6281 = vpop.f32.mrb[0].mxu0
      %v6282 = vadd.f32 0.0, %v6281
      %v6283 = vpop.f32.mrb[0].mxu0
      %v6284 = vpop.f32.mrb[0].mxu0
      %v6285 = vadd.f32 0.0, %v6284
      %v6286 = vpop.f32.mrb[0].mxu0
      %6287 = vmatprep.mubr.bf16.mxu0 0
      %6288 = vmatmul.mubr.bf16.gmra.mrb[0].mxu0 %v5979
      %v6289 = vpop.f32.mrb[0].mxu0
      %v6290 = vadd.f32 0.0, %v6289
      %v6291 = vpop.f32.mrb[0].mxu0
      %v6292 = vpop.f32.mrb[0].mxu0
      %v6293 = vadd.f32 0.0, %v6292
      %v6294 = vpop.f32.mrb[0].mxu0
      %6295 = vmatprep.mubr.bf16.mxu0 0
      %6296 = vmatmul.mubr.bf16.gmra.mrb[0].mxu0 %v5982
      %v6297 = vpop.f32.mrb[0].mxu0
      %v6298 = vadd.f32 0.0, %v6297
      %v6299 = vpop.f32.mrb[0].mxu0
      %v6300 = vpop.f32.mrb[0].mxu0
      %v6301 = vadd.f32 0.0, %v6300
      %v6302 = vpop.f32.mrb[0].mxu0
      %6303 = vmatprep.mubr.bf16.mxu0 0
      %6304 = vmatmul.mubr.bf16.gmra.mrb[0].mxu0 %v5985
      %v6305 = vpop.f32.mrb[0].mxu0
      %v6306 = vadd.f32 0.0, %v6305
      %v6307 = vpop.f32.mrb[0].mxu0
      %v6308 = vpop.f32.mrb[0].mxu0
      %v6309 = vadd.f32 0.0, %v6308
      %v6310 = vpop.f32.mrb[0].mxu0
      %6311 = vmatprep.mubr.bf16.mxu0 0
      %6312 = vmatmul.mubr.bf16.gmra.mrb[0].mxu0 %v5988
      %v6313 = vpop.f32.mrb[0].mxu0
      %v6314 = vadd.f32 0.0, %v6313
      %v6315 = vpop.f32.mrb[0].mxu0
      %v6316 = vpop.f32.mrb[0].mxu0
      %v6317 = vadd.f32 0.0, %v6316
      %v6318 = vpop.f32.mrb[0].mxu0
      %6319 = vmatprep.mubr.bf16.mxu0 0
      %6320 = vmatmul.mubr.bf16.gmra.mrb[0].mxu0 %v5991
      %v6321 = vpop.f32.mrb[0].mxu0
      %v6322 = vadd.f32 0.0, %v6321
      %v6323 = vpop.f32.mrb[0].mxu0
      %v6324 = vpop.f32.mrb[0].mxu0
      %v6325 = vadd.f32 0.0, %v6324
      %v6326 = vpop.f32.mrb[0].mxu0
      %6327 = vmatprep.mubr.bf16.mxu0 0
      %6328 = vmatmul.mubr.bf16.gmra.mrb[0].mxu0 %v5994
      %v6329 = vpop.f32.mrb[0].mxu0
      %v6330 = vadd.f32 0.0, %v6329
      %v6331 = vpop.f32.mrb[0].mxu0
      %v6332 = vpop.f32.mrb[0].mxu0
      %v6333 = vadd.f32 0.0, %v6332
      %v6334 = vpop.f32.mrb[0].mxu0
      %6335 = vmatprep.mubr.bf16.mxu0 0
      %6336 = vmatmul.mubr.bf16.gmra.mrb[0].mxu0 %v5997
      %v6337 = vpop.f32.mrb[0].mxu0
      %v6338 = vadd.f32 0.0, %v6337
      %v6339 = vpop.f32.mrb[0].mxu0
      %v6340 = vpop.f32.mrb[0].mxu0
      %v6341 = vadd.f32 0.0, %v6340
      %v6342 = vpop.f32.mrb[0].mxu0
      %6343 = vmatprep.mubr.bf16.mxu0 0
      %6344 = vmatmul.mubr.bf16.gmra.mrb[0].mxu0 %v6000
      %v6345 = vpop.f32.mrb[0].mxu0
      %v6346 = vadd.f32 0.0, %v6345
      %v6347 = vpop.f32.mrb[0].mxu0
      %v6348 = vpop.f32.mrb[0].mxu0
      %v6349 = vadd.f32 0.0, %v6348
      %v6350 = vpop.f32.mrb[0].mxu0
      %6351 = vmatprep.mubr.bf16.mxu0 0
      %6352 = vmatmul.mubr.bf16.gmra.mrb[0].mxu0 %v6003
      %v6353 = vpop.f32.mrb[0].mxu0
      %v6354 = vadd.f32 0.0, %v6353
      %v6355 = vpop.f32.mrb[0].mxu0
      %v6356 = vpop.f32.mrb[0].mxu0
      %v6357 = vadd.f32 0.0, %v6356
      %v6358 = vpop.f32.mrb[0].mxu0
      %6359 = vmatprep.mubr.bf16.mxu0 0
      %6360 = vmatmul.mubr.bf16.gmra.mrb[0].mxu0 %v6006
      %v6361 = vpop.f32.mrb[0].mxu0
      %v6362 = vadd.f32 0.0, %v6361
      %v6363 = vpop.f32.mrb[0].mxu0
      %v6364 = vpop.f32.mrb[0].mxu0
      %v6365 = vadd.f32 0.0, %v6364
      %v6366 = vpop.f32.mrb[0].mxu0
      %6367 = vmatprep.mubr.bf16.mxu0 0
      %6368 = vmatmul.mubr.bf16.gmra.mrb[0].mxu0 %v6009
      %v6369 = vpop.f32.mrb[0].mxu0
      %v6370 = vadd.f32 0.0, %v6369
      %v6371 = vpop.f32.mrb[0].mxu0
      %v6372 = vpop.f32.mrb[0].mxu0
      %v6373 = vadd.f32 0.0, %v6372
      %v6374 = vpop.f32.mrb[0].mxu0
      %6375 = vmatprep.mubr.bf16.mxu0 0
      %6376 = vmatmul.mubr.bf16.gmra.mrb[0].mxu0 %v6012
      %v6377 = vpop.f32.mrb[0].mxu0
      %v6378 = vadd.f32 0.0, %v6377
      %v6379 = vpop.f32.mrb[0].mxu0
      %v6380 = vpop.f32.mrb[0].mxu0
      %v6381 = vadd.f32 0.0, %v6380
      %v6382 = vpop.f32.mrb[0].mxu0
      %6383 = vmatprep.mubr.bf16.mxu0 0
      %6384 = vmatmul.mubr.bf16.gmra.mrb[0].mxu0 %v6015
      %v6385 = vpop.f32.mrb[0].mxu0
      %v6386 = vadd.f32 0.0, %v6385
      %v6387 = vpop.f32.mrb[0].mxu0
      %v6388 = vpop.f32.mrb[0].mxu0
      %v6389 = vadd.f32 0.0, %v6388
      %v6390 = vpop.f32.mrb[0].mxu0
      %6391 = vmatprep.mubr.bf16.mxu0 0
      %6392 = vmatmul.mubr.bf16.gmra.mrb[0].mxu0 %v6018
      %v6393 = vpop.f32.mrb[0].mxu0
      %v6394 = vadd.f32 0.0, %v6393
      %v6395 = vpop.f32.mrb[0].mxu0
      %v6396 = vpop.f32.mrb[0].mxu0
      %v6397 = vadd.f32 0.0, %v6396
      %v6398 = vpop.f32.mrb[0].mxu0
      %6399 = vmatprep.mubr.bf16.mxu0 0
      %6400 = vmatmul.mubr.bf16.gmra.mrb[0].mxu0 %v6021
      %v6401 = vpop.f32.mrb[0].mxu0
      %v6402 = vadd.f32 0.0, %v6401
      %v6403 = vpop.f32.mrb[0].mxu0
      %v6404 = vpop.f32.mrb[0].mxu0
      %v6405 = vadd.f32 0.0, %v6404
      %v6406 = vpop.f32.mrb[0].mxu0
      %6407 = vmatprep.mubr.bf16.mxu0 0
      %6408 = vmatmul.mubr.bf16.gmra.mrb[0].mxu0 %v6024
      %v6409 = vpop.f32.mrb[0].mxu0
      %v6410 = vadd.f32 0.0, %v6409
      %v6411 = vpop.f32.mrb[0].mxu0
      %v6412 = vpop.f32.mrb[0].mxu0
      %v6413 = vadd.f32 0.0, %v6412
      %v6414 = vpop.f32.mrb[0].mxu0
      %6415 = vmatprep.mubr.bf16.mxu0 0
      %6416 = vmatmul.mubr.bf16.gmra.mrb[0].mxu0 %v6027
      %v6417 = vpop.f32.mrb[0].mxu0
      %v6418 = vadd.f32 0.0, %v6417
      %v6419 = vpop.f32.mrb[0].mxu0
      %v6420 = vpop.f32.mrb[0].mxu0
      %v6421 = vadd.f32 0.0, %v6420
      %v6422 = vpop.f32.mrb[0].mxu0
      %6423 = vmatprep.mubr.bf16.mxu0 0
      %6424 = vmatmul.mubr.bf16.gmra.mrb[0].mxu0 %v6030
      %v6425 = vpop.f32.mrb[0].mxu0
      %v6426 = vadd.f32 0.0, %v6425
      %v6427 = vpop.f32.mrb[0].mxu0
      %v6428 = vpop.f32.mrb[0].mxu0
      %v6429 = vadd.f32 0.0, %v6428
      %v6430 = vpop.f32.mrb[0].mxu0
      %6431 = vmatprep.mubr.bf16.mxu0 0
      %6432 = vmatmul.mubr.bf16.gmra.mrb[0].mxu0 %v6033
      %v6433 = vpop.f32.mrb[0].mxu0
      %v6434 = vadd.f32 0.0, %v6433
      %v6435 = vpop.f32.mrb[0].mxu0
      %v6436 = vpop.f32.mrb[0].mxu0
      %v6437 = vadd.f32 0.0, %v6436
      %v6438 = vpop.f32.mrb[0].mxu0
      %6439 = vmatprep.mubr.bf16.mxu0 0
      %6440 = vmatmul.mubr.bf16.gmra.mrb[0].mxu0 %v6036
      %v6441 = vpop.f32.mrb[0].mxu0
      %v6442 = vadd.f32 0.0, %v6441
      %v6443 = vpop.f32.mrb[0].mxu0
      %v6444 = vpop.f32.mrb[0].mxu0
      %v6445 = vadd.f32 0.0, %v6444
      %v6446 = vpop.f32.mrb[0].mxu0
      %6447 = vmatprep.mubr.bf16.mxu0 0
      %6448 = vmatmul.mubr.bf16.gmra.mrb[0].mxu0 %v6039
      %v6449 = vpop.f32.mrb[0].mxu0
      %v6450 = vadd.f32 0.0, %v6449
      %v6451 = vpop.f32.mrb[0].mxu0
      %v6452 = vpop.f32.mrb[0].mxu0
      %v6453 = vadd.f32 0.0, %v6452
      %v6454 = vpop.f32.mrb[0].mxu0
      %6455 = vmatprep.mubr.bf16.mxu0 0
      %6456 = vmatmul.mubr.bf16.gmra.mrb[0].mxu0 %v6042
      %v6457 = vpop.f32.mrb[0].mxu0
      %v6458 = vadd.f32 0.0, %v6457
      %v6459 = vpop.f32.mrb[0].mxu0
      %v6460 = vpop.f32.mrb[0].mxu0
      %v6461 = vadd.f32 0.0, %v6460
      %v6462 = vpop.f32.mrb[0].mxu0
      %6463 = vmatprep.mubr.bf16.mxu0 0
      %6464 = vmatmul.mubr.bf16.gmra.mrb[0].mxu0 %v6045
      %v6465 = vpop.f32.mrb[0].mxu0
      %v6466 = vadd.f32 0.0, %v6465
      %v6467 = vpop.f32.mrb[0].mxu0
      %v6468 = vpop.f32.mrb[0].mxu0
      %v6469 = vadd.f32 0.0, %v6468
      %v6470 = vpop.f32.mrb[0].mxu0
      %6471 = vmatprep.mubr.bf16.mxu0 0
      %6472 = vmatmul.mubr.bf16.gmra.mrb[0].mxu0 %v6048
      %v6473 = vpop.f32.mrb[0].mxu0
      %v6474 = vadd.f32 0.0, %v6473
      %v6475 = vpop.f32.mrb[0].mxu0
      %v6476 = vpop.f32.mrb[0].mxu0
      %v6477 = vadd.f32 0.0, %v6476
      %v6478 = vpop.f32.mrb[0].mxu0
      %6479 = vmatprep.mubr.bf16.mxu0 0
      %6480 = vmatmul.mubr.bf16.gmra.mrb[0].mxu0 %v6051
      %v6481 = vpop.f32.mrb[0].mxu0
      %v6482 = vadd.f32 0.0, %v6481
      %v6483 = vpop.f32.mrb[0].mxu0
      %v6484 = vpop.f32.mrb[0].mxu0
      %v6485 = vadd.f32 0.0, %v6484
      %v6486 = vpop.f32.mrb[0].mxu0
      %6487 = vmatprep.mubr.bf16.mxu0 0
      %6488 = vmatmul.mubr.bf16.gmra.mrb[0].mxu0 %v6054
      %v6489 = vpop.f32.mrb[0].mxu0
      %v6490 = vadd.f32 0.0, %v6489
      %v6491 = vpop.f32.mrb[0].mxu0
      %v6492 = vpop.f32.mrb[0].mxu0
      %v6493 = vadd.f32 0.0, %v6492
      %v6494 = vpop.f32.mrb[0].mxu0
      %6495 = vmatprep.mubr.bf16.mxu0 0
      %6496 = vmatmul.mubr.bf16.gmra.mrb[0].mxu0 %v6057
      %v6497 = vpop.f32.mrb[0].mxu0
      %v6498 = vadd.f32 0.0, %v6497
      %v6499 = vpop.f32.mrb[0].mxu0
      %v6500 = vpop.f32.mrb[0].mxu0
      %v6501 = vadd.f32 0.0, %v6500
      %v6502 = vpop.f32.mrb[0].mxu0
      %6503 = vmatprep.mubr.bf16.mxu0 0
      %6504 = vmatmul.mubr.bf16.gmra.mrb[0].mxu0 %v6060
      %v6505 = vpop.f32.mrb[0].mxu0
      %v6506 = vadd.f32 0.0, %v6505
      %v6507 = vpop.f32.mrb[0].mxu0
      %v6508 = vpop.f32.mrb[0].mxu0
      %v6509 = vadd.f32 0.0, %v6508
      %v6510 = vpop.f32.mrb[0].mxu0
      %6511 = vmatprep.mubr.bf16.mxu0 0
      %6512 = vmatmul.mubr.bf16.gmra.mrb[0].mxu0 %v6063
      %v6513 = vpop.f32.mrb[0].mxu0
      %v6514 = vadd.f32 0.0, %v6513
      %v6515 = vpop.f32.mrb[0].mxu0
      %v6516 = vpop.f32.mrb[0].mxu0
      %v6517 = vadd.f32 0.0, %v6516
      %v6518 = vpop.f32.mrb[0].mxu0
      %6519 = vmatprep.mubr.bf16.mxu0 0
      %6520 = vmatmul.mubr.bf16.gmra.mrb[0].mxu0 %v6066
      %v6521 = vpop.f32.mrb[0].mxu0
      %v6522 = vadd.f32 0.0, %v6521
      %v6523 = vpop.f32.mrb[0].mxu0
      %v6524 = vpop.f32.mrb[0].mxu0
      %v6525 = vadd.f32 0.0, %v6524
      %v6526 = vpop.f32.mrb[0].mxu0
      %6527 = vmatprep.mubr.bf16.mxu0 0
      %6528 = vmatmul.mubr.bf16.gmra.mrb[0].mxu0 %v6069
      %v6529 = vpop.f32.mrb[0].mxu0
      %v6530 = vadd.f32 0.0, %v6529
      %v6531 = vpop.f32.mrb[0].mxu0
      %v6532 = vpop.f32.mrb[0].mxu0
      %v6533 = vadd.f32 0.0, %v6532
      %v6534 = vpop.f32.mrb[0].mxu0
      %6535 = vmatprep.mubr.bf16.mxu0 0
      %6536 = vmatmul.mubr.bf16.gmra.mrb[0].mxu0 %v6072
      %v6537 = vpop.f32.mrb[0].mxu0
      %v6538 = vadd.f32 0.0, %v6537
      %v6539 = vpop.f32.mrb[0].mxu0
      %v6540 = vpop.f32.mrb[0].mxu0
      %v6541 = vadd.f32 0.0, %v6540
      %v6542 = vpop.f32.mrb[0].mxu0
      %6543 = vmatprep.mubr.bf16.mxu0 0
      %6544 = vmatmul.mubr.bf16.gmra.mrb[0].mxu0 %v6075
      %v6545 = vpop.f32.mrb[0].mxu0
      %v6546 = vadd.f32 0.0, %v6545
      %v6547 = vpop.f32.mrb[0].mxu0
      %v6548 = vpop.f32.mrb[0].mxu0
      %v6549 = vadd.f32 0.0, %v6548
      %v6550 = vpop.f32.mrb[0].mxu0
      %6551 = vmatprep.mubr.bf16.mxu0 0
      %6552 = vmatmul.mubr.bf16.gmra.mrb[0].mxu0 %v6078
      %v6553 = vpop.f32.mrb[0].mxu0
      %v6554 = vadd.f32 0.0, %v6553
      %v6555 = vpop.f32.mrb[0].mxu0
      %v6556 = vpop.f32.mrb[0].mxu0
      %v6557 = vadd.f32 0.0, %v6556
      %v6558 = vpop.f32.mrb[0].mxu0
      %6559 = vmatprep.mubr.bf16.mxu0 0
      %6560 = vmatmul.mubr.bf16.gmra.mrb[0].mxu0 %v6081
      %v6561 = vpop.f32.mrb[0].mxu0
      %v6562 = vadd.f32 0.0, %v6561
      %v6563 = vpop.f32.mrb[0].mxu0
      %v6564 = vpop.f32.mrb[0].mxu0
      %v6565 = vadd.f32 0.0, %v6564
      %v6566 = vpop.f32.mrb[0].mxu0
      %6567 = vmatprep.mubr.bf16.mxu0 0
      %6568 = vmatmul.mubr.bf16.gmra.mrb[0].mxu0 %v6084
      %v6569 = vpop.f32.mrb[0].mxu0
      %v6570 = vadd.f32 0.0, %v6569
      %v6571 = vpop.f32.mrb[0].mxu0
      %v6572 = vpop.f32.mrb[0].mxu0
      %v6573 = vadd.f32 0.0, %v6572
      %v6574 = vpop.f32.mrb[0].mxu0
      %6575 = vmatprep.mubr.bf16.mxu0 0
      %6576 = vmatmul.mubr.bf16.gmra.mrb[0].mxu0 %v6087
      %v6577 = vpop.f32.mrb[0].mxu0
      %v6578 = vadd.f32 0.0, %v6577
      %v6579 = vpop.f32.mrb[0].mxu0
      %v6580 = vpop.f32.mrb[0].mxu0
      %v6581 = vadd.f32 0.0, %v6580
      %v6582 = vpop.f32.mrb[0].mxu0
      %6583 = vmatprep.mubr.bf16.mxu0 0
      %6584 = vmatmul.mubr.bf16.gmra.mrb[0].mxu0 %v6090
      %v6585 = vpop.f32.mrb[0].mxu0
      %v6586 = vadd.f32 0.0, %v6585
      %v6587 = vpop.f32.mrb[0].mxu0
      %v6588 = vpop.f32.mrb[0].mxu0
      %v6589 = vadd.f32 0.0, %v6588
      %v6590 = vpop.f32.mrb[0].mxu0
      %6591 = vmatprep.mubr.bf16.mxu0 0
      %6592 = vmatmul.mubr.bf16.gmra.mrb[0].mxu0 %v6093
      %v6593 = vpop.f32.mrb[0].mxu0
      %v6594 = vadd.f32 0.0, %v6593
      %v6595 = vpop.f32.mrb[0].mxu0
      %v6596 = vpop.f32.mrb[0].mxu0
      %v6597 = vadd.f32 0.0, %v6596
      %v6598 = vpop.f32.mrb[0].mxu0
      %6599 = vmatprep.mubr.bf16.mxu0 0
      %6600 = vmatmul.mubr.bf16.gmra.mrb[0].mxu0 %v6096
      %v6601 = vpop.f32.mrb[0].mxu0
      %v6602 = vadd.f32 0.0, %v6601
      %v6603 = vpop.f32.mrb[0].mxu0
      %v6604 = vpop.f32.mrb[0].mxu0
      %v6605 = vadd.f32 0.0, %v6604
      %v6606 = vpop.f32.mrb[0].mxu0
      %6607 = vmatprep.mubr.bf16.mxu0 0
      %6608 = vmatmul.mubr.bf16.gmra.mrb[0].mxu0 %v6099
      %v6609 = vpop.f32.mrb[0].mxu0
      %v6610 = vadd.f32 0.0, %v6609
      %v6611 = vpop.f32.mrb[0].mxu0
      %v6612 = vpop.f32.mrb[0].mxu0
      %v6613 = vadd.f32 0.0, %v6612
      %v6614 = vpop.f32.mrb[0].mxu0
      %6615 = vmatprep.mubr.bf16.mxu0 0
      %6616 = vmatmul.mubr.bf16.gmra.mrb[0].mxu0 %v6102
      %v6617 = vpop.f32.mrb[0].mxu0
      %v6618 = vadd.f32 0.0, %v6617
      %v6619 = vpop.f32.mrb[0].mxu0
      %v6620 = vpop.f32.mrb[0].mxu0
      %v6621 = vadd.f32 0.0, %v6620
      %v6622 = vpop.f32.mrb[0].mxu0
      %6623 = vmatprep.mubr.bf16.mxu0 0
      %6624 = vmatmul.mubr.bf16.gmra.mrb[0].mxu0 %v6105
      %v6625 = vpop.f32.mrb[0].mxu0
      %v6626 = vadd.f32 0.0, %v6625
      %v6627 = vpop.f32.mrb[0].mxu0
      %v6628 = vpop.f32.mrb[0].mxu0
      %v6629 = vadd.f32 0.0, %v6628
      %v6630 = vpop.f32.mrb[0].mxu0
      %6631 = vmatprep.mubr.bf16.mxu0 0
      %6632 = vmatmul.mubr.bf16.gmra.mrb[0].mxu0 %v6108
      %v6633 = vpop.f32.mrb[0].mxu0
      %v6634 = vadd.f32 0.0, %v6633
      %v6635 = vpop.f32.mrb[0].mxu0
      %v6636 = vpop.f32.mrb[0].mxu0
      %v6637 = vadd.f32 0.0, %v6636
      %v6638 = vpop.f32.mrb[0].mxu0
      %6639 = vmatprep.mubr.bf16.mxu0 0
      %6640 = vmatmul.mubr.bf16.gmra.mrb[0].mxu0 %v6111
      %v6641 = vpop.f32.mrb[0].mxu0
      %v6642 = vadd.f32 0.0, %v6641
      %v6643 = vpop.f32.mrb[0].mxu0
      %v6644 = vpop.f32.mrb[0].mxu0
      %v6645 = vadd.f32 0.0, %v6644
      %v6646 = vpop.f32.mrb[0].mxu0
      %6647 = vmatprep.mubr.bf16.mxu0 0
      %6648 = vmatmul.mubr.bf16.gmra.mrb[0].mxu0 %v6114
      %v6649 = vpop.f32.mrb[0].mxu0
      %v6650 = vadd.f32 0.0, %v6649
      %v6651 = vpop.f32.mrb[0].mxu0
      %v6652 = vpop.f32.mrb[0].mxu0
      %v6653 = vadd.f32 0.0, %v6652
      %v6654 = vpop.f32.mrb[0].mxu0
      %6655 = vmatprep.mubr.bf16.mxu0 0
      %6656 = vmatmul.mubr.bf16.gmra.mrb[0].mxu0 %v6117
      %v6657 = vpop.f32.mrb[0].mxu0
      %v6658 = vadd.f32 0.0, %v6657
      %v6659 = vpop.f32.mrb[0].mxu0
      %v6660 = vpop.f32.mrb[0].mxu0
      %v6661 = vadd.f32 0.0, %v6660
      %v6662 = vpop.f32.mrb[0].mxu0
      %6663 = vmatprep.mubr.bf16.mxu0 0
      %6664 = vmatmul.mubr.bf16.gmra.mrb[0].mxu0 %v6120
      %v6665 = vpop.f32.mrb[0].mxu0
      %v6666 = vadd.f32 0.0, %v6665
      %v6667 = vpop.f32.mrb[0].mxu0
      %v6668 = vpop.f32.mrb[0].mxu0
      %v6669 = vadd.f32 0.0, %v6668
      %v6670 = vpop.f32.mrb[0].mxu0
      %6671 = vmatprep.mubr.bf16.mxu0 0
      %6672 = vmatmul.mubr.bf16.gmra.mrb[0].mxu0 %v6123
      %v6673 = vpop.f32.mrb[0].mxu0
      %v6674 = vadd.f32 0.0, %v6673
      %v6675 = vpop.f32.mrb[0].mxu0
      %v6676 = vpop.f32.mrb[0].mxu0
      %v6677 = vadd.f32 0.0, %v6676
      %v6678 = vpop.f32.mrb[0].mxu0
      %6679 = vmatprep.mubr.bf16.mxu0 0
      %6680 = vmatmul.mubr.bf16.gmra.mrb[0].mxu0 %v6126
      %v6681 = vpop.f32.mrb[0].mxu0
      %v6682 = vadd.f32 0.0, %v6681
      %v6683 = vpop.f32.mrb[0].mxu0
      %v6684 = vpop.f32.mrb[0].mxu0
      %v6685 = vadd.f32 0.0, %v6684
      %v6686 = vpop.f32.mrb[0].mxu0
      %6687 = vmatprep.mubr.bf16.mxu0 0
      %6688 = vmatmul.mubr.bf16.gmra.mrb[0].mxu0 %v6129
      %v6689 = vpop.f32.mrb[0].mxu0
      %v6690 = vadd.f32 0.0, %v6689
      %v6691 = vpop.f32.mrb[0].mxu0
      %v6692 = vpop.f32.mrb[0].mxu0
      %v6693 = vadd.f32 0.0, %v6692
      %v6694 = vpop.f32.mrb[0].mxu0
      %6695 = vmatprep.mubr.bf16.mxu0 0
      %6696 = vmatmul.mubr.bf16.gmra.mrb[0].mxu0 %v6132
      %v6697 = vpop.f32.mrb[0].mxu0
      %v6698 = vadd.f32 0.0, %v6697
      %v6699 = vpop.f32.mrb[0].mxu0
      %v6700 = vpop.f32.mrb[0].mxu0
      %v6701 = vadd.f32 0.0, %v6700
      %v6702 = vpop.f32.mrb[0].mxu0
      %6703 = vmatprep.mubr.bf16.mxu0 0
      %6704 = vmatmul.mubr.bf16.gmra.mrb[0].mxu0 %v6135
      %v6705 = vpop.f32.mrb[0].mxu0
      %v6706 = vadd.f32 0.0, %v6705
      %v6707 = vpop.f32.mrb[0].mxu0
      %v6708 = vpop.f32.mrb[0].mxu0
      %v6709 = vadd.f32 0.0, %v6708
      %v6710 = vpop.f32.mrb[0].mxu0
      %6711 = vmatprep.mubr.bf16.mxu0 0
      %6712 = vmatmul.mubr.bf16.gmra.mrb[0].mxu0 %v6138
      %v6713 = vpop.f32.mrb[0].mxu0
      %v6714 = vadd.f32 0.0, %v6713
      %v6715 = vpop.f32.mrb[0].mxu0
      %v6716 = vpop.f32.mrb[0].mxu0
      %v6717 = vadd.f32 0.0, %v6716
      %v6718 = vpop.f32.mrb[0].mxu0
      %6719 = vdwg.mxu0
      %v6720 = vadd.f32 %v5173, %v6178
      %v6721 = vadd.f32 %v5174, %v6181
      %v6722 = vadd.f32 %v5175, %v6186
      %v6723 = vadd.f32 %v5176, %v6189
      %v6724 = vadd.f32 %v5177, %v6194
      %v6725 = vadd.f32 %v5178, %v6197
      %v6726 = vadd.f32 %v5179, %v6202
      %v6727 = vadd.f32 %v5180, %v6205
      %v6728 = vadd.f32 %v5181, %v6210
      %v6729 = vadd.f32 %v5182, %v6213
      %v6730 = vadd.f32 %v5183, %v6218
      %v6731 = vadd.f32 %v5184, %v6221
      %v6732 = vadd.f32 %v5185, %v6226
      %v6733 = vadd.f32 %v5186, %v6229
      %v6734 = vadd.f32 %v5187, %v6234
      %v6735 = vadd.f32 %v5188, %v6237
      %v6736 = vadd.f32 %v5189, %v6242
      %v6737 = vadd.f32 %v5190, %v6245
      %v6738 = vadd.f32 %v5191, %v6250
      %v6739 = vadd.f32 %v5192, %v6253
      %v6740 = vadd.f32 %v5193, %v6258
      %v6741 = vadd.f32 %v5194, %v6261
      %v6742 = vadd.f32 %v5195, %v6266
      %v6743 = vadd.f32 %v5196, %v6269
      %v6744 = vadd.f32 %v5197, %v6274
      %v6745 = vadd.f32 %v5198, %v6277
      %v6746 = vadd.f32 %v5199, %v6282
      %v6747 = vadd.f32 %v5200, %v6285
      %v6748 = vadd.f32 %v5201, %v6290
      %v6749 = vadd.f32 %v5202, %v6293
      %v6750 = vadd.f32 %v5203, %v6298
      %v6751 = vadd.f32 %v5204, %v6301
      %v6752 = vadd.f32 %v5205, %v6306
      %v6753 = vadd.f32 %v5206, %v6309
      %v6754 = vadd.f32 %v5207, %v6314
      %v6755 = vadd.f32 %v5208, %v6317
      %v6756 = vadd.f32 %v5209, %v6322
      %v6757 = vadd.f32 %v5210, %v6325
      %v6758 = vadd.f32 %v5211, %v6330
      %v6759 = vadd.f32 %v5212, %v6333
      %v6760 = vadd.f32 %v5213, %v6338
      %v6761 = vadd.f32 %v5214, %v6341
      %v6762 = vadd.f32 %v5215, %v6346
      %v6763 = vadd.f32 %v5216, %v6349
      %v6764 = vadd.f32 %v5217, %v6354
      %v6765 = vadd.f32 %v5218, %v6357
      %v6766 = vadd.f32 %v5219, %v6362
      %v6767 = vadd.f32 %v5220, %v6365
      %v6768 = vadd.f32 %v5221, %v6370
      %v6769 = vadd.f32 %v5222, %v6373
      %v6770 = vadd.f32 %v5223, %v6378
      %v6771 = vadd.f32 %v5224, %v6381
      %v6772 = vadd.f32 %v5225, %v6386
      %v6773 = vadd.f32 %v5226, %v6389
      %v6774 = vadd.f32 %v5227, %v6394
      %v6775 = vadd.f32 %v5228, %v6397
      %v6776 = vadd.f32 %v5229, %v6402
      %v6777 = vadd.f32 %v5230, %v6405
      %v6778 = vadd.f32 %v5231, %v6410
      %v6779 = vadd.f32 %v5232, %v6413
      %v6780 = vadd.f32 %v5233, %v6418
      %v6781 = vadd.f32 %v5234, %v6421
      %v6782 = vadd.f32 %v5235, %v6426
      %v6783 = vadd.f32 %v5236, %v6429
      %v6784 = vadd.f32 %v5237, %v6434
      %v6785 = vadd.f32 %v5238, %v6437
      %v6786 = vadd.f32 %v5239, %v6442
      %v6787 = vadd.f32 %v5240, %v6445
      %v6788 = vadd.f32 %v5241, %v6450
      %v6789 = vadd.f32 %v5242, %v6453
      %v6790 = vadd.f32 %v5243, %v6458
      %v6791 = vadd.f32 %v5244, %v6461
      %v6792 = vadd.f32 %v5245, %v6466
      %v6793 = vadd.f32 %v5246, %v6469
      %v6794 = vadd.f32 %v5247, %v6474
      %v6795 = vadd.f32 %v5248, %v6477
      %v6796 = vadd.f32 %v5249, %v6482
      %v6797 = vadd.f32 %v5250, %v6485
      %v6798 = vadd.f32 %v5251, %v6490
      %v6799 = vadd.f32 %v5252, %v6493
      %v6800 = vadd.f32 %v5253, %v6498
      %v6801 = vadd.f32 %v5254, %v6501
      %v6802 = vadd.f32 %v5255, %v6506
      %v6803 = vadd.f32 %v5256, %v6509
      %v6804 = vadd.f32 %v5257, %v6514
      %v6805 = vadd.f32 %v5258, %v6517
      %v6806 = vadd.f32 %v5259, %v6522
      %v6807 = vadd.f32 %v5260, %v6525
      %v6808 = vadd.f32 %v5261, %v6530
      %v6809 = vadd.f32 %v5262, %v6533
      %v6810 = vadd.f32 %v5263, %v6538
      %v6811 = vadd.f32 %v5264, %v6541
      %v6812 = vadd.f32 %v5265, %v6546
      %v6813 = vadd.f32 %v5266, %v6549
      %v6814 = vadd.f32 %v5267, %v6554
      %v6815 = vadd.f32 %v5268, %v6557
      %v6816 = vadd.f32 %v5269, %v6562
      %v6817 = vadd.f32 %v5270, %v6565
      %v6818 = vadd.f32 %v5271, %v6570
      %v6819 = vadd.f32 %v5272, %v6573
      %v6820 = vadd.f32 %v5273, %v6578
      %v6821 = vadd.f32 %v5274, %v6581
      %v6822 = vadd.f32 %v5275, %v6586
      %v6823 = vadd.f32 %v5276, %v6589
      %v6824 = vadd.f32 %v5277, %v6594
      %v6825 = vadd.f32 %v5278, %v6597
      %v6826 = vadd.f32 %v5279, %v6602
      %v6827 = vadd.f32 %v5280, %v6605
      %v6828 = vadd.f32 %v5281, %v6610
      %v6829 = vadd.f32 %v5282, %v6613
      %v6830 = vadd.f32 %v5283, %v6618
      %v6831 = vadd.f32 %v5284, %v6621
      %v6832 = vadd.f32 %v5285, %v6626
      %v6833 = vadd.f32 %v5286, %v6629
      %v6834 = vadd.f32 %v5287, %v6634
      %v6835 = vadd.f32 %v5288, %v6637
      %v6836 = vadd.f32 %v5289, %v6642
      %v6837 = vadd.f32 %v5290, %v6645
      %v6838 = vadd.f32 %v5291, %v6650
      %v6839 = vadd.f32 %v5292, %v6653
      %v6840 = vadd.f32 %v5293, %v6658
      %v6841 = vadd.f32 %v5294, %v6661
      %v6842 = vadd.f32 %v5295, %v6666
      %v6843 = vadd.f32 %v5296, %v6669
      %v6844 = vadd.f32 %v5297, %v6674
      %v6845 = vadd.f32 %v5298, %v6677
      %v6846 = vadd.f32 %v5299, %v6682
      %v6847 = vadd.f32 %v5300, %v6685
      %v6848 = vadd.f32 %v5301, %v6690
      %v6849 = vadd.f32 %v5302, %v6693
      %v6850 = vadd.f32 %v5303, %v6698
      %v6851 = vadd.f32 %v5304, %v6701
      %v6852 = vadd.f32 %v5305, %v6706
      %v6853 = vadd.f32 %v5306, %v6709
      %v6854 = vadd.f32 %v5307, %v6714
      %v6855 = vadd.f32 %v5308, %v6717
      %v6856 = vld [vmem:[%s165 + $0x10] sm:$0xc]
      %s6857 = scalar_lea.vmem %s1, 20
      %v6858 = vld [vmem:[%s6857] sm:$0xf]
      %v6860 = vunpack.c.l.b16 %v6856
      %v6861 = vpack.c.b16 %v4047, %v6860
      %vm6862 = vcmask 1045504
      %v6863 = vrot.slane %v6861, 2
      %v6864 = vrot.slane %v4184, 2
      %v6865 = vsel %vm6862, %v6863, %v6864
      %v6866 = vrot.slane %v4185, 2
      %v6867 = vsel %vm6862, %v6864, %v6866
      %v6868 = vrot.slane %v4186, 2
      %v6869 = vsel %vm6862, %v6866, %v6868
      %v6870 = vrot.slane %v4187, 2
      %v6871 = vsel %vm6862, %v6868, %v6870
      %v6872 = vrot.slane %v4188, 2
      %v6873 = vsel %vm6862, %v6870, %v6872
      %v6874 = vrot.slane %v4189, 2
      %v6875 = vsel %vm6862, %v6872, %v6874
      %v6876 = vrot.slane %v4190, 2
      %v6877 = vsel %vm6862, %v6874, %v6876
      %v6878 = vrot.slane %v4191, 2
      %v6879 = vsel %vm6862, %v6876, %v6878
      %v6880 = vrot.slane %v4192, 2
      %v6881 = vsel %vm6862, %v6878, %v6880
      %v6882 = vrot.slane %v4193, 2
      %v6883 = vsel %vm6862, %v6880, %v6882
      %v6884 = vrot.slane %v4194, 2
      %v6885 = vsel %vm6862, %v6882, %v6884
      %v6886 = vrot.slane %v4195, 2
      %v6887 = vsel %vm6862, %v6884, %v6886
      %v6888 = vrot.slane %v4196, 2
      %v6889 = vsel %vm6862, %v6886, %v6888
      %v6890 = vrot.slane %v4197, 2
      %v6891 = vsel %vm6862, %v6888, %v6890
      %v6892 = vrot.slane %v4198, 2
      %v6893 = vsel %vm6862, %v6890, %v6892
      %v6894 = vrot.slane %v4199, 2
      %v6895 = vsel %vm6862, %v6892, %v6894
      %v6896 = vrot.slane %v4200, 2
      %v6897 = vsel %vm6862, %v6894, %v6896
      %v6898 = vrot.slane %v4201, 2
      %v6899 = vsel %vm6862, %v6896, %v6898
      %v6900 = vrot.slane %v4202, 2
      %v6901 = vsel %vm6862, %v6898, %v6900
      %v6902 = vrot.slane %v4203, 2
      %v6903 = vsel %vm6862, %v6900, %v6902
      %v6904 = vrot.slane %v4204, 2
      %v6905 = vsel %vm6862, %v6902, %v6904
      %v6906 = vrot.slane %v4205, 2
      %v6907 = vsel %vm6862, %v6904, %v6906
      %v6908 = vrot.slane %v4206, 2
      %v6909 = vsel %vm6862, %v6906, %v6908
      %v6910 = vrot.slane %v4207, 2
      %v6911 = vsel %vm6862, %v6908, %v6910
      %v6912 = vrot.slane %v4208, 2
      %v6913 = vsel %vm6862, %v6910, %v6912
      %v6914 = vrot.slane %v4209, 2
      %v6915 = vsel %vm6862, %v6912, %v6914
      %v6916 = vrot.slane %v4210, 2
      %v6917 = vsel %vm6862, %v6914, %v6916
      %v6918 = vrot.slane %v4211, 2
      %v6919 = vsel %vm6862, %v6916, %v6918
      %v6920 = vrot.slane %v4212, 2
      %v6921 = vsel %vm6862, %v6918, %v6920
      %v6922 = vrot.slane %v4213, 2
      %v6923 = vsel %vm6862, %v6920, %v6922
      %v6924 = vrot.slane %v4214, 2
      %v6925 = vsel %vm6862, %v6922, %v6924
      %v6926 = vrot.slane %v4215, 2
      %v6927 = vsel %vm6862, %v6924, %v6926
      %v6928 = vrot.slane %v4216, 2
      %v6929 = vsel %vm6862, %v6926, %v6928
      %v6930 = vrot.slane %v4217, 2
      %v6931 = vsel %vm6862, %v6928, %v6930
      %v6932 = vrot.slane %v4218, 2
      %v6933 = vsel %vm6862, %v6930, %v6932
      %v6934 = vrot.slane %v4219, 2
      %v6935 = vsel %vm6862, %v6932, %v6934
      %v6936 = vrot.slane %v4220, 2
      %v6937 = vsel %vm6862, %v6934, %v6936
      %v6938 = vrot.slane %v4221, 2
      %v6939 = vsel %vm6862, %v6936, %v6938
      %v6940 = vrot.slane %v4222, 2
      %v6941 = vsel %vm6862, %v6938, %v6940
      %v6942 = vrot.slane %v4223, 2
      %v6943 = vsel %vm6862, %v6940, %v6942
      %v6944 = vrot.slane %v4224, 2
      %v6945 = vsel %vm6862, %v6942, %v6944
      %v6946 = vrot.slane %v4225, 2
      %v6947 = vsel %vm6862, %v6944, %v6946
      %v6948 = vrot.slane %v4226, 2
      %v6949 = vsel %vm6862, %v6946, %v6948
      %v6950 = vrot.slane %v4227, 2
      %v6951 = vsel %vm6862, %v6948, %v6950
      %v6952 = vrot.slane %v4228, 2
      %v6953 = vsel %vm6862, %v6950, %v6952
      %v6954 = vrot.slane %v4229, 2
      %v6955 = vsel %vm6862, %v6952, %v6954
      %v6956 = vrot.slane %v4230, 2
      %v6957 = vsel %vm6862, %v6954, %v6956
      %v6958 = vrot.slane %v4231, 2
      %v6959 = vsel %vm6862, %v6956, %v6958
      %v6960 = vrot.slane %v4232, 2
      %v6961 = vsel %vm6862, %v6958, %v6960
      %v6962 = vrot.slane %v4233, 2
      %v6963 = vsel %vm6862, %v6960, %v6962
      %v6964 = vrot.slane %v4234, 2
      %v6965 = vsel %vm6862, %v6962, %v6964
      %v6966 = vrot.slane %v4235, 2
      %v6967 = vsel %vm6862, %v6964, %v6966
      %v6968 = vrot.slane %v4236, 2
      %v6969 = vsel %vm6862, %v6966, %v6968
      %v6970 = vrot.slane %v4237, 2
      %v6971 = vsel %vm6862, %v6968, %v6970
      %v6972 = vrot.slane %v4238, 2
      %v6973 = vsel %vm6862, %v6970, %v6972
      %v6974 = vrot.slane %v4239, 2
      %v6975 = vsel %vm6862, %v6972, %v6974
      %v6976 = vrot.slane %v4240, 2
      %v6977 = vsel %vm6862, %v6974, %v6976
      %v6978 = vrot.slane %v4241, 2
      %v6979 = vsel %vm6862, %v6976, %v6978
      %v6980 = vrot.slane %v4242, 2
      %v6981 = vsel %vm6862, %v6978, %v6980
      %v6982 = vrot.slane %v4243, 2
      %v6983 = vsel %vm6862, %v6980, %v6982
      %v6984 = vrot.slane %v4244, 2
      %v6985 = vsel %vm6862, %v6982, %v6984
      %v6986 = vrot.slane %v4245, 2
      %v6987 = vsel %vm6862, %v6984, %v6986
      %v6988 = vrot.slane %v4246, 2
      %v6989 = vsel %vm6862, %v6986, %v6988
      %v6990 = vrot.slane %v4247, 2
      %v6991 = vsel %vm6862, %v6988, %v6990
      %v6992 = vrot.slane %v4248, 2
      %v6993 = vsel %vm6862, %v6990, %v6992
      %v6994 = vrot.slane %v4249, 2
      %v6995 = vsel %vm6862, %v6992, %v6994
      %v6996 = vrot.slane %v4250, 2
      %v6997 = vsel %vm6862, %v6994, %v6996
      %v6998 = vrot.slane %v5314, 2
      %v6999 = vsel %vm6862, %v6996, %v6998
      %v7001 = vsel %vm1204, %v6865, 0
      %v7004 = vsel %vm1204, %v6867, 0
      %v7007 = vsel %vm1204, %v6869, 0
      %v7010 = vsel %vm1204, %v6871, 0
      %v7013 = vsel %vm1204, %v6873, 0
      %v7016 = vsel %vm1204, %v6875, 0
      %v7019 = vsel %vm1204, %v6877, 0
      %v7022 = vsel %vm1204, %v6879, 0
      %v7025 = vsel %vm1204, %v6881, 0
      %v7028 = vsel %vm1204, %v6883, 0
      %v7031 = vsel %vm1204, %v6885, 0
      %v7034 = vsel %vm1204, %v6887, 0
      %v7037 = vsel %vm1204, %v6889, 0
      %v7040 = vsel %vm1204, %v6891, 0
      %v7043 = vsel %vm1204, %v6893, 0
      %v7046 = vsel %vm1204, %v6895, 0
      %v7049 = vsel %vm1204, %v6897, 0
      %v7052 = vsel %vm1204, %v6899, 0
      %v7055 = vsel %vm1204, %v6901, 0
      %v7058 = vsel %vm1204, %v6903, 0
      %v7061 = vsel %vm1204, %v6905, 0
      %v7064 = vsel %vm1204, %v6907, 0
      %v7067 = vsel %vm1204, %v6909, 0
      %v7070 = vsel %vm1204, %v6911, 0
      %v7073 = vsel %vm1204, %v6913, 0
      %v7076 = vsel %vm1204, %v6915, 0
      %v7079 = vsel %vm1204, %v6917, 0
      %v7082 = vsel %vm1204, %v6919, 0
      %v7085 = vsel %vm1204, %v6921, 0
      %v7088 = vsel %vm1204, %v6923, 0
      %v7091 = vsel %vm1204, %v6925, 0
      %v7094 = vsel %vm1204, %v6927, 0
      %v7097 = vsel %vm1204, %v6929, 0
      %v7100 = vsel %vm1204, %v6931, 0
      %v7103 = vsel %vm1204, %v6933, 0
      %v7106 = vsel %vm1204, %v6935, 0
      %v7109 = vsel %vm1204, %v6937, 0
      %v7112 = vsel %vm1204, %v6939, 0
      %v7115 = vsel %vm1204, %v6941, 0
      %v7118 = vsel %vm1204, %v6943, 0
      %v7121 = vsel %vm1204, %v6945, 0
      %v7124 = vsel %vm1204, %v6947, 0
      %v7127 = vsel %vm1204, %v6949, 0
      %v7130 = vsel %vm1204, %v6951, 0
      %v7133 = vsel %vm1204, %v6953, 0
      %v7136 = vsel %vm1204, %v6955, 0
      %v7139 = vsel %vm1204, %v6957, 0
      %v7142 = vsel %vm1204, %v6959, 0
      %v7145 = vsel %vm1204, %v6961, 0
      %v7148 = vsel %vm1204, %v6963, 0
      %v7151 = vsel %vm1204, %v6965, 0
      %v7154 = vsel %vm1204, %v6967, 0
      %v7157 = vsel %vm1204, %v6969, 0
      %v7160 = vsel %vm1204, %v6971, 0
      %v7163 = vsel %vm1204, %v6973, 0
      %v7166 = vsel %vm1204, %v6975, 0
      %v7169 = vsel %vm1204, %v6977, 0
      %v7172 = vsel %vm1204, %v6979, 0
      %v7175 = vsel %vm1204, %v6981, 0
      %v7178 = vsel %vm1204, %v6983, 0
      %v7181 = vsel %vm1204, %v6985, 0
      %v7184 = vsel %vm1204, %v6987, 0
      %v7187 = vsel %vm1204, %v6989, 0
      %v7190 = vsel %vm1204, %v6991, 0
      %v7193 = vsel %vm1204, %v6993, 0
      %v7196 = vsel %vm1204, %v6995, 0
      %v7199 = vsel %vm1204, %v6997, 0
      %v7202 = vsel %vm1204, %v6999, 0
      %v7205 = vsel %vm1409, %v6858, 0
      %7207 = vmatprep.subr.bf16.mxu0 0
      %7208 = vmatpush1.bf16.msra.mxu0 %v7205
      %7209 = vmatprep.subr.bf16.mxu0 0
      %7210 = vmatpush1.bf16.msra.mxu0 0
      %7211 = vmatprep.subr.bf16.mxu0 0
      %7212 = vmatpush1.bf16.msra.mxu0 0
      %7213 = vmatprep.subr.bf16.mxu0 0
      %7214 = vmatpush1.bf16.msra.mxu0 0
      %7215 = vmatprep.subr.bf16.mxu0 0
      %7216 = vmatpush1.bf16.msra.mxu0 0
      %7217 = vmatprep.subr.bf16.mxu0 0
      %7218 = vmatpush1.bf16.msra.mxu0 0
      %7219 = vmatprep.subr.bf16.mxu0 0
      %7220 = vmatpush1.bf16.msra.mxu0 0
      %7221 = vmatprep.subr.bf16.mxu0 0
      %7222 = vmatpush1.bf16.msra.mxu0 0
      %7223 = vmatprep.subr.bf16.mxu0 0
      %7224 = vmatpush1.bf16.msra.mxu0 0
      %7225 = vmatprep.subr.bf16.mxu0 0
      %7226 = vmatpush1.bf16.msra.mxu0 0
      %7227 = vmatprep.subr.bf16.mxu0 0
      %7228 = vmatpush1.bf16.msra.mxu0 0
      %7229 = vmatprep.subr.bf16.mxu0 0
      %7230 = vmatpush1.bf16.msra.mxu0 0
      %7231 = vmatprep.subr.bf16.mxu0 0
      %7232 = vmatpush1.bf16.msra.mxu0 0
      %7233 = vmatprep.subr.bf16.mxu0 0
      %7234 = vmatpush1.bf16.msra.mxu0 0
      %7235 = vmatprep.subr.bf16.mxu0 0
      %7236 = vmatpush1.bf16.msra.mxu0 0
      %7237 = vmatprep.subr.bf16.mxu0 0
      %7238 = vmatpush1.bf16.msra.mxu0 0
      %7239 = vmatprep.mubr.bf16.mxu0 0
      %7240 = vmatmul.mubr.bf16.gmra.mrb[0].mxu0 %v7001
      %v7241 = vpop.f32.mrb[0].mxu0
      %v7242 = vadd.f32 0.0, %v7241
      %v7243 = vpop.f32.mrb[0].mxu0
      %v7244 = vpop.f32.mrb[0].mxu0
      %v7245 = vadd.f32 0.0, %v7244
      %v7246 = vpop.f32.mrb[0].mxu0
      %7247 = vmatprep.mubr.bf16.mxu0 0
      %7248 = vmatmul.mubr.bf16.gmra.mrb[0].mxu0 %v7004
      %v7249 = vpop.f32.mrb[0].mxu0
      %v7250 = vadd.f32 0.0, %v7249
      %v7251 = vpop.f32.mrb[0].mxu0
      %v7252 = vpop.f32.mrb[0].mxu0
      %v7253 = vadd.f32 0.0, %v7252
      %v7254 = vpop.f32.mrb[0].mxu0
      %7255 = vmatprep.mubr.bf16.mxu0 0
      %7256 = vmatmul.mubr.bf16.gmra.mrb[0].mxu0 %v7007
      %v7257 = vpop.f32.mrb[0].mxu0
      %v7258 = vadd.f32 0.0, %v7257
      %v7259 = vpop.f32.mrb[0].mxu0
      %v7260 = vpop.f32.mrb[0].mxu0
      %v7261 = vadd.f32 0.0, %v7260
      %v7262 = vpop.f32.mrb[0].mxu0
      %7263 = vmatprep.mubr.bf16.mxu0 0
      %7264 = vmatmul.mubr.bf16.gmra.mrb[0].mxu0 %v7010
      %v7265 = vpop.f32.mrb[0].mxu0
      %v7266 = vadd.f32 0.0, %v7265
      %v7267 = vpop.f32.mrb[0].mxu0
      %v7268 = vpop.f32.mrb[0].mxu0
      %v7269 = vadd.f32 0.0, %v7268
      %v7270 = vpop.f32.mrb[0].mxu0
      %7271 = vmatprep.mubr.bf16.mxu0 0
      %7272 = vmatmul.mubr.bf16.gmra.mrb[0].mxu0 %v7013
      %v7273 = vpop.f32.mrb[0].mxu0
      %v7274 = vadd.f32 0.0, %v7273
      %v7275 = vpop.f32.mrb[0].mxu0
      %v7276 = vpop.f32.mrb[0].mxu0
      %v7277 = vadd.f32 0.0, %v7276
      %v7278 = vpop.f32.mrb[0].mxu0
      %7279 = vmatprep.mubr.bf16.mxu0 0
      %7280 = vmatmul.mubr.bf16.gmra.mrb[0].mxu0 %v7016
      %v7281 = vpop.f32.mrb[0].mxu0
      %v7282 = vadd.f32 0.0, %v7281
      %v7283 = vpop.f32.mrb[0].mxu0
      %v7284 = vpop.f32.mrb[0].mxu0
      %v7285 = vadd.f32 0.0, %v7284
      %v7286 = vpop.f32.mrb[0].mxu0
      %7287 = vmatprep.mubr.bf16.mxu0 0
      %7288 = vmatmul.mubr.bf16.gmra.mrb[0].mxu0 %v7019
      %v7289 = vpop.f32.mrb[0].mxu0
      %v7290 = vadd.f32 0.0, %v7289
      %v7291 = vpop.f32.mrb[0].mxu0
      %v7292 = vpop.f32.mrb[0].mxu0
      %v7293 = vadd.f32 0.0, %v7292
      %v7294 = vpop.f32.mrb[0].mxu0
      %7295 = vmatprep.mubr.bf16.mxu0 0
      %7296 = vmatmul.mubr.bf16.gmra.mrb[0].mxu0 %v7022
      %v7297 = vpop.f32.mrb[0].mxu0
      %v7298 = vadd.f32 0.0, %v7297
      %v7299 = vpop.f32.mrb[0].mxu0
      %v7300 = vpop.f32.mrb[0].mxu0
      %v7301 = vadd.f32 0.0, %v7300
      %v7302 = vpop.f32.mrb[0].mxu0
      %7303 = vmatprep.mubr.bf16.mxu0 0
      %7304 = vmatmul.mubr.bf16.gmra.mrb[0].mxu0 %v7025
      %v7305 = vpop.f32.mrb[0].mxu0
      %v7306 = vadd.f32 0.0, %v7305
      %v7307 = vpop.f32.mrb[0].mxu0
      %v7308 = vpop.f32.mrb[0].mxu0
      %v7309 = vadd.f32 0.0, %v7308
      %v7310 = vpop.f32.mrb[0].mxu0
      %7311 = vmatprep.mubr.bf16.mxu0 0
      %7312 = vmatmul.mubr.bf16.gmra.mrb[0].mxu0 %v7028
      %v7313 = vpop.f32.mrb[0].mxu0
      %v7314 = vadd.f32 0.0, %v7313
      %v7315 = vpop.f32.mrb[0].mxu0
      %v7316 = vpop.f32.mrb[0].mxu0
      %v7317 = vadd.f32 0.0, %v7316
      %v7318 = vpop.f32.mrb[0].mxu0
      %7319 = vmatprep.mubr.bf16.mxu0 0
      %7320 = vmatmul.mubr.bf16.gmra.mrb[0].mxu0 %v7031
      %v7321 = vpop.f32.mrb[0].mxu0
      %v7322 = vadd.f32 0.0, %v7321
      %v7323 = vpop.f32.mrb[0].mxu0
      %v7324 = vpop.f32.mrb[0].mxu0
      %v7325 = vadd.f32 0.0, %v7324
      %v7326 = vpop.f32.mrb[0].mxu0
      %7327 = vmatprep.mubr.bf16.mxu0 0
      %7328 = vmatmul.mubr.bf16.gmra.mrb[0].mxu0 %v7034
      %v7329 = vpop.f32.mrb[0].mxu0
      %v7330 = vadd.f32 0.0, %v7329
      %v7331 = vpop.f32.mrb[0].mxu0
      %v7332 = vpop.f32.mrb[0].mxu0
      %v7333 = vadd.f32 0.0, %v7332
      %v7334 = vpop.f32.mrb[0].mxu0
      %7335 = vmatprep.mubr.bf16.mxu0 0
      %7336 = vmatmul.mubr.bf16.gmra.mrb[0].mxu0 %v7037
      %v7337 = vpop.f32.mrb[0].mxu0
      %v7338 = vadd.f32 0.0, %v7337
      %v7339 = vpop.f32.mrb[0].mxu0
      %v7340 = vpop.f32.mrb[0].mxu0
      %v7341 = vadd.f32 0.0, %v7340
      %v7342 = vpop.f32.mrb[0].mxu0
      %7343 = vmatprep.mubr.bf16.mxu0 0
      %7344 = vmatmul.mubr.bf16.gmra.mrb[0].mxu0 %v7040
      %v7345 = vpop.f32.mrb[0].mxu0
      %v7346 = vadd.f32 0.0, %v7345
      %v7347 = vpop.f32.mrb[0].mxu0
      %v7348 = vpop.f32.mrb[0].mxu0
      %v7349 = vadd.f32 0.0, %v7348
      %v7350 = vpop.f32.mrb[0].mxu0
      %7351 = vmatprep.mubr.bf16.mxu0 0
      %7352 = vmatmul.mubr.bf16.gmra.mrb[0].mxu0 %v7043
      %v7353 = vpop.f32.mrb[0].mxu0
      %v7354 = vadd.f32 0.0, %v7353
      %v7355 = vpop.f32.mrb[0].mxu0
      %v7356 = vpop.f32.mrb[0].mxu0
      %v7357 = vadd.f32 0.0, %v7356
      %v7358 = vpop.f32.mrb[0].mxu0
      %7359 = vmatprep.mubr.bf16.mxu0 0
      %7360 = vmatmul.mubr.bf16.gmra.mrb[0].mxu0 %v7046
      %v7361 = vpop.f32.mrb[0].mxu0
      %v7362 = vadd.f32 0.0, %v7361
      %v7363 = vpop.f32.mrb[0].mxu0
      %v7364 = vpop.f32.mrb[0].mxu0
      %v7365 = vadd.f32 0.0, %v7364
      %v7366 = vpop.f32.mrb[0].mxu0
      %7367 = vmatprep.mubr.bf16.mxu0 0
      %7368 = vmatmul.mubr.bf16.gmra.mrb[0].mxu0 %v7049
      %v7369 = vpop.f32.mrb[0].mxu0
      %v7370 = vadd.f32 0.0, %v7369
      %v7371 = vpop.f32.mrb[0].mxu0
      %v7372 = vpop.f32.mrb[0].mxu0
      %v7373 = vadd.f32 0.0, %v7372
      %v7374 = vpop.f32.mrb[0].mxu0
      %7375 = vmatprep.mubr.bf16.mxu0 0
      %7376 = vmatmul.mubr.bf16.gmra.mrb[0].mxu0 %v7052
      %v7377 = vpop.f32.mrb[0].mxu0
      %v7378 = vadd.f32 0.0, %v7377
      %v7379 = vpop.f32.mrb[0].mxu0
      %v7380 = vpop.f32.mrb[0].mxu0
      %v7381 = vadd.f32 0.0, %v7380
      %v7382 = vpop.f32.mrb[0].mxu0
      %7383 = vmatprep.mubr.bf16.mxu0 0
      %7384 = vmatmul.mubr.bf16.gmra.mrb[0].mxu0 %v7055
      %v7385 = vpop.f32.mrb[0].mxu0
      %v7386 = vadd.f32 0.0, %v7385
      %v7387 = vpop.f32.mrb[0].mxu0
      %v7388 = vpop.f32.mrb[0].mxu0
      %v7389 = vadd.f32 0.0, %v7388
      %v7390 = vpop.f32.mrb[0].mxu0
      %7391 = vmatprep.mubr.bf16.mxu0 0
      %7392 = vmatmul.mubr.bf16.gmra.mrb[0].mxu0 %v7058
      %v7393 = vpop.f32.mrb[0].mxu0
      %v7394 = vadd.f32 0.0, %v7393
      %v7395 = vpop.f32.mrb[0].mxu0
      %v7396 = vpop.f32.mrb[0].mxu0
      %v7397 = vadd.f32 0.0, %v7396
      %v7398 = vpop.f32.mrb[0].mxu0
      %7399 = vmatprep.mubr.bf16.mxu0 0
      %7400 = vmatmul.mubr.bf16.gmra.mrb[0].mxu0 %v7061
      %v7401 = vpop.f32.mrb[0].mxu0
      %v7402 = vadd.f32 0.0, %v7401
      %v7403 = vpop.f32.mrb[0].mxu0
      %v7404 = vpop.f32.mrb[0].mxu0
      %v7405 = vadd.f32 0.0, %v7404
      %v7406 = vpop.f32.mrb[0].mxu0
      %7407 = vmatprep.mubr.bf16.mxu0 0
      %7408 = vmatmul.mubr.bf16.gmra.mrb[0].mxu0 %v7064
      %v7409 = vpop.f32.mrb[0].mxu0
      %v7410 = vadd.f32 0.0, %v7409
      %v7411 = vpop.f32.mrb[0].mxu0
      %v7412 = vpop.f32.mrb[0].mxu0
      %v7413 = vadd.f32 0.0, %v7412
      %v7414 = vpop.f32.mrb[0].mxu0
      %7415 = vmatprep.mubr.bf16.mxu0 0
      %7416 = vmatmul.mubr.bf16.gmra.mrb[0].mxu0 %v7067
      %v7417 = vpop.f32.mrb[0].mxu0
      %v7418 = vadd.f32 0.0, %v7417
      %v7419 = vpop.f32.mrb[0].mxu0
      %v7420 = vpop.f32.mrb[0].mxu0
      %v7421 = vadd.f32 0.0, %v7420
      %v7422 = vpop.f32.mrb[0].mxu0
      %7423 = vmatprep.mubr.bf16.mxu0 0
      %7424 = vmatmul.mubr.bf16.gmra.mrb[0].mxu0 %v7070
      %v7425 = vpop.f32.mrb[0].mxu0
      %v7426 = vadd.f32 0.0, %v7425
      %v7427 = vpop.f32.mrb[0].mxu0
      %v7428 = vpop.f32.mrb[0].mxu0
      %v7429 = vadd.f32 0.0, %v7428
      %v7430 = vpop.f32.mrb[0].mxu0
      %7431 = vmatprep.mubr.bf16.mxu0 0
      %7432 = vmatmul.mubr.bf16.gmra.mrb[0].mxu0 %v7073
      %v7433 = vpop.f32.mrb[0].mxu0
      %v7434 = vadd.f32 0.0, %v7433
      %v7435 = vpop.f32.mrb[0].mxu0
      %v7436 = vpop.f32.mrb[0].mxu0
      %v7437 = vadd.f32 0.0, %v7436
      %v7438 = vpop.f32.mrb[0].mxu0
      %7439 = vmatprep.mubr.bf16.mxu0 0
      %7440 = vmatmul.mubr.bf16.gmra.mrb[0].mxu0 %v7076
      %v7441 = vpop.f32.mrb[0].mxu0
      %v7442 = vadd.f32 0.0, %v7441
      %v7443 = vpop.f32.mrb[0].mxu0
      %v7444 = vpop.f32.mrb[0].mxu0
      %v7445 = vadd.f32 0.0, %v7444
      %v7446 = vpop.f32.mrb[0].mxu0
      %7447 = vmatprep.mubr.bf16.mxu0 0
      %7448 = vmatmul.mubr.bf16.gmra.mrb[0].mxu0 %v7079
      %v7449 = vpop.f32.mrb[0].mxu0
      %v7450 = vadd.f32 0.0, %v7449
      %v7451 = vpop.f32.mrb[0].mxu0
      %v7452 = vpop.f32.mrb[0].mxu0
      %v7453 = vadd.f32 0.0, %v7452
      %v7454 = vpop.f32.mrb[0].mxu0
      %7455 = vmatprep.mubr.bf16.mxu0 0
      %7456 = vmatmul.mubr.bf16.gmra.mrb[0].mxu0 %v7082
      %v7457 = vpop.f32.mrb[0].mxu0
      %v7458 = vadd.f32 0.0, %v7457
      %v7459 = vpop.f32.mrb[0].mxu0
      %v7460 = vpop.f32.mrb[0].mxu0
      %v7461 = vadd.f32 0.0, %v7460
      %v7462 = vpop.f32.mrb[0].mxu0
      %7463 = vmatprep.mubr.bf16.mxu0 0
      %7464 = vmatmul.mubr.bf16.gmra.mrb[0].mxu0 %v7085
      %v7465 = vpop.f32.mrb[0].mxu0
      %v7466 = vadd.f32 0.0, %v7465
      %v7467 = vpop.f32.mrb[0].mxu0
      %v7468 = vpop.f32.mrb[0].mxu0
      %v7469 = vadd.f32 0.0, %v7468
      %v7470 = vpop.f32.mrb[0].mxu0
      %7471 = vmatprep.mubr.bf16.mxu0 0
      %7472 = vmatmul.mubr.bf16.gmra.mrb[0].mxu0 %v7088
      %v7473 = vpop.f32.mrb[0].mxu0
      %v7474 = vadd.f32 0.0, %v7473
      %v7475 = vpop.f32.mrb[0].mxu0
      %v7476 = vpop.f32.mrb[0].mxu0
      %v7477 = vadd.f32 0.0, %v7476
      %v7478 = vpop.f32.mrb[0].mxu0
      %7479 = vmatprep.mubr.bf16.mxu0 0
      %7480 = vmatmul.mubr.bf16.gmra.mrb[0].mxu0 %v7091
      %v7481 = vpop.f32.mrb[0].mxu0
      %v7482 = vadd.f32 0.0, %v7481
      %v7483 = vpop.f32.mrb[0].mxu0
      %v7484 = vpop.f32.mrb[0].mxu0
      %v7485 = vadd.f32 0.0, %v7484
      %v7486 = vpop.f32.mrb[0].mxu0
      %7487 = vmatprep.mubr.bf16.mxu0 0
      %7488 = vmatmul.mubr.bf16.gmra.mrb[0].mxu0 %v7094
      %v7489 = vpop.f32.mrb[0].mxu0
      %v7490 = vadd.f32 0.0, %v7489
      %v7491 = vpop.f32.mrb[0].mxu0
      %v7492 = vpop.f32.mrb[0].mxu0
      %v7493 = vadd.f32 0.0, %v7492
      %v7494 = vpop.f32.mrb[0].mxu0
      %7495 = vmatprep.mubr.bf16.mxu0 0
      %7496 = vmatmul.mubr.bf16.gmra.mrb[0].mxu0 %v7097
      %v7497 = vpop.f32.mrb[0].mxu0
      %v7498 = vadd.f32 0.0, %v7497
      %v7499 = vpop.f32.mrb[0].mxu0
      %v7500 = vpop.f32.mrb[0].mxu0
      %v7501 = vadd.f32 0.0, %v7500
      %v7502 = vpop.f32.mrb[0].mxu0
      %7503 = vmatprep.mubr.bf16.mxu0 0
      %7504 = vmatmul.mubr.bf16.gmra.mrb[0].mxu0 %v7100
      %v7505 = vpop.f32.mrb[0].mxu0
      %v7506 = vadd.f32 0.0, %v7505
      %v7507 = vpop.f32.mrb[0].mxu0
      %v7508 = vpop.f32.mrb[0].mxu0
      %v7509 = vadd.f32 0.0, %v7508
      %v7510 = vpop.f32.mrb[0].mxu0
      %7511 = vmatprep.mubr.bf16.mxu0 0
      %7512 = vmatmul.mubr.bf16.gmra.mrb[0].mxu0 %v7103
      %v7513 = vpop.f32.mrb[0].mxu0
      %v7514 = vadd.f32 0.0, %v7513
      %v7515 = vpop.f32.mrb[0].mxu0
      %v7516 = vpop.f32.mrb[0].mxu0
      %v7517 = vadd.f32 0.0, %v7516
      %v7518 = vpop.f32.mrb[0].mxu0
      %7519 = vmatprep.mubr.bf16.mxu0 0
      %7520 = vmatmul.mubr.bf16.gmra.mrb[0].mxu0 %v7106
      %v7521 = vpop.f32.mrb[0].mxu0
      %v7522 = vadd.f32 0.0, %v7521
      %v7523 = vpop.f32.mrb[0].mxu0
      %v7524 = vpop.f32.mrb[0].mxu0
      %v7525 = vadd.f32 0.0, %v7524
      %v7526 = vpop.f32.mrb[0].mxu0
      %7527 = vmatprep.mubr.bf16.mxu0 0
      %7528 = vmatmul.mubr.bf16.gmra.mrb[0].mxu0 %v7109
      %v7529 = vpop.f32.mrb[0].mxu0
      %v7530 = vadd.f32 0.0, %v7529
      %v7531 = vpop.f32.mrb[0].mxu0
      %v7532 = vpop.f32.mrb[0].mxu0
      %v7533 = vadd.f32 0.0, %v7532
      %v7534 = vpop.f32.mrb[0].mxu0
      %7535 = vmatprep.mubr.bf16.mxu0 0
      %7536 = vmatmul.mubr.bf16.gmra.mrb[0].mxu0 %v7112
      %v7537 = vpop.f32.mrb[0].mxu0
      %v7538 = vadd.f32 0.0, %v7537
      %v7539 = vpop.f32.mrb[0].mxu0
      %v7540 = vpop.f32.mrb[0].mxu0
      %v7541 = vadd.f32 0.0, %v7540
      %v7542 = vpop.f32.mrb[0].mxu0
      %7543 = vmatprep.mubr.bf16.mxu0 0
      %7544 = vmatmul.mubr.bf16.gmra.mrb[0].mxu0 %v7115
      %v7545 = vpop.f32.mrb[0].mxu0
      %v7546 = vadd.f32 0.0, %v7545
      %v7547 = vpop.f32.mrb[0].mxu0
      %v7548 = vpop.f32.mrb[0].mxu0
      %v7549 = vadd.f32 0.0, %v7548
      %v7550 = vpop.f32.mrb[0].mxu0
      %7551 = vmatprep.mubr.bf16.mxu0 0
      %7552 = vmatmul.mubr.bf16.gmra.mrb[0].mxu0 %v7118
      %v7553 = vpop.f32.mrb[0].mxu0
      %v7554 = vadd.f32 0.0, %v7553
      %v7555 = vpop.f32.mrb[0].mxu0
      %v7556 = vpop.f32.mrb[0].mxu0
      %v7557 = vadd.f32 0.0, %v7556
      %v7558 = vpop.f32.mrb[0].mxu0
      %7559 = vmatprep.mubr.bf16.mxu0 0
      %7560 = vmatmul.mubr.bf16.gmra.mrb[0].mxu0 %v7121
      %v7561 = vpop.f32.mrb[0].mxu0
      %v7562 = vadd.f32 0.0, %v7561
      %v7563 = vpop.f32.mrb[0].mxu0
      %v7564 = vpop.f32.mrb[0].mxu0
      %v7565 = vadd.f32 0.0, %v7564
      %v7566 = vpop.f32.mrb[0].mxu0
      %7567 = vmatprep.mubr.bf16.mxu0 0
      %7568 = vmatmul.mubr.bf16.gmra.mrb[0].mxu0 %v7124
      %v7569 = vpop.f32.mrb[0].mxu0
      %v7570 = vadd.f32 0.0, %v7569
      %v7571 = vpop.f32.mrb[0].mxu0
      %v7572 = vpop.f32.mrb[0].mxu0
      %v7573 = vadd.f32 0.0, %v7572
      %v7574 = vpop.f32.mrb[0].mxu0
      %7575 = vmatprep.mubr.bf16.mxu0 0
      %7576 = vmatmul.mubr.bf16.gmra.mrb[0].mxu0 %v7127
      %v7577 = vpop.f32.mrb[0].mxu0
      %v7578 = vadd.f32 0.0, %v7577
      %v7579 = vpop.f32.mrb[0].mxu0
      %v7580 = vpop.f32.mrb[0].mxu0
      %v7581 = vadd.f32 0.0, %v7580
      %v7582 = vpop.f32.mrb[0].mxu0
      %7583 = vmatprep.mubr.bf16.mxu0 0
      %7584 = vmatmul.mubr.bf16.gmra.mrb[0].mxu0 %v7130
      %v7585 = vpop.f32.mrb[0].mxu0
      %v7586 = vadd.f32 0.0, %v7585
      %v7587 = vpop.f32.mrb[0].mxu0
      %v7588 = vpop.f32.mrb[0].mxu0
      %v7589 = vadd.f32 0.0, %v7588
      %v7590 = vpop.f32.mrb[0].mxu0
      %7591 = vmatprep.mubr.bf16.mxu0 0
      %7592 = vmatmul.mubr.bf16.gmra.mrb[0].mxu0 %v7133
      %v7593 = vpop.f32.mrb[0].mxu0
      %v7594 = vadd.f32 0.0, %v7593
      %v7595 = vpop.f32.mrb[0].mxu0
      %v7596 = vpop.f32.mrb[0].mxu0
      %v7597 = vadd.f32 0.0, %v7596
      %v7598 = vpop.f32.mrb[0].mxu0
      %7599 = vmatprep.mubr.bf16.mxu0 0
      %7600 = vmatmul.mubr.bf16.gmra.mrb[0].mxu0 %v7136
      %v7601 = vpop.f32.mrb[0].mxu0
      %v7602 = vadd.f32 0.0, %v7601
      %v7603 = vpop.f32.mrb[0].mxu0
      %v7604 = vpop.f32.mrb[0].mxu0
      %v7605 = vadd.f32 0.0, %v7604
      %v7606 = vpop.f32.mrb[0].mxu0
      %7607 = vmatprep.mubr.bf16.mxu0 0
      %7608 = vmatmul.mubr.bf16.gmra.mrb[0].mxu0 %v7139
      %v7609 = vpop.f32.mrb[0].mxu0
      %v7610 = vadd.f32 0.0, %v7609
      %v7611 = vpop.f32.mrb[0].mxu0
      %v7612 = vpop.f32.mrb[0].mxu0
      %v7613 = vadd.f32 0.0, %v7612
      %v7614 = vpop.f32.mrb[0].mxu0
      %7615 = vmatprep.mubr.bf16.mxu0 0
      %7616 = vmatmul.mubr.bf16.gmra.mrb[0].mxu0 %v7142
      %v7617 = vpop.f32.mrb[0].mxu0
      %v7618 = vadd.f32 0.0, %v7617
      %v7619 = vpop.f32.mrb[0].mxu0
      %v7620 = vpop.f32.mrb[0].mxu0
      %v7621 = vadd.f32 0.0, %v7620
      %v7622 = vpop.f32.mrb[0].mxu0
      %7623 = vmatprep.mubr.bf16.mxu0 0
      %7624 = vmatmul.mubr.bf16.gmra.mrb[0].mxu0 %v7145
      %v7625 = vpop.f32.mrb[0].mxu0
      %v7626 = vadd.f32 0.0, %v7625
      %v7627 = vpop.f32.mrb[0].mxu0
      %v7628 = vpop.f32.mrb[0].mxu0
      %v7629 = vadd.f32 0.0, %v7628
      %v7630 = vpop.f32.mrb[0].mxu0
      %7631 = vmatprep.mubr.bf16.mxu0 0
      %7632 = vmatmul.mubr.bf16.gmra.mrb[0].mxu0 %v7148
      %v7633 = vpop.f32.mrb[0].mxu0
      %v7634 = vadd.f32 0.0, %v7633
      %v7635 = vpop.f32.mrb[0].mxu0
      %v7636 = vpop.f32.mrb[0].mxu0
      %v7637 = vadd.f32 0.0, %v7636
      %v7638 = vpop.f32.mrb[0].mxu0
      %7639 = vmatprep.mubr.bf16.mxu0 0
      %7640 = vmatmul.mubr.bf16.gmra.mrb[0].mxu0 %v7151
      %v7641 = vpop.f32.mrb[0].mxu0
      %v7642 = vadd.f32 0.0, %v7641
      %v7643 = vpop.f32.mrb[0].mxu0
      %v7644 = vpop.f32.mrb[0].mxu0
      %v7645 = vadd.f32 0.0, %v7644
      %v7646 = vpop.f32.mrb[0].mxu0
      %7647 = vmatprep.mubr.bf16.mxu0 0
      %7648 = vmatmul.mubr.bf16.gmra.mrb[0].mxu0 %v7154
      %v7649 = vpop.f32.mrb[0].mxu0
      %v7650 = vadd.f32 0.0, %v7649
      %v7651 = vpop.f32.mrb[0].mxu0
      %v7652 = vpop.f32.mrb[0].mxu0
      %v7653 = vadd.f32 0.0, %v7652
      %v7654 = vpop.f32.mrb[0].mxu0
      %7655 = vmatprep.mubr.bf16.mxu0 0
      %7656 = vmatmul.mubr.bf16.gmra.mrb[0].mxu0 %v7157
      %v7657 = vpop.f32.mrb[0].mxu0
      %v7658 = vadd.f32 0.0, %v7657
      %v7659 = vpop.f32.mrb[0].mxu0
      %v7660 = vpop.f32.mrb[0].mxu0
      %v7661 = vadd.f32 0.0, %v7660
      %v7662 = vpop.f32.mrb[0].mxu0
      %7663 = vmatprep.mubr.bf16.mxu0 0
      %7664 = vmatmul.mubr.bf16.gmra.mrb[0].mxu0 %v7160
      %v7665 = vpop.f32.mrb[0].mxu0
      %v7666 = vadd.f32 0.0, %v7665
      %v7667 = vpop.f32.mrb[0].mxu0
      %v7668 = vpop.f32.mrb[0].mxu0
      %v7669 = vadd.f32 0.0, %v7668
      %v7670 = vpop.f32.mrb[0].mxu0
      %7671 = vmatprep.mubr.bf16.mxu0 0
      %7672 = vmatmul.mubr.bf16.gmra.mrb[0].mxu0 %v7163
      %v7673 = vpop.f32.mrb[0].mxu0
      %v7674 = vadd.f32 0.0, %v7673
      %v7675 = vpop.f32.mrb[0].mxu0
      %v7676 = vpop.f32.mrb[0].mxu0
      %v7677 = vadd.f32 0.0, %v7676
      %v7678 = vpop.f32.mrb[0].mxu0
      %7679 = vmatprep.mubr.bf16.mxu0 0
      %7680 = vmatmul.mubr.bf16.gmra.mrb[0].mxu0 %v7166
      %v7681 = vpop.f32.mrb[0].mxu0
      %v7682 = vadd.f32 0.0, %v7681
      %v7683 = vpop.f32.mrb[0].mxu0
      %v7684 = vpop.f32.mrb[0].mxu0
      %v7685 = vadd.f32 0.0, %v7684
      %v7686 = vpop.f32.mrb[0].mxu0
      %7687 = vmatprep.mubr.bf16.mxu0 0
      %7688 = vmatmul.mubr.bf16.gmra.mrb[0].mxu0 %v7169
      %v7689 = vpop.f32.mrb[0].mxu0
      %v7690 = vadd.f32 0.0, %v7689
      %v7691 = vpop.f32.mrb[0].mxu0
      %v7692 = vpop.f32.mrb[0].mxu0
      %v7693 = vadd.f32 0.0, %v7692
      %v7694 = vpop.f32.mrb[0].mxu0
      %7695 = vmatprep.mubr.bf16.mxu0 0
      %7696 = vmatmul.mubr.bf16.gmra.mrb[0].mxu0 %v7172
      %v7697 = vpop.f32.mrb[0].mxu0
      %v7698 = vadd.f32 0.0, %v7697
      %v7699 = vpop.f32.mrb[0].mxu0
      %v7700 = vpop.f32.mrb[0].mxu0
      %v7701 = vadd.f32 0.0, %v7700
      %v7702 = vpop.f32.mrb[0].mxu0
      %7703 = vmatprep.mubr.bf16.mxu0 0
      %7704 = vmatmul.mubr.bf16.gmra.mrb[0].mxu0 %v7175
      %v7705 = vpop.f32.mrb[0].mxu0
      %v7706 = vadd.f32 0.0, %v7705
      %v7707 = vpop.f32.mrb[0].mxu0
      %v7708 = vpop.f32.mrb[0].mxu0
      %v7709 = vadd.f32 0.0, %v7708
      %v7710 = vpop.f32.mrb[0].mxu0
      %7711 = vmatprep.mubr.bf16.mxu0 0
      %7712 = vmatmul.mubr.bf16.gmra.mrb[0].mxu0 %v7178
      %v7713 = vpop.f32.mrb[0].mxu0
      %v7714 = vadd.f32 0.0, %v7713
      %v7715 = vpop.f32.mrb[0].mxu0
      %v7716 = vpop.f32.mrb[0].mxu0
      %v7717 = vadd.f32 0.0, %v7716
      %v7718 = vpop.f32.mrb[0].mxu0
      %7719 = vmatprep.mubr.bf16.mxu0 0
      %7720 = vmatmul.mubr.bf16.gmra.mrb[0].mxu0 %v7181
      %v7721 = vpop.f32.mrb[0].mxu0
      %v7722 = vadd.f32 0.0, %v7721
      %v7723 = vpop.f32.mrb[0].mxu0
      %v7724 = vpop.f32.mrb[0].mxu0
      %v7725 = vadd.f32 0.0, %v7724
      %v7726 = vpop.f32.mrb[0].mxu0
      %7727 = vmatprep.mubr.bf16.mxu0 0
      %7728 = vmatmul.mubr.bf16.gmra.mrb[0].mxu0 %v7184
      %v7729 = vpop.f32.mrb[0].mxu0
      %v7730 = vadd.f32 0.0, %v7729
      %v7731 = vpop.f32.mrb[0].mxu0
      %v7732 = vpop.f32.mrb[0].mxu0
      %v7733 = vadd.f32 0.0, %v7732
      %v7734 = vpop.f32.mrb[0].mxu0
      %7735 = vmatprep.mubr.bf16.mxu0 0
      %7736 = vmatmul.mubr.bf16.gmra.mrb[0].mxu0 %v7187
      %v7737 = vpop.f32.mrb[0].mxu0
      %v7738 = vadd.f32 0.0, %v7737
      %v7739 = vpop.f32.mrb[0].mxu0
      %v7740 = vpop.f32.mrb[0].mxu0
      %v7741 = vadd.f32 0.0, %v7740
      %v7742 = vpop.f32.mrb[0].mxu0
      %7743 = vmatprep.mubr.bf16.mxu0 0
      %7744 = vmatmul.mubr.bf16.gmra.mrb[0].mxu0 %v7190
      %v7745 = vpop.f32.mrb[0].mxu0
      %v7746 = vadd.f32 0.0, %v7745
      %v7747 = vpop.f32.mrb[0].mxu0
      %v7748 = vpop.f32.mrb[0].mxu0
      %v7749 = vadd.f32 0.0, %v7748
      %v7750 = vpop.f32.mrb[0].mxu0
      %7751 = vmatprep.mubr.bf16.mxu0 0
      %7752 = vmatmul.mubr.bf16.gmra.mrb[0].mxu0 %v7193
      %v7753 = vpop.f32.mrb[0].mxu0
      %v7754 = vadd.f32 0.0, %v7753
      %v7755 = vpop.f32.mrb[0].mxu0
      %v7756 = vpop.f32.mrb[0].mxu0
      %v7757 = vadd.f32 0.0, %v7756
      %v7758 = vpop.f32.mrb[0].mxu0
      %7759 = vmatprep.mubr.bf16.mxu0 0
      %7760 = vmatmul.mubr.bf16.gmra.mrb[0].mxu0 %v7196
      %v7761 = vpop.f32.mrb[0].mxu0
      %v7762 = vadd.f32 0.0, %v7761
      %v7763 = vpop.f32.mrb[0].mxu0
      %v7764 = vpop.f32.mrb[0].mxu0
      %v7765 = vadd.f32 0.0, %v7764
      %v7766 = vpop.f32.mrb[0].mxu0
      %7767 = vmatprep.mubr.bf16.mxu0 0
      %7768 = vmatmul.mubr.bf16.gmra.mrb[0].mxu0 %v7199
      %v7769 = vpop.f32.mrb[0].mxu0
      %v7770 = vadd.f32 0.0, %v7769
      %v7771 = vpop.f32.mrb[0].mxu0
      %v7772 = vpop.f32.mrb[0].mxu0
      %v7773 = vadd.f32 0.0, %v7772
      %v7774 = vpop.f32.mrb[0].mxu0
      %7775 = vmatprep.mubr.bf16.mxu0 0
      %7776 = vmatmul.mubr.bf16.gmra.mrb[0].mxu0 %v7202
      %v7777 = vpop.f32.mrb[0].mxu0
      %v7778 = vadd.f32 0.0, %v7777
      %v7779 = vpop.f32.mrb[0].mxu0
      %v7780 = vpop.f32.mrb[0].mxu0
      %v7781 = vadd.f32 0.0, %v7780
      %v7782 = vpop.f32.mrb[0].mxu0
      %7783 = vdwg.mxu0
      %v7784 = vadd.f32 %v6720, %v7242
      %v7785 = vadd.f32 %v6721, %v7245
      %v7786 = vadd.f32 %v6722, %v7250
      %v7787 = vadd.f32 %v6723, %v7253
      %v7788 = vadd.f32 %v6724, %v7258
      %v7789 = vadd.f32 %v6725, %v7261
      %v7790 = vadd.f32 %v6726, %v7266
      %v7791 = vadd.f32 %v6727, %v7269
      %v7792 = vadd.f32 %v6728, %v7274
      %v7793 = vadd.f32 %v6729, %v7277
      %v7794 = vadd.f32 %v6730, %v7282
      %v7795 = vadd.f32 %v6731, %v7285
      %v7796 = vadd.f32 %v6732, %v7290
      %v7797 = vadd.f32 %v6733, %v7293
      %v7798 = vadd.f32 %v6734, %v7298
      %v7799 = vadd.f32 %v6735, %v7301
      %v7800 = vadd.f32 %v6736, %v7306
      %v7801 = vadd.f32 %v6737, %v7309
      %v7802 = vadd.f32 %v6738, %v7314
      %v7803 = vadd.f32 %v6739, %v7317
      %v7804 = vadd.f32 %v6740, %v7322
      %v7805 = vadd.f32 %v6741, %v7325
      %v7806 = vadd.f32 %v6742, %v7330
      %v7807 = vadd.f32 %v6743, %v7333
      %v7808 = vadd.f32 %v6744, %v7338
      %v7809 = vadd.f32 %v6745, %v7341
      %v7810 = vadd.f32 %v6746, %v7346
      %v7811 = vadd.f32 %v6747, %v7349
      %v7812 = vadd.f32 %v6748, %v7354
      %v7813 = vadd.f32 %v6749, %v7357
      %v7814 = vadd.f32 %v6750, %v7362
      %v7815 = vadd.f32 %v6751, %v7365
      %v7816 = vadd.f32 %v6752, %v7370
      %v7817 = vadd.f32 %v6753, %v7373
      %v7818 = vadd.f32 %v6754, %v7378
      %v7819 = vadd.f32 %v6755, %v7381
      %v7820 = vadd.f32 %v6756, %v7386
      %v7821 = vadd.f32 %v6757, %v7389
      %v7822 = vadd.f32 %v6758, %v7394
      %v7823 = vadd.f32 %v6759, %v7397
      %v7824 = vadd.f32 %v6760, %v7402
      %v7825 = vadd.f32 %v6761, %v7405
      %v7826 = vadd.f32 %v6762, %v7410
      %v7827 = vadd.f32 %v6763, %v7413
      %v7828 = vadd.f32 %v6764, %v7418
      %v7829 = vadd.f32 %v6765, %v7421
      %v7830 = vadd.f32 %v6766, %v7426
      %v7831 = vadd.f32 %v6767, %v7429
      %v7832 = vadd.f32 %v6768, %v7434
      %v7833 = vadd.f32 %v6769, %v7437
      %v7834 = vadd.f32 %v6770, %v7442
      %v7835 = vadd.f32 %v6771, %v7445
      %v7836 = vadd.f32 %v6772, %v7450
      %v7837 = vadd.f32 %v6773, %v7453
      %v7838 = vadd.f32 %v6774, %v7458
      %v7839 = vadd.f32 %v6775, %v7461
      %v7840 = vadd.f32 %v6776, %v7466
      %v7841 = vadd.f32 %v6777, %v7469
      %v7842 = vadd.f32 %v6778, %v7474
      %v7843 = vadd.f32 %v6779, %v7477
      %v7844 = vadd.f32 %v6780, %v7482
      %v7845 = vadd.f32 %v6781, %v7485
      %v7846 = vadd.f32 %v6782, %v7490
      %v7847 = vadd.f32 %v6783, %v7493
      %v7848 = vadd.f32 %v6784, %v7498
      %v7849 = vadd.f32 %v6785, %v7501
      %v7850 = vadd.f32 %v6786, %v7506
      %v7851 = vadd.f32 %v6787, %v7509
      %v7852 = vadd.f32 %v6788, %v7514
      %v7853 = vadd.f32 %v6789, %v7517
      %v7854 = vadd.f32 %v6790, %v7522
      %v7855 = vadd.f32 %v6791, %v7525
      %v7856 = vadd.f32 %v6792, %v7530
      %v7857 = vadd.f32 %v6793, %v7533
      %v7858 = vadd.f32 %v6794, %v7538
      %v7859 = vadd.f32 %v6795, %v7541
      %v7860 = vadd.f32 %v6796, %v7546
      %v7861 = vadd.f32 %v6797, %v7549
      %v7862 = vadd.f32 %v6798, %v7554
      %v7863 = vadd.f32 %v6799, %v7557
      %v7864 = vadd.f32 %v6800, %v7562
      %v7865 = vadd.f32 %v6801, %v7565
      %v7866 = vadd.f32 %v6802, %v7570
      %v7867 = vadd.f32 %v6803, %v7573
      %v7868 = vadd.f32 %v6804, %v7578
      %v7869 = vadd.f32 %v6805, %v7581
      %v7870 = vadd.f32 %v6806, %v7586
      %v7871 = vadd.f32 %v6807, %v7589
      %v7872 = vadd.f32 %v6808, %v7594
      %v7873 = vadd.f32 %v6809, %v7597
      %v7874 = vadd.f32 %v6810, %v7602
      %v7875 = vadd.f32 %v6811, %v7605
      %v7876 = vadd.f32 %v6812, %v7610
      %v7877 = vadd.f32 %v6813, %v7613
      %v7878 = vadd.f32 %v6814, %v7618
      %v7879 = vadd.f32 %v6815, %v7621
      %v7880 = vadd.f32 %v6816, %v7626
      %v7881 = vadd.f32 %v6817, %v7629
      %v7882 = vadd.f32 %v6818, %v7634
      %v7883 = vadd.f32 %v6819, %v7637
      %v7884 = vadd.f32 %v6820, %v7642
      %v7885 = vadd.f32 %v6821, %v7645
      %v7886 = vadd.f32 %v6822, %v7650
      %v7887 = vadd.f32 %v6823, %v7653
      %v7888 = vadd.f32 %v6824, %v7658
      %v7889 = vadd.f32 %v6825, %v7661
      %v7890 = vadd.f32 %v6826, %v7666
      %v7891 = vadd.f32 %v6827, %v7669
      %v7892 = vadd.f32 %v6828, %v7674
      %v7893 = vadd.f32 %v6829, %v7677
      %v7894 = vadd.f32 %v6830, %v7682
      %v7895 = vadd.f32 %v6831, %v7685
      %v7896 = vadd.f32 %v6832, %v7690
      %v7897 = vadd.f32 %v6833, %v7693
      %v7898 = vadd.f32 %v6834, %v7698
      %v7899 = vadd.f32 %v6835, %v7701
      %v7900 = vadd.f32 %v6836, %v7706
      %v7901 = vadd.f32 %v6837, %v7709
      %v7902 = vadd.f32 %v6838, %v7714
      %v7903 = vadd.f32 %v6839, %v7717
      %v7904 = vadd.f32 %v6840, %v7722
      %v7905 = vadd.f32 %v6841, %v7725
      %v7906 = vadd.f32 %v6842, %v7730
      %v7907 = vadd.f32 %v6843, %v7733
      %v7908 = vadd.f32 %v6844, %v7738
      %v7909 = vadd.f32 %v6845, %v7741
      %v7910 = vadd.f32 %v6846, %v7746
      %v7911 = vadd.f32 %v6847, %v7749
      %v7912 = vadd.f32 %v6848, %v7754
      %v7913 = vadd.f32 %v6849, %v7757
      %v7914 = vadd.f32 %v6850, %v7762
      %v7915 = vadd.f32 %v6851, %v7765
      %v7916 = vadd.f32 %v6852, %v7770
      %v7917 = vadd.f32 %v6853, %v7773
      %v7918 = vadd.f32 %v6854, %v7778
      %v7919 = vadd.f32 %v6855, %v7781
      %v7920 = vld [vmem:[%s165 + $0x20] sm:$0xc]
      %v7921 = vld [vmem:[%s165 + $0x24] sm:$0xf]
      %v7922 = vld [vmem:[%s165 + $0x28] sm:$0xf]
      %v7923 = vld [vmem:[%s165 + $0x2c] sm:$0xf]
      %v7924 = vld [vmem:[%s165 + $0x30] sm:$0xf]
      %v7925 = vld [vmem:[%s165 + $0x34] sm:$0xf]
      %v7926 = vld [vmem:[%s165 + $0x38] sm:$0xf]
      %v7927 = vld [vmem:[%s165 + $0x3c] sm:$0xf]
      %v7928 = vld [vmem:[%s165 + $0x40] sm:$0xf]
      %v7929 = vld [vmem:[%s165 + $0x44] sm:$0xf]
      %v7930 = vld [vmem:[%s165 + $0x48] sm:$0xf]
      %v7931 = vld [vmem:[%s165 + $0x4c] sm:$0xf]
      %v7932 = vld [vmem:[%s165 + $0x50] sm:$0xf]
      %v7933 = vld [vmem:[%s165 + $0x54] sm:$0xf]
      %v7934 = vld [vmem:[%s165 + $0x58] sm:$0xf]
      %v7935 = vld [vmem:[%s165 + $0x5c] sm:$0xf]
      %v7936 = vld [vmem:[%s165 + $0x60] sm:$0xf]
      %v7937 = vld [vmem:[%s165 + $0x64] sm:$0xf]
      %v7938 = vld [vmem:[%s165 + $0x68] sm:$0xf]
      %v7939 = vld [vmem:[%s165 + $0x6c] sm:$0xf]
      %v7940 = vld [vmem:[%s165 + $0x70] sm:$0xf]
      %v7941 = vld [vmem:[%s165 + $0x74] sm:$0xf]
      %v7942 = vld [vmem:[%s165 + $0x78] sm:$0xf]
      %v7943 = vld [vmem:[%s165 + $0x7c] sm:$0xf]
      %v7944 = vld [vmem:[%s165 + $0x80] sm:$0xf]
      %v7945 = vld [vmem:[%s165 + $0x84] sm:$0xf]
      %v7946 = vld [vmem:[%s165 + $0x88] sm:$0xf]
      %v7947 = vld [vmem:[%s165 + $0x8c] sm:$0xf]
      %v7948 = vld [vmem:[%s165 + $0x90] sm:$0xf]
      %v7949 = vld [vmem:[%s165 + $0x94] sm:$0xf]
      %v7950 = vld [vmem:[%s165 + $0x98] sm:$0xf]
      %v7951 = vld [vmem:[%s165 + $0x9c] sm:$0xf]
      %v7952 = vld [vmem:[%s165 + $0xa0] sm:$0xf]
      %v7953 = vld [vmem:[%s165 + $0xa4] sm:$0xf]
      %v7954 = vld [vmem:[%s165 + $0xa8] sm:$0xf]
      %v7955 = vld [vmem:[%s165 + $0xac] sm:$0xf]
      %v7956 = vld [vmem:[%s165 + $0xb0] sm:$0xf]
      %v7957 = vld [vmem:[%s165 + $0xb4] sm:$0xf]
      %v7958 = vld [vmem:[%s165 + $0xb8] sm:$0xf]
      %v7959 = vld [vmem:[%s165 + $0xbc] sm:$0xf]
      %v7960 = vld [vmem:[%s165 + $0xc0] sm:$0xf]
      %v7961 = vld [vmem:[%s165 + $0xc4] sm:$0xf]
      %v7962 = vld [vmem:[%s165 + $0xc8] sm:$0xf]
      %v7963 = vld [vmem:[%s165 + $0xcc] sm:$0xf]
      %v7964 = vld [vmem:[%s165 + $0xd0] sm:$0xf]
      %v7965 = vld [vmem:[%s165 + $0xd4] sm:$0xf]
      %v7966 = vld [vmem:[%s165 + $0xd8] sm:$0xf]
      %v7967 = vld [vmem:[%s165 + $0xdc] sm:$0xf]
      %v7968 = vld [vmem:[%s165 + $0xe0] sm:$0xf]
      %v7969 = vld [vmem:[%s165 + $0xe4] sm:$0xf]
      %v7970 = vld [vmem:[%s165 + $0xe8] sm:$0xf]
      %v7971 = vld [vmem:[%s165 + $0xec] sm:$0xf]
      %v7972 = vld [vmem:[%s165 + $0xf0] sm:$0xf]
      %v7973 = vld [vmem:[%s165 + $0xf4] sm:$0xf]
      %v7974 = vld [vmem:[%s165 + $0xf8] sm:$0xf]
      %v7975 = vld [vmem:[%s165 + $0xfc] sm:$0xf]
      %v7976 = vld [vmem:[%s165 + $0x100] sm:$0xf]
      %v7977 = vld [vmem:[%s165 + $0x104] sm:$0xf]
      %v7978 = vld [vmem:[%s165 + $0x108] sm:$0xf]
      %v7979 = vld [vmem:[%s165 + $0x10c] sm:$0xf]
      %v7980 = vld [vmem:[%s165 + $0x110] sm:$0xf]
      %v7981 = vld [vmem:[%s165 + $0x114] sm:$0xf]
      %v7982 = vld [vmem:[%s165 + $0x118] sm:$0xf]
      %v7983 = vld [vmem:[%s165 + $0x11c] sm:$0xf]
      %v7984 = vld [vmem:[%s165 + $0x120] sm:$0xf]
      %v7985 = vld [vmem:[%s165 + $0x124] sm:$0xf]
      %v7986 = vld [vmem:[%s165 + $0x128] sm:$0xf]
      %v7987 = vld [vmem:[%s165 + $0x12c] sm:$0xf]
      %v7988 = vld [vmem:[%s165 + $0x130] sm:$0xf]
      %v7989 = vld [vmem:[%s165 + $0x134] sm:$0xf]
      %v7990 = vld [vmem:[%s165 + $0x138] sm:$0xf]
      %v7991 = vld [vmem:[%s165 + $0x13c] sm:$0xf]
      %v7992 = vld [vmem:[%s165 + $0x140] sm:$0xf]
      %v7993 = vld [vmem:[%s165 + $0x144] sm:$0xf]
      %v7994 = vld [vmem:[%s165 + $0x148] sm:$0xf]
      %v7995 = vld [vmem:[%s165 + $0x14c] sm:$0xf]
      %v7996 = vld [vmem:[%s165 + $0x150] sm:$0xf]
      %v7997 = vld [vmem:[%s165 + $0x154] sm:$0xf]
      %v7998 = vld [vmem:[%s165 + $0x158] sm:$0xf]
      %v7999 = vld [vmem:[%s165 + $0x15c] sm:$0xf]
      %v8000 = vld [vmem:[%s165 + $0x160] sm:$0xf]
      %v8001 = vld [vmem:[%s165 + $0x164] sm:$0xf]
      %v8002 = vld [vmem:[%s165 + $0x168] sm:$0xf]
      %v8003 = vld [vmem:[%s165 + $0x16c] sm:$0xf]
      %v8004 = vld [vmem:[%s165 + $0x170] sm:$0xf]
      %v8005 = vld [vmem:[%s165 + $0x174] sm:$0xf]
      %v8006 = vld [vmem:[%s165 + $0x178] sm:$0xf]
      %v8007 = vld [vmem:[%s165 + $0x17c] sm:$0xf]
      %v8008 = vld [vmem:[%s165 + $0x180] sm:$0xf]
      %v8009 = vld [vmem:[%s165 + $0x184] sm:$0xf]
      %v8010 = vld [vmem:[%s165 + $0x188] sm:$0xf]
      %v8011 = vld [vmem:[%s165 + $0x18c] sm:$0xf]
      %v8012 = vld [vmem:[%s165 + $0x190] sm:$0xf]
      %v8013 = vld [vmem:[%s165 + $0x194] sm:$0xf]
      %v8014 = vld [vmem:[%s165 + $0x198] sm:$0xf]
      %v8015 = vld [vmem:[%s165 + $0x19c] sm:$0xf]
      %v8016 = vld [vmem:[%s165 + $0x1a0] sm:$0xf]
      %v8017 = vld [vmem:[%s165 + $0x1a4] sm:$0xf]
      %v8018 = vld [vmem:[%s165 + $0x1a8] sm:$0xf]
      %v8019 = vld [vmem:[%s165 + $0x1ac] sm:$0xf]
      %v8020 = vld [vmem:[%s165 + $0x1b0] sm:$0xf]
      %v8021 = vld [vmem:[%s165 + $0x1b4] sm:$0xf]
      %v8022 = vld [vmem:[%s165 + $0x1b8] sm:$0xf]
      %v8023 = vld [vmem:[%s165 + $0x1bc] sm:$0xf]
      %v8024 = vld [vmem:[%s165 + $0x1c0] sm:$0xf]
      %v8025 = vld [vmem:[%s165 + $0x1c4] sm:$0xf]
      %v8026 = vld [vmem:[%s165 + $0x1c8] sm:$0xf]
      %v8027 = vld [vmem:[%s165 + $0x1cc] sm:$0xf]
      %v8028 = vld [vmem:[%s165 + $0x1d0] sm:$0xf]
      %v8029 = vld [vmem:[%s165 + $0x1d4] sm:$0xf]
      %v8030 = vld [vmem:[%s165 + $0x1d8] sm:$0xf]
      %v8031 = vld [vmem:[%s165 + $0x1dc] sm:$0xf]
      %v8032 = vld [vmem:[%s165 + $0x1e0] sm:$0xf]
      %v8033 = vld [vmem:[%s165 + $0x1e4] sm:$0xf]
      %v8034 = vld [vmem:[%s165 + $0x1e8] sm:$0xf]
      %v8035 = vld [vmem:[%s165 + $0x1ec] sm:$0xf]
      %v8036 = vld [vmem:[%s165 + $0x1f0] sm:$0xf]
      %v8037 = vld [vmem:[%s165 + $0x1f4] sm:$0xf]
      %v8038 = vld [vmem:[%s165 + $0x1f8] sm:$0xf]
      %v8039 = vld [vmem:[%s165 + $0x1fc] sm:$0xf]
      %v8040 = vld [vmem:[%s165 + $0x200] sm:$0xf]
      %v8041 = vld [vmem:[%s165 + $0x204] sm:$0xf]
      %v8042 = vld [vmem:[%s165 + $0x208] sm:$0xf]
      %v8043 = vld [vmem:[%s165 + $0x20c] sm:$0xf]
      %v8044 = vld [vmem:[%s165 + $0x210] sm:$0xf]
      %v8045 = vld [vmem:[%s165 + $0x214] sm:$0xf]
      %v8046 = vld [vmem:[%s165 + $0x218] sm:$0xf]
      %v8047 = vld [vmem:[%s165 + $0x21c] sm:$0xf]
      %v8048 = vld [vmem:[%s165 + $0x220] sm:$0xf]
      %v8049 = vld [vmem:[%s165 + $0x224] sm:$0xf]
      %v8050 = vld [vmem:[%s165 + $0x228] sm:$0xf]
      %v8051 = vld [vmem:[%s165 + $0x22c] sm:$0xf]
      %v8052 = vld [vmem:[%s165 + $0x230] sm:$0xf]
      %v8053 = vld [vmem:[%s165 + $0x234] sm:$0xf]
      %v8054 = vld [vmem:[%s165 + $0x238] sm:$0xf]
      %v8055 = vld [vmem:[%s165 + $0x23c] sm:$0xf]
      %v8056 = vld [vmem:[%s165 + $0x240] sm:$0x3]
      %s8057 = scalar_lea.vmem %s1, 24
      %v8058 = vld [vmem:[%s8057] sm:$0xf]
      %v8196 = vunpack.c.l.b16 %v7920
      %v8197 = vunpack.c.l.b16 %v7921
      %v8198 = vunpack.c.l.b16 %v7922
      %v8199 = vunpack.c.l.b16 %v7923
      %v8200 = vunpack.c.l.b16 %v7924
      %v8201 = vunpack.c.l.b16 %v7925
      %v8202 = vunpack.c.l.b16 %v7926
      %v8203 = vunpack.c.l.b16 %v7927
      %v8204 = vunpack.c.l.b16 %v7928
      %v8205 = vunpack.c.l.b16 %v7929
      %v8206 = vunpack.c.l.b16 %v7930
      %v8207 = vunpack.c.l.b16 %v7931
      %v8208 = vunpack.c.l.b16 %v7932
      %v8209 = vunpack.c.l.b16 %v7933
      %v8210 = vunpack.c.l.b16 %v7934
      %v8211 = vunpack.c.l.b16 %v7935
      %v8212 = vunpack.c.l.b16 %v7936
      %v8213 = vunpack.c.l.b16 %v7937
      %v8214 = vunpack.c.l.b16 %v7938
      %v8215 = vunpack.c.l.b16 %v7939
      %v8216 = vunpack.c.l.b16 %v7940
      %v8217 = vunpack.c.l.b16 %v7941
      %v8218 = vunpack.c.l.b16 %v7942
      %v8219 = vunpack.c.l.b16 %v7943
      %v8220 = vunpack.c.l.b16 %v7944
      %v8221 = vunpack.c.l.b16 %v7945
      %v8222 = vunpack.c.l.b16 %v7946
      %v8223 = vunpack.c.l.b16 %v7947
      %v8224 = vunpack.c.l.b16 %v7948
      %v8225 = vunpack.c.l.b16 %v7949
      %v8226 = vunpack.c.l.b16 %v7950
      %v8227 = vunpack.c.l.b16 %v7951
      %v8228 = vunpack.c.l.b16 %v7952
      %v8229 = vunpack.c.l.b16 %v7953
      %v8230 = vunpack.c.l.b16 %v7954
      %v8231 = vunpack.c.l.b16 %v7955
      %v8232 = vunpack.c.l.b16 %v7956
      %v8233 = vunpack.c.l.b16 %v7957
      %v8234 = vunpack.c.l.b16 %v7958
      %v8235 = vunpack.c.l.b16 %v7959
      %v8236 = vunpack.c.l.b16 %v7960
      %v8237 = vunpack.c.l.b16 %v7961
      %v8238 = vunpack.c.l.b16 %v7962
      %v8239 = vunpack.c.l.b16 %v7963
      %v8240 = vunpack.c.l.b16 %v7964
      %v8241 = vunpack.c.l.b16 %v7965
      %v8242 = vunpack.c.l.b16 %v7966
      %v8243 = vunpack.c.l.b16 %v7967
      %v8244 = vunpack.c.l.b16 %v7968
      %v8245 = vunpack.c.l.b16 %v7969
      %v8246 = vunpack.c.l.b16 %v7970
      %v8247 = vunpack.c.l.b16 %v7971
      %v8248 = vunpack.c.l.b16 %v7972
      %v8249 = vunpack.c.l.b16 %v7973
      %v8250 = vunpack.c.l.b16 %v7974
      %v8251 = vunpack.c.l.b16 %v7975
      %v8252 = vunpack.c.l.b16 %v7976
      %v8253 = vunpack.c.l.b16 %v7977
      %v8254 = vunpack.c.l.b16 %v7978
      %v8255 = vunpack.c.l.b16 %v7979
      %v8256 = vunpack.c.l.b16 %v7980
      %v8257 = vunpack.c.l.b16 %v7981
      %v8258 = vunpack.c.l.b16 %v7982
      %v8259 = vunpack.c.l.b16 %v7983
      %v8260 = vunpack.c.l.b16 %v7984
      %v8261 = vunpack.c.l.b16 %v7985
      %v8262 = vunpack.c.l.b16 %v7986
      %v8263 = vunpack.c.l.b16 %v7987
      %v8264 = vunpack.c.l.b16 %v7988
      %v8265 = vunpack.c.l.b16 %v7989
      %v8266 = vunpack.c.l.b16 %v7990
      %v8267 = vunpack.c.l.b16 %v7991
      %v8268 = vunpack.c.l.b16 %v7992
      %v8269 = vunpack.c.l.b16 %v7993
      %v8270 = vunpack.c.l.b16 %v7994
      %v8271 = vunpack.c.l.b16 %v7995
      %v8272 = vunpack.c.l.b16 %v7996
      %v8273 = vunpack.c.l.b16 %v7997
      %v8274 = vunpack.c.l.b16 %v7998
      %v8275 = vunpack.c.l.b16 %v7999
      %v8276 = vunpack.c.l.b16 %v8000
      %v8277 = vunpack.c.l.b16 %v8001
      %v8278 = vunpack.c.l.b16 %v8002
      %v8279 = vunpack.c.l.b16 %v8003
      %v8280 = vunpack.c.l.b16 %v8004
      %v8281 = vunpack.c.l.b16 %v8005
      %v8282 = vunpack.c.l.b16 %v8006
      %v8283 = vunpack.c.l.b16 %v8007
      %v8284 = vunpack.c.l.b16 %v8008
      %v8285 = vunpack.c.l.b16 %v8009
      %v8286 = vunpack.c.l.b16 %v8010
      %v8287 = vunpack.c.l.b16 %v8011
      %v8288 = vunpack.c.l.b16 %v8012
      %v8289 = vunpack.c.l.b16 %v8013
      %v8290 = vunpack.c.l.b16 %v8014
      %v8291 = vunpack.c.l.b16 %v8015
      %v8292 = vunpack.c.l.b16 %v8016
      %v8293 = vunpack.c.l.b16 %v8017
      %v8294 = vunpack.c.l.b16 %v8018
      %v8295 = vunpack.c.l.b16 %v8019
      %v8296 = vunpack.c.l.b16 %v8020
      %v8297 = vunpack.c.l.b16 %v8021
      %v8298 = vunpack.c.l.b16 %v8022
      %v8299 = vunpack.c.l.b16 %v8023
      %v8300 = vunpack.c.l.b16 %v8024
      %v8301 = vunpack.c.l.b16 %v8025
      %v8302 = vunpack.c.l.b16 %v8026
      %v8303 = vunpack.c.l.b16 %v8027
      %v8304 = vunpack.c.l.b16 %v8028
      %v8305 = vunpack.c.l.b16 %v8029
      %v8306 = vunpack.c.l.b16 %v8030
      %v8307 = vunpack.c.l.b16 %v8031
      %v8308 = vunpack.c.l.b16 %v8032
      %v8309 = vunpack.c.l.b16 %v8033
      %v8310 = vunpack.c.l.b16 %v8034
      %v8311 = vunpack.c.l.b16 %v8035
      %v8312 = vunpack.c.l.b16 %v8036
      %v8313 = vunpack.c.l.b16 %v8037
      %v8314 = vunpack.c.l.b16 %v8038
      %v8315 = vunpack.c.l.b16 %v8039
      %v8316 = vunpack.c.l.b16 %v8040
      %v8317 = vunpack.c.l.b16 %v8041
      %v8318 = vunpack.c.l.b16 %v8042
      %v8319 = vunpack.c.l.b16 %v8043
      %v8320 = vunpack.c.l.b16 %v8044
      %v8321 = vunpack.c.l.b16 %v8045
      %v8322 = vunpack.c.l.b16 %v8046
      %v8323 = vunpack.c.l.b16 %v8047
      %v8324 = vunpack.c.l.b16 %v8048
      %v8325 = vunpack.c.l.b16 %v8049
      %v8326 = vunpack.c.l.b16 %v8050
      %v8327 = vunpack.c.l.b16 %v8051
      %v8328 = vunpack.c.l.b16 %v8052
      %v8329 = vunpack.c.l.b16 %v8053
      %v8330 = vunpack.c.l.b16 %v8054
      %v8331 = vunpack.c.l.b16 %v8055
      %v8332 = vunpack.c.l.b16 %v8056
      %v8333 = vpack.c.b16 %v8197, %v8196
      %v8334 = vpack.c.b16 %v8199, %v8198
      %v8335 = vpack.c.b16 %v8201, %v8200
      %v8336 = vpack.c.b16 %v8203, %v8202
      %v8337 = vpack.c.b16 %v8205, %v8204
      %v8338 = vpack.c.b16 %v8207, %v8206
      %v8339 = vpack.c.b16 %v8209, %v8208
      %v8340 = vpack.c.b16 %v8211, %v8210
      %v8341 = vpack.c.b16 %v8213, %v8212
      %v8342 = vpack.c.b16 %v8215, %v8214
      %v8343 = vpack.c.b16 %v8217, %v8216
      %v8344 = vpack.c.b16 %v8219, %v8218
      %v8345 = vpack.c.b16 %v8221, %v8220
      %v8346 = vpack.c.b16 %v8223, %v8222
      %v8347 = vpack.c.b16 %v8225, %v8224
      %v8348 = vpack.c.b16 %v8227, %v8226
      %v8349 = vpack.c.b16 %v8229, %v8228
      %v8350 = vpack.c.b16 %v8231, %v8230
      %v8351 = vpack.c.b16 %v8233, %v8232
      %v8352 = vpack.c.b16 %v8235, %v8234
      %v8353 = vpack.c.b16 %v8237, %v8236
      %v8354 = vpack.c.b16 %v8239, %v8238
      %v8355 = vpack.c.b16 %v8241, %v8240
      %v8356 = vpack.c.b16 %v8243, %v8242
      %v8357 = vpack.c.b16 %v8245, %v8244
      %v8358 = vpack.c.b16 %v8247, %v8246
      %v8359 = vpack.c.b16 %v8249, %v8248
      %v8360 = vpack.c.b16 %v8251, %v8250
      %v8361 = vpack.c.b16 %v8253, %v8252
      %v8362 = vpack.c.b16 %v8255, %v8254
      %v8363 = vpack.c.b16 %v8257, %v8256
      %v8364 = vpack.c.b16 %v8259, %v8258
      %v8365 = vpack.c.b16 %v8261, %v8260
      %v8366 = vpack.c.b16 %v8263, %v8262
      %v8367 = vpack.c.b16 %v8265, %v8264
      %v8368 = vpack.c.b16 %v8267, %v8266
      %v8369 = vpack.c.b16 %v8269, %v8268
      %v8370 = vpack.c.b16 %v8271, %v8270
      %v8371 = vpack.c.b16 %v8273, %v8272
      %v8372 = vpack.c.b16 %v8275, %v8274
      %v8373 = vpack.c.b16 %v8277, %v8276
      %v8374 = vpack.c.b16 %v8279, %v8278
      %v8375 = vpack.c.b16 %v8281, %v8280
      %v8376 = vpack.c.b16 %v8283, %v8282
      %v8377 = vpack.c.b16 %v8285, %v8284
      %v8378 = vpack.c.b16 %v8287, %v8286
      %v8379 = vpack.c.b16 %v8289, %v8288
      %v8380 = vpack.c.b16 %v8291, %v8290
      %v8381 = vpack.c.b16 %v8293, %v8292
      %v8382 = vpack.c.b16 %v8295, %v8294
      %v8383 = vpack.c.b16 %v8297, %v8296
      %v8384 = vpack.c.b16 %v8299, %v8298
      %v8385 = vpack.c.b16 %v8301, %v8300
      %v8386 = vpack.c.b16 %v8303, %v8302
      %v8387 = vpack.c.b16 %v8305, %v8304
      %v8388 = vpack.c.b16 %v8307, %v8306
      %v8389 = vpack.c.b16 %v8309, %v8308
      %v8390 = vpack.c.b16 %v8311, %v8310
      %v8391 = vpack.c.b16 %v8313, %v8312
      %v8392 = vpack.c.b16 %v8315, %v8314
      %v8393 = vpack.c.b16 %v8317, %v8316
      %v8394 = vpack.c.b16 %v8319, %v8318
      %v8395 = vpack.c.b16 %v8321, %v8320
      %v8396 = vpack.c.b16 %v8323, %v8322
      %v8397 = vpack.c.b16 %v8325, %v8324
      %v8398 = vpack.c.b16 %v8327, %v8326
      %v8399 = vpack.c.b16 %v8329, %v8328
      %v8400 = vpack.c.b16 %v8331, %v8330
      %v8401 = vpack.c.b16 %v8332, %v8332
      %v8402 = vrot.slane %v8333, 2
      %v8403 = vrot.slane %v8334, 2
      %v8404 = vsel %vm6862, %v8402, %v8403
      %v8405 = vrot.slane %v8335, 2
      %v8406 = vsel %vm6862, %v8403, %v8405
      %v8407 = vrot.slane %v8336, 2
      %v8408 = vsel %vm6862, %v8405, %v8407
      %v8409 = vrot.slane %v8337, 2
      %v8410 = vsel %vm6862, %v8407, %v8409
      %v8411 = vrot.slane %v8338, 2
      %v8412 = vsel %vm6862, %v8409, %v8411
      %v8413 = vrot.slane %v8339, 2
      %v8414 = vsel %vm6862, %v8411, %v8413
      %v8415 = vrot.slane %v8340, 2
      %v8416 = vsel %vm6862, %v8413, %v8415
      %v8417 = vrot.slane %v8341, 2
      %v8418 = vsel %vm6862, %v8415, %v8417
      %v8419 = vrot.slane %v8342, 2
      %v8420 = vsel %vm6862, %v8417, %v8419
      %v8421 = vrot.slane %v8343, 2
      %v8422 = vsel %vm6862, %v8419, %v8421
      %v8423 = vrot.slane %v8344, 2
      %v8424 = vsel %vm6862, %v8421, %v8423
      %v8425 = vrot.slane %v8345, 2
      %v8426 = vsel %vm6862, %v8423, %v8425
      %v8427 = vrot.slane %v8346, 2
      %v8428 = vsel %vm6862, %v8425, %v8427
      %v8429 = vrot.slane %v8347, 2
      %v8430 = vsel %vm6862, %v8427, %v8429
      %v8431 = vrot.slane %v8348, 2
      %v8432 = vsel %vm6862, %v8429, %v8431
      %v8433 = vrot.slane %v8349, 2
      %v8434 = vsel %vm6862, %v8431, %v8433
      %v8435 = vrot.slane %v8350, 2
      %v8436 = vsel %vm6862, %v8433, %v8435
      %v8437 = vrot.slane %v8351, 2
      %v8438 = vsel %vm6862, %v8435, %v8437
      %v8439 = vrot.slane %v8352, 2
      %v8440 = vsel %vm6862, %v8437, %v8439
      %v8441 = vrot.slane %v8353, 2
      %v8442 = vsel %vm6862, %v8439, %v8441
      %v8443 = vrot.slane %v8354, 2
      %v8444 = vsel %vm6862, %v8441, %v8443
      %v8445 = vrot.slane %v8355, 2
      %v8446 = vsel %vm6862, %v8443, %v8445
      %v8447 = vrot.slane %v8356, 2
      %v8448 = vsel %vm6862, %v8445, %v8447
      %v8449 = vrot.slane %v8357, 2
      %v8450 = vsel %vm6862, %v8447, %v8449
      %v8451 = vrot.slane %v8358, 2
      %v8452 = vsel %vm6862, %v8449, %v8451
      %v8453 = vrot.slane %v8359, 2
      %v8454 = vsel %vm6862, %v8451, %v8453
      %v8455 = vrot.slane %v8360, 2
      %v8456 = vsel %vm6862, %v8453, %v8455
      %v8457 = vrot.slane %v8361, 2
      %v8458 = vsel %vm6862, %v8455, %v8457
      %v8459 = vrot.slane %v8362, 2
      %v8460 = vsel %vm6862, %v8457, %v8459
      %v8461 = vrot.slane %v8363, 2
      %v8462 = vsel %vm6862, %v8459, %v8461
      %v8463 = vrot.slane %v8364, 2
      %v8464 = vsel %vm6862, %v8461, %v8463
      %v8465 = vrot.slane %v8365, 2
      %v8466 = vsel %vm6862, %v8463, %v8465
      %v8467 = vrot.slane %v8366, 2
      %v8468 = vsel %vm6862, %v8465, %v8467
      %v8469 = vrot.slane %v8367, 2
      %v8470 = vsel %vm6862, %v8467, %v8469
      %v8471 = vrot.slane %v8368, 2
      %v8472 = vsel %vm6862, %v8469, %v8471
      %v8473 = vrot.slane %v8369, 2
      %v8474 = vsel %vm6862, %v8471, %v8473
      %v8475 = vrot.slane %v8370, 2
      %v8476 = vsel %vm6862, %v8473, %v8475
      %v8477 = vrot.slane %v8371, 2
      %v8478 = vsel %vm6862, %v8475, %v8477
      %v8479 = vrot.slane %v8372, 2
      %v8480 = vsel %vm6862, %v8477, %v8479
      %v8481 = vrot.slane %v8373, 2
      %v8482 = vsel %vm6862, %v8479, %v8481
      %v8483 = vrot.slane %v8374, 2
      %v8484 = vsel %vm6862, %v8481, %v8483
      %v8485 = vrot.slane %v8375, 2
      %v8486 = vsel %vm6862, %v8483, %v8485
      %v8487 = vrot.slane %v8376, 2
      %v8488 = vsel %vm6862, %v8485, %v8487
      %v8489 = vrot.slane %v8377, 2
      %v8490 = vsel %vm6862, %v8487, %v8489
      %v8491 = vrot.slane %v8378, 2
      %v8492 = vsel %vm6862, %v8489, %v8491
      %v8493 = vrot.slane %v8379, 2
      %v8494 = vsel %vm6862, %v8491, %v8493
      %v8495 = vrot.slane %v8380, 2
      %v8496 = vsel %vm6862, %v8493, %v8495
      %v8497 = vrot.slane %v8381, 2
      %v8498 = vsel %vm6862, %v8495, %v8497
      %v8499 = vrot.slane %v8382, 2
      %v8500 = vsel %vm6862, %v8497, %v8499
      %v8501 = vrot.slane %v8383, 2
      %v8502 = vsel %vm6862, %v8499, %v8501
      %v8503 = vrot.slane %v8384, 2
      %v8504 = vsel %vm6862, %v8501, %v8503
      %v8505 = vrot.slane %v8385, 2
      %v8506 = vsel %vm6862, %v8503, %v8505
      %v8507 = vrot.slane %v8386, 2
      %v8508 = vsel %vm6862, %v8505, %v8507
      %v8509 = vrot.slane %v8387, 2
      %v8510 = vsel %vm6862, %v8507, %v8509
      %v8511 = vrot.slane %v8388, 2
      %v8512 = vsel %vm6862, %v8509, %v8511
      %v8513 = vrot.slane %v8389, 2
      %v8514 = vsel %vm6862, %v8511, %v8513
      %v8515 = vrot.slane %v8390, 2
      %v8516 = vsel %vm6862, %v8513, %v8515
      %v8517 = vrot.slane %v8391, 2
      %v8518 = vsel %vm6862, %v8515, %v8517
      %v8519 = vrot.slane %v8392, 2
      %v8520 = vsel %vm6862, %v8517, %v8519
      %v8521 = vrot.slane %v8393, 2
      %v8522 = vsel %vm6862, %v8519, %v8521
      %v8523 = vrot.slane %v8394, 2
      %v8524 = vsel %vm6862, %v8521, %v8523
      %v8525 = vrot.slane %v8395, 2
      %v8526 = vsel %vm6862, %v8523, %v8525
      %v8527 = vrot.slane %v8396, 2
      %v8528 = vsel %vm6862, %v8525, %v8527
      %v8529 = vrot.slane %v8397, 2
      %v8530 = vsel %vm6862, %v8527, %v8529
      %v8531 = vrot.slane %v8398, 2
      %v8532 = vsel %vm6862, %v8529, %v8531
      %v8533 = vrot.slane %v8399, 2
      %v8534 = vsel %vm6862, %v8531, %v8533
      %v8535 = vrot.slane %v8400, 2
      %v8536 = vsel %vm6862, %v8533, %v8535
      %v8537 = vrot.slane %v8401, 2
      %v8538 = vsel %vm6862, %v8535, %v8537
      %v8540 = vsel %vm1204, %v8404, 0
      %v8543 = vsel %vm1204, %v8406, 0
      %v8546 = vsel %vm1204, %v8408, 0
      %v8549 = vsel %vm1204, %v8410, 0
      %v8552 = vsel %vm1204, %v8412, 0
      %v8555 = vsel %vm1204, %v8414, 0
      %v8558 = vsel %vm1204, %v8416, 0
      %v8561 = vsel %vm1204, %v8418, 0
      %v8564 = vsel %vm1204, %v8420, 0
      %v8567 = vsel %vm1204, %v8422, 0
      %v8570 = vsel %vm1204, %v8424, 0
      %v8573 = vsel %vm1204, %v8426, 0
      %v8576 = vsel %vm1204, %v8428, 0
      %v8579 = vsel %vm1204, %v8430, 0
      %v8582 = vsel %vm1204, %v8432, 0
      %v8585 = vsel %vm1204, %v8434, 0
      %v8588 = vsel %vm1204, %v8436, 0
      %v8591 = vsel %vm1204, %v8438, 0
      %v8594 = vsel %vm1204, %v8440, 0
      %v8597 = vsel %vm1204, %v8442, 0
      %v8600 = vsel %vm1204, %v8444, 0
      %v8603 = vsel %vm1204, %v8446, 0
      %v8606 = vsel %vm1204, %v8448, 0
      %v8609 = vsel %vm1204, %v8450, 0
      %v8612 = vsel %vm1204, %v8452, 0
      %v8615 = vsel %vm1204, %v8454, 0
      %v8618 = vsel %vm1204, %v8456, 0
      %v8621 = vsel %vm1204, %v8458, 0
      %v8624 = vsel %vm1204, %v8460, 0
      %v8627 = vsel %vm1204, %v8462, 0
      %v8630 = vsel %vm1204, %v8464, 0
      %v8633 = vsel %vm1204, %v8466, 0
      %v8636 = vsel %vm1204, %v8468, 0
      %v8639 = vsel %vm1204, %v8470, 0
      %v8642 = vsel %vm1204, %v8472, 0
      %v8645 = vsel %vm1204, %v8474, 0
      %v8648 = vsel %vm1204, %v8476, 0
      %v8651 = vsel %vm1204, %v8478, 0
      %v8654 = vsel %vm1204, %v8480, 0
      %v8657 = vsel %vm1204, %v8482, 0
      %v8660 = vsel %vm1204, %v8484, 0
      %v8663 = vsel %vm1204, %v8486, 0
      %v8666 = vsel %vm1204, %v8488, 0
      %v8669 = vsel %vm1204, %v8490, 0
      %v8672 = vsel %vm1204, %v8492, 0
      %v8675 = vsel %vm1204, %v8494, 0
      %v8678 = vsel %vm1204, %v8496, 0
      %v8681 = vsel %vm1204, %v8498, 0
      %v8684 = vsel %vm1204, %v8500, 0
      %v8687 = vsel %vm1204, %v8502, 0
      %v8690 = vsel %vm1204, %v8504, 0
      %v8693 = vsel %vm1204, %v8506, 0
      %v8696 = vsel %vm1204, %v8508, 0
      %v8699 = vsel %vm1204, %v8510, 0
      %v8702 = vsel %vm1204, %v8512, 0
      %v8705 = vsel %vm1204, %v8514, 0
      %v8708 = vsel %vm1204, %v8516, 0
      %v8711 = vsel %vm1204, %v8518, 0
      %v8714 = vsel %vm1204, %v8520, 0
      %v8717 = vsel %vm1204, %v8522, 0
      %v8720 = vsel %vm1204, %v8524, 0
      %v8723 = vsel %vm1204, %v8526, 0
      %v8726 = vsel %vm1204, %v8528, 0
      %v8729 = vsel %vm1204, %v8530, 0
      %v8732 = vsel %vm1204, %v8532, 0
      %v8735 = vsel %vm1204, %v8534, 0
      %v8738 = vsel %vm1204, %v8536, 0
      %v8741 = vsel %vm1204, %v8538, 0
      %v8744 = vsel %vm1409, %v8058, 0
      %8746 = vmatprep.subr.bf16.mxu0 0
      %8747 = vmatpush1.bf16.msra.mxu0 %v8744
      %8748 = vmatprep.subr.bf16.mxu0 0
      %8749 = vmatpush1.bf16.msra.mxu0 0
      %8750 = vmatprep.subr.bf16.mxu0 0
      %8751 = vmatpush1.bf16.msra.mxu0 0
      %8752 = vmatprep.subr.bf16.mxu0 0
      %8753 = vmatpush1.bf16.msra.mxu0 0
      %8754 = vmatprep.subr.bf16.mxu0 0
      %8755 = vmatpush1.bf16.msra.mxu0 0
      %8756 = vmatprep.subr.bf16.mxu0 0
      %8757 = vmatpush1.bf16.msra.mxu0 0
      %8758 = vmatprep.subr.bf16.mxu0 0
      %8759 = vmatpush1.bf16.msra.mxu0 0
      %8760 = vmatprep.subr.bf16.mxu0 0
      %8761 = vmatpush1.bf16.msra.mxu0 0
      %8762 = vmatprep.subr.bf16.mxu0 0
      %8763 = vmatpush1.bf16.msra.mxu0 0
      %8764 = vmatprep.subr.bf16.mxu0 0
      %8765 = vmatpush1.bf16.msra.mxu0 0
      %8766 = vmatprep.subr.bf16.mxu0 0
      %8767 = vmatpush1.bf16.msra.mxu0 0
      %8768 = vmatprep.subr.bf16.mxu0 0
      %8769 = vmatpush1.bf16.msra.mxu0 0
      %8770 = vmatprep.subr.bf16.mxu0 0
      %8771 = vmatpush1.bf16.msra.mxu0 0
      %8772 = vmatprep.subr.bf16.mxu0 0
      %8773 = vmatpush1.bf16.msra.mxu0 0
      %8774 = vmatprep.subr.bf16.mxu0 0
      %8775 = vmatpush1.bf16.msra.mxu0 0
      %8776 = vmatprep.subr.bf16.mxu0 0
      %8777 = vmatpush1.bf16.msra.mxu0 0
      %8778 = vmatprep.mubr.bf16.mxu0 0
      %8779 = vmatmul.mubr.bf16.gmra.mrb[0].mxu0 %v8540
      %v8780 = vpop.f32.mrb[0].mxu0
      %v8781 = vadd.f32 0.0, %v8780
      %v8782 = vpop.f32.mrb[0].mxu0
      %v8783 = vpop.f32.mrb[0].mxu0
      %v8784 = vadd.f32 0.0, %v8783
      %v8785 = vpop.f32.mrb[0].mxu0
      %8786 = vmatprep.mubr.bf16.mxu0 0
      %8787 = vmatmul.mubr.bf16.gmra.mrb[0].mxu0 %v8543
      %v8788 = vpop.f32.mrb[0].mxu0
      %v8789 = vadd.f32 0.0, %v8788
      %v8790 = vpop.f32.mrb[0].mxu0
      %v8791 = vpop.f32.mrb[0].mxu0
      %v8792 = vadd.f32 0.0, %v8791
      %v8793 = vpop.f32.mrb[0].mxu0
      %8794 = vmatprep.mubr.bf16.mxu0 0
      %8795 = vmatmul.mubr.bf16.gmra.mrb[0].mxu0 %v8546
      %v8796 = vpop.f32.mrb[0].mxu0
      %v8797 = vadd.f32 0.0, %v8796
      %v8798 = vpop.f32.mrb[0].mxu0
      %v8799 = vpop.f32.mrb[0].mxu0
      %v8800 = vadd.f32 0.0, %v8799
      %v8801 = vpop.f32.mrb[0].mxu0
      %8802 = vmatprep.mubr.bf16.mxu0 0
      %8803 = vmatmul.mubr.bf16.gmra.mrb[0].mxu0 %v8549
      %v8804 = vpop.f32.mrb[0].mxu0
      %v8805 = vadd.f32 0.0, %v8804
      %v8806 = vpop.f32.mrb[0].mxu0
      %v8807 = vpop.f32.mrb[0].mxu0
      %v8808 = vadd.f32 0.0, %v8807
      %v8809 = vpop.f32.mrb[0].mxu0
      %8810 = vmatprep.mubr.bf16.mxu0 0
      %8811 = vmatmul.mubr.bf16.gmra.mrb[0].mxu0 %v8552
      %v8812 = vpop.f32.mrb[0].mxu0
      %v8813 = vadd.f32 0.0, %v8812
      %v8814 = vpop.f32.mrb[0].mxu0
      %v8815 = vpop.f32.mrb[0].mxu0
      %v8816 = vadd.f32 0.0, %v8815
      %v8817 = vpop.f32.mrb[0].mxu0
      %8818 = vmatprep.mubr.bf16.mxu0 0
      %8819 = vmatmul.mubr.bf16.gmra.mrb[0].mxu0 %v8555
      %v8820 = vpop.f32.mrb[0].mxu0
      %v8821 = vadd.f32 0.0, %v8820
      %v8822 = vpop.f32.mrb[0].mxu0
      %v8823 = vpop.f32.mrb[0].mxu0
      %v8824 = vadd.f32 0.0, %v8823
      %v8825 = vpop.f32.mrb[0].mxu0
      %8826 = vmatprep.mubr.bf16.mxu0 0
      %8827 = vmatmul.mubr.bf16.gmra.mrb[0].mxu0 %v8558
      %v8828 = vpop.f32.mrb[0].mxu0
      %v8829 = vadd.f32 0.0, %v8828
      %v8830 = vpop.f32.mrb[0].mxu0
      %v8831 = vpop.f32.mrb[0].mxu0
      %v8832 = vadd.f32 0.0, %v8831
      %v8833 = vpop.f32.mrb[0].mxu0
      %8834 = vmatprep.mubr.bf16.mxu0 0
      %8835 = vmatmul.mubr.bf16.gmra.mrb[0].mxu0 %v8561
      %v8836 = vpop.f32.mrb[0].mxu0
      %v8837 = vadd.f32 0.0, %v8836
      %v8838 = vpop.f32.mrb[0].mxu0
      %v8839 = vpop.f32.mrb[0].mxu0
      %v8840 = vadd.f32 0.0, %v8839
      %v8841 = vpop.f32.mrb[0].mxu0
      %8842 = vmatprep.mubr.bf16.mxu0 0
      %8843 = vmatmul.mubr.bf16.gmra.mrb[0].mxu0 %v8564
      %v8844 = vpop.f32.mrb[0].mxu0
      %v8845 = vadd.f32 0.0, %v8844
      %v8846 = vpop.f32.mrb[0].mxu0
      %v8847 = vpop.f32.mrb[0].mxu0
      %v8848 = vadd.f32 0.0, %v8847
      %v8849 = vpop.f32.mrb[0].mxu0
      %8850 = vmatprep.mubr.bf16.mxu0 0
      %8851 = vmatmul.mubr.bf16.gmra.mrb[0].mxu0 %v8567
      %v8852 = vpop.f32.mrb[0].mxu0
      %v8853 = vadd.f32 0.0, %v8852
      %v8854 = vpop.f32.mrb[0].mxu0
      %v8855 = vpop.f32.mrb[0].mxu0
      %v8856 = vadd.f32 0.0, %v8855
      %v8857 = vpop.f32.mrb[0].mxu0
      %8858 = vmatprep.mubr.bf16.mxu0 0
      %8859 = vmatmul.mubr.bf16.gmra.mrb[0].mxu0 %v8570
      %v8860 = vpop.f32.mrb[0].mxu0
      %v8861 = vadd.f32 0.0, %v8860
      %v8862 = vpop.f32.mrb[0].mxu0
      %v8863 = vpop.f32.mrb[0].mxu0
      %v8864 = vadd.f32 0.0, %v8863
      %v8865 = vpop.f32.mrb[0].mxu0
      %8866 = vmatprep.mubr.bf16.mxu0 0
      %8867 = vmatmul.mubr.bf16.gmra.mrb[0].mxu0 %v8573
      %v8868 = vpop.f32.mrb[0].mxu0
      %v8869 = vadd.f32 0.0, %v8868
      %v8870 = vpop.f32.mrb[0].mxu0
      %v8871 = vpop.f32.mrb[0].mxu0
      %v8872 = vadd.f32 0.0, %v8871
      %v8873 = vpop.f32.mrb[0].mxu0
      %8874 = vmatprep.mubr.bf16.mxu0 0
      %8875 = vmatmul.mubr.bf16.gmra.mrb[0].mxu0 %v8576
      %v8876 = vpop.f32.mrb[0].mxu0
      %v8877 = vadd.f32 0.0, %v8876
      %v8878 = vpop.f32.mrb[0].mxu0
      %v8879 = vpop.f32.mrb[0].mxu0
      %v8880 = vadd.f32 0.0, %v8879
      %v8881 = vpop.f32.mrb[0].mxu0
      %8882 = vmatprep.mubr.bf16.mxu0 0
      %8883 = vmatmul.mubr.bf16.gmra.mrb[0].mxu0 %v8579
      %v8884 = vpop.f32.mrb[0].mxu0
      %v8885 = vadd.f32 0.0, %v8884
      %v8886 = vpop.f32.mrb[0].mxu0
      %v8887 = vpop.f32.mrb[0].mxu0
      %v8888 = vadd.f32 0.0, %v8887
      %v8889 = vpop.f32.mrb[0].mxu0
      %8890 = vmatprep.mubr.bf16.mxu0 0
      %8891 = vmatmul.mubr.bf16.gmra.mrb[0].mxu0 %v8582
      %v8892 = vpop.f32.mrb[0].mxu0
      %v8893 = vadd.f32 0.0, %v8892
      %v8894 = vpop.f32.mrb[0].mxu0
      %v8895 = vpop.f32.mrb[0].mxu0
      %v8896 = vadd.f32 0.0, %v8895
      %v8897 = vpop.f32.mrb[0].mxu0
      %8898 = vmatprep.mubr.bf16.mxu0 0
      %8899 = vmatmul.mubr.bf16.gmra.mrb[0].mxu0 %v8585
      %v8900 = vpop.f32.mrb[0].mxu0
      %v8901 = vadd.f32 0.0, %v8900
      %v8902 = vpop.f32.mrb[0].mxu0
      %v8903 = vpop.f32.mrb[0].mxu0
      %v8904 = vadd.f32 0.0, %v8903
      %v8905 = vpop.f32.mrb[0].mxu0
      %8906 = vmatprep.mubr.bf16.mxu0 0
      %8907 = vmatmul.mubr.bf16.gmra.mrb[0].mxu0 %v8588
      %v8908 = vpop.f32.mrb[0].mxu0
      %v8909 = vadd.f32 0.0, %v8908
      %v8910 = vpop.f32.mrb[0].mxu0
      %v8911 = vpop.f32.mrb[0].mxu0
      %v8912 = vadd.f32 0.0, %v8911
      %v8913 = vpop.f32.mrb[0].mxu0
      %8914 = vmatprep.mubr.bf16.mxu0 0
      %8915 = vmatmul.mubr.bf16.gmra.mrb[0].mxu0 %v8591
      %v8916 = vpop.f32.mrb[0].mxu0
      %v8917 = vadd.f32 0.0, %v8916
      %v8918 = vpop.f32.mrb[0].mxu0
      %v8919 = vpop.f32.mrb[0].mxu0
      %v8920 = vadd.f32 0.0, %v8919
      %v8921 = vpop.f32.mrb[0].mxu0
      %8922 = vmatprep.mubr.bf16.mxu0 0
      %8923 = vmatmul.mubr.bf16.gmra.mrb[0].mxu0 %v8594
      %v8924 = vpop.f32.mrb[0].mxu0
      %v8925 = vadd.f32 0.0, %v8924
      %v8926 = vpop.f32.mrb[0].mxu0
      %v8927 = vpop.f32.mrb[0].mxu0
      %v8928 = vadd.f32 0.0, %v8927
      %v8929 = vpop.f32.mrb[0].mxu0
      %8930 = vmatprep.mubr.bf16.mxu0 0
      %8931 = vmatmul.mubr.bf16.gmra.mrb[0].mxu0 %v8597
      %v8932 = vpop.f32.mrb[0].mxu0
      %v8933 = vadd.f32 0.0, %v8932
      %v8934 = vpop.f32.mrb[0].mxu0
      %v8935 = vpop.f32.mrb[0].mxu0
      %v8936 = vadd.f32 0.0, %v8935
      %v8937 = vpop.f32.mrb[0].mxu0
      %8938 = vmatprep.mubr.bf16.mxu0 0
      %8939 = vmatmul.mubr.bf16.gmra.mrb[0].mxu0 %v8600
      %v8940 = vpop.f32.mrb[0].mxu0
      %v8941 = vadd.f32 0.0, %v8940
      %v8942 = vpop.f32.mrb[0].mxu0
      %v8943 = vpop.f32.mrb[0].mxu0
      %v8944 = vadd.f32 0.0, %v8943
      %v8945 = vpop.f32.mrb[0].mxu0
      %8946 = vmatprep.mubr.bf16.mxu0 0
      %8947 = vmatmul.mubr.bf16.gmra.mrb[0].mxu0 %v8603
      %v8948 = vpop.f32.mrb[0].mxu0
      %v8949 = vadd.f32 0.0, %v8948
      %v8950 = vpop.f32.mrb[0].mxu0
      %v8951 = vpop.f32.mrb[0].mxu0
      %v8952 = vadd.f32 0.0, %v8951
      %v8953 = vpop.f32.mrb[0].mxu0
      %8954 = vmatprep.mubr.bf16.mxu0 0
      %8955 = vmatmul.mubr.bf16.gmra.mrb[0].mxu0 %v8606
      %v8956 = vpop.f32.mrb[0].mxu0
      %v8957 = vadd.f32 0.0, %v8956
      %v8958 = vpop.f32.mrb[0].mxu0
      %v8959 = vpop.f32.mrb[0].mxu0
      %v8960 = vadd.f32 0.0, %v8959
      %v8961 = vpop.f32.mrb[0].mxu0
      %8962 = vmatprep.mubr.bf16.mxu0 0
      %8963 = vmatmul.mubr.bf16.gmra.mrb[0].mxu0 %v8609
      %v8964 = vpop.f32.mrb[0].mxu0
      %v8965 = vadd.f32 0.0, %v8964
      %v8966 = vpop.f32.mrb[0].mxu0
      %v8967 = vpop.f32.mrb[0].mxu0
      %v8968 = vadd.f32 0.0, %v8967
      %v8969 = vpop.f32.mrb[0].mxu0
      %8970 = vmatprep.mubr.bf16.mxu0 0
      %8971 = vmatmul.mubr.bf16.gmra.mrb[0].mxu0 %v8612
      %v8972 = vpop.f32.mrb[0].mxu0
      %v8973 = vadd.f32 0.0, %v8972
      %v8974 = vpop.f32.mrb[0].mxu0
      %v8975 = vpop.f32.mrb[0].mxu0
      %v8976 = vadd.f32 0.0, %v8975
      %v8977 = vpop.f32.mrb[0].mxu0
      %8978 = vmatprep.mubr.bf16.mxu0 0
      %8979 = vmatmul.mubr.bf16.gmra.mrb[0].mxu0 %v8615
      %v8980 = vpop.f32.mrb[0].mxu0
      %v8981 = vadd.f32 0.0, %v8980
      %v8982 = vpop.f32.mrb[0].mxu0
      %v8983 = vpop.f32.mrb[0].mxu0
      %v8984 = vadd.f32 0.0, %v8983
      %v8985 = vpop.f32.mrb[0].mxu0
      %8986 = vmatprep.mubr.bf16.mxu0 0
      %8987 = vmatmul.mubr.bf16.gmra.mrb[0].mxu0 %v8618
      %v8988 = vpop.f32.mrb[0].mxu0
      %v8989 = vadd.f32 0.0, %v8988
      %v8990 = vpop.f32.mrb[0].mxu0
      %v8991 = vpop.f32.mrb[0].mxu0
      %v8992 = vadd.f32 0.0, %v8991
      %v8993 = vpop.f32.mrb[0].mxu0
      %8994 = vmatprep.mubr.bf16.mxu0 0
      %8995 = vmatmul.mubr.bf16.gmra.mrb[0].mxu0 %v8621
      %v8996 = vpop.f32.mrb[0].mxu0
      %v8997 = vadd.f32 0.0, %v8996
      %v8998 = vpop.f32.mrb[0].mxu0
      %v8999 = vpop.f32.mrb[0].mxu0
      %v9000 = vadd.f32 0.0, %v8999
      %v9001 = vpop.f32.mrb[0].mxu0
      %9002 = vmatprep.mubr.bf16.mxu0 0
      %9003 = vmatmul.mubr.bf16.gmra.mrb[0].mxu0 %v8624
      %v9004 = vpop.f32.mrb[0].mxu0
      %v9005 = vadd.f32 0.0, %v9004
      %v9006 = vpop.f32.mrb[0].mxu0
      %v9007 = vpop.f32.mrb[0].mxu0
      %v9008 = vadd.f32 0.0, %v9007
      %v9009 = vpop.f32.mrb[0].mxu0
      %9010 = vmatprep.mubr.bf16.mxu0 0
      %9011 = vmatmul.mubr.bf16.gmra.mrb[0].mxu0 %v8627
      %v9012 = vpop.f32.mrb[0].mxu0
      %v9013 = vadd.f32 0.0, %v9012
      %v9014 = vpop.f32.mrb[0].mxu0
      %v9015 = vpop.f32.mrb[0].mxu0
      %v9016 = vadd.f32 0.0, %v9015
      %v9017 = vpop.f32.mrb[0].mxu0
      %9018 = vmatprep.mubr.bf16.mxu0 0
      %9019 = vmatmul.mubr.bf16.gmra.mrb[0].mxu0 %v8630
      %v9020 = vpop.f32.mrb[0].mxu0
      %v9021 = vadd.f32 0.0, %v9020
      %v9022 = vpop.f32.mrb[0].mxu0
      %v9023 = vpop.f32.mrb[0].mxu0
      %v9024 = vadd.f32 0.0, %v9023
      %v9025 = vpop.f32.mrb[0].mxu0
      %9026 = vmatprep.mubr.bf16.mxu0 0
      %9027 = vmatmul.mubr.bf16.gmra.mrb[0].mxu0 %v8633
      %v9028 = vpop.f32.mrb[0].mxu0
      %v9029 = vadd.f32 0.0, %v9028
      %v9030 = vpop.f32.mrb[0].mxu0
      %v9031 = vpop.f32.mrb[0].mxu0
      %v9032 = vadd.f32 0.0, %v9031
      %v9033 = vpop.f32.mrb[0].mxu0
      %9034 = vmatprep.mubr.bf16.mxu0 0
      %9035 = vmatmul.mubr.bf16.gmra.mrb[0].mxu0 %v8636
      %v9036 = vpop.f32.mrb[0].mxu0
      %v9037 = vadd.f32 0.0, %v9036
      %v9038 = vpop.f32.mrb[0].mxu0
      %v9039 = vpop.f32.mrb[0].mxu0
      %v9040 = vadd.f32 0.0, %v9039
      %v9041 = vpop.f32.mrb[0].mxu0
      %9042 = vmatprep.mubr.bf16.mxu0 0
      %9043 = vmatmul.mubr.bf16.gmra.mrb[0].mxu0 %v8639
      %v9044 = vpop.f32.mrb[0].mxu0
      %v9045 = vadd.f32 0.0, %v9044
      %v9046 = vpop.f32.mrb[0].mxu0
      %v9047 = vpop.f32.mrb[0].mxu0
      %v9048 = vadd.f32 0.0, %v9047
      %v9049 = vpop.f32.mrb[0].mxu0
      %9050 = vmatprep.mubr.bf16.mxu0 0
      %9051 = vmatmul.mubr.bf16.gmra.mrb[0].mxu0 %v8642
      %v9052 = vpop.f32.mrb[0].mxu0
      %v9053 = vadd.f32 0.0, %v9052
      %v9054 = vpop.f32.mrb[0].mxu0
      %v9055 = vpop.f32.mrb[0].mxu0
      %v9056 = vadd.f32 0.0, %v9055
      %v9057 = vpop.f32.mrb[0].mxu0
      %9058 = vmatprep.mubr.bf16.mxu0 0
      %9059 = vmatmul.mubr.bf16.gmra.mrb[0].mxu0 %v8645
      %v9060 = vpop.f32.mrb[0].mxu0
      %v9061 = vadd.f32 0.0, %v9060
      %v9062 = vpop.f32.mrb[0].mxu0
      %v9063 = vpop.f32.mrb[0].mxu0
      %v9064 = vadd.f32 0.0, %v9063
      %v9065 = vpop.f32.mrb[0].mxu0
      %9066 = vmatprep.mubr.bf16.mxu0 0
      %9067 = vmatmul.mubr.bf16.gmra.mrb[0].mxu0 %v8648
      %v9068 = vpop.f32.mrb[0].mxu0
      %v9069 = vadd.f32 0.0, %v9068
      %v9070 = vpop.f32.mrb[0].mxu0
      %v9071 = vpop.f32.mrb[0].mxu0
      %v9072 = vadd.f32 0.0, %v9071
      %v9073 = vpop.f32.mrb[0].mxu0
      %9074 = vmatprep.mubr.bf16.mxu0 0
      %9075 = vmatmul.mubr.bf16.gmra.mrb[0].mxu0 %v8651
      %v9076 = vpop.f32.mrb[0].mxu0
      %v9077 = vadd.f32 0.0, %v9076
      %v9078 = vpop.f32.mrb[0].mxu0
      %v9079 = vpop.f32.mrb[0].mxu0
      %v9080 = vadd.f32 0.0, %v9079
      %v9081 = vpop.f32.mrb[0].mxu0
      %9082 = vmatprep.mubr.bf16.mxu0 0
      %9083 = vmatmul.mubr.bf16.gmra.mrb[0].mxu0 %v8654
      %v9084 = vpop.f32.mrb[0].mxu0
      %v9085 = vadd.f32 0.0, %v9084
      %v9086 = vpop.f32.mrb[0].mxu0
      %v9087 = vpop.f32.mrb[0].mxu0
      %v9088 = vadd.f32 0.0, %v9087
      %v9089 = vpop.f32.mrb[0].mxu0
      %9090 = vmatprep.mubr.bf16.mxu0 0
      %9091 = vmatmul.mubr.bf16.gmra.mrb[0].mxu0 %v8657
      %v9092 = vpop.f32.mrb[0].mxu0
      %v9093 = vadd.f32 0.0, %v9092
      %v9094 = vpop.f32.mrb[0].mxu0
      %v9095 = vpop.f32.mrb[0].mxu0
      %v9096 = vadd.f32 0.0, %v9095
      %v9097 = vpop.f32.mrb[0].mxu0
      %9098 = vmatprep.mubr.bf16.mxu0 0
      %9099 = vmatmul.mubr.bf16.gmra.mrb[0].mxu0 %v8660
      %v9100 = vpop.f32.mrb[0].mxu0
      %v9101 = vadd.f32 0.0, %v9100
      %v9102 = vpop.f32.mrb[0].mxu0
      %v9103 = vpop.f32.mrb[0].mxu0
      %v9104 = vadd.f32 0.0, %v9103
      %v9105 = vpop.f32.mrb[0].mxu0
      %9106 = vmatprep.mubr.bf16.mxu0 0
      %9107 = vmatmul.mubr.bf16.gmra.mrb[0].mxu0 %v8663
      %v9108 = vpop.f32.mrb[0].mxu0
      %v9109 = vadd.f32 0.0, %v9108
      %v9110 = vpop.f32.mrb[0].mxu0
      %v9111 = vpop.f32.mrb[0].mxu0
      %v9112 = vadd.f32 0.0, %v9111
      %v9113 = vpop.f32.mrb[0].mxu0
      %9114 = vmatprep.mubr.bf16.mxu0 0
      %9115 = vmatmul.mubr.bf16.gmra.mrb[0].mxu0 %v8666
      %v9116 = vpop.f32.mrb[0].mxu0
      %v9117 = vadd.f32 0.0, %v9116
      %v9118 = vpop.f32.mrb[0].mxu0
      %v9119 = vpop.f32.mrb[0].mxu0
      %v9120 = vadd.f32 0.0, %v9119
      %v9121 = vpop.f32.mrb[0].mxu0
      %9122 = vmatprep.mubr.bf16.mxu0 0
      %9123 = vmatmul.mubr.bf16.gmra.mrb[0].mxu0 %v8669
      %v9124 = vpop.f32.mrb[0].mxu0
      %v9125 = vadd.f32 0.0, %v9124
      %v9126 = vpop.f32.mrb[0].mxu0
      %v9127 = vpop.f32.mrb[0].mxu0
      %v9128 = vadd.f32 0.0, %v9127
      %v9129 = vpop.f32.mrb[0].mxu0
      %9130 = vmatprep.mubr.bf16.mxu0 0
      %9131 = vmatmul.mubr.bf16.gmra.mrb[0].mxu0 %v8672
      %v9132 = vpop.f32.mrb[0].mxu0
      %v9133 = vadd.f32 0.0, %v9132
      %v9134 = vpop.f32.mrb[0].mxu0
      %v9135 = vpop.f32.mrb[0].mxu0
      %v9136 = vadd.f32 0.0, %v9135
      %v9137 = vpop.f32.mrb[0].mxu0
      %9138 = vmatprep.mubr.bf16.mxu0 0
      %9139 = vmatmul.mubr.bf16.gmra.mrb[0].mxu0 %v8675
      %v9140 = vpop.f32.mrb[0].mxu0
      %v9141 = vadd.f32 0.0, %v9140
      %v9142 = vpop.f32.mrb[0].mxu0
      %v9143 = vpop.f32.mrb[0].mxu0
      %v9144 = vadd.f32 0.0, %v9143
      %v9145 = vpop.f32.mrb[0].mxu0
      %9146 = vmatprep.mubr.bf16.mxu0 0
      %9147 = vmatmul.mubr.bf16.gmra.mrb[0].mxu0 %v8678
      %v9148 = vpop.f32.mrb[0].mxu0
      %v9149 = vadd.f32 0.0, %v9148
      %v9150 = vpop.f32.mrb[0].mxu0
      %v9151 = vpop.f32.mrb[0].mxu0
      %v9152 = vadd.f32 0.0, %v9151
      %v9153 = vpop.f32.mrb[0].mxu0
      %9154 = vmatprep.mubr.bf16.mxu0 0
      %9155 = vmatmul.mubr.bf16.gmra.mrb[0].mxu0 %v8681
      %v9156 = vpop.f32.mrb[0].mxu0
      %v9157 = vadd.f32 0.0, %v9156
      %v9158 = vpop.f32.mrb[0].mxu0
      %v9159 = vpop.f32.mrb[0].mxu0
      %v9160 = vadd.f32 0.0, %v9159
      %v9161 = vpop.f32.mrb[0].mxu0
      %9162 = vmatprep.mubr.bf16.mxu0 0
      %9163 = vmatmul.mubr.bf16.gmra.mrb[0].mxu0 %v8684
      %v9164 = vpop.f32.mrb[0].mxu0
      %v9165 = vadd.f32 0.0, %v9164
      %v9166 = vpop.f32.mrb[0].mxu0
      %v9167 = vpop.f32.mrb[0].mxu0
      %v9168 = vadd.f32 0.0, %v9167
      %v9169 = vpop.f32.mrb[0].mxu0
      %9170 = vmatprep.mubr.bf16.mxu0 0
      %9171 = vmatmul.mubr.bf16.gmra.mrb[0].mxu0 %v8687
      %v9172 = vpop.f32.mrb[0].mxu0
      %v9173 = vadd.f32 0.0, %v9172
      %v9174 = vpop.f32.mrb[0].mxu0
      %v9175 = vpop.f32.mrb[0].mxu0
      %v9176 = vadd.f32 0.0, %v9175
      %v9177 = vpop.f32.mrb[0].mxu0
      %9178 = vmatprep.mubr.bf16.mxu0 0
      %9179 = vmatmul.mubr.bf16.gmra.mrb[0].mxu0 %v8690
      %v9180 = vpop.f32.mrb[0].mxu0
      %v9181 = vadd.f32 0.0, %v9180
      %v9182 = vpop.f32.mrb[0].mxu0
      %v9183 = vpop.f32.mrb[0].mxu0
      %v9184 = vadd.f32 0.0, %v9183
      %v9185 = vpop.f32.mrb[0].mxu0
      %9186 = vmatprep.mubr.bf16.mxu0 0
      %9187 = vmatmul.mubr.bf16.gmra.mrb[0].mxu0 %v8693
      %v9188 = vpop.f32.mrb[0].mxu0
      %v9189 = vadd.f32 0.0, %v9188
      %v9190 = vpop.f32.mrb[0].mxu0
      %v9191 = vpop.f32.mrb[0].mxu0
      %v9192 = vadd.f32 0.0, %v9191
      %v9193 = vpop.f32.mrb[0].mxu0
      %9194 = vmatprep.mubr.bf16.mxu0 0
      %9195 = vmatmul.mubr.bf16.gmra.mrb[0].mxu0 %v8696
      %v9196 = vpop.f32.mrb[0].mxu0
      %v9197 = vadd.f32 0.0, %v9196
      %v9198 = vpop.f32.mrb[0].mxu0
      %v9199 = vpop.f32.mrb[0].mxu0
      %v9200 = vadd.f32 0.0, %v9199
      %v9201 = vpop.f32.mrb[0].mxu0
      %9202 = vmatprep.mubr.bf16.mxu0 0
      %9203 = vmatmul.mubr.bf16.gmra.mrb[0].mxu0 %v8699
      %v9204 = vpop.f32.mrb[0].mxu0
      %v9205 = vadd.f32 0.0, %v9204
      %v9206 = vpop.f32.mrb[0].mxu0
      %v9207 = vpop.f32.mrb[0].mxu0
      %v9208 = vadd.f32 0.0, %v9207
      %v9209 = vpop.f32.mrb[0].mxu0
      %9210 = vmatprep.mubr.bf16.mxu0 0
      %9211 = vmatmul.mubr.bf16.gmra.mrb[0].mxu0 %v8702
      %v9212 = vpop.f32.mrb[0].mxu0
      %v9213 = vadd.f32 0.0, %v9212
      %v9214 = vpop.f32.mrb[0].mxu0
      %v9215 = vpop.f32.mrb[0].mxu0
      %v9216 = vadd.f32 0.0, %v9215
      %v9217 = vpop.f32.mrb[0].mxu0
      %9218 = vmatprep.mubr.bf16.mxu0 0
      %9219 = vmatmul.mubr.bf16.gmra.mrb[0].mxu0 %v8705
      %v9220 = vpop.f32.mrb[0].mxu0
      %v9221 = vadd.f32 0.0, %v9220
      %v9222 = vpop.f32.mrb[0].mxu0
      %v9223 = vpop.f32.mrb[0].mxu0
      %v9224 = vadd.f32 0.0, %v9223
      %v9225 = vpop.f32.mrb[0].mxu0
      %9226 = vmatprep.mubr.bf16.mxu0 0
      %9227 = vmatmul.mubr.bf16.gmra.mrb[0].mxu0 %v8708
      %v9228 = vpop.f32.mrb[0].mxu0
      %v9229 = vadd.f32 0.0, %v9228
      %v9230 = vpop.f32.mrb[0].mxu0
      %v9231 = vpop.f32.mrb[0].mxu0
      %v9232 = vadd.f32 0.0, %v9231
      %v9233 = vpop.f32.mrb[0].mxu0
      %9234 = vmatprep.mubr.bf16.mxu0 0
      %9235 = vmatmul.mubr.bf16.gmra.mrb[0].mxu0 %v8711
      %v9236 = vpop.f32.mrb[0].mxu0
      %v9237 = vadd.f32 0.0, %v9236
      %v9238 = vpop.f32.mrb[0].mxu0
      %v9239 = vpop.f32.mrb[0].mxu0
      %v9240 = vadd.f32 0.0, %v9239
      %v9241 = vpop.f32.mrb[0].mxu0
      %9242 = vmatprep.mubr.bf16.mxu0 0
      %9243 = vmatmul.mubr.bf16.gmra.mrb[0].mxu0 %v8714
      %v9244 = vpop.f32.mrb[0].mxu0
      %v9245 = vadd.f32 0.0, %v9244
      %v9246 = vpop.f32.mrb[0].mxu0
      %v9247 = vpop.f32.mrb[0].mxu0
      %v9248 = vadd.f32 0.0, %v9247
      %v9249 = vpop.f32.mrb[0].mxu0
      %9250 = vmatprep.mubr.bf16.mxu0 0
      %9251 = vmatmul.mubr.bf16.gmra.mrb[0].mxu0 %v8717
      %v9252 = vpop.f32.mrb[0].mxu0
      %v9253 = vadd.f32 0.0, %v9252
      %v9254 = vpop.f32.mrb[0].mxu0
      %v9255 = vpop.f32.mrb[0].mxu0
      %v9256 = vadd.f32 0.0, %v9255
      %v9257 = vpop.f32.mrb[0].mxu0
      %9258 = vmatprep.mubr.bf16.mxu0 0
      %9259 = vmatmul.mubr.bf16.gmra.mrb[0].mxu0 %v8720
      %v9260 = vpop.f32.mrb[0].mxu0
      %v9261 = vadd.f32 0.0, %v9260
      %v9262 = vpop.f32.mrb[0].mxu0
      %v9263 = vpop.f32.mrb[0].mxu0
      %v9264 = vadd.f32 0.0, %v9263
      %v9265 = vpop.f32.mrb[0].mxu0
      %9266 = vmatprep.mubr.bf16.mxu0 0
      %9267 = vmatmul.mubr.bf16.gmra.mrb[0].mxu0 %v8723
      %v9268 = vpop.f32.mrb[0].mxu0
      %v9269 = vadd.f32 0.0, %v9268
      %v9270 = vpop.f32.mrb[0].mxu0
      %v9271 = vpop.f32.mrb[0].mxu0
      %v9272 = vadd.f32 0.0, %v9271
      %v9273 = vpop.f32.mrb[0].mxu0
      %9274 = vmatprep.mubr.bf16.mxu0 0
      %9275 = vmatmul.mubr.bf16.gmra.mrb[0].mxu0 %v8726
      %v9276 = vpop.f32.mrb[0].mxu0
      %v9277 = vadd.f32 0.0, %v9276
      %v9278 = vpop.f32.mrb[0].mxu0
      %v9279 = vpop.f32.mrb[0].mxu0
      %v9280 = vadd.f32 0.0, %v9279
      %v9281 = vpop.f32.mrb[0].mxu0
      %9282 = vmatprep.mubr.bf16.mxu0 0
      %9283 = vmatmul.mubr.bf16.gmra.mrb[0].mxu0 %v8729
      %v9284 = vpop.f32.mrb[0].mxu0
      %v9285 = vadd.f32 0.0, %v9284
      %v9286 = vpop.f32.mrb[0].mxu0
      %v9287 = vpop.f32.mrb[0].mxu0
      %v9288 = vadd.f32 0.0, %v9287
      %v9289 = vpop.f32.mrb[0].mxu0
      %9290 = vmatprep.mubr.bf16.mxu0 0
      %9291 = vmatmul.mubr.bf16.gmra.mrb[0].mxu0 %v8732
      %v9292 = vpop.f32.mrb[0].mxu0
      %v9293 = vadd.f32 0.0, %v9292
      %v9294 = vpop.f32.mrb[0].mxu0
      %v9295 = vpop.f32.mrb[0].mxu0
      %v9296 = vadd.f32 0.0, %v9295
      %v9297 = vpop.f32.mrb[0].mxu0
      %9298 = vmatprep.mubr.bf16.mxu0 0
      %9299 = vmatmul.mubr.bf16.gmra.mrb[0].mxu0 %v8735
      %v9300 = vpop.f32.mrb[0].mxu0
      %v9301 = vadd.f32 0.0, %v9300
      %v9302 = vpop.f32.mrb[0].mxu0
      %v9303 = vpop.f32.mrb[0].mxu0
      %v9304 = vadd.f32 0.0, %v9303
      %v9305 = vpop.f32.mrb[0].mxu0
      %9306 = vmatprep.mubr.bf16.mxu0 0
      %9307 = vmatmul.mubr.bf16.gmra.mrb[0].mxu0 %v8738
      %v9308 = vpop.f32.mrb[0].mxu0
      %v9309 = vadd.f32 0.0, %v9308
      %v9310 = vpop.f32.mrb[0].mxu0
      %v9311 = vpop.f32.mrb[0].mxu0
      %v9312 = vadd.f32 0.0, %v9311
      %v9313 = vpop.f32.mrb[0].mxu0
      %9314 = vmatprep.mubr.bf16.mxu0 0
      %9315 = vmatmul.mubr.bf16.gmra.mrb[0].mxu0 %v8741
      %v9316 = vpop.f32.mrb[0].mxu0
      %v9317 = vadd.f32 0.0, %v9316
      %v9318 = vpop.f32.mrb[0].mxu0
      %v9319 = vpop.f32.mrb[0].mxu0
      %v9320 = vadd.f32 0.0, %v9319
      %v9321 = vpop.f32.mrb[0].mxu0
      %9322 = vdwg.mxu0
      %v9323 = vadd.f32 %v7784, %v8781
      %v9324 = vadd.f32 %v7785, %v8784
      %v9325 = vadd.f32 %v7786, %v8789
      %v9326 = vadd.f32 %v7787, %v8792
      %v9327 = vadd.f32 %v7788, %v8797
      %v9328 = vadd.f32 %v7789, %v8800
      %v9329 = vadd.f32 %v7790, %v8805
      %v9330 = vadd.f32 %v7791, %v8808
      %v9331 = vadd.f32 %v7792, %v8813
      %v9332 = vadd.f32 %v7793, %v8816
      %v9333 = vadd.f32 %v7794, %v8821
      %v9334 = vadd.f32 %v7795, %v8824
      %v9335 = vadd.f32 %v7796, %v8829
      %v9336 = vadd.f32 %v7797, %v8832
      %v9337 = vadd.f32 %v7798, %v8837
      %v9338 = vadd.f32 %v7799, %v8840
      %v9339 = vadd.f32 %v7800, %v8845
      %v9340 = vadd.f32 %v7801, %v8848
      %v9341 = vadd.f32 %v7802, %v8853
      %v9342 = vadd.f32 %v7803, %v8856
      %v9343 = vadd.f32 %v7804, %v8861
      %v9344 = vadd.f32 %v7805, %v8864
      %v9345 = vadd.f32 %v7806, %v8869
      %v9346 = vadd.f32 %v7807, %v8872
      %v9347 = vadd.f32 %v7808, %v8877
      %v9348 = vadd.f32 %v7809, %v8880
      %v9349 = vadd.f32 %v7810, %v8885
      %v9350 = vadd.f32 %v7811, %v8888
      %v9351 = vadd.f32 %v7812, %v8893
      %v9352 = vadd.f32 %v7813, %v8896
      %v9353 = vadd.f32 %v7814, %v8901
      %v9354 = vadd.f32 %v7815, %v8904
      %v9355 = vadd.f32 %v7816, %v8909
      %v9356 = vadd.f32 %v7817, %v8912
      %v9357 = vadd.f32 %v7818, %v8917
      %v9358 = vadd.f32 %v7819, %v8920
      %v9359 = vadd.f32 %v7820, %v8925
      %v9360 = vadd.f32 %v7821, %v8928
      %v9361 = vadd.f32 %v7822, %v8933
      %v9362 = vadd.f32 %v7823, %v8936
      %v9363 = vadd.f32 %v7824, %v8941
      %v9364 = vadd.f32 %v7825, %v8944
      %v9365 = vadd.f32 %v7826, %v8949
      %v9366 = vadd.f32 %v7827, %v8952
      %v9367 = vadd.f32 %v7828, %v8957
      %v9368 = vadd.f32 %v7829, %v8960
      %v9369 = vadd.f32 %v7830, %v8965
      %v9370 = vadd.f32 %v7831, %v8968
      %v9371 = vadd.f32 %v7832, %v8973
      %v9372 = vadd.f32 %v7833, %v8976
      %v9373 = vadd.f32 %v7834, %v8981
      %v9374 = vadd.f32 %v7835, %v8984
      %v9375 = vadd.f32 %v7836, %v8989
      %v9376 = vadd.f32 %v7837, %v8992
      %v9377 = vadd.f32 %v7838, %v8997
      %v9378 = vadd.f32 %v7839, %v9000
      %v9379 = vadd.f32 %v7840, %v9005
      %v9380 = vadd.f32 %v7841, %v9008
      %v9381 = vadd.f32 %v7842, %v9013
      %v9382 = vadd.f32 %v7843, %v9016
      %v9383 = vadd.f32 %v7844, %v9021
      %v9384 = vadd.f32 %v7845, %v9024
      %v9385 = vadd.f32 %v7846, %v9029
      %v9386 = vadd.f32 %v7847, %v9032
      %v9387 = vadd.f32 %v7848, %v9037
      %v9388 = vadd.f32 %v7849, %v9040
      %v9389 = vadd.f32 %v7850, %v9045
      %v9390 = vadd.f32 %v7851, %v9048
      %v9391 = vadd.f32 %v7852, %v9053
      %v9392 = vadd.f32 %v7853, %v9056
      %v9393 = vadd.f32 %v7854, %v9061
      %v9394 = vadd.f32 %v7855, %v9064
      %v9395 = vadd.f32 %v7856, %v9069
      %v9396 = vadd.f32 %v7857, %v9072
      %v9397 = vadd.f32 %v7858, %v9077
      %v9398 = vadd.f32 %v7859, %v9080
      %v9399 = vadd.f32 %v7860, %v9085
      %v9400 = vadd.f32 %v7861, %v9088
      %v9401 = vadd.f32 %v7862, %v9093
      %v9402 = vadd.f32 %v7863, %v9096
      %v9403 = vadd.f32 %v7864, %v9101
      %v9404 = vadd.f32 %v7865, %v9104
      %v9405 = vadd.f32 %v7866, %v9109
      %v9406 = vadd.f32 %v7867, %v9112
      %v9407 = vadd.f32 %v7868, %v9117
      %v9408 = vadd.f32 %v7869, %v9120
      %v9409 = vadd.f32 %v7870, %v9125
      %v9410 = vadd.f32 %v7871, %v9128
      %v9411 = vadd.f32 %v7872, %v9133
      %v9412 = vadd.f32 %v7873, %v9136
      %v9413 = vadd.f32 %v7874, %v9141
      %v9414 = vadd.f32 %v7875, %v9144
      %v9415 = vadd.f32 %v7876, %v9149
      %v9416 = vadd.f32 %v7877, %v9152
      %v9417 = vadd.f32 %v7878, %v9157
      %v9418 = vadd.f32 %v7879, %v9160
      %v9419 = vadd.f32 %v7880, %v9165
      %v9420 = vadd.f32 %v7881, %v9168
      %v9421 = vadd.f32 %v7882, %v9173
      %v9422 = vadd.f32 %v7883, %v9176
      %v9423 = vadd.f32 %v7884, %v9181
      %v9424 = vadd.f32 %v7885, %v9184
      %v9425 = vadd.f32 %v7886, %v9189
      %v9426 = vadd.f32 %v7887, %v9192
      %v9427 = vadd.f32 %v7888, %v9197
      %v9428 = vadd.f32 %v7889, %v9200
      %v9429 = vadd.f32 %v7890, %v9205
      %v9430 = vadd.f32 %v7891, %v9208
      %v9431 = vadd.f32 %v7892, %v9213
      %v9432 = vadd.f32 %v7893, %v9216
      %v9433 = vadd.f32 %v7894, %v9221
      %v9434 = vadd.f32 %v7895, %v9224
      %v9435 = vadd.f32 %v7896, %v9229
      %v9436 = vadd.f32 %v7897, %v9232
      %v9437 = vadd.f32 %v7898, %v9237
      %v9438 = vadd.f32 %v7899, %v9240
      %v9439 = vadd.f32 %v7900, %v9245
      %v9440 = vadd.f32 %v7901, %v9248
      %v9441 = vadd.f32 %v7902, %v9253
      %v9442 = vadd.f32 %v7903, %v9256
      %v9443 = vadd.f32 %v7904, %v9261
      %v9444 = vadd.f32 %v7905, %v9264
      %v9445 = vadd.f32 %v7906, %v9269
      %v9446 = vadd.f32 %v7907, %v9272
      %v9447 = vadd.f32 %v7908, %v9277
      %v9448 = vadd.f32 %v7909, %v9280
      %v9449 = vadd.f32 %v7910, %v9285
      %v9450 = vadd.f32 %v7911, %v9288
      %v9451 = vadd.f32 %v7912, %v9293
      %v9452 = vadd.f32 %v7913, %v9296
      %v9453 = vadd.f32 %v7914, %v9301
      %v9454 = vadd.f32 %v7915, %v9304
      %v9455 = vadd.f32 %v7916, %v9309
      %v9456 = vadd.f32 %v7917, %v9312
      %v9457 = vadd.f32 %v7918, %v9317
      %v9458 = vadd.f32 %v7919, %v9320
      %v9459 = vld [vmem:[%s165 + $0x240] sm:$0x7]
      %s9460 = scalar_lea.vmem %s1, 28
      %v9461 = vld [vmem:[%s9460] sm:$0xf]
      %v9463 = vunpack.c.l.b16 %v9459
      %v9464 = vpack.c.b16 %v9463, %v9463
      %vm9465 = vsmask.f32 5376
      %v9467 = vshrl.u32 %v8333, 16
      %v9469 = vrot.slane %v9467, 2
      %v9470 = vshll.u32 %v8333, 16
      %v9472 = vrot.slane %v9470, 3
      %v9473 = vor.u32 %v9469, %v9472
      %v9475 = vshrl.u32 %v8334, 16
      %v9477 = vrot.slane %v9475, 2
      %v9478 = vshll.u32 %v8334, 16
      %v9480 = vrot.slane %v9478, 3
      %v9481 = vor.u32 %v9477, %v9480
      %v9482 = vsel %vm9465, %v9473, %v9481
      %v9484 = vshrl.u32 %v8335, 16
      %v9486 = vrot.slane %v9484, 2
      %v9487 = vshll.u32 %v8335, 16
      %v9489 = vrot.slane %v9487, 3
      %v9490 = vor.u32 %v9486, %v9489
      %v9491 = vsel %vm9465, %v9481, %v9490
      %v9493 = vshrl.u32 %v8336, 16
      %v9495 = vrot.slane %v9493, 2
      %v9496 = vshll.u32 %v8336, 16
      %v9498 = vrot.slane %v9496, 3
      %v9499 = vor.u32 %v9495, %v9498
      %v9500 = vsel %vm9465, %v9490, %v9499
      %v9502 = vshrl.u32 %v8337, 16
      %v9504 = vrot.slane %v9502, 2
      %v9505 = vshll.u32 %v8337, 16
      %v9507 = vrot.slane %v9505, 3
      %v9508 = vor.u32 %v9504, %v9507
      %v9509 = vsel %vm9465, %v9499, %v9508
      %v9511 = vshrl.u32 %v8338, 16
      %v9513 = vrot.slane %v9511, 2
      %v9514 = vshll.u32 %v8338, 16
      %v9516 = vrot.slane %v9514, 3
      %v9517 = vor.u32 %v9513, %v9516
      %v9518 = vsel %vm9465, %v9508, %v9517
      %v9520 = vshrl.u32 %v8339, 16
      %v9522 = vrot.slane %v9520, 2
      %v9523 = vshll.u32 %v8339, 16
      %v9525 = vrot.slane %v9523, 3
      %v9526 = vor.u32 %v9522, %v9525
      %v9527 = vsel %vm9465, %v9517, %v9526
      %v9529 = vshrl.u32 %v8340, 16
      %v9531 = vrot.slane %v9529, 2
      %v9532 = vshll.u32 %v8340, 16
      %v9534 = vrot.slane %v9532, 3
      %v9535 = vor.u32 %v9531, %v9534
      %v9536 = vsel %vm9465, %v9526, %v9535
      %v9538 = vshrl.u32 %v8341, 16
      %v9540 = vrot.slane %v9538, 2
      %v9541 = vshll.u32 %v8341, 16
      %v9543 = vrot.slane %v9541, 3
      %v9544 = vor.u32 %v9540, %v9543
      %v9545 = vsel %vm9465, %v9535, %v9544
      %v9547 = vshrl.u32 %v8342, 16
      %v9549 = vrot.slane %v9547, 2
      %v9550 = vshll.u32 %v8342, 16
      %v9552 = vrot.slane %v9550, 3
      %v9553 = vor.u32 %v9549, %v9552
      %v9554 = vsel %vm9465, %v9544, %v9553
      %v9556 = vshrl.u32 %v8343, 16
      %v9558 = vrot.slane %v9556, 2
      %v9559 = vshll.u32 %v8343, 16
      %v9561 = vrot.slane %v9559, 3
      %v9562 = vor.u32 %v9558, %v9561
      %v9563 = vsel %vm9465, %v9553, %v9562
      %v9565 = vshrl.u32 %v8344, 16
      %v9567 = vrot.slane %v9565, 2
      %v9568 = vshll.u32 %v8344, 16
      %v9570 = vrot.slane %v9568, 3
      %v9571 = vor.u32 %v9567, %v9570
      %v9572 = vsel %vm9465, %v9562, %v9571
      %v9574 = vshrl.u32 %v8345, 16
      %v9576 = vrot.slane %v9574, 2
      %v9577 = vshll.u32 %v8345, 16
      %v9579 = vrot.slane %v9577, 3
      %v9580 = vor.u32 %v9576, %v9579
      %v9581 = vsel %vm9465, %v9571, %v9580
      %v9583 = vshrl.u32 %v8346, 16
      %v9585 = vrot.slane %v9583, 2
      %v9586 = vshll.u32 %v8346, 16
      %v9588 = vrot.slane %v9586, 3
      %v9589 = vor.u32 %v9585, %v9588
      %v9590 = vsel %vm9465, %v9580, %v9589
      %v9592 = vshrl.u32 %v8347, 16
      %v9594 = vrot.slane %v9592, 2
      %v9595 = vshll.u32 %v8347, 16
      %v9597 = vrot.slane %v9595, 3
      %v9598 = vor.u32 %v9594, %v9597
      %v9599 = vsel %vm9465, %v9589, %v9598
      %v9601 = vshrl.u32 %v8348, 16
      %v9603 = vrot.slane %v9601, 2
      %v9604 = vshll.u32 %v8348, 16
      %v9606 = vrot.slane %v9604, 3
      %v9607 = vor.u32 %v9603, %v9606
      %v9608 = vsel %vm9465, %v9598, %v9607
      %v9610 = vshrl.u32 %v8349, 16
      %v9612 = vrot.slane %v9610, 2
      %v9613 = vshll.u32 %v8349, 16
      %v9615 = vrot.slane %v9613, 3
      %v9616 = vor.u32 %v9612, %v9615
      %v9617 = vsel %vm9465, %v9607, %v9616
      %v9619 = vshrl.u32 %v8350, 16
      %v9621 = vrot.slane %v9619, 2
      %v9622 = vshll.u32 %v8350, 16
      %v9624 = vrot.slane %v9622, 3
      %v9625 = vor.u32 %v9621, %v9624
      %v9626 = vsel %vm9465, %v9616, %v9625
      %v9628 = vshrl.u32 %v8351, 16
      %v9630 = vrot.slane %v9628, 2
      %v9631 = vshll.u32 %v8351, 16
      %v9633 = vrot.slane %v9631, 3
      %v9634 = vor.u32 %v9630, %v9633
      %v9635 = vsel %vm9465, %v9625, %v9634
      %v9637 = vshrl.u32 %v8352, 16
      %v9639 = vrot.slane %v9637, 2
      %v9640 = vshll.u32 %v8352, 16
      %v9642 = vrot.slane %v9640, 3
      %v9643 = vor.u32 %v9639, %v9642
      %v9644 = vsel %vm9465, %v9634, %v9643
      %v9646 = vshrl.u32 %v8353, 16
      %v9648 = vrot.slane %v9646, 2
      %v9649 = vshll.u32 %v8353, 16
      %v9651 = vrot.slane %v9649, 3
      %v9652 = vor.u32 %v9648, %v9651
      %v9653 = vsel %vm9465, %v9643, %v9652
      %v9655 = vshrl.u32 %v8354, 16
      %v9657 = vrot.slane %v9655, 2
      %v9658 = vshll.u32 %v8354, 16
      %v9660 = vrot.slane %v9658, 3
      %v9661 = vor.u32 %v9657, %v9660
      %v9662 = vsel %vm9465, %v9652, %v9661
      %v9664 = vshrl.u32 %v8355, 16
      %v9666 = vrot.slane %v9664, 2
      %v9667 = vshll.u32 %v8355, 16
      %v9669 = vrot.slane %v9667, 3
      %v9670 = vor.u32 %v9666, %v9669
      %v9671 = vsel %vm9465, %v9661, %v9670
      %v9673 = vshrl.u32 %v8356, 16
      %v9675 = vrot.slane %v9673, 2
      %v9676 = vshll.u32 %v8356, 16
      %v9678 = vrot.slane %v9676, 3
      %v9679 = vor.u32 %v9675, %v9678
      %v9680 = vsel %vm9465, %v9670, %v9679
      %v9682 = vshrl.u32 %v8357, 16
      %v9684 = vrot.slane %v9682, 2
      %v9685 = vshll.u32 %v8357, 16
      %v9687 = vrot.slane %v9685, 3
      %v9688 = vor.u32 %v9684, %v9687
      %v9689 = vsel %vm9465, %v9679, %v9688
      %v9691 = vshrl.u32 %v8358, 16
      %v9693 = vrot.slane %v9691, 2
      %v9694 = vshll.u32 %v8358, 16
      %v9696 = vrot.slane %v9694, 3
      %v9697 = vor.u32 %v9693, %v9696
      %v9698 = vsel %vm9465, %v9688, %v9697
      %v9700 = vshrl.u32 %v8359, 16
      %v9702 = vrot.slane %v9700, 2
      %v9703 = vshll.u32 %v8359, 16
      %v9705 = vrot.slane %v9703, 3
      %v9706 = vor.u32 %v9702, %v9705
      %v9707 = vsel %vm9465, %v9697, %v9706
      %v9709 = vshrl.u32 %v8360, 16
      %v9711 = vrot.slane %v9709, 2
      %v9712 = vshll.u32 %v8360, 16
      %v9714 = vrot.slane %v9712, 3
      %v9715 = vor.u32 %v9711, %v9714
      %v9716 = vsel %vm9465, %v9706, %v9715
      %v9718 = vshrl.u32 %v8361, 16
      %v9720 = vrot.slane %v9718, 2
      %v9721 = vshll.u32 %v8361, 16
      %v9723 = vrot.slane %v9721, 3
      %v9724 = vor.u32 %v9720, %v9723
      %v9725 = vsel %vm9465, %v9715, %v9724
      %v9727 = vshrl.u32 %v8362, 16
      %v9729 = vrot.slane %v9727, 2
      %v9730 = vshll.u32 %v8362, 16
      %v9732 = vrot.slane %v9730, 3
      %v9733 = vor.u32 %v9729, %v9732
      %v9734 = vsel %vm9465, %v9724, %v9733
      %v9736 = vshrl.u32 %v8363, 16
      %v9738 = vrot.slane %v9736, 2
      %v9739 = vshll.u32 %v8363, 16
      %v9741 = vrot.slane %v9739, 3
      %v9742 = vor.u32 %v9738, %v9741
      %v9743 = vsel %vm9465, %v9733, %v9742
      %v9745 = vshrl.u32 %v8364, 16
      %v9747 = vrot.slane %v9745, 2
      %v9748 = vshll.u32 %v8364, 16
      %v9750 = vrot.slane %v9748, 3
      %v9751 = vor.u32 %v9747, %v9750
      %v9752 = vsel %vm9465, %v9742, %v9751
      %v9754 = vshrl.u32 %v8365, 16
      %v9756 = vrot.slane %v9754, 2
      %v9757 = vshll.u32 %v8365, 16
      %v9759 = vrot.slane %v9757, 3
      %v9760 = vor.u32 %v9756, %v9759
      %v9761 = vsel %vm9465, %v9751, %v9760
      %v9763 = vshrl.u32 %v8366, 16
      %v9765 = vrot.slane %v9763, 2
      %v9766 = vshll.u32 %v8366, 16
      %v9768 = vrot.slane %v9766, 3
      %v9769 = vor.u32 %v9765, %v9768
      %v9770 = vsel %vm9465, %v9760, %v9769
      %v9772 = vshrl.u32 %v8367, 16
      %v9774 = vrot.slane %v9772, 2
      %v9775 = vshll.u32 %v8367, 16
      %v9777 = vrot.slane %v9775, 3
      %v9778 = vor.u32 %v9774, %v9777
      %v9779 = vsel %vm9465, %v9769, %v9778
      %v9781 = vshrl.u32 %v8368, 16
      %v9783 = vrot.slane %v9781, 2
      %v9784 = vshll.u32 %v8368, 16
      %v9786 = vrot.slane %v9784, 3
      %v9787 = vor.u32 %v9783, %v9786
      %v9788 = vsel %vm9465, %v9778, %v9787
      %v9790 = vshrl.u32 %v8369, 16
      %v9792 = vrot.slane %v9790, 2
      %v9793 = vshll.u32 %v8369, 16
      %v9795 = vrot.slane %v9793, 3
      %v9796 = vor.u32 %v9792, %v9795
      %v9797 = vsel %vm9465, %v9787, %v9796
      %v9799 = vshrl.u32 %v8370, 16
      %v9801 = vrot.slane %v9799, 2
      %v9802 = vshll.u32 %v8370, 16
      %v9804 = vrot.slane %v9802, 3
      %v9805 = vor.u32 %v9801, %v9804
      %v9806 = vsel %vm9465, %v9796, %v9805
      %v9808 = vshrl.u32 %v8371, 16
      %v9810 = vrot.slane %v9808, 2
      %v9811 = vshll.u32 %v8371, 16
      %v9813 = vrot.slane %v9811, 3
      %v9814 = vor.u32 %v9810, %v9813
      %v9815 = vsel %vm9465, %v9805, %v9814
      %v9817 = vshrl.u32 %v8372, 16
      %v9819 = vrot.slane %v9817, 2
      %v9820 = vshll.u32 %v8372, 16
      %v9822 = vrot.slane %v9820, 3
      %v9823 = vor.u32 %v9819, %v9822
      %v9824 = vsel %vm9465, %v9814, %v9823
      %v9826 = vshrl.u32 %v8373, 16
      %v9828 = vrot.slane %v9826, 2
      %v9829 = vshll.u32 %v8373, 16
      %v9831 = vrot.slane %v9829, 3
      %v9832 = vor.u32 %v9828, %v9831
      %v9833 = vsel %vm9465, %v9823, %v9832
      %v9835 = vshrl.u32 %v8374, 16
      %v9837 = vrot.slane %v9835, 2
      %v9838 = vshll.u32 %v8374, 16
      %v9840 = vrot.slane %v9838, 3
      %v9841 = vor.u32 %v9837, %v9840
      %v9842 = vsel %vm9465, %v9832, %v9841
      %v9844 = vshrl.u32 %v8375, 16
      %v9846 = vrot.slane %v9844, 2
      %v9847 = vshll.u32 %v8375, 16
      %v9849 = vrot.slane %v9847, 3
      %v9850 = vor.u32 %v9846, %v9849
      %v9851 = vsel %vm9465, %v9841, %v9850
      %v9853 = vshrl.u32 %v8376, 16
      %v9855 = vrot.slane %v9853, 2
      %v9856 = vshll.u32 %v8376, 16
      %v9858 = vrot.slane %v9856, 3
      %v9859 = vor.u32 %v9855, %v9858
      %v9860 = vsel %vm9465, %v9850, %v9859
      %v9862 = vshrl.u32 %v8377, 16
      %v9864 = vrot.slane %v9862, 2
      %v9865 = vshll.u32 %v8377, 16
      %v9867 = vrot.slane %v9865, 3
      %v9868 = vor.u32 %v9864, %v9867
      %v9869 = vsel %vm9465, %v9859, %v9868
      %v9871 = vshrl.u32 %v8378, 16
      %v9873 = vrot.slane %v9871, 2
      %v9874 = vshll.u32 %v8378, 16
      %v9876 = vrot.slane %v9874, 3
      %v9877 = vor.u32 %v9873, %v9876
      %v9878 = vsel %vm9465, %v9868, %v9877
      %v9880 = vshrl.u32 %v8379, 16
      %v9882 = vrot.slane %v9880, 2
      %v9883 = vshll.u32 %v8379, 16
      %v9885 = vrot.slane %v9883, 3
      %v9886 = vor.u32 %v9882, %v9885
      %v9887 = vsel %vm9465, %v9877, %v9886
      %v9889 = vshrl.u32 %v8380, 16
      %v9891 = vrot.slane %v9889, 2
      %v9892 = vshll.u32 %v8380, 16
      %v9894 = vrot.slane %v9892, 3
      %v9895 = vor.u32 %v9891, %v9894
      %v9896 = vsel %vm9465, %v9886, %v9895
      %v9898 = vshrl.u32 %v8381, 16
      %v9900 = vrot.slane %v9898, 2
      %v9901 = vshll.u32 %v8381, 16
      %v9903 = vrot.slane %v9901, 3
      %v9904 = vor.u32 %v9900, %v9903
      %v9905 = vsel %vm9465, %v9895, %v9904
      %v9907 = vshrl.u32 %v8382, 16
      %v9909 = vrot.slane %v9907, 2
      %v9910 = vshll.u32 %v8382, 16
      %v9912 = vrot.slane %v9910, 3
      %v9913 = vor.u32 %v9909, %v9912
      %v9914 = vsel %vm9465, %v9904, %v9913
      %v9916 = vshrl.u32 %v8383, 16
      %v9918 = vrot.slane %v9916, 2
      %v9919 = vshll.u32 %v8383, 16
      %v9921 = vrot.slane %v9919, 3
      %v9922 = vor.u32 %v9918, %v9921
      %v9923 = vsel %vm9465, %v9913, %v9922
      %v9925 = vshrl.u32 %v8384, 16
      %v9927 = vrot.slane %v9925, 2
      %v9928 = vshll.u32 %v8384, 16
      %v9930 = vrot.slane %v9928, 3
      %v9931 = vor.u32 %v9927, %v9930
      %v9932 = vsel %vm9465, %v9922, %v9931
      %v9934 = vshrl.u32 %v8385, 16
      %v9936 = vrot.slane %v9934, 2
      %v9937 = vshll.u32 %v8385, 16
      %v9939 = vrot.slane %v9937, 3
      %v9940 = vor.u32 %v9936, %v9939
      %v9941 = vsel %vm9465, %v9931, %v9940
      %v9943 = vshrl.u32 %v8386, 16
      %v9945 = vrot.slane %v9943, 2
      %v9946 = vshll.u32 %v8386, 16
      %v9948 = vrot.slane %v9946, 3
      %v9949 = vor.u32 %v9945, %v9948
      %v9950 = vsel %vm9465, %v9940, %v9949
      %v9952 = vshrl.u32 %v8387, 16
      %v9954 = vrot.slane %v9952, 2
      %v9955 = vshll.u32 %v8387, 16
      %v9957 = vrot.slane %v9955, 3
      %v9958 = vor.u32 %v9954, %v9957
      %v9959 = vsel %vm9465, %v9949, %v9958
      %v9961 = vshrl.u32 %v8388, 16
      %v9963 = vrot.slane %v9961, 2
      %v9964 = vshll.u32 %v8388, 16
      %v9966 = vrot.slane %v9964, 3
      %v9967 = vor.u32 %v9963, %v9966
      %v9968 = vsel %vm9465, %v9958, %v9967
      %v9970 = vshrl.u32 %v8389, 16
      %v9972 = vrot.slane %v9970, 2
      %v9973 = vshll.u32 %v8389, 16
      %v9975 = vrot.slane %v9973, 3
      %v9976 = vor.u32 %v9972, %v9975
      %v9977 = vsel %vm9465, %v9967, %v9976
      %v9979 = vshrl.u32 %v8390, 16
      %v9981 = vrot.slane %v9979, 2
      %v9982 = vshll.u32 %v8390, 16
      %v9984 = vrot.slane %v9982, 3
      %v9985 = vor.u32 %v9981, %v9984
      %v9986 = vsel %vm9465, %v9976, %v9985
      %v9988 = vshrl.u32 %v8391, 16
      %v9990 = vrot.slane %v9988, 2
      %v9991 = vshll.u32 %v8391, 16
      %v9993 = vrot.slane %v9991, 3
      %v9994 = vor.u32 %v9990, %v9993
      %v9995 = vsel %vm9465, %v9985, %v9994
      %v9997 = vshrl.u32 %v8392, 16
      %v9999 = vrot.slane %v9997, 2
      %v10000 = vshll.u32 %v8392, 16
      %v10002 = vrot.slane %v10000, 3
      %v10003 = vor.u32 %v9999, %v10002
      %v10004 = vsel %vm9465, %v9994, %v10003
      %v10006 = vshrl.u32 %v8393, 16
      %v10008 = vrot.slane %v10006, 2
      %v10009 = vshll.u32 %v8393, 16
      %v10011 = vrot.slane %v10009, 3
      %v10012 = vor.u32 %v10008, %v10011
      %v10013 = vsel %vm9465, %v10003, %v10012
      %v10015 = vshrl.u32 %v8394, 16
      %v10017 = vrot.slane %v10015, 2
      %v10018 = vshll.u32 %v8394, 16
      %v10020 = vrot.slane %v10018, 3
      %v10021 = vor.u32 %v10017, %v10020
      %v10022 = vsel %vm9465, %v10012, %v10021
      %v10024 = vshrl.u32 %v8395, 16
      %v10026 = vrot.slane %v10024, 2
      %v10027 = vshll.u32 %v8395, 16
      %v10029 = vrot.slane %v10027, 3
      %v10030 = vor.u32 %v10026, %v10029
      %v10031 = vsel %vm9465, %v10021, %v10030
      %v10033 = vshrl.u32 %v8396, 16
      %v10035 = vrot.slane %v10033, 2
      %v10036 = vshll.u32 %v8396, 16
      %v10038 = vrot.slane %v10036, 3
      %v10039 = vor.u32 %v10035, %v10038
      %v10040 = vsel %vm9465, %v10030, %v10039
      %v10042 = vshrl.u32 %v8397, 16
      %v10044 = vrot.slane %v10042, 2
      %v10045 = vshll.u32 %v8397, 16
      %v10047 = vrot.slane %v10045, 3
      %v10048 = vor.u32 %v10044, %v10047
      %v10049 = vsel %vm9465, %v10039, %v10048
      %v10051 = vshrl.u32 %v8398, 16
      %v10053 = vrot.slane %v10051, 2
      %v10054 = vshll.u32 %v8398, 16
      %v10056 = vrot.slane %v10054, 3
      %v10057 = vor.u32 %v10053, %v10056
      %v10058 = vsel %vm9465, %v10048, %v10057
      %v10060 = vshrl.u32 %v8399, 16
      %v10062 = vrot.slane %v10060, 2
      %v10063 = vshll.u32 %v8399, 16
      %v10065 = vrot.slane %v10063, 3
      %v10066 = vor.u32 %v10062, %v10065
      %v10067 = vsel %vm9465, %v10057, %v10066
      %v10069 = vshrl.u32 %v8400, 16
      %v10071 = vrot.slane %v10069, 2
      %v10072 = vshll.u32 %v8400, 16
      %v10074 = vrot.slane %v10072, 3
      %v10075 = vor.u32 %v10071, %v10074
      %v10076 = vsel %vm9465, %v10066, %v10075
      %v10078 = vshrl.u32 %v9464, 16
      %v10080 = vrot.slane %v10078, 2
      %v10081 = vshll.u32 %v9464, 16
      %v10083 = vrot.slane %v10081, 3
      %v10084 = vor.u32 %v10080, %v10083
      %v10085 = vsel %vm9465, %v10075, %v10084
      %v10087 = vsel %vm1204, %v9482, 0
      %v10090 = vsel %vm1204, %v9491, 0
      %v10093 = vsel %vm1204, %v9500, 0
      %v10096 = vsel %vm1204, %v9509, 0
      %v10099 = vsel %vm1204, %v9518, 0
      %v10102 = vsel %vm1204, %v9527, 0
      %v10105 = vsel %vm1204, %v9536, 0
      %v10108 = vsel %vm1204, %v9545, 0
      %v10111 = vsel %vm1204, %v9554, 0
      %v10114 = vsel %vm1204, %v9563, 0
      %v10117 = vsel %vm1204, %v9572, 0
      %v10120 = vsel %vm1204, %v9581, 0
      %v10123 = vsel %vm1204, %v9590, 0
      %v10126 = vsel %vm1204, %v9599, 0
      %v10129 = vsel %vm1204, %v9608, 0
      %v10132 = vsel %vm1204, %v9617, 0
      %v10135 = vsel %vm1204, %v9626, 0
      %v10138 = vsel %vm1204, %v9635, 0
      %v10141 = vsel %vm1204, %v9644, 0
      %v10144 = vsel %vm1204, %v9653, 0
      %v10147 = vsel %vm1204, %v9662, 0
      %v10150 = vsel %vm1204, %v9671, 0
      %v10153 = vsel %vm1204, %v9680, 0
      %v10156 = vsel %vm1204, %v9689, 0
      %v10159 = vsel %vm1204, %v9698, 0
      %v10162 = vsel %vm1204, %v9707, 0
      %v10165 = vsel %vm1204, %v9716, 0
      %v10168 = vsel %vm1204, %v9725, 0
      %v10171 = vsel %vm1204, %v9734, 0
      %v10174 = vsel %vm1204, %v9743, 0
      %v10177 = vsel %vm1204, %v9752, 0
      %v10180 = vsel %vm1204, %v9761, 0
      %v10183 = vsel %vm1204, %v9770, 0
      %v10186 = vsel %vm1204, %v9779, 0
      %v10189 = vsel %vm1204, %v9788, 0
      %v10192 = vsel %vm1204, %v9797, 0
      %v10195 = vsel %vm1204, %v9806, 0
      %v10198 = vsel %vm1204, %v9815, 0
      %v10201 = vsel %vm1204, %v9824, 0
      %v10204 = vsel %vm1204, %v9833, 0
      %v10207 = vsel %vm1204, %v9842, 0
      %v10210 = vsel %vm1204, %v9851, 0
      %v10213 = vsel %vm1204, %v9860, 0
      %v10216 = vsel %vm1204, %v9869, 0
      %v10219 = vsel %vm1204, %v9878, 0
      %v10222 = vsel %vm1204, %v9887, 0
      %v10225 = vsel %vm1204, %v9896, 0
      %v10228 = vsel %vm1204, %v9905, 0
      %v10231 = vsel %vm1204, %v9914, 0
      %v10234 = vsel %vm1204, %v9923, 0
      %v10237 = vsel %vm1204, %v9932, 0
      %v10240 = vsel %vm1204, %v9941, 0
      %v10243 = vsel %vm1204, %v9950, 0
      %v10246 = vsel %vm1204, %v9959, 0
      %v10249 = vsel %vm1204, %v9968, 0
      %v10252 = vsel %vm1204, %v9977, 0
      %v10255 = vsel %vm1204, %v9986, 0
      %v10258 = vsel %vm1204, %v9995, 0
      %v10261 = vsel %vm1204, %v10004, 0
      %v10264 = vsel %vm1204, %v10013, 0
      %v10267 = vsel %vm1204, %v10022, 0
      %v10270 = vsel %vm1204, %v10031, 0
      %v10273 = vsel %vm1204, %v10040, 0
      %v10276 = vsel %vm1204, %v10049, 0
      %v10279 = vsel %vm1204, %v10058, 0
      %v10282 = vsel %vm1204, %v10067, 0
      %v10285 = vsel %vm1204, %v10076, 0
      %v10288 = vsel %vm1204, %v10085, 0
      %v10291 = vsel %vm1409, %v9461, 0
      %10293 = vmatprep.subr.bf16.mxu0 0
      %10294 = vmatpush1.bf16.msra.mxu0 %v10291
      %10295 = vmatprep.subr.bf16.mxu0 0
      %10296 = vmatpush1.bf16.msra.mxu0 0
      %10297 = vmatprep.subr.bf16.mxu0 0
      %10298 = vmatpush1.bf16.msra.mxu0 0
      %10299 = vmatprep.subr.bf16.mxu0 0
      %10300 = vmatpush1.bf16.msra.mxu0 0
      %10301 = vmatprep.subr.bf16.mxu0 0
      %10302 = vmatpush1.bf16.msra.mxu0 0
      %10303 = vmatprep.subr.bf16.mxu0 0
      %10304 = vmatpush1.bf16.msra.mxu0 0
      %10305 = vmatprep.subr.bf16.mxu0 0
      %10306 = vmatpush1.bf16.msra.mxu0 0
      %10307 = vmatprep.subr.bf16.mxu0 0
      %10308 = vmatpush1.bf16.msra.mxu0 0
      %10309 = vmatprep.subr.bf16.mxu0 0
      %10310 = vmatpush1.bf16.msra.mxu0 0
      %10311 = vmatprep.subr.bf16.mxu0 0
      %10312 = vmatpush1.bf16.msra.mxu0 0
      %10313 = vmatprep.subr.bf16.mxu0 0
      %10314 = vmatpush1.bf16.msra.mxu0 0
      %10315 = vmatprep.subr.bf16.mxu0 0
      %10316 = vmatpush1.bf16.msra.mxu0 0
      %10317 = vmatprep.subr.bf16.mxu0 0
      %10318 = vmatpush1.bf16.msra.mxu0 0
      %10319 = vmatprep.subr.bf16.mxu0 0
      %10320 = vmatpush1.bf16.msra.mxu0 0
      %10321 = vmatprep.subr.bf16.mxu0 0
      %10322 = vmatpush1.bf16.msra.mxu0 0
      %10323 = vmatprep.subr.bf16.mxu0 0
      %10324 = vmatpush1.bf16.msra.mxu0 0
      %10325 = vmatprep.mubr.bf16.mxu0 0
      %10326 = vmatmul.mubr.bf16.gmra.mrb[0].mxu0 %v10087
      %v10327 = vpop.f32.mrb[0].mxu0
      %v10328 = vadd.f32 0.0, %v10327
      %v10329 = vpop.f32.mrb[0].mxu0
      %v10330 = vpop.f32.mrb[0].mxu0
      %v10331 = vadd.f32 0.0, %v10330
      %v10332 = vpop.f32.mrb[0].mxu0
      %10333 = vmatprep.mubr.bf16.mxu0 0
      %10334 = vmatmul.mubr.bf16.gmra.mrb[0].mxu0 %v10090
      %v10335 = vpop.f32.mrb[0].mxu0
      %v10336 = vadd.f32 0.0, %v10335
      %v10337 = vpop.f32.mrb[0].mxu0
      %v10338 = vpop.f32.mrb[0].mxu0
      %v10339 = vadd.f32 0.0, %v10338
      %v10340 = vpop.f32.mrb[0].mxu0
      %10341 = vmatprep.mubr.bf16.mxu0 0
      %10342 = vmatmul.mubr.bf16.gmra.mrb[0].mxu0 %v10093
      %v10343 = vpop.f32.mrb[0].mxu0
      %v10344 = vadd.f32 0.0, %v10343
      %v10345 = vpop.f32.mrb[0].mxu0
      %v10346 = vpop.f32.mrb[0].mxu0
      %v10347 = vadd.f32 0.0, %v10346
      %v10348 = vpop.f32.mrb[0].mxu0
      %10349 = vmatprep.mubr.bf16.mxu0 0
      %10350 = vmatmul.mubr.bf16.gmra.mrb[0].mxu0 %v10096
      %v10351 = vpop.f32.mrb[0].mxu0
      %v10352 = vadd.f32 0.0, %v10351
      %v10353 = vpop.f32.mrb[0].mxu0
      %v10354 = vpop.f32.mrb[0].mxu0
      %v10355 = vadd.f32 0.0, %v10354
      %v10356 = vpop.f32.mrb[0].mxu0
      %10357 = vmatprep.mubr.bf16.mxu0 0
      %10358 = vmatmul.mubr.bf16.gmra.mrb[0].mxu0 %v10099
      %v10359 = vpop.f32.mrb[0].mxu0
      %v10360 = vadd.f32 0.0, %v10359
      %v10361 = vpop.f32.mrb[0].mxu0
      %v10362 = vpop.f32.mrb[0].mxu0
      %v10363 = vadd.f32 0.0, %v10362
      %v10364 = vpop.f32.mrb[0].mxu0
      %10365 = vmatprep.mubr.bf16.mxu0 0
      %10366 = vmatmul.mubr.bf16.gmra.mrb[0].mxu0 %v10102
      %v10367 = vpop.f32.mrb[0].mxu0
      %v10368 = vadd.f32 0.0, %v10367
      %v10369 = vpop.f32.mrb[0].mxu0
      %v10370 = vpop.f32.mrb[0].mxu0
      %v10371 = vadd.f32 0.0, %v10370
      %v10372 = vpop.f32.mrb[0].mxu0
      %10373 = vmatprep.mubr.bf16.mxu0 0
      %10374 = vmatmul.mubr.bf16.gmra.mrb[0].mxu0 %v10105
      %v10375 = vpop.f32.mrb[0].mxu0
      %v10376 = vadd.f32 0.0, %v10375
      %v10377 = vpop.f32.mrb[0].mxu0
      %v10378 = vpop.f32.mrb[0].mxu0
      %v10379 = vadd.f32 0.0, %v10378
      %v10380 = vpop.f32.mrb[0].mxu0
      %10381 = vmatprep.mubr.bf16.mxu0 0
      %10382 = vmatmul.mubr.bf16.gmra.mrb[0].mxu0 %v10108
      %v10383 = vpop.f32.mrb[0].mxu0
      %v10384 = vadd.f32 0.0, %v10383
      %v10385 = vpop.f32.mrb[0].mxu0
      %v10386 = vpop.f32.mrb[0].mxu0
      %v10387 = vadd.f32 0.0, %v10386
      %v10388 = vpop.f32.mrb[0].mxu0
      %10389 = vmatprep.mubr.bf16.mxu0 0
      %10390 = vmatmul.mubr.bf16.gmra.mrb[0].mxu0 %v10111
      %v10391 = vpop.f32.mrb[0].mxu0
      %v10392 = vadd.f32 0.0, %v10391
      %v10393 = vpop.f32.mrb[0].mxu0
      %v10394 = vpop.f32.mrb[0].mxu0
      %v10395 = vadd.f32 0.0, %v10394
      %v10396 = vpop.f32.mrb[0].mxu0
      %10397 = vmatprep.mubr.bf16.mxu0 0
      %10398 = vmatmul.mubr.bf16.gmra.mrb[0].mxu0 %v10114
      %v10399 = vpop.f32.mrb[0].mxu0
      %v10400 = vadd.f32 0.0, %v10399
      %v10401 = vpop.f32.mrb[0].mxu0
      %v10402 = vpop.f32.mrb[0].mxu0
      %v10403 = vadd.f32 0.0, %v10402
      %v10404 = vpop.f32.mrb[0].mxu0
      %10405 = vmatprep.mubr.bf16.mxu0 0
      %10406 = vmatmul.mubr.bf16.gmra.mrb[0].mxu0 %v10117
      %v10407 = vpop.f32.mrb[0].mxu0
      %v10408 = vadd.f32 0.0, %v10407
      %v10409 = vpop.f32.mrb[0].mxu0
      %v10410 = vpop.f32.mrb[0].mxu0
      %v10411 = vadd.f32 0.0, %v10410
      %v10412 = vpop.f32.mrb[0].mxu0
      %10413 = vmatprep.mubr.bf16.mxu0 0
      %10414 = vmatmul.mubr.bf16.gmra.mrb[0].mxu0 %v10120
      %v10415 = vpop.f32.mrb[0].mxu0
      %v10416 = vadd.f32 0.0, %v10415
      %v10417 = vpop.f32.mrb[0].mxu0
      %v10418 = vpop.f32.mrb[0].mxu0
      %v10419 = vadd.f32 0.0, %v10418
      %v10420 = vpop.f32.mrb[0].mxu0
      %10421 = vmatprep.mubr.bf16.mxu0 0
      %10422 = vmatmul.mubr.bf16.gmra.mrb[0].mxu0 %v10123
      %v10423 = vpop.f32.mrb[0].mxu0
      %v10424 = vadd.f32 0.0, %v10423
      %v10425 = vpop.f32.mrb[0].mxu0
      %v10426 = vpop.f32.mrb[0].mxu0
      %v10427 = vadd.f32 0.0, %v10426
      %v10428 = vpop.f32.mrb[0].mxu0
      %10429 = vmatprep.mubr.bf16.mxu0 0
      %10430 = vmatmul.mubr.bf16.gmra.mrb[0].mxu0 %v10126
      %v10431 = vpop.f32.mrb[0].mxu0
      %v10432 = vadd.f32 0.0, %v10431
      %v10433 = vpop.f32.mrb[0].mxu0
      %v10434 = vpop.f32.mrb[0].mxu0
      %v10435 = vadd.f32 0.0, %v10434
      %v10436 = vpop.f32.mrb[0].mxu0
      %10437 = vmatprep.mubr.bf16.mxu0 0
      %10438 = vmatmul.mubr.bf16.gmra.mrb[0].mxu0 %v10129
      %v10439 = vpop.f32.mrb[0].mxu0
      %v10440 = vadd.f32 0.0, %v10439
      %v10441 = vpop.f32.mrb[0].mxu0
      %v10442 = vpop.f32.mrb[0].mxu0
      %v10443 = vadd.f32 0.0, %v10442
      %v10444 = vpop.f32.mrb[0].mxu0
      %10445 = vmatprep.mubr.bf16.mxu0 0
      %10446 = vmatmul.mubr.bf16.gmra.mrb[0].mxu0 %v10132
      %v10447 = vpop.f32.mrb[0].mxu0
      %v10448 = vadd.f32 0.0, %v10447
      %v10449 = vpop.f32.mrb[0].mxu0
      %v10450 = vpop.f32.mrb[0].mxu0
      %v10451 = vadd.f32 0.0, %v10450
      %v10452 = vpop.f32.mrb[0].mxu0
      %10453 = vmatprep.mubr.bf16.mxu0 0
      %10454 = vmatmul.mubr.bf16.gmra.mrb[0].mxu0 %v10135
      %v10455 = vpop.f32.mrb[0].mxu0
      %v10456 = vadd.f32 0.0, %v10455
      %v10457 = vpop.f32.mrb[0].mxu0
      %v10458 = vpop.f32.mrb[0].mxu0
      %v10459 = vadd.f32 0.0, %v10458
      %v10460 = vpop.f32.mrb[0].mxu0
      %10461 = vmatprep.mubr.bf16.mxu0 0
      %10462 = vmatmul.mubr.bf16.gmra.mrb[0].mxu0 %v10138
      %v10463 = vpop.f32.mrb[0].mxu0
      %v10464 = vadd.f32 0.0, %v10463
      %v10465 = vpop.f32.mrb[0].mxu0
      %v10466 = vpop.f32.mrb[0].mxu0
      %v10467 = vadd.f32 0.0, %v10466
      %v10468 = vpop.f32.mrb[0].mxu0
      %10469 = vmatprep.mubr.bf16.mxu0 0
      %10470 = vmatmul.mubr.bf16.gmra.mrb[0].mxu0 %v10141
      %v10471 = vpop.f32.mrb[0].mxu0
      %v10472 = vadd.f32 0.0, %v10471
      %v10473 = vpop.f32.mrb[0].mxu0
      %v10474 = vpop.f32.mrb[0].mxu0
      %v10475 = vadd.f32 0.0, %v10474
      %v10476 = vpop.f32.mrb[0].mxu0
      %10477 = vmatprep.mubr.bf16.mxu0 0
      %10478 = vmatmul.mubr.bf16.gmra.mrb[0].mxu0 %v10144
      %v10479 = vpop.f32.mrb[0].mxu0
      %v10480 = vadd.f32 0.0, %v10479
      %v10481 = vpop.f32.mrb[0].mxu0
      %v10482 = vpop.f32.mrb[0].mxu0
      %v10483 = vadd.f32 0.0, %v10482
      %v10484 = vpop.f32.mrb[0].mxu0
      %10485 = vmatprep.mubr.bf16.mxu0 0
      %10486 = vmatmul.mubr.bf16.gmra.mrb[0].mxu0 %v10147
      %v10487 = vpop.f32.mrb[0].mxu0
      %v10488 = vadd.f32 0.0, %v10487
      %v10489 = vpop.f32.mrb[0].mxu0
      %v10490 = vpop.f32.mrb[0].mxu0
      %v10491 = vadd.f32 0.0, %v10490
      %v10492 = vpop.f32.mrb[0].mxu0
      %10493 = vmatprep.mubr.bf16.mxu0 0
      %10494 = vmatmul.mubr.bf16.gmra.mrb[0].mxu0 %v10150
      %v10495 = vpop.f32.mrb[0].mxu0
      %v10496 = vadd.f32 0.0, %v10495
      %v10497 = vpop.f32.mrb[0].mxu0
      %v10498 = vpop.f32.mrb[0].mxu0
      %v10499 = vadd.f32 0.0, %v10498
      %v10500 = vpop.f32.mrb[0].mxu0
      %10501 = vmatprep.mubr.bf16.mxu0 0
      %10502 = vmatmul.mubr.bf16.gmra.mrb[0].mxu0 %v10153
      %v10503 = vpop.f32.mrb[0].mxu0
      %v10504 = vadd.f32 0.0, %v10503
      %v10505 = vpop.f32.mrb[0].mxu0
      %v10506 = vpop.f32.mrb[0].mxu0
      %v10507 = vadd.f32 0.0, %v10506
      %v10508 = vpop.f32.mrb[0].mxu0
      %10509 = vmatprep.mubr.bf16.mxu0 0
      %10510 = vmatmul.mubr.bf16.gmra.mrb[0].mxu0 %v10156
      %v10511 = vpop.f32.mrb[0].mxu0
      %v10512 = vadd.f32 0.0, %v10511
      %v10513 = vpop.f32.mrb[0].mxu0
      %v10514 = vpop.f32.mrb[0].mxu0
      %v10515 = vadd.f32 0.0, %v10514
      %v10516 = vpop.f32.mrb[0].mxu0
      %10517 = vmatprep.mubr.bf16.mxu0 0
      %10518 = vmatmul.mubr.bf16.gmra.mrb[0].mxu0 %v10159
      %v10519 = vpop.f32.mrb[0].mxu0
      %v10520 = vadd.f32 0.0, %v10519
      %v10521 = vpop.f32.mrb[0].mxu0
      %v10522 = vpop.f32.mrb[0].mxu0
      %v10523 = vadd.f32 0.0, %v10522
      %v10524 = vpop.f32.mrb[0].mxu0
      %10525 = vmatprep.mubr.bf16.mxu0 0
      %10526 = vmatmul.mubr.bf16.gmra.mrb[0].mxu0 %v10162
      %v10527 = vpop.f32.mrb[0].mxu0
      %v10528 = vadd.f32 0.0, %v10527
      %v10529 = vpop.f32.mrb[0].mxu0
      %v10530 = vpop.f32.mrb[0].mxu0
      %v10531 = vadd.f32 0.0, %v10530
      %v10532 = vpop.f32.mrb[0].mxu0
      %10533 = vmatprep.mubr.bf16.mxu0 0
      %10534 = vmatmul.mubr.bf16.gmra.mrb[0].mxu0 %v10165
      %v10535 = vpop.f32.mrb[0].mxu0
      %v10536 = vadd.f32 0.0, %v10535
      %v10537 = vpop.f32.mrb[0].mxu0
      %v10538 = vpop.f32.mrb[0].mxu0
      %v10539 = vadd.f32 0.0, %v10538
      %v10540 = vpop.f32.mrb[0].mxu0
      %10541 = vmatprep.mubr.bf16.mxu0 0
      %10542 = vmatmul.mubr.bf16.gmra.mrb[0].mxu0 %v10168
      %v10543 = vpop.f32.mrb[0].mxu0
      %v10544 = vadd.f32 0.0, %v10543
      %v10545 = vpop.f32.mrb[0].mxu0
      %v10546 = vpop.f32.mrb[0].mxu0
      %v10547 = vadd.f32 0.0, %v10546
      %v10548 = vpop.f32.mrb[0].mxu0
      %10549 = vmatprep.mubr.bf16.mxu0 0
      %10550 = vmatmul.mubr.bf16.gmra.mrb[0].mxu0 %v10171
      %v10551 = vpop.f32.mrb[0].mxu0
      %v10552 = vadd.f32 0.0, %v10551
      %v10553 = vpop.f32.mrb[0].mxu0
      %v10554 = vpop.f32.mrb[0].mxu0
      %v10555 = vadd.f32 0.0, %v10554
      %v10556 = vpop.f32.mrb[0].mxu0
      %10557 = vmatprep.mubr.bf16.mxu0 0
      %10558 = vmatmul.mubr.bf16.gmra.mrb[0].mxu0 %v10174
      %v10559 = vpop.f32.mrb[0].mxu0
      %v10560 = vadd.f32 0.0, %v10559
      %v10561 = vpop.f32.mrb[0].mxu0
      %v10562 = vpop.f32.mrb[0].mxu0
      %v10563 = vadd.f32 0.0, %v10562
      %v10564 = vpop.f32.mrb[0].mxu0
      %10565 = vmatprep.mubr.bf16.mxu0 0
      %10566 = vmatmul.mubr.bf16.gmra.mrb[0].mxu0 %v10177
      %v10567 = vpop.f32.mrb[0].mxu0
      %v10568 = vadd.f32 0.0, %v10567
      %v10569 = vpop.f32.mrb[0].mxu0
      %v10570 = vpop.f32.mrb[0].mxu0
      %v10571 = vadd.f32 0.0, %v10570
      %v10572 = vpop.f32.mrb[0].mxu0
      %10573 = vmatprep.mubr.bf16.mxu0 0
      %10574 = vmatmul.mubr.bf16.gmra.mrb[0].mxu0 %v10180
      %v10575 = vpop.f32.mrb[0].mxu0
      %v10576 = vadd.f32 0.0, %v10575
      %v10577 = vpop.f32.mrb[0].mxu0
      %v10578 = vpop.f32.mrb[0].mxu0
      %v10579 = vadd.f32 0.0, %v10578
      %v10580 = vpop.f32.mrb[0].mxu0
      %10581 = vmatprep.mubr.bf16.mxu0 0
      %10582 = vmatmul.mubr.bf16.gmra.mrb[0].mxu0 %v10183
      %v10583 = vpop.f32.mrb[0].mxu0
      %v10584 = vadd.f32 0.0, %v10583
      %v10585 = vpop.f32.mrb[0].mxu0
      %v10586 = vpop.f32.mrb[0].mxu0
      %v10587 = vadd.f32 0.0, %v10586
      %v10588 = vpop.f32.mrb[0].mxu0
      %10589 = vmatprep.mubr.bf16.mxu0 0
      %10590 = vmatmul.mubr.bf16.gmra.mrb[0].mxu0 %v10186
      %v10591 = vpop.f32.mrb[0].mxu0
      %v10592 = vadd.f32 0.0, %v10591
      %v10593 = vpop.f32.mrb[0].mxu0
      %v10594 = vpop.f32.mrb[0].mxu0
      %v10595 = vadd.f32 0.0, %v10594
      %v10596 = vpop.f32.mrb[0].mxu0
      %10597 = vmatprep.mubr.bf16.mxu0 0
      %10598 = vmatmul.mubr.bf16.gmra.mrb[0].mxu0 %v10189
      %v10599 = vpop.f32.mrb[0].mxu0
      %v10600 = vadd.f32 0.0, %v10599
      %v10601 = vpop.f32.mrb[0].mxu0
      %v10602 = vpop.f32.mrb[0].mxu0
      %v10603 = vadd.f32 0.0, %v10602
      %v10604 = vpop.f32.mrb[0].mxu0
      %10605 = vmatprep.mubr.bf16.mxu0 0
      %10606 = vmatmul.mubr.bf16.gmra.mrb[0].mxu0 %v10192
      %v10607 = vpop.f32.mrb[0].mxu0
      %v10608 = vadd.f32 0.0, %v10607
      %v10609 = vpop.f32.mrb[0].mxu0
      %v10610 = vpop.f32.mrb[0].mxu0
      %v10611 = vadd.f32 0.0, %v10610
      %v10612 = vpop.f32.mrb[0].mxu0
      %10613 = vmatprep.mubr.bf16.mxu0 0
      %10614 = vmatmul.mubr.bf16.gmra.mrb[0].mxu0 %v10195
      %v10615 = vpop.f32.mrb[0].mxu0
      %v10616 = vadd.f32 0.0, %v10615
      %v10617 = vpop.f32.mrb[0].mxu0
      %v10618 = vpop.f32.mrb[0].mxu0
      %v10619 = vadd.f32 0.0, %v10618
      %v10620 = vpop.f32.mrb[0].mxu0
      %10621 = vmatprep.mubr.bf16.mxu0 0
      %10622 = vmatmul.mubr.bf16.gmra.mrb[0].mxu0 %v10198
      %v10623 = vpop.f32.mrb[0].mxu0
      %v10624 = vadd.f32 0.0, %v10623
      %v10625 = vpop.f32.mrb[0].mxu0
      %v10626 = vpop.f32.mrb[0].mxu0
      %v10627 = vadd.f32 0.0, %v10626
      %v10628 = vpop.f32.mrb[0].mxu0
      %10629 = vmatprep.mubr.bf16.mxu0 0
      %10630 = vmatmul.mubr.bf16.gmra.mrb[0].mxu0 %v10201
      %v10631 = vpop.f32.mrb[0].mxu0
      %v10632 = vadd.f32 0.0, %v10631
      %v10633 = vpop.f32.mrb[0].mxu0
      %v10634 = vpop.f32.mrb[0].mxu0
      %v10635 = vadd.f32 0.0, %v10634
      %v10636 = vpop.f32.mrb[0].mxu0
      %10637 = vmatprep.mubr.bf16.mxu0 0
      %10638 = vmatmul.mubr.bf16.gmra.mrb[0].mxu0 %v10204
      %v10639 = vpop.f32.mrb[0].mxu0
      %v10640 = vadd.f32 0.0, %v10639
      %v10641 = vpop.f32.mrb[0].mxu0
      %v10642 = vpop.f32.mrb[0].mxu0
      %v10643 = vadd.f32 0.0, %v10642
      %v10644 = vpop.f32.mrb[0].mxu0
      %10645 = vmatprep.mubr.bf16.mxu0 0
      %10646 = vmatmul.mubr.bf16.gmra.mrb[0].mxu0 %v10207
      %v10647 = vpop.f32.mrb[0].mxu0
      %v10648 = vadd.f32 0.0, %v10647
      %v10649 = vpop.f32.mrb[0].mxu0
      %v10650 = vpop.f32.mrb[0].mxu0
      %v10651 = vadd.f32 0.0, %v10650
      %v10652 = vpop.f32.mrb[0].mxu0
      %10653 = vmatprep.mubr.bf16.mxu0 0
      %10654 = vmatmul.mubr.bf16.gmra.mrb[0].mxu0 %v10210
      %v10655 = vpop.f32.mrb[0].mxu0
      %v10656 = vadd.f32 0.0, %v10655
      %v10657 = vpop.f32.mrb[0].mxu0
      %v10658 = vpop.f32.mrb[0].mxu0
      %v10659 = vadd.f32 0.0, %v10658
      %v10660 = vpop.f32.mrb[0].mxu0
      %10661 = vmatprep.mubr.bf16.mxu0 0
      %10662 = vmatmul.mubr.bf16.gmra.mrb[0].mxu0 %v10213
      %v10663 = vpop.f32.mrb[0].mxu0
      %v10664 = vadd.f32 0.0, %v10663
      %v10665 = vpop.f32.mrb[0].mxu0
      %v10666 = vpop.f32.mrb[0].mxu0
      %v10667 = vadd.f32 0.0, %v10666
      %v10668 = vpop.f32.mrb[0].mxu0
      %10669 = vmatprep.mubr.bf16.mxu0 0
      %10670 = vmatmul.mubr.bf16.gmra.mrb[0].mxu0 %v10216
      %v10671 = vpop.f32.mrb[0].mxu0
      %v10672 = vadd.f32 0.0, %v10671
      %v10673 = vpop.f32.mrb[0].mxu0
      %v10674 = vpop.f32.mrb[0].mxu0
      %v10675 = vadd.f32 0.0, %v10674
      %v10676 = vpop.f32.mrb[0].mxu0
      %10677 = vmatprep.mubr.bf16.mxu0 0
      %10678 = vmatmul.mubr.bf16.gmra.mrb[0].mxu0 %v10219
      %v10679 = vpop.f32.mrb[0].mxu0
      %v10680 = vadd.f32 0.0, %v10679
      %v10681 = vpop.f32.mrb[0].mxu0
      %v10682 = vpop.f32.mrb[0].mxu0
      %v10683 = vadd.f32 0.0, %v10682
      %v10684 = vpop.f32.mrb[0].mxu0
      %10685 = vmatprep.mubr.bf16.mxu0 0
      %10686 = vmatmul.mubr.bf16.gmra.mrb[0].mxu0 %v10222
      %v10687 = vpop.f32.mrb[0].mxu0
      %v10688 = vadd.f32 0.0, %v10687
      %v10689 = vpop.f32.mrb[0].mxu0
      %v10690 = vpop.f32.mrb[0].mxu0
      %v10691 = vadd.f32 0.0, %v10690
      %v10692 = vpop.f32.mrb[0].mxu0
      %10693 = vmatprep.mubr.bf16.mxu0 0
      %10694 = vmatmul.mubr.bf16.gmra.mrb[0].mxu0 %v10225
      %v10695 = vpop.f32.mrb[0].mxu0
      %v10696 = vadd.f32 0.0, %v10695
      %v10697 = vpop.f32.mrb[0].mxu0
      %v10698 = vpop.f32.mrb[0].mxu0
      %v10699 = vadd.f32 0.0, %v10698
      %v10700 = vpop.f32.mrb[0].mxu0
      %10701 = vmatprep.mubr.bf16.mxu0 0
      %10702 = vmatmul.mubr.bf16.gmra.mrb[0].mxu0 %v10228
      %v10703 = vpop.f32.mrb[0].mxu0
      %v10704 = vadd.f32 0.0, %v10703
      %v10705 = vpop.f32.mrb[0].mxu0
      %v10706 = vpop.f32.mrb[0].mxu0
      %v10707 = vadd.f32 0.0, %v10706
      %v10708 = vpop.f32.mrb[0].mxu0
      %10709 = vmatprep.mubr.bf16.mxu0 0
      %10710 = vmatmul.mubr.bf16.gmra.mrb[0].mxu0 %v10231
      %v10711 = vpop.f32.mrb[0].mxu0
      %v10712 = vadd.f32 0.0, %v10711
      %v10713 = vpop.f32.mrb[0].mxu0
      %v10714 = vpop.f32.mrb[0].mxu0
      %v10715 = vadd.f32 0.0, %v10714
      %v10716 = vpop.f32.mrb[0].mxu0
      %10717 = vmatprep.mubr.bf16.mxu0 0
      %10718 = vmatmul.mubr.bf16.gmra.mrb[0].mxu0 %v10234
      %v10719 = vpop.f32.mrb[0].mxu0
      %v10720 = vadd.f32 0.0, %v10719
      %v10721 = vpop.f32.mrb[0].mxu0
      %v10722 = vpop.f32.mrb[0].mxu0
      %v10723 = vadd.f32 0.0, %v10722
      %v10724 = vpop.f32.mrb[0].mxu0
      %10725 = vmatprep.mubr.bf16.mxu0 0
      %10726 = vmatmul.mubr.bf16.gmra.mrb[0].mxu0 %v10237
      %v10727 = vpop.f32.mrb[0].mxu0
      %v10728 = vadd.f32 0.0, %v10727
      %v10729 = vpop.f32.mrb[0].mxu0
      %v10730 = vpop.f32.mrb[0].mxu0
      %v10731 = vadd.f32 0.0, %v10730
      %v10732 = vpop.f32.mrb[0].mxu0
      %10733 = vmatprep.mubr.bf16.mxu0 0
      %10734 = vmatmul.mubr.bf16.gmra.mrb[0].mxu0 %v10240
      %v10735 = vpop.f32.mrb[0].mxu0
      %v10736 = vadd.f32 0.0, %v10735
      %v10737 = vpop.f32.mrb[0].mxu0
      %v10738 = vpop.f32.mrb[0].mxu0
      %v10739 = vadd.f32 0.0, %v10738
      %v10740 = vpop.f32.mrb[0].mxu0
      %10741 = vmatprep.mubr.bf16.mxu0 0
      %10742 = vmatmul.mubr.bf16.gmra.mrb[0].mxu0 %v10243
      %v10743 = vpop.f32.mrb[0].mxu0
      %v10744 = vadd.f32 0.0, %v10743
      %v10745 = vpop.f32.mrb[0].mxu0
      %v10746 = vpop.f32.mrb[0].mxu0
      %v10747 = vadd.f32 0.0, %v10746
      %v10748 = vpop.f32.mrb[0].mxu0
      %10749 = vmatprep.mubr.bf16.mxu0 0
      %10750 = vmatmul.mubr.bf16.gmra.mrb[0].mxu0 %v10246
      %v10751 = vpop.f32.mrb[0].mxu0
      %v10752 = vadd.f32 0.0, %v10751
      %v10753 = vpop.f32.mrb[0].mxu0
      %v10754 = vpop.f32.mrb[0].mxu0
      %v10755 = vadd.f32 0.0, %v10754
      %v10756 = vpop.f32.mrb[0].mxu0
      %10757 = vmatprep.mubr.bf16.mxu0 0
      %10758 = vmatmul.mubr.bf16.gmra.mrb[0].mxu0 %v10249
      %v10759 = vpop.f32.mrb[0].mxu0
      %v10760 = vadd.f32 0.0, %v10759
      %v10761 = vpop.f32.mrb[0].mxu0
      %v10762 = vpop.f32.mrb[0].mxu0
      %v10763 = vadd.f32 0.0, %v10762
      %v10764 = vpop.f32.mrb[0].mxu0
      %10765 = vmatprep.mubr.bf16.mxu0 0
      %10766 = vmatmul.mubr.bf16.gmra.mrb[0].mxu0 %v10252
      %v10767 = vpop.f32.mrb[0].mxu0
      %v10768 = vadd.f32 0.0, %v10767
      %v10769 = vpop.f32.mrb[0].mxu0
      %v10770 = vpop.f32.mrb[0].mxu0
      %v10771 = vadd.f32 0.0, %v10770
      %v10772 = vpop.f32.mrb[0].mxu0
      %10773 = vmatprep.mubr.bf16.mxu0 0
      %10774 = vmatmul.mubr.bf16.gmra.mrb[0].mxu0 %v10255
      %v10775 = vpop.f32.mrb[0].mxu0
      %v10776 = vadd.f32 0.0, %v10775
      %v10777 = vpop.f32.mrb[0].mxu0
      %v10778 = vpop.f32.mrb[0].mxu0
      %v10779 = vadd.f32 0.0, %v10778
      %v10780 = vpop.f32.mrb[0].mxu0
      %10781 = vmatprep.mubr.bf16.mxu0 0
      %10782 = vmatmul.mubr.bf16.gmra.mrb[0].mxu0 %v10258
      %v10783 = vpop.f32.mrb[0].mxu0
      %v10784 = vadd.f32 0.0, %v10783
      %v10785 = vpop.f32.mrb[0].mxu0
      %v10786 = vpop.f32.mrb[0].mxu0
      %v10787 = vadd.f32 0.0, %v10786
      %v10788 = vpop.f32.mrb[0].mxu0
      %10789 = vmatprep.mubr.bf16.mxu0 0
      %10790 = vmatmul.mubr.bf16.gmra.mrb[0].mxu0 %v10261
      %v10791 = vpop.f32.mrb[0].mxu0
      %v10792 = vadd.f32 0.0, %v10791
      %v10793 = vpop.f32.mrb[0].mxu0
      %v10794 = vpop.f32.mrb[0].mxu0
      %v10795 = vadd.f32 0.0, %v10794
      %v10796 = vpop.f32.mrb[0].mxu0
      %10797 = vmatprep.mubr.bf16.mxu0 0
      %10798 = vmatmul.mubr.bf16.gmra.mrb[0].mxu0 %v10264
      %v10799 = vpop.f32.mrb[0].mxu0
      %v10800 = vadd.f32 0.0, %v10799
      %v10801 = vpop.f32.mrb[0].mxu0
      %v10802 = vpop.f32.mrb[0].mxu0
      %v10803 = vadd.f32 0.0, %v10802
      %v10804 = vpop.f32.mrb[0].mxu0
      %10805 = vmatprep.mubr.bf16.mxu0 0
      %10806 = vmatmul.mubr.bf16.gmra.mrb[0].mxu0 %v10267
      %v10807 = vpop.f32.mrb[0].mxu0
      %v10808 = vadd.f32 0.0, %v10807
      %v10809 = vpop.f32.mrb[0].mxu0
      %v10810 = vpop.f32.mrb[0].mxu0
      %v10811 = vadd.f32 0.0, %v10810
      %v10812 = vpop.f32.mrb[0].mxu0
      %10813 = vmatprep.mubr.bf16.mxu0 0
      %10814 = vmatmul.mubr.bf16.gmra.mrb[0].mxu0 %v10270
      %v10815 = vpop.f32.mrb[0].mxu0
      %v10816 = vadd.f32 0.0, %v10815
      %v10817 = vpop.f32.mrb[0].mxu0
      %v10818 = vpop.f32.mrb[0].mxu0
      %v10819 = vadd.f32 0.0, %v10818
      %v10820 = vpop.f32.mrb[0].mxu0
      %10821 = vmatprep.mubr.bf16.mxu0 0
      %10822 = vmatmul.mubr.bf16.gmra.mrb[0].mxu0 %v10273
      %v10823 = vpop.f32.mrb[0].mxu0
      %v10824 = vadd.f32 0.0, %v10823
      %v10825 = vpop.f32.mrb[0].mxu0
      %v10826 = vpop.f32.mrb[0].mxu0
      %v10827 = vadd.f32 0.0, %v10826
      %v10828 = vpop.f32.mrb[0].mxu0
      %10829 = vmatprep.mubr.bf16.mxu0 0
      %10830 = vmatmul.mubr.bf16.gmra.mrb[0].mxu0 %v10276
      %v10831 = vpop.f32.mrb[0].mxu0
      %v10832 = vadd.f32 0.0, %v10831
      %v10833 = vpop.f32.mrb[0].mxu0
      %v10834 = vpop.f32.mrb[0].mxu0
      %v10835 = vadd.f32 0.0, %v10834
      %v10836 = vpop.f32.mrb[0].mxu0
      %10837 = vmatprep.mubr.bf16.mxu0 0
      %10838 = vmatmul.mubr.bf16.gmra.mrb[0].mxu0 %v10279
      %v10839 = vpop.f32.mrb[0].mxu0
      %v10840 = vadd.f32 0.0, %v10839
      %v10841 = vpop.f32.mrb[0].mxu0
      %v10842 = vpop.f32.mrb[0].mxu0
      %v10843 = vadd.f32 0.0, %v10842
      %v10844 = vpop.f32.mrb[0].mxu0
      %10845 = vmatprep.mubr.bf16.mxu0 0
      %10846 = vmatmul.mubr.bf16.gmra.mrb[0].mxu0 %v10282
      %v10847 = vpop.f32.mrb[0].mxu0
      %v10848 = vadd.f32 0.0, %v10847
      %v10849 = vpop.f32.mrb[0].mxu0
      %v10850 = vpop.f32.mrb[0].mxu0
      %v10851 = vadd.f32 0.0, %v10850
      %v10852 = vpop.f32.mrb[0].mxu0
      %10853 = vmatprep.mubr.bf16.mxu0 0
      %10854 = vmatmul.mubr.bf16.gmra.mrb[0].mxu0 %v10285
      %v10855 = vpop.f32.mrb[0].mxu0
      %v10856 = vadd.f32 0.0, %v10855
      %v10857 = vpop.f32.mrb[0].mxu0
      %v10858 = vpop.f32.mrb[0].mxu0
      %v10859 = vadd.f32 0.0, %v10858
      %v10860 = vpop.f32.mrb[0].mxu0
      %10861 = vmatprep.mubr.bf16.mxu0 0
      %10862 = vmatmul.mubr.bf16.gmra.mrb[0].mxu0 %v10288
      %v10863 = vpop.f32.mrb[0].mxu0
      %v10864 = vadd.f32 0.0, %v10863
      %v10865 = vpop.f32.mrb[0].mxu0
      %v10866 = vpop.f32.mrb[0].mxu0
      %v10867 = vadd.f32 0.0, %v10866
      %v10868 = vpop.f32.mrb[0].mxu0
      %10869 = vdwg.mxu0
      %v10870 = vadd.f32 %v9323, %v10328
      %v10871 = vadd.f32 %v9324, %v10331
      %v10872 = vadd.f32 %v9325, %v10336
      %v10873 = vadd.f32 %v9326, %v10339
      %v10874 = vadd.f32 %v9327, %v10344
      %v10875 = vadd.f32 %v9328, %v10347
      %v10876 = vadd.f32 %v9329, %v10352
      %v10877 = vadd.f32 %v9330, %v10355
      %v10878 = vadd.f32 %v9331, %v10360
      %v10879 = vadd.f32 %v9332, %v10363
      %v10880 = vadd.f32 %v9333, %v10368
      %v10881 = vadd.f32 %v9334, %v10371
      %v10882 = vadd.f32 %v9335, %v10376
      %v10883 = vadd.f32 %v9336, %v10379
      %v10884 = vadd.f32 %v9337, %v10384
      %v10885 = vadd.f32 %v9338, %v10387
      %v10886 = vadd.f32 %v9339, %v10392
      %v10887 = vadd.f32 %v9340, %v10395
      %v10888 = vadd.f32 %v9341, %v10400
      %v10889 = vadd.f32 %v9342, %v10403
      %v10890 = vadd.f32 %v9343, %v10408
      %v10891 = vadd.f32 %v9344, %v10411
      %v10892 = vadd.f32 %v9345, %v10416
      %v10893 = vadd.f32 %v9346, %v10419
      %v10894 = vadd.f32 %v9347, %v10424
      %v10895 = vadd.f32 %v9348, %v10427
      %v10896 = vadd.f32 %v9349, %v10432
      %v10897 = vadd.f32 %v9350, %v10435
      %v10898 = vadd.f32 %v9351, %v10440
      %v10899 = vadd.f32 %v9352, %v10443
      %v10900 = vadd.f32 %v9353, %v10448
      %v10901 = vadd.f32 %v9354, %v10451
      %v10902 = vadd.f32 %v9355, %v10456
      %v10903 = vadd.f32 %v9356, %v10459
      %v10904 = vadd.f32 %v9357, %v10464
      %v10905 = vadd.f32 %v9358, %v10467
      %v10906 = vadd.f32 %v9359, %v10472
      %v10907 = vadd.f32 %v9360, %v10475
      %v10908 = vadd.f32 %v9361, %v10480
      %v10909 = vadd.f32 %v9362, %v10483
      %v10910 = vadd.f32 %v9363, %v10488
      %v10911 = vadd.f32 %v9364, %v10491
      %v10912 = vadd.f32 %v9365, %v10496
      %v10913 = vadd.f32 %v9366, %v10499
      %v10914 = vadd.f32 %v9367, %v10504
      %v10915 = vadd.f32 %v9368, %v10507
      %v10916 = vadd.f32 %v9369, %v10512
      %v10917 = vadd.f32 %v9370, %v10515
      %v10918 = vadd.f32 %v9371, %v10520
      %v10919 = vadd.f32 %v9372, %v10523
      %v10920 = vadd.f32 %v9373, %v10528
      %v10921 = vadd.f32 %v9374, %v10531
      %v10922 = vadd.f32 %v9375, %v10536
      %v10923 = vadd.f32 %v9376, %v10539
      %v10924 = vadd.f32 %v9377, %v10544
      %v10925 = vadd.f32 %v9378, %v10547
      %v10926 = vadd.f32 %v9379, %v10552
      %v10927 = vadd.f32 %v9380, %v10555
      %v10928 = vadd.f32 %v9381, %v10560
      %v10929 = vadd.f32 %v9382, %v10563
      %v10930 = vadd.f32 %v9383, %v10568
      %v10931 = vadd.f32 %v9384, %v10571
      %v10932 = vadd.f32 %v9385, %v10576
      %v10933 = vadd.f32 %v9386, %v10579
      %v10934 = vadd.f32 %v9387, %v10584
      %v10935 = vadd.f32 %v9388, %v10587
      %v10936 = vadd.f32 %v9389, %v10592
      %v10937 = vadd.f32 %v9390, %v10595
      %v10938 = vadd.f32 %v9391, %v10600
      %v10939 = vadd.f32 %v9392, %v10603
      %v10940 = vadd.f32 %v9393, %v10608
      %v10941 = vadd.f32 %v9394, %v10611
      %v10942 = vadd.f32 %v9395, %v10616
      %v10943 = vadd.f32 %v9396, %v10619
      %v10944 = vadd.f32 %v9397, %v10624
      %v10945 = vadd.f32 %v9398, %v10627
      %v10946 = vadd.f32 %v9399, %v10632
      %v10947 = vadd.f32 %v9400, %v10635
      %v10948 = vadd.f32 %v9401, %v10640
      %v10949 = vadd.f32 %v9402, %v10643
      %v10950 = vadd.f32 %v9403, %v10648
      %v10951 = vadd.f32 %v9404, %v10651
      %v10952 = vadd.f32 %v9405, %v10656
      %v10953 = vadd.f32 %v9406, %v10659
      %v10954 = vadd.f32 %v9407, %v10664
      %v10955 = vadd.f32 %v9408, %v10667
      %v10956 = vadd.f32 %v9409, %v10672
      %v10957 = vadd.f32 %v9410, %v10675
      %v10958 = vadd.f32 %v9411, %v10680
      %v10959 = vadd.f32 %v9412, %v10683
      %v10960 = vadd.f32 %v9413, %v10688
      %v10961 = vadd.f32 %v9414, %v10691
      %v10962 = vadd.f32 %v9415, %v10696
      %v10963 = vadd.f32 %v9416, %v10699
      %v10964 = vadd.f32 %v9417, %v10704
      %v10965 = vadd.f32 %v9418, %v10707
      %v10966 = vadd.f32 %v9419, %v10712
      %v10967 = vadd.f32 %v9420, %v10715
      %v10968 = vadd.f32 %v9421, %v10720
      %v10969 = vadd.f32 %v9422, %v10723
      %v10970 = vadd.f32 %v9423, %v10728
      %v10971 = vadd.f32 %v9424, %v10731
      %v10972 = vadd.f32 %v9425, %v10736
      %v10973 = vadd.f32 %v9426, %v10739
      %v10974 = vadd.f32 %v9427, %v10744
      %v10975 = vadd.f32 %v9428, %v10747
      %v10976 = vadd.f32 %v9429, %v10752
      %v10977 = vadd.f32 %v9430, %v10755
      %v10978 = vadd.f32 %v9431, %v10760
      %v10979 = vadd.f32 %v9432, %v10763
      %v10980 = vadd.f32 %v9433, %v10768
      %v10981 = vadd.f32 %v9434, %v10771
      %v10982 = vadd.f32 %v9435, %v10776
      %v10983 = vadd.f32 %v9436, %v10779
      %v10984 = vadd.f32 %v9437, %v10784
      %v10985 = vadd.f32 %v9438, %v10787
      %v10986 = vadd.f32 %v9439, %v10792
      %v10987 = vadd.f32 %v9440, %v10795
      %v10988 = vadd.f32 %v9441, %v10800
      %v10989 = vadd.f32 %v9442, %v10803
      %v10990 = vadd.f32 %v9443, %v10808
      %v10991 = vadd.f32 %v9444, %v10811
      %v10992 = vadd.f32 %v9445, %v10816
      %v10993 = vadd.f32 %v9446, %v10819
      %v10994 = vadd.f32 %v9447, %v10824
      %v10995 = vadd.f32 %v9448, %v10827
      %v10996 = vadd.f32 %v9449, %v10832
      %v10997 = vadd.f32 %v9450, %v10835
      %v10998 = vadd.f32 %v9451, %v10840
      %v10999 = vadd.f32 %v9452, %v10843
      %v11000 = vadd.f32 %v9453, %v10848
      %v11001 = vadd.f32 %v9454, %v10851
      %v11002 = vadd.f32 %v9455, %v10856
      %v11003 = vadd.f32 %v9456, %v10859
      %v11004 = vadd.f32 %v9457, %v10864
      %v11005 = vadd.f32 %v9458, %v10867
      %v11006 = vld [vmem:[%s165 + $0x20] sm:$0x8]
      %s11007 = scalar_lea.vmem %s1, 32
      %v11008 = vld [vmem:[%s11007] sm:$0xf]
      %v11010 = vunpack.c.l.b16 %v11006
      %v11011 = vpack.c.b16 %v8197, %v11010
      %vm11012 = vcmask 1044480
      %v11013 = vrot.slane %v11011, 3
      %v11014 = vrot.slane %v8334, 3
      %v11015 = vsel %vm11012, %v11013, %v11014
      %v11016 = vrot.slane %v8335, 3
      %v11017 = vsel %vm11012, %v11014, %v11016
      %v11018 = vrot.slane %v8336, 3
      %v11019 = vsel %vm11012, %v11016, %v11018
      %v11020 = vrot.slane %v8337, 3
      %v11021 = vsel %vm11012, %v11018, %v11020
      %v11022 = vrot.slane %v8338, 3
      %v11023 = vsel %vm11012, %v11020, %v11022
      %v11024 = vrot.slane %v8339, 3
      %v11025 = vsel %vm11012, %v11022, %v11024
      %v11026 = vrot.slane %v8340, 3
      %v11027 = vsel %vm11012, %v11024, %v11026
      %v11028 = vrot.slane %v8341, 3
      %v11029 = vsel %vm11012, %v11026, %v11028
      %v11030 = vrot.slane %v8342, 3
      %v11031 = vsel %vm11012, %v11028, %v11030
      %v11032 = vrot.slane %v8343, 3
      %v11033 = vsel %vm11012, %v11030, %v11032
      %v11034 = vrot.slane %v8344, 3
      %v11035 = vsel %vm11012, %v11032, %v11034
      %v11036 = vrot.slane %v8345, 3
      %v11037 = vsel %vm11012, %v11034, %v11036
      %v11038 = vrot.slane %v8346, 3
      %v11039 = vsel %vm11012, %v11036, %v11038
      %v11040 = vrot.slane %v8347, 3
      %v11041 = vsel %vm11012, %v11038, %v11040
      %v11042 = vrot.slane %v8348, 3
      %v11043 = vsel %vm11012, %v11040, %v11042
      %v11044 = vrot.slane %v8349, 3
      %v11045 = vsel %vm11012, %v11042, %v11044
      %v11046 = vrot.slane %v8350, 3
      %v11047 = vsel %vm11012, %v11044, %v11046
      %v11048 = vrot.slane %v8351, 3
      %v11049 = vsel %vm11012, %v11046, %v11048
      %v11050 = vrot.slane %v8352, 3
      %v11051 = vsel %vm11012, %v11048, %v11050
      %v11052 = vrot.slane %v8353, 3
      %v11053 = vsel %vm11012, %v11050, %v11052
      %v11054 = vrot.slane %v8354, 3
      %v11055 = vsel %vm11012, %v11052, %v11054
      %v11056 = vrot.slane %v8355, 3
      %v11057 = vsel %vm11012, %v11054, %v11056
      %v11058 = vrot.slane %v8356, 3
      %v11059 = vsel %vm11012, %v11056, %v11058
      %v11060 = vrot.slane %v8357, 3
      %v11061 = vsel %vm11012, %v11058, %v11060
      %v11062 = vrot.slane %v8358, 3
      %v11063 = vsel %vm11012, %v11060, %v11062
      %v11064 = vrot.slane %v8359, 3
      %v11065 = vsel %vm11012, %v11062, %v11064
      %v11066 = vrot.slane %v8360, 3
      %v11067 = vsel %vm11012, %v11064, %v11066
      %v11068 = vrot.slane %v8361, 3
      %v11069 = vsel %vm11012, %v11066, %v11068
      %v11070 = vrot.slane %v8362, 3
      %v11071 = vsel %vm11012, %v11068, %v11070
      %v11072 = vrot.slane %v8363, 3
      %v11073 = vsel %vm11012, %v11070, %v11072
      %v11074 = vrot.slane %v8364, 3
      %v11075 = vsel %vm11012, %v11072, %v11074
      %v11076 = vrot.slane %v8365, 3
      %v11077 = vsel %vm11012, %v11074, %v11076
      %v11078 = vrot.slane %v8366, 3
      %v11079 = vsel %vm11012, %v11076, %v11078
      %v11080 = vrot.slane %v8367, 3
      %v11081 = vsel %vm11012, %v11078, %v11080
      %v11082 = vrot.slane %v8368, 3
      %v11083 = vsel %vm11012, %v11080, %v11082
      %v11084 = vrot.slane %v8369, 3
      %v11085 = vsel %vm11012, %v11082, %v11084
      %v11086 = vrot.slane %v8370, 3
      %v11087 = vsel %vm11012, %v11084, %v11086
      %v11088 = vrot.slane %v8371, 3
      %v11089 = vsel %vm11012, %v11086, %v11088
      %v11090 = vrot.slane %v8372, 3
      %v11091 = vsel %vm11012, %v11088, %v11090
      %v11092 = vrot.slane %v8373, 3
      %v11093 = vsel %vm11012, %v11090, %v11092
      %v11094 = vrot.slane %v8374, 3
      %v11095 = vsel %vm11012, %v11092, %v11094
      %v11096 = vrot.slane %v8375, 3
      %v11097 = vsel %vm11012, %v11094, %v11096
      %v11098 = vrot.slane %v8376, 3
      %v11099 = vsel %vm11012, %v11096, %v11098
      %v11100 = vrot.slane %v8377, 3
      %v11101 = vsel %vm11012, %v11098, %v11100
      %v11102 = vrot.slane %v8378, 3
      %v11103 = vsel %vm11012, %v11100, %v11102
      %v11104 = vrot.slane %v8379, 3
      %v11105 = vsel %vm11012, %v11102, %v11104
      %v11106 = vrot.slane %v8380, 3
      %v11107 = vsel %vm11012, %v11104, %v11106
      %v11108 = vrot.slane %v8381, 3
      %v11109 = vsel %vm11012, %v11106, %v11108
      %v11110 = vrot.slane %v8382, 3
      %v11111 = vsel %vm11012, %v11108, %v11110
      %v11112 = vrot.slane %v8383, 3
      %v11113 = vsel %vm11012, %v11110, %v11112
      %v11114 = vrot.slane %v8384, 3
      %v11115 = vsel %vm11012, %v11112, %v11114
      %v11116 = vrot.slane %v8385, 3
      %v11117 = vsel %vm11012, %v11114, %v11116
      %v11118 = vrot.slane %v8386, 3
      %v11119 = vsel %vm11012, %v11116, %v11118
      %v11120 = vrot.slane %v8387, 3
      %v11121 = vsel %vm11012, %v11118, %v11120
      %v11122 = vrot.slane %v8388, 3
      %v11123 = vsel %vm11012, %v11120, %v11122
      %v11124 = vrot.slane %v8389, 3
      %v11125 = vsel %vm11012, %v11122, %v11124
      %v11126 = vrot.slane %v8390, 3
      %v11127 = vsel %vm11012, %v11124, %v11126
      %v11128 = vrot.slane %v8391, 3
      %v11129 = vsel %vm11012, %v11126, %v11128
      %v11130 = vrot.slane %v8392, 3
      %v11131 = vsel %vm11012, %v11128, %v11130
      %v11132 = vrot.slane %v8393, 3
      %v11133 = vsel %vm11012, %v11130, %v11132
      %v11134 = vrot.slane %v8394, 3
      %v11135 = vsel %vm11012, %v11132, %v11134
      %v11136 = vrot.slane %v8395, 3
      %v11137 = vsel %vm11012, %v11134, %v11136
      %v11138 = vrot.slane %v8396, 3
      %v11139 = vsel %vm11012, %v11136, %v11138
      %v11140 = vrot.slane %v8397, 3
      %v11141 = vsel %vm11012, %v11138, %v11140
      %v11142 = vrot.slane %v8398, 3
      %v11143 = vsel %vm11012, %v11140, %v11142
      %v11144 = vrot.slane %v8399, 3
      %v11145 = vsel %vm11012, %v11142, %v11144
      %v11146 = vrot.slane %v8400, 3
      %v11147 = vsel %vm11012, %v11144, %v11146
      %v11148 = vrot.slane %v9464, 3
      %v11149 = vsel %vm11012, %v11146, %v11148
      %v11151 = vsel %vm1204, %v11015, 0
      %v11154 = vsel %vm1204, %v11017, 0
      %v11157 = vsel %vm1204, %v11019, 0
      %v11160 = vsel %vm1204, %v11021, 0
      %v11163 = vsel %vm1204, %v11023, 0
      %v11166 = vsel %vm1204, %v11025, 0
      %v11169 = vsel %vm1204, %v11027, 0
      %v11172 = vsel %vm1204, %v11029, 0
      %v11175 = vsel %vm1204, %v11031, 0
      %v11178 = vsel %vm1204, %v11033, 0
      %v11181 = vsel %vm1204, %v11035, 0
      %v11184 = vsel %vm1204, %v11037, 0
      %v11187 = vsel %vm1204, %v11039, 0
      %v11190 = vsel %vm1204, %v11041, 0
      %v11193 = vsel %vm1204, %v11043, 0
      %v11196 = vsel %vm1204, %v11045, 0
      %v11199 = vsel %vm1204, %v11047, 0
      %v11202 = vsel %vm1204, %v11049, 0
      %v11205 = vsel %vm1204, %v11051, 0
      %v11208 = vsel %vm1204, %v11053, 0
      %v11211 = vsel %vm1204, %v11055, 0
      %v11214 = vsel %vm1204, %v11057, 0
      %v11217 = vsel %vm1204, %v11059, 0
      %v11220 = vsel %vm1204, %v11061, 0
      %v11223 = vsel %vm1204, %v11063, 0
      %v11226 = vsel %vm1204, %v11065, 0
      %v11229 = vsel %vm1204, %v11067, 0
      %v11232 = vsel %vm1204, %v11069, 0
      %v11235 = vsel %vm1204, %v11071, 0
      %v11238 = vsel %vm1204, %v11073, 0
      %v11241 = vsel %vm1204, %v11075, 0
      %v11244 = vsel %vm1204, %v11077, 0
      %v11247 = vsel %vm1204, %v11079, 0
      %v11250 = vsel %vm1204, %v11081, 0
      %v11253 = vsel %vm1204, %v11083, 0
      %v11256 = vsel %vm1204, %v11085, 0
      %v11259 = vsel %vm1204, %v11087, 0
      %v11262 = vsel %vm1204, %v11089, 0
      %v11265 = vsel %vm1204, %v11091, 0
      %v11268 = vsel %vm1204, %v11093, 0
      %v11271 = vsel %vm1204, %v11095, 0
      %v11274 = vsel %vm1204, %v11097, 0
      %v11277 = vsel %vm1204, %v11099, 0
      %v11280 = vsel %vm1204, %v11101, 0
      %v11283 = vsel %vm1204, %v11103, 0
      %v11286 = vsel %vm1204, %v11105, 0
      %v11289 = vsel %vm1204, %v11107, 0
      %v11292 = vsel %vm1204, %v11109, 0
      %v11295 = vsel %vm1204, %v11111, 0
      %v11298 = vsel %vm1204, %v11113, 0
      %v11301 = vsel %vm1204, %v11115, 0
      %v11304 = vsel %vm1204, %v11117, 0
      %v11307 = vsel %vm1204, %v11119, 0
      %v11310 = vsel %vm1204, %v11121, 0
      %v11313 = vsel %vm1204, %v11123, 0
      %v11316 = vsel %vm1204, %v11125, 0
      %v11319 = vsel %vm1204, %v11127, 0
      %v11322 = vsel %vm1204, %v11129, 0
      %v11325 = vsel %vm1204, %v11131, 0
      %v11328 = vsel %vm1204, %v11133, 0
      %v11331 = vsel %vm1204, %v11135, 0
      %v11334 = vsel %vm1204, %v11137, 0
      %v11337 = vsel %vm1204, %v11139, 0
      %v11340 = vsel %vm1204, %v11141, 0
      %v11343 = vsel %vm1204, %v11143, 0
      %v11346 = vsel %vm1204, %v11145, 0
      %v11349 = vsel %vm1204, %v11147, 0
      %v11352 = vsel %vm1204, %v11149, 0
      %v11355 = vsel %vm1409, %v11008, 0
      %11357 = vmatprep.subr.bf16.mxu0 0
      %11358 = vmatpush1.bf16.msra.mxu0 %v11355
      %11359 = vmatprep.subr.bf16.mxu0 0
      %11360 = vmatpush1.bf16.msra.mxu0 0
      %11361 = vmatprep.subr.bf16.mxu0 0
      %11362 = vmatpush1.bf16.msra.mxu0 0
      %11363 = vmatprep.subr.bf16.mxu0 0
      %11364 = vmatpush1.bf16.msra.mxu0 0
      %11365 = vmatprep.subr.bf16.mxu0 0
      %11366 = vmatpush1.bf16.msra.mxu0 0
      %11367 = vmatprep.subr.bf16.mxu0 0
      %11368 = vmatpush1.bf16.msra.mxu0 0
      %11369 = vmatprep.subr.bf16.mxu0 0
      %11370 = vmatpush1.bf16.msra.mxu0 0
      %11371 = vmatprep.subr.bf16.mxu0 0
      %11372 = vmatpush1.bf16.msra.mxu0 0
      %11373 = vmatprep.subr.bf16.mxu0 0
      %11374 = vmatpush1.bf16.msra.mxu0 0
      %11375 = vmatprep.subr.bf16.mxu0 0
      %11376 = vmatpush1.bf16.msra.mxu0 0
      %11377 = vmatprep.subr.bf16.mxu0 0
      %11378 = vmatpush1.bf16.msra.mxu0 0
      %11379 = vmatprep.subr.bf16.mxu0 0
      %11380 = vmatpush1.bf16.msra.mxu0 0
      %11381 = vmatprep.subr.bf16.mxu0 0
      %11382 = vmatpush1.bf16.msra.mxu0 0
      %11383 = vmatprep.subr.bf16.mxu0 0
      %11384 = vmatpush1.bf16.msra.mxu0 0
      %11385 = vmatprep.subr.bf16.mxu0 0
      %11386 = vmatpush1.bf16.msra.mxu0 0
      %11387 = vmatprep.subr.bf16.mxu0 0
      %11388 = vmatpush1.bf16.msra.mxu0 0
      %11389 = vmatprep.mubr.bf16.mxu0 0
      %11390 = vmatmul.mubr.bf16.gmra.mrb[0].mxu0 %v11151
      %v11391 = vpop.f32.mrb[0].mxu0
      %v11392 = vadd.f32 0.0, %v11391
      %v11393 = vpop.f32.mrb[0].mxu0
      %v11394 = vpop.f32.mrb[0].mxu0
      %v11395 = vadd.f32 0.0, %v11394
      %v11396 = vpop.f32.mrb[0].mxu0
      %11397 = vmatprep.mubr.bf16.mxu0 0
      %11398 = vmatmul.mubr.bf16.gmra.mrb[0].mxu0 %v11154
      %v11399 = vpop.f32.mrb[0].mxu0
      %v11400 = vadd.f32 0.0, %v11399
      %v11401 = vpop.f32.mrb[0].mxu0
      %v11402 = vpop.f32.mrb[0].mxu0
      %v11403 = vadd.f32 0.0, %v11402
      %v11404 = vpop.f32.mrb[0].mxu0
      %11405 = vmatprep.mubr.bf16.mxu0 0
      %11406 = vmatmul.mubr.bf16.gmra.mrb[0].mxu0 %v11157
      %v11407 = vpop.f32.mrb[0].mxu0
      %v11408 = vadd.f32 0.0, %v11407
      %v11409 = vpop.f32.mrb[0].mxu0
      %v11410 = vpop.f32.mrb[0].mxu0
      %v11411 = vadd.f32 0.0, %v11410
      %v11412 = vpop.f32.mrb[0].mxu0
      %11413 = vmatprep.mubr.bf16.mxu0 0
      %11414 = vmatmul.mubr.bf16.gmra.mrb[0].mxu0 %v11160
      %v11415 = vpop.f32.mrb[0].mxu0
      %v11416 = vadd.f32 0.0, %v11415
      %v11417 = vpop.f32.mrb[0].mxu0
      %v11418 = vpop.f32.mrb[0].mxu0
      %v11419 = vadd.f32 0.0, %v11418
      %v11420 = vpop.f32.mrb[0].mxu0
      %11421 = vmatprep.mubr.bf16.mxu0 0
      %11422 = vmatmul.mubr.bf16.gmra.mrb[0].mxu0 %v11163
      %v11423 = vpop.f32.mrb[0].mxu0
      %v11424 = vadd.f32 0.0, %v11423
      %v11425 = vpop.f32.mrb[0].mxu0
      %v11426 = vpop.f32.mrb[0].mxu0
      %v11427 = vadd.f32 0.0, %v11426
      %v11428 = vpop.f32.mrb[0].mxu0
      %11429 = vmatprep.mubr.bf16.mxu0 0
      %11430 = vmatmul.mubr.bf16.gmra.mrb[0].mxu0 %v11166
      %v11431 = vpop.f32.mrb[0].mxu0
      %v11432 = vadd.f32 0.0, %v11431
      %v11433 = vpop.f32.mrb[0].mxu0
      %v11434 = vpop.f32.mrb[0].mxu0
      %v11435 = vadd.f32 0.0, %v11434
      %v11436 = vpop.f32.mrb[0].mxu0
      %11437 = vmatprep.mubr.bf16.mxu0 0
      %11438 = vmatmul.mubr.bf16.gmra.mrb[0].mxu0 %v11169
      %v11439 = vpop.f32.mrb[0].mxu0
      %v11440 = vadd.f32 0.0, %v11439
      %v11441 = vpop.f32.mrb[0].mxu0
      %v11442 = vpop.f32.mrb[0].mxu0
      %v11443 = vadd.f32 0.0, %v11442
      %v11444 = vpop.f32.mrb[0].mxu0
      %11445 = vmatprep.mubr.bf16.mxu0 0
      %11446 = vmatmul.mubr.bf16.gmra.mrb[0].mxu0 %v11172
      %v11447 = vpop.f32.mrb[0].mxu0
      %v11448 = vadd.f32 0.0, %v11447
      %v11449 = vpop.f32.mrb[0].mxu0
      %v11450 = vpop.f32.mrb[0].mxu0
      %v11451 = vadd.f32 0.0, %v11450
      %v11452 = vpop.f32.mrb[0].mxu0
      %11453 = vmatprep.mubr.bf16.mxu0 0
      %11454 = vmatmul.mubr.bf16.gmra.mrb[0].mxu0 %v11175
      %v11455 = vpop.f32.mrb[0].mxu0
      %v11456 = vadd.f32 0.0, %v11455
      %v11457 = vpop.f32.mrb[0].mxu0
      %v11458 = vpop.f32.mrb[0].mxu0
      %v11459 = vadd.f32 0.0, %v11458
      %v11460 = vpop.f32.mrb[0].mxu0
      %11461 = vmatprep.mubr.bf16.mxu0 0
      %11462 = vmatmul.mubr.bf16.gmra.mrb[0].mxu0 %v11178
      %v11463 = vpop.f32.mrb[0].mxu0
      %v11464 = vadd.f32 0.0, %v11463
      %v11465 = vpop.f32.mrb[0].mxu0
      %v11466 = vpop.f32.mrb[0].mxu0
      %v11467 = vadd.f32 0.0, %v11466
      %v11468 = vpop.f32.mrb[0].mxu0
      %11469 = vmatprep.mubr.bf16.mxu0 0
      %11470 = vmatmul.mubr.bf16.gmra.mrb[0].mxu0 %v11181
      %v11471 = vpop.f32.mrb[0].mxu0
      %v11472 = vadd.f32 0.0, %v11471
      %v11473 = vpop.f32.mrb[0].mxu0
      %v11474 = vpop.f32.mrb[0].mxu0
      %v11475 = vadd.f32 0.0, %v11474
      %v11476 = vpop.f32.mrb[0].mxu0
      %11477 = vmatprep.mubr.bf16.mxu0 0
      %11478 = vmatmul.mubr.bf16.gmra.mrb[0].mxu0 %v11184
      %v11479 = vpop.f32.mrb[0].mxu0
      %v11480 = vadd.f32 0.0, %v11479
      %v11481 = vpop.f32.mrb[0].mxu0
      %v11482 = vpop.f32.mrb[0].mxu0
      %v11483 = vadd.f32 0.0, %v11482
      %v11484 = vpop.f32.mrb[0].mxu0
      %11485 = vmatprep.mubr.bf16.mxu0 0
      %11486 = vmatmul.mubr.bf16.gmra.mrb[0].mxu0 %v11187
      %v11487 = vpop.f32.mrb[0].mxu0
      %v11488 = vadd.f32 0.0, %v11487
      %v11489 = vpop.f32.mrb[0].mxu0
      %v11490 = vpop.f32.mrb[0].mxu0
      %v11491 = vadd.f32 0.0, %v11490
      %v11492 = vpop.f32.mrb[0].mxu0
      %11493 = vmatprep.mubr.bf16.mxu0 0
      %11494 = vmatmul.mubr.bf16.gmra.mrb[0].mxu0 %v11190
      %v11495 = vpop.f32.mrb[0].mxu0
      %v11496 = vadd.f32 0.0, %v11495
      %v11497 = vpop.f32.mrb[0].mxu0
      %v11498 = vpop.f32.mrb[0].mxu0
      %v11499 = vadd.f32 0.0, %v11498
      %v11500 = vpop.f32.mrb[0].mxu0
      %11501 = vmatprep.mubr.bf16.mxu0 0
      %11502 = vmatmul.mubr.bf16.gmra.mrb[0].mxu0 %v11193
      %v11503 = vpop.f32.mrb[0].mxu0
      %v11504 = vadd.f32 0.0, %v11503
      %v11505 = vpop.f32.mrb[0].mxu0
      %v11506 = vpop.f32.mrb[0].mxu0
      %v11507 = vadd.f32 0.0, %v11506
      %v11508 = vpop.f32.mrb[0].mxu0
      %11509 = vmatprep.mubr.bf16.mxu0 0
      %11510 = vmatmul.mubr.bf16.gmra.mrb[0].mxu0 %v11196
      %v11511 = vpop.f32.mrb[0].mxu0
      %v11512 = vadd.f32 0.0, %v11511
      %v11513 = vpop.f32.mrb[0].mxu0
      %v11514 = vpop.f32.mrb[0].mxu0
      %v11515 = vadd.f32 0.0, %v11514
      %v11516 = vpop.f32.mrb[0].mxu0
      %11517 = vmatprep.mubr.bf16.mxu0 0
      %11518 = vmatmul.mubr.bf16.gmra.mrb[0].mxu0 %v11199
      %v11519 = vpop.f32.mrb[0].mxu0
      %v11520 = vadd.f32 0.0, %v11519
      %v11521 = vpop.f32.mrb[0].mxu0
      %v11522 = vpop.f32.mrb[0].mxu0
      %v11523 = vadd.f32 0.0, %v11522
      %v11524 = vpop.f32.mrb[0].mxu0
      %11525 = vmatprep.mubr.bf16.mxu0 0
      %11526 = vmatmul.mubr.bf16.gmra.mrb[0].mxu0 %v11202
      %v11527 = vpop.f32.mrb[0].mxu0
      %v11528 = vadd.f32 0.0, %v11527
      %v11529 = vpop.f32.mrb[0].mxu0
      %v11530 = vpop.f32.mrb[0].mxu0
      %v11531 = vadd.f32 0.0, %v11530
      %v11532 = vpop.f32.mrb[0].mxu0
      %11533 = vmatprep.mubr.bf16.mxu0 0
      %11534 = vmatmul.mubr.bf16.gmra.mrb[0].mxu0 %v11205
      %v11535 = vpop.f32.mrb[0].mxu0
      %v11536 = vadd.f32 0.0, %v11535
      %v11537 = vpop.f32.mrb[0].mxu0
      %v11538 = vpop.f32.mrb[0].mxu0
      %v11539 = vadd.f32 0.0, %v11538
      %v11540 = vpop.f32.mrb[0].mxu0
      %11541 = vmatprep.mubr.bf16.mxu0 0
      %11542 = vmatmul.mubr.bf16.gmra.mrb[0].mxu0 %v11208
      %v11543 = vpop.f32.mrb[0].mxu0
      %v11544 = vadd.f32 0.0, %v11543
      %v11545 = vpop.f32.mrb[0].mxu0
      %v11546 = vpop.f32.mrb[0].mxu0
      %v11547 = vadd.f32 0.0, %v11546
      %v11548 = vpop.f32.mrb[0].mxu0
      %11549 = vmatprep.mubr.bf16.mxu0 0
      %11550 = vmatmul.mubr.bf16.gmra.mrb[0].mxu0 %v11211
      %v11551 = vpop.f32.mrb[0].mxu0
      %v11552 = vadd.f32 0.0, %v11551
      %v11553 = vpop.f32.mrb[0].mxu0
      %v11554 = vpop.f32.mrb[0].mxu0
      %v11555 = vadd.f32 0.0, %v11554
      %v11556 = vpop.f32.mrb[0].mxu0
      %11557 = vmatprep.mubr.bf16.mxu0 0
      %11558 = vmatmul.mubr.bf16.gmra.mrb[0].mxu0 %v11214
      %v11559 = vpop.f32.mrb[0].mxu0
      %v11560 = vadd.f32 0.0, %v11559
      %v11561 = vpop.f32.mrb[0].mxu0
      %v11562 = vpop.f32.mrb[0].mxu0
      %v11563 = vadd.f32 0.0, %v11562
      %v11564 = vpop.f32.mrb[0].mxu0
      %11565 = vmatprep.mubr.bf16.mxu0 0
      %11566 = vmatmul.mubr.bf16.gmra.mrb[0].mxu0 %v11217
      %v11567 = vpop.f32.mrb[0].mxu0
      %v11568 = vadd.f32 0.0, %v11567
      %v11569 = vpop.f32.mrb[0].mxu0
      %v11570 = vpop.f32.mrb[0].mxu0
      %v11571 = vadd.f32 0.0, %v11570
      %v11572 = vpop.f32.mrb[0].mxu0
      %11573 = vmatprep.mubr.bf16.mxu0 0
      %11574 = vmatmul.mubr.bf16.gmra.mrb[0].mxu0 %v11220
      %v11575 = vpop.f32.mrb[0].mxu0
      %v11576 = vadd.f32 0.0, %v11575
      %v11577 = vpop.f32.mrb[0].mxu0
      %v11578 = vpop.f32.mrb[0].mxu0
      %v11579 = vadd.f32 0.0, %v11578
      %v11580 = vpop.f32.mrb[0].mxu0
      %11581 = vmatprep.mubr.bf16.mxu0 0
      %11582 = vmatmul.mubr.bf16.gmra.mrb[0].mxu0 %v11223
      %v11583 = vpop.f32.mrb[0].mxu0
      %v11584 = vadd.f32 0.0, %v11583
      %v11585 = vpop.f32.mrb[0].mxu0
      %v11586 = vpop.f32.mrb[0].mxu0
      %v11587 = vadd.f32 0.0, %v11586
      %v11588 = vpop.f32.mrb[0].mxu0
      %11589 = vmatprep.mubr.bf16.mxu0 0
      %11590 = vmatmul.mubr.bf16.gmra.mrb[0].mxu0 %v11226
      %v11591 = vpop.f32.mrb[0].mxu0
      %v11592 = vadd.f32 0.0, %v11591
      %v11593 = vpop.f32.mrb[0].mxu0
      %v11594 = vpop.f32.mrb[0].mxu0
      %v11595 = vadd.f32 0.0, %v11594
      %v11596 = vpop.f32.mrb[0].mxu0
      %11597 = vmatprep.mubr.bf16.mxu0 0
      %11598 = vmatmul.mubr.bf16.gmra.mrb[0].mxu0 %v11229
      %v11599 = vpop.f32.mrb[0].mxu0
      %v11600 = vadd.f32 0.0, %v11599
      %v11601 = vpop.f32.mrb[0].mxu0
      %v11602 = vpop.f32.mrb[0].mxu0
      %v11603 = vadd.f32 0.0, %v11602
      %v11604 = vpop.f32.mrb[0].mxu0
      %11605 = vmatprep.mubr.bf16.mxu0 0
      %11606 = vmatmul.mubr.bf16.gmra.mrb[0].mxu0 %v11232
      %v11607 = vpop.f32.mrb[0].mxu0
      %v11608 = vadd.f32 0.0, %v11607
      %v11609 = vpop.f32.mrb[0].mxu0
      %v11610 = vpop.f32.mrb[0].mxu0
      %v11611 = vadd.f32 0.0, %v11610
      %v11612 = vpop.f32.mrb[0].mxu0
      %11613 = vmatprep.mubr.bf16.mxu0 0
      %11614 = vmatmul.mubr.bf16.gmra.mrb[0].mxu0 %v11235
      %v11615 = vpop.f32.mrb[0].mxu0
      %v11616 = vadd.f32 0.0, %v11615
      %v11617 = vpop.f32.mrb[0].mxu0
      %v11618 = vpop.f32.mrb[0].mxu0
      %v11619 = vadd.f32 0.0, %v11618
      %v11620 = vpop.f32.mrb[0].mxu0
      %11621 = vmatprep.mubr.bf16.mxu0 0
      %11622 = vmatmul.mubr.bf16.gmra.mrb[0].mxu0 %v11238
      %v11623 = vpop.f32.mrb[0].mxu0
      %v11624 = vadd.f32 0.0, %v11623
      %v11625 = vpop.f32.mrb[0].mxu0
      %v11626 = vpop.f32.mrb[0].mxu0
      %v11627 = vadd.f32 0.0, %v11626
      %v11628 = vpop.f32.mrb[0].mxu0
      %11629 = vmatprep.mubr.bf16.mxu0 0
      %11630 = vmatmul.mubr.bf16.gmra.mrb[0].mxu0 %v11241
      %v11631 = vpop.f32.mrb[0].mxu0
      %v11632 = vadd.f32 0.0, %v11631
      %v11633 = vpop.f32.mrb[0].mxu0
      %v11634 = vpop.f32.mrb[0].mxu0
      %v11635 = vadd.f32 0.0, %v11634
      %v11636 = vpop.f32.mrb[0].mxu0
      %11637 = vmatprep.mubr.bf16.mxu0 0
      %11638 = vmatmul.mubr.bf16.gmra.mrb[0].mxu0 %v11244
      %v11639 = vpop.f32.mrb[0].mxu0
      %v11640 = vadd.f32 0.0, %v11639
      %v11641 = vpop.f32.mrb[0].mxu0
      %v11642 = vpop.f32.mrb[0].mxu0
      %v11643 = vadd.f32 0.0, %v11642
      %v11644 = vpop.f32.mrb[0].mxu0
      %11645 = vmatprep.mubr.bf16.mxu0 0
      %11646 = vmatmul.mubr.bf16.gmra.mrb[0].mxu0 %v11247
      %v11647 = vpop.f32.mrb[0].mxu0
      %v11648 = vadd.f32 0.0, %v11647
      %v11649 = vpop.f32.mrb[0].mxu0
      %v11650 = vpop.f32.mrb[0].mxu0
      %v11651 = vadd.f32 0.0, %v11650
      %v11652 = vpop.f32.mrb[0].mxu0
      %11653 = vmatprep.mubr.bf16.mxu0 0
      %11654 = vmatmul.mubr.bf16.gmra.mrb[0].mxu0 %v11250
      %v11655 = vpop.f32.mrb[0].mxu0
      %v11656 = vadd.f32 0.0, %v11655
      %v11657 = vpop.f32.mrb[0].mxu0
      %v11658 = vpop.f32.mrb[0].mxu0
      %v11659 = vadd.f32 0.0, %v11658
      %v11660 = vpop.f32.mrb[0].mxu0
      %11661 = vmatprep.mubr.bf16.mxu0 0
      %11662 = vmatmul.mubr.bf16.gmra.mrb[0].mxu0 %v11253
      %v11663 = vpop.f32.mrb[0].mxu0
      %v11664 = vadd.f32 0.0, %v11663
      %v11665 = vpop.f32.mrb[0].mxu0
      %v11666 = vpop.f32.mrb[0].mxu0
      %v11667 = vadd.f32 0.0, %v11666
      %v11668 = vpop.f32.mrb[0].mxu0
      %11669 = vmatprep.mubr.bf16.mxu0 0
      %11670 = vmatmul.mubr.bf16.gmra.mrb[0].mxu0 %v11256
      %v11671 = vpop.f32.mrb[0].mxu0
      %v11672 = vadd.f32 0.0, %v11671
      %v11673 = vpop.f32.mrb[0].mxu0
      %v11674 = vpop.f32.mrb[0].mxu0
      %v11675 = vadd.f32 0.0, %v11674
      %v11676 = vpop.f32.mrb[0].mxu0
      %11677 = vmatprep.mubr.bf16.mxu0 0
      %11678 = vmatmul.mubr.bf16.gmra.mrb[0].mxu0 %v11259
      %v11679 = vpop.f32.mrb[0].mxu0
      %v11680 = vadd.f32 0.0, %v11679
      %v11681 = vpop.f32.mrb[0].mxu0
      %v11682 = vpop.f32.mrb[0].mxu0
      %v11683 = vadd.f32 0.0, %v11682
      %v11684 = vpop.f32.mrb[0].mxu0
      %11685 = vmatprep.mubr.bf16.mxu0 0
      %11686 = vmatmul.mubr.bf16.gmra.mrb[0].mxu0 %v11262
      %v11687 = vpop.f32.mrb[0].mxu0
      %v11688 = vadd.f32 0.0, %v11687
      %v11689 = vpop.f32.mrb[0].mxu0
      %v11690 = vpop.f32.mrb[0].mxu0
      %v11691 = vadd.f32 0.0, %v11690
      %v11692 = vpop.f32.mrb[0].mxu0
      %11693 = vmatprep.mubr.bf16.mxu0 0
      %11694 = vmatmul.mubr.bf16.gmra.mrb[0].mxu0 %v11265
      %v11695 = vpop.f32.mrb[0].mxu0
      %v11696 = vadd.f32 0.0, %v11695
      %v11697 = vpop.f32.mrb[0].mxu0
      %v11698 = vpop.f32.mrb[0].mxu0
      %v11699 = vadd.f32 0.0, %v11698
      %v11700 = vpop.f32.mrb[0].mxu0
      %11701 = vmatprep.mubr.bf16.mxu0 0
      %11702 = vmatmul.mubr.bf16.gmra.mrb[0].mxu0 %v11268
      %v11703 = vpop.f32.mrb[0].mxu0
      %v11704 = vadd.f32 0.0, %v11703
      %v11705 = vpop.f32.mrb[0].mxu0
      %v11706 = vpop.f32.mrb[0].mxu0
      %v11707 = vadd.f32 0.0, %v11706
      %v11708 = vpop.f32.mrb[0].mxu0
      %11709 = vmatprep.mubr.bf16.mxu0 0
      %11710 = vmatmul.mubr.bf16.gmra.mrb[0].mxu0 %v11271
      %v11711 = vpop.f32.mrb[0].mxu0
      %v11712 = vadd.f32 0.0, %v11711
      %v11713 = vpop.f32.mrb[0].mxu0
      %v11714 = vpop.f32.mrb[0].mxu0
      %v11715 = vadd.f32 0.0, %v11714
      %v11716 = vpop.f32.mrb[0].mxu0
      %11717 = vmatprep.mubr.bf16.mxu0 0
      %11718 = vmatmul.mubr.bf16.gmra.mrb[0].mxu0 %v11274
      %v11719 = vpop.f32.mrb[0].mxu0
      %v11720 = vadd.f32 0.0, %v11719
      %v11721 = vpop.f32.mrb[0].mxu0
      %v11722 = vpop.f32.mrb[0].mxu0
      %v11723 = vadd.f32 0.0, %v11722
      %v11724 = vpop.f32.mrb[0].mxu0
      %11725 = vmatprep.mubr.bf16.mxu0 0
      %11726 = vmatmul.mubr.bf16.gmra.mrb[0].mxu0 %v11277
      %v11727 = vpop.f32.mrb[0].mxu0
      %v11728 = vadd.f32 0.0, %v11727
      %v11729 = vpop.f32.mrb[0].mxu0
      %v11730 = vpop.f32.mrb[0].mxu0
      %v11731 = vadd.f32 0.0, %v11730
      %v11732 = vpop.f32.mrb[0].mxu0
      %11733 = vmatprep.mubr.bf16.mxu0 0
      %11734 = vmatmul.mubr.bf16.gmra.mrb[0].mxu0 %v11280
      %v11735 = vpop.f32.mrb[0].mxu0
      %v11736 = vadd.f32 0.0, %v11735
      %v11737 = vpop.f32.mrb[0].mxu0
      %v11738 = vpop.f32.mrb[0].mxu0
      %v11739 = vadd.f32 0.0, %v11738
      %v11740 = vpop.f32.mrb[0].mxu0
      %11741 = vmatprep.mubr.bf16.mxu0 0
      %11742 = vmatmul.mubr.bf16.gmra.mrb[0].mxu0 %v11283
      %v11743 = vpop.f32.mrb[0].mxu0
      %v11744 = vadd.f32 0.0, %v11743
      %v11745 = vpop.f32.mrb[0].mxu0
      %v11746 = vpop.f32.mrb[0].mxu0
      %v11747 = vadd.f32 0.0, %v11746
      %v11748 = vpop.f32.mrb[0].mxu0
      %11749 = vmatprep.mubr.bf16.mxu0 0
      %11750 = vmatmul.mubr.bf16.gmra.mrb[0].mxu0 %v11286
      %v11751 = vpop.f32.mrb[0].mxu0
      %v11752 = vadd.f32 0.0, %v11751
      %v11753 = vpop.f32.mrb[0].mxu0
      %v11754 = vpop.f32.mrb[0].mxu0
      %v11755 = vadd.f32 0.0, %v11754
      %v11756 = vpop.f32.mrb[0].mxu0
      %11757 = vmatprep.mubr.bf16.mxu0 0
      %11758 = vmatmul.mubr.bf16.gmra.mrb[0].mxu0 %v11289
      %v11759 = vpop.f32.mrb[0].mxu0
      %v11760 = vadd.f32 0.0, %v11759
      %v11761 = vpop.f32.mrb[0].mxu0
      %v11762 = vpop.f32.mrb[0].mxu0
      %v11763 = vadd.f32 0.0, %v11762
      %v11764 = vpop.f32.mrb[0].mxu0
      %11765 = vmatprep.mubr.bf16.mxu0 0
      %11766 = vmatmul.mubr.bf16.gmra.mrb[0].mxu0 %v11292
      %v11767 = vpop.f32.mrb[0].mxu0
      %v11768 = vadd.f32 0.0, %v11767
      %v11769 = vpop.f32.mrb[0].mxu0
      %v11770 = vpop.f32.mrb[0].mxu0
      %v11771 = vadd.f32 0.0, %v11770
      %v11772 = vpop.f32.mrb[0].mxu0
      %11773 = vmatprep.mubr.bf16.mxu0 0
      %11774 = vmatmul.mubr.bf16.gmra.mrb[0].mxu0 %v11295
      %v11775 = vpop.f32.mrb[0].mxu0
      %v11776 = vadd.f32 0.0, %v11775
      %v11777 = vpop.f32.mrb[0].mxu0
      %v11778 = vpop.f32.mrb[0].mxu0
      %v11779 = vadd.f32 0.0, %v11778
      %v11780 = vpop.f32.mrb[0].mxu0
      %11781 = vmatprep.mubr.bf16.mxu0 0
      %11782 = vmatmul.mubr.bf16.gmra.mrb[0].mxu0 %v11298
      %v11783 = vpop.f32.mrb[0].mxu0
      %v11784 = vadd.f32 0.0, %v11783
      %v11785 = vpop.f32.mrb[0].mxu0
      %v11786 = vpop.f32.mrb[0].mxu0
      %v11787 = vadd.f32 0.0, %v11786
      %v11788 = vpop.f32.mrb[0].mxu0
      %11789 = vmatprep.mubr.bf16.mxu0 0
      %11790 = vmatmul.mubr.bf16.gmra.mrb[0].mxu0 %v11301
      %v11791 = vpop.f32.mrb[0].mxu0
      %v11792 = vadd.f32 0.0, %v11791
      %v11793 = vpop.f32.mrb[0].mxu0
      %v11794 = vpop.f32.mrb[0].mxu0
      %v11795 = vadd.f32 0.0, %v11794
      %v11796 = vpop.f32.mrb[0].mxu0
      %11797 = vmatprep.mubr.bf16.mxu0 0
      %11798 = vmatmul.mubr.bf16.gmra.mrb[0].mxu0 %v11304
      %v11799 = vpop.f32.mrb[0].mxu0
      %v11800 = vadd.f32 0.0, %v11799
      %v11801 = vpop.f32.mrb[0].mxu0
      %v11802 = vpop.f32.mrb[0].mxu0
      %v11803 = vadd.f32 0.0, %v11802
      %v11804 = vpop.f32.mrb[0].mxu0
      %11805 = vmatprep.mubr.bf16.mxu0 0
      %11806 = vmatmul.mubr.bf16.gmra.mrb[0].mxu0 %v11307
      %v11807 = vpop.f32.mrb[0].mxu0
      %v11808 = vadd.f32 0.0, %v11807
      %v11809 = vpop.f32.mrb[0].mxu0
      %v11810 = vpop.f32.mrb[0].mxu0
      %v11811 = vadd.f32 0.0, %v11810
      %v11812 = vpop.f32.mrb[0].mxu0
      %11813 = vmatprep.mubr.bf16.mxu0 0
      %11814 = vmatmul.mubr.bf16.gmra.mrb[0].mxu0 %v11310
      %v11815 = vpop.f32.mrb[0].mxu0
      %v11816 = vadd.f32 0.0, %v11815
      %v11817 = vpop.f32.mrb[0].mxu0
      %v11818 = vpop.f32.mrb[0].mxu0
      %v11819 = vadd.f32 0.0, %v11818
      %v11820 = vpop.f32.mrb[0].mxu0
      %11821 = vmatprep.mubr.bf16.mxu0 0
      %11822 = vmatmul.mubr.bf16.gmra.mrb[0].mxu0 %v11313
      %v11823 = vpop.f32.mrb[0].mxu0
      %v11824 = vadd.f32 0.0, %v11823
      %v11825 = vpop.f32.mrb[0].mxu0
      %v11826 = vpop.f32.mrb[0].mxu0
      %v11827 = vadd.f32 0.0, %v11826
      %v11828 = vpop.f32.mrb[0].mxu0
      %11829 = vmatprep.mubr.bf16.mxu0 0
      %11830 = vmatmul.mubr.bf16.gmra.mrb[0].mxu0 %v11316
      %v11831 = vpop.f32.mrb[0].mxu0
      %v11832 = vadd.f32 0.0, %v11831
      %v11833 = vpop.f32.mrb[0].mxu0
      %v11834 = vpop.f32.mrb[0].mxu0
      %v11835 = vadd.f32 0.0, %v11834
      %v11836 = vpop.f32.mrb[0].mxu0
      %11837 = vmatprep.mubr.bf16.mxu0 0
      %11838 = vmatmul.mubr.bf16.gmra.mrb[0].mxu0 %v11319
      %v11839 = vpop.f32.mrb[0].mxu0
      %v11840 = vadd.f32 0.0, %v11839
      %v11841 = vpop.f32.mrb[0].mxu0
      %v11842 = vpop.f32.mrb[0].mxu0
      %v11843 = vadd.f32 0.0, %v11842
      %v11844 = vpop.f32.mrb[0].mxu0
      %11845 = vmatprep.mubr.bf16.mxu0 0
      %11846 = vmatmul.mubr.bf16.gmra.mrb[0].mxu0 %v11322
      %v11847 = vpop.f32.mrb[0].mxu0
      %v11848 = vadd.f32 0.0, %v11847
      %v11849 = vpop.f32.mrb[0].mxu0
      %v11850 = vpop.f32.mrb[0].mxu0
      %v11851 = vadd.f32 0.0, %v11850
      %v11852 = vpop.f32.mrb[0].mxu0
      %11853 = vmatprep.mubr.bf16.mxu0 0
      %11854 = vmatmul.mubr.bf16.gmra.mrb[0].mxu0 %v11325
      %v11855 = vpop.f32.mrb[0].mxu0
      %v11856 = vadd.f32 0.0, %v11855
      %v11857 = vpop.f32.mrb[0].mxu0
      %v11858 = vpop.f32.mrb[0].mxu0
      %v11859 = vadd.f32 0.0, %v11858
      %v11860 = vpop.f32.mrb[0].mxu0
      %11861 = vmatprep.mubr.bf16.mxu0 0
      %11862 = vmatmul.mubr.bf16.gmra.mrb[0].mxu0 %v11328
      %v11863 = vpop.f32.mrb[0].mxu0
      %v11864 = vadd.f32 0.0, %v11863
      %v11865 = vpop.f32.mrb[0].mxu0
      %v11866 = vpop.f32.mrb[0].mxu0
      %v11867 = vadd.f32 0.0, %v11866
      %v11868 = vpop.f32.mrb[0].mxu0
      %11869 = vmatprep.mubr.bf16.mxu0 0
      %11870 = vmatmul.mubr.bf16.gmra.mrb[0].mxu0 %v11331
      %v11871 = vpop.f32.mrb[0].mxu0
      %v11872 = vadd.f32 0.0, %v11871
      %v11873 = vpop.f32.mrb[0].mxu0
      %v11874 = vpop.f32.mrb[0].mxu0
      %v11875 = vadd.f32 0.0, %v11874
      %v11876 = vpop.f32.mrb[0].mxu0
      %11877 = vmatprep.mubr.bf16.mxu0 0
      %11878 = vmatmul.mubr.bf16.gmra.mrb[0].mxu0 %v11334
      %v11879 = vpop.f32.mrb[0].mxu0
      %v11880 = vadd.f32 0.0, %v11879
      %v11881 = vpop.f32.mrb[0].mxu0
      %v11882 = vpop.f32.mrb[0].mxu0
      %v11883 = vadd.f32 0.0, %v11882
      %v11884 = vpop.f32.mrb[0].mxu0
      %11885 = vmatprep.mubr.bf16.mxu0 0
      %11886 = vmatmul.mubr.bf16.gmra.mrb[0].mxu0 %v11337
      %v11887 = vpop.f32.mrb[0].mxu0
      %v11888 = vadd.f32 0.0, %v11887
      %v11889 = vpop.f32.mrb[0].mxu0
      %v11890 = vpop.f32.mrb[0].mxu0
      %v11891 = vadd.f32 0.0, %v11890
      %v11892 = vpop.f32.mrb[0].mxu0
      %11893 = vmatprep.mubr.bf16.mxu0 0
      %11894 = vmatmul.mubr.bf16.gmra.mrb[0].mxu0 %v11340
      %v11895 = vpop.f32.mrb[0].mxu0
      %v11896 = vadd.f32 0.0, %v11895
      %v11897 = vpop.f32.mrb[0].mxu0
      %v11898 = vpop.f32.mrb[0].mxu0
      %v11899 = vadd.f32 0.0, %v11898
      %v11900 = vpop.f32.mrb[0].mxu0
      %11901 = vmatprep.mubr.bf16.mxu0 0
      %11902 = vmatmul.mubr.bf16.gmra.mrb[0].mxu0 %v11343
      %v11903 = vpop.f32.mrb[0].mxu0
      %v11904 = vadd.f32 0.0, %v11903
      %v11905 = vpop.f32.mrb[0].mxu0
      %v11906 = vpop.f32.mrb[0].mxu0
      %v11907 = vadd.f32 0.0, %v11906
      %v11908 = vpop.f32.mrb[0].mxu0
      %11909 = vmatprep.mubr.bf16.mxu0 0
      %11910 = vmatmul.mubr.bf16.gmra.mrb[0].mxu0 %v11346
      %v11911 = vpop.f32.mrb[0].mxu0
      %v11912 = vadd.f32 0.0, %v11911
      %v11913 = vpop.f32.mrb[0].mxu0
      %v11914 = vpop.f32.mrb[0].mxu0
      %v11915 = vadd.f32 0.0, %v11914
      %v11916 = vpop.f32.mrb[0].mxu0
      %11917 = vmatprep.mubr.bf16.mxu0 0
      %11918 = vmatmul.mubr.bf16.gmra.mrb[0].mxu0 %v11349
      %v11919 = vpop.f32.mrb[0].mxu0
      %v11920 = vadd.f32 0.0, %v11919
      %v11921 = vpop.f32.mrb[0].mxu0
      %v11922 = vpop.f32.mrb[0].mxu0
      %v11923 = vadd.f32 0.0, %v11922
      %v11924 = vpop.f32.mrb[0].mxu0
      %11925 = vmatprep.mubr.bf16.mxu0 0
      %11926 = vmatmul.mubr.bf16.gmra.mrb[0].mxu0 %v11352
      %v11927 = vpop.f32.mrb[0].mxu0
      %v11928 = vadd.f32 0.0, %v11927
      %v11929 = vpop.f32.mrb[0].mxu0
      %v11930 = vpop.f32.mrb[0].mxu0
      %v11931 = vadd.f32 0.0, %v11930
      %v11932 = vpop.f32.mrb[0].mxu0
      %11933 = vdwg.mxu0
      %v11934 = vadd.f32 %v10870, %v11392
      %v11935 = vadd.f32 %v10871, %v11395
      %v11936 = vadd.f32 %v10872, %v11400
      %v11937 = vadd.f32 %v10873, %v11403
      %v11938 = vadd.f32 %v10874, %v11408
      %v11939 = vadd.f32 %v10875, %v11411
      %v11940 = vadd.f32 %v10876, %v11416
      %v11941 = vadd.f32 %v10877, %v11419
      %v11942 = vadd.f32 %v10878, %v11424
      %v11943 = vadd.f32 %v10879, %v11427
      %v11944 = vadd.f32 %v10880, %v11432
      %v11945 = vadd.f32 %v10881, %v11435
      %v11946 = vadd.f32 %v10882, %v11440
      %v11947 = vadd.f32 %v10883, %v11443
      %v11948 = vadd.f32 %v10884, %v11448
      %v11949 = vadd.f32 %v10885, %v11451
      %v11950 = vadd.f32 %v10886, %v11456
      %v11951 = vadd.f32 %v10887, %v11459
      %v11952 = vadd.f32 %v10888, %v11464
      %v11953 = vadd.f32 %v10889, %v11467
      %v11954 = vadd.f32 %v10890, %v11472
      %v11955 = vadd.f32 %v10891, %v11475
      %v11956 = vadd.f32 %v10892, %v11480
      %v11957 = vadd.f32 %v10893, %v11483
      %v11958 = vadd.f32 %v10894, %v11488
      %v11959 = vadd.f32 %v10895, %v11491
      %v11960 = vadd.f32 %v10896, %v11496
      %v11961 = vadd.f32 %v10897, %v11499
      %v11962 = vadd.f32 %v10898, %v11504
      %v11963 = vadd.f32 %v10899, %v11507
      %v11964 = vadd.f32 %v10900, %v11512
      %v11965 = vadd.f32 %v10901, %v11515
      %v11966 = vadd.f32 %v10902, %v11520
      %v11967 = vadd.f32 %v10903, %v11523
      %v11968 = vadd.f32 %v10904, %v11528
      %v11969 = vadd.f32 %v10905, %v11531
      %v11970 = vadd.f32 %v10906, %v11536
      %v11971 = vadd.f32 %v10907, %v11539
      %v11972 = vadd.f32 %v10908, %v11544
      %v11973 = vadd.f32 %v10909, %v11547
      %v11974 = vadd.f32 %v10910, %v11552
      %v11975 = vadd.f32 %v10911, %v11555
      %v11976 = vadd.f32 %v10912, %v11560
      %v11977 = vadd.f32 %v10913, %v11563
      %v11978 = vadd.f32 %v10914, %v11568
      %v11979 = vadd.f32 %v10915, %v11571
      %v11980 = vadd.f32 %v10916, %v11576
      %v11981 = vadd.f32 %v10917, %v11579
      %v11982 = vadd.f32 %v10918, %v11584
      %v11983 = vadd.f32 %v10919, %v11587
      %v11984 = vadd.f32 %v10920, %v11592
      %v11985 = vadd.f32 %v10921, %v11595
      %v11986 = vadd.f32 %v10922, %v11600
      %v11987 = vadd.f32 %v10923, %v11603
      %v11988 = vadd.f32 %v10924, %v11608
      %v11989 = vadd.f32 %v10925, %v11611
      %v11990 = vadd.f32 %v10926, %v11616
      %v11991 = vadd.f32 %v10927, %v11619
      %v11992 = vadd.f32 %v10928, %v11624
      %v11993 = vadd.f32 %v10929, %v11627
      %v11994 = vadd.f32 %v10930, %v11632
      %v11995 = vadd.f32 %v10931, %v11635
      %v11996 = vadd.f32 %v10932, %v11640
      %v11997 = vadd.f32 %v10933, %v11643
      %v11998 = vadd.f32 %v10934, %v11648
      %v11999 = vadd.f32 %v10935, %v11651
      %v12000 = vadd.f32 %v10936, %v11656
      %v12001 = vadd.f32 %v10937, %v11659
      %v12002 = vadd.f32 %v10938, %v11664
      %v12003 = vadd.f32 %v10939, %v11667
      %v12004 = vadd.f32 %v10940, %v11672
      %v12005 = vadd.f32 %v10941, %v11675
      %v12006 = vadd.f32 %v10942, %v11680
      %v12007 = vadd.f32 %v10943, %v11683
      %v12008 = vadd.f32 %v10944, %v11688
      %v12009 = vadd.f32 %v10945, %v11691
      %v12010 = vadd.f32 %v10946, %v11696
      %v12011 = vadd.f32 %v10947, %v11699
      %v12012 = vadd.f32 %v10948, %v11704
      %v12013 = vadd.f32 %v10949, %v11707
      %v12014 = vadd.f32 %v10950, %v11712
      %v12015 = vadd.f32 %v10951, %v11715
      %v12016 = vadd.f32 %v10952, %v11720
      %v12017 = vadd.f32 %v10953, %v11723
      %v12018 = vadd.f32 %v10954, %v11728
      %v12019 = vadd.f32 %v10955, %v11731
      %v12020 = vadd.f32 %v10956, %v11736
      %v12021 = vadd.f32 %v10957, %v11739
      %v12022 = vadd.f32 %v10958, %v11744
      %v12023 = vadd.f32 %v10959, %v11747
      %v12024 = vadd.f32 %v10960, %v11752
      %v12025 = vadd.f32 %v10961, %v11755
      %v12026 = vadd.f32 %v10962, %v11760
      %v12027 = vadd.f32 %v10963, %v11763
      %v12028 = vadd.f32 %v10964, %v11768
      %v12029 = vadd.f32 %v10965, %v11771
      %v12030 = vadd.f32 %v10966, %v11776
      %v12031 = vadd.f32 %v10967, %v11779
      %v12032 = vadd.f32 %v10968, %v11784
      %v12033 = vadd.f32 %v10969, %v11787
      %v12034 = vadd.f32 %v10970, %v11792
      %v12035 = vadd.f32 %v10971, %v11795
      %v12036 = vadd.f32 %v10972, %v11800
      %v12037 = vadd.f32 %v10973, %v11803
      %v12038 = vadd.f32 %v10974, %v11808
      %v12039 = vadd.f32 %v10975, %v11811
      %v12040 = vadd.f32 %v10976, %v11816
      %v12041 = vadd.f32 %v10977, %v11819
      %v12042 = vadd.f32 %v10978, %v11824
      %v12043 = vadd.f32 %v10979, %v11827
      %v12044 = vadd.f32 %v10980, %v11832
      %v12045 = vadd.f32 %v10981, %v11835
      %v12046 = vadd.f32 %v10982, %v11840
      %v12047 = vadd.f32 %v10983, %v11843
      %v12048 = vadd.f32 %v10984, %v11848
      %v12049 = vadd.f32 %v10985, %v11851
      %v12050 = vadd.f32 %v10986, %v11856
      %v12051 = vadd.f32 %v10987, %v11859
      %v12052 = vadd.f32 %v10988, %v11864
      %v12053 = vadd.f32 %v10989, %v11867
      %v12054 = vadd.f32 %v10990, %v11872
      %v12055 = vadd.f32 %v10991, %v11875
      %v12056 = vadd.f32 %v10992, %v11880
      %v12057 = vadd.f32 %v10993, %v11883
      %v12058 = vadd.f32 %v10994, %v11888
      %v12059 = vadd.f32 %v10995, %v11891
      %v12060 = vadd.f32 %v10996, %v11896
      %v12061 = vadd.f32 %v10997, %v11899
      %v12062 = vadd.f32 %v10998, %v11904
      %v12063 = vadd.f32 %v10999, %v11907
      %v12064 = vadd.f32 %v11000, %v11912
      %v12065 = vadd.f32 %v11001, %v11915
      %v12066 = vadd.f32 %v11002, %v11920
      %v12067 = vadd.f32 %v11003, %v11923
      %v12068 = vadd.f32 %v11004, %v11928
      %v12069 = vadd.f32 %v11005, %v11931
      %v12070 = vld [vmem:[%s2] sm:$0x1]
      %v12072 = vlaneseq
      %v12073 = vshrl.u32 %v12072, 7
      %v12074 = vsub.s32 0, %v12073
      %v12075 = vrot.slane %v12070, %v12074
      %v12077 = vadd.f32 %v11934, %v12075
      %v12078 = vadd.f32 %v11935, %v12075
      %v12079 = vadd.f32 %v11936, %v12075
      %v12080 = vadd.f32 %v11937, %v12075
      %v12081 = vadd.f32 %v11938, %v12075
      %v12082 = vadd.f32 %v11939, %v12075
      %v12083 = vadd.f32 %v11940, %v12075
      %v12084 = vadd.f32 %v11941, %v12075
      %v12085 = vadd.f32 %v11942, %v12075
      %v12086 = vadd.f32 %v11943, %v12075
      %v12087 = vadd.f32 %v11944, %v12075
      %v12088 = vadd.f32 %v11945, %v12075
      %v12089 = vadd.f32 %v11946, %v12075
      %v12090 = vadd.f32 %v11947, %v12075
      %v12091 = vadd.f32 %v11948, %v12075
      %v12092 = vadd.f32 %v11949, %v12075
      %v12093 = vadd.f32 %v11950, %v12075
      %v12094 = vadd.f32 %v11951, %v12075
      %v12095 = vadd.f32 %v11952, %v12075
      %v12096 = vadd.f32 %v11953, %v12075
      %v12097 = vadd.f32 %v11954, %v12075
      %v12098 = vadd.f32 %v11955, %v12075
      %v12099 = vadd.f32 %v11956, %v12075
      %v12100 = vadd.f32 %v11957, %v12075
      %v12101 = vadd.f32 %v11958, %v12075
      %v12102 = vadd.f32 %v11959, %v12075
      %v12103 = vadd.f32 %v11960, %v12075
      %v12104 = vadd.f32 %v11961, %v12075
      %v12105 = vadd.f32 %v11962, %v12075
      %v12106 = vadd.f32 %v11963, %v12075
      %v12107 = vadd.f32 %v11964, %v12075
      %v12108 = vadd.f32 %v11965, %v12075
      %v12109 = vadd.f32 %v11966, %v12075
      %v12110 = vadd.f32 %v11967, %v12075
      %v12111 = vadd.f32 %v11968, %v12075
      %v12112 = vadd.f32 %v11969, %v12075
      %v12113 = vadd.f32 %v11970, %v12075
      %v12114 = vadd.f32 %v11971, %v12075
      %v12115 = vadd.f32 %v11972, %v12075
      %v12116 = vadd.f32 %v11973, %v12075
      %v12117 = vadd.f32 %v11974, %v12075
      %v12118 = vadd.f32 %v11975, %v12075
      %v12119 = vadd.f32 %v11976, %v12075
      %v12120 = vadd.f32 %v11977, %v12075
      %v12121 = vadd.f32 %v11978, %v12075
      %v12122 = vadd.f32 %v11979, %v12075
      %v12123 = vadd.f32 %v11980, %v12075
      %v12124 = vadd.f32 %v11981, %v12075
      %v12125 = vadd.f32 %v11982, %v12075
      %v12126 = vadd.f32 %v11983, %v12075
      %v12127 = vadd.f32 %v11984, %v12075
      %v12128 = vadd.f32 %v11985, %v12075
      %v12129 = vadd.f32 %v11986, %v12075
      %v12130 = vadd.f32 %v11987, %v12075
      %v12131 = vadd.f32 %v11988, %v12075
      %v12132 = vadd.f32 %v11989, %v12075
      %v12133 = vadd.f32 %v11990, %v12075
      %v12134 = vadd.f32 %v11991, %v12075
      %v12135 = vadd.f32 %v11992, %v12075
      %v12136 = vadd.f32 %v11993, %v12075
      %v12137 = vadd.f32 %v11994, %v12075
      %v12138 = vadd.f32 %v11995, %v12075
      %v12139 = vadd.f32 %v11996, %v12075
      %v12140 = vadd.f32 %v11997, %v12075
      %v12141 = vadd.f32 %v11998, %v12075
      %v12142 = vadd.f32 %v11999, %v12075
      %v12143 = vadd.f32 %v12000, %v12075
      %v12144 = vadd.f32 %v12001, %v12075
      %v12145 = vadd.f32 %v12002, %v12075
      %v12146 = vadd.f32 %v12003, %v12075
      %v12147 = vadd.f32 %v12004, %v12075
      %v12148 = vadd.f32 %v12005, %v12075
      %v12149 = vadd.f32 %v12006, %v12075
      %v12150 = vadd.f32 %v12007, %v12075
      %v12151 = vadd.f32 %v12008, %v12075
      %v12152 = vadd.f32 %v12009, %v12075
      %v12153 = vadd.f32 %v12010, %v12075
      %v12154 = vadd.f32 %v12011, %v12075
      %v12155 = vadd.f32 %v12012, %v12075
      %v12156 = vadd.f32 %v12013, %v12075
      %v12157 = vadd.f32 %v12014, %v12075
      %v12158 = vadd.f32 %v12015, %v12075
      %v12159 = vadd.f32 %v12016, %v12075
      %v12160 = vadd.f32 %v12017, %v12075
      %v12161 = vadd.f32 %v12018, %v12075
      %v12162 = vadd.f32 %v12019, %v12075
      %v12163 = vadd.f32 %v12020, %v12075
      %v12164 = vadd.f32 %v12021, %v12075
      %v12165 = vadd.f32 %v12022, %v12075
      %v12166 = vadd.f32 %v12023, %v12075
      %v12167 = vadd.f32 %v12024, %v12075
      %v12168 = vadd.f32 %v12025, %v12075
      %v12169 = vadd.f32 %v12026, %v12075
      %v12170 = vadd.f32 %v12027, %v12075
      %v12171 = vadd.f32 %v12028, %v12075
      %v12172 = vadd.f32 %v12029, %v12075
      %v12173 = vadd.f32 %v12030, %v12075
      %v12174 = vadd.f32 %v12031, %v12075
      %v12175 = vadd.f32 %v12032, %v12075
      %v12176 = vadd.f32 %v12033, %v12075
      %v12177 = vadd.f32 %v12034, %v12075
      %v12178 = vadd.f32 %v12035, %v12075
      %v12179 = vadd.f32 %v12036, %v12075
      %v12180 = vadd.f32 %v12037, %v12075
      %v12181 = vadd.f32 %v12038, %v12075
      %v12182 = vadd.f32 %v12039, %v12075
      %v12183 = vadd.f32 %v12040, %v12075
      %v12184 = vadd.f32 %v12041, %v12075
      %v12185 = vadd.f32 %v12042, %v12075
      %v12186 = vadd.f32 %v12043, %v12075
      %v12187 = vadd.f32 %v12044, %v12075
      %v12188 = vadd.f32 %v12045, %v12075
      %v12189 = vadd.f32 %v12046, %v12075
      %v12190 = vadd.f32 %v12047, %v12075
      %v12191 = vadd.f32 %v12048, %v12075
      %v12192 = vadd.f32 %v12049, %v12075
      %v12193 = vadd.f32 %v12050, %v12075
      %v12194 = vadd.f32 %v12051, %v12075
      %v12195 = vadd.f32 %v12052, %v12075
      %v12196 = vadd.f32 %v12053, %v12075
      %v12197 = vadd.f32 %v12054, %v12075
      %v12198 = vadd.f32 %v12055, %v12075
      %v12199 = vadd.f32 %v12056, %v12075
      %v12200 = vadd.f32 %v12057, %v12075
      %v12201 = vadd.f32 %v12058, %v12075
      %v12202 = vadd.f32 %v12059, %v12075
      %v12203 = vadd.f32 %v12060, %v12075
      %v12204 = vadd.f32 %v12061, %v12075
      %v12205 = vadd.f32 %v12062, %v12075
      %v12206 = vadd.f32 %v12063, %v12075
      %v12207 = vadd.f32 %v12064, %v12075
      %v12208 = vadd.f32 %v12065, %v12075
      %v12209 = vadd.f32 %v12066, %v12075
      %v12210 = vadd.f32 %v12067, %v12075
      %v12211 = vadd.f32 %v12068, %v12075
      %v12212 = vadd.f32 %v12069, %v12075
      %v12213 = vmax.f32 %v12077, 0.0
      %v12214 = vmax.f32 %v12078, 0.0
      %v12215 = vmax.f32 %v12079, 0.0
      %v12216 = vmax.f32 %v12080, 0.0
      %v12217 = vmax.f32 %v12081, 0.0
      %v12218 = vmax.f32 %v12082, 0.0
      %v12219 = vmax.f32 %v12083, 0.0
      %v12220 = vmax.f32 %v12084, 0.0
      %v12221 = vmax.f32 %v12085, 0.0
      %v12222 = vmax.f32 %v12086, 0.0
      %v12223 = vmax.f32 %v12087, 0.0
      %v12224 = vmax.f32 %v12088, 0.0
      %v12225 = vmax.f32 %v12089, 0.0
      %v12226 = vmax.f32 %v12090, 0.0
      %v12227 = vmax.f32 %v12091, 0.0
      %v12228 = vmax.f32 %v12092, 0.0
      %v12229 = vmax.f32 %v12093, 0.0
      %v12230 = vmax.f32 %v12094, 0.0
      %v12231 = vmax.f32 %v12095, 0.0
      %v12232 = vmax.f32 %v12096, 0.0
      %v12233 = vmax.f32 %v12097, 0.0
      %v12234 = vmax.f32 %v12098, 0.0
      %v12235 = vmax.f32 %v12099, 0.0
      %v12236 = vmax.f32 %v12100, 0.0
      %v12237 = vmax.f32 %v12101, 0.0
      %v12238 = vmax.f32 %v12102, 0.0
      %v12239 = vmax.f32 %v12103, 0.0
      %v12240 = vmax.f32 %v12104, 0.0
      %v12241 = vmax.f32 %v12105, 0.0
      %v12242 = vmax.f32 %v12106, 0.0
      %v12243 = vmax.f32 %v12107, 0.0
      %v12244 = vmax.f32 %v12108, 0.0
      %v12245 = vmax.f32 %v12109, 0.0
      %v12246 = vmax.f32 %v12110, 0.0
      %v12247 = vmax.f32 %v12111, 0.0
      %v12248 = vmax.f32 %v12112, 0.0
      %v12249 = vmax.f32 %v12113, 0.0
      %v12250 = vmax.f32 %v12114, 0.0
      %v12251 = vmax.f32 %v12115, 0.0
      %v12252 = vmax.f32 %v12116, 0.0
      %v12253 = vmax.f32 %v12117, 0.0
      %v12254 = vmax.f32 %v12118, 0.0
      %v12255 = vmax.f32 %v12119, 0.0
      %v12256 = vmax.f32 %v12120, 0.0
      %v12257 = vmax.f32 %v12121, 0.0
      %v12258 = vmax.f32 %v12122, 0.0
      %v12259 = vmax.f32 %v12123, 0.0
      %v12260 = vmax.f32 %v12124, 0.0
      %v12261 = vmax.f32 %v12125, 0.0
      %v12262 = vmax.f32 %v12126, 0.0
      %v12263 = vmax.f32 %v12127, 0.0
      %v12264 = vmax.f32 %v12128, 0.0
      %v12265 = vmax.f32 %v12129, 0.0
      %v12266 = vmax.f32 %v12130, 0.0
      %v12267 = vmax.f32 %v12131, 0.0
      %v12268 = vmax.f32 %v12132, 0.0
      %v12269 = vmax.f32 %v12133, 0.0
      %v12270 = vmax.f32 %v12134, 0.0
      %v12271 = vmax.f32 %v12135, 0.0
      %v12272 = vmax.f32 %v12136, 0.0
      %v12273 = vmax.f32 %v12137, 0.0
      %v12274 = vmax.f32 %v12138, 0.0
      %v12275 = vmax.f32 %v12139, 0.0
      %v12276 = vmax.f32 %v12140, 0.0
      %v12277 = vmax.f32 %v12141, 0.0
      %v12278 = vmax.f32 %v12142, 0.0
      %v12279 = vmax.f32 %v12143, 0.0
      %v12280 = vmax.f32 %v12144, 0.0
      %v12281 = vmax.f32 %v12145, 0.0
      %v12282 = vmax.f32 %v12146, 0.0
      %v12283 = vmax.f32 %v12147, 0.0
      %v12284 = vmax.f32 %v12148, 0.0
      %v12285 = vmax.f32 %v12149, 0.0
      %v12286 = vmax.f32 %v12150, 0.0
      %v12287 = vmax.f32 %v12151, 0.0
      %v12288 = vmax.f32 %v12152, 0.0
      %v12289 = vmax.f32 %v12153, 0.0
      %v12290 = vmax.f32 %v12154, 0.0
      %v12291 = vmax.f32 %v12155, 0.0
      %v12292 = vmax.f32 %v12156, 0.0
      %v12293 = vmax.f32 %v12157, 0.0
      %v12294 = vmax.f32 %v12158, 0.0
      %v12295 = vmax.f32 %v12159, 0.0
      %v12296 = vmax.f32 %v12160, 0.0
      %v12297 = vmax.f32 %v12161, 0.0
      %v12298 = vmax.f32 %v12162, 0.0
      %v12299 = vmax.f32 %v12163, 0.0
      %v12300 = vmax.f32 %v12164, 0.0
      %v12301 = vmax.f32 %v12165, 0.0
      %v12302 = vmax.f32 %v12166, 0.0
      %v12303 = vmax.f32 %v12167, 0.0
      %v12304 = vmax.f32 %v12168, 0.0
      %v12305 = vmax.f32 %v12169, 0.0
      %v12306 = vmax.f32 %v12170, 0.0
      %v12307 = vmax.f32 %v12171, 0.0
      %v12308 = vmax.f32 %v12172, 0.0
      %v12309 = vmax.f32 %v12173, 0.0
      %v12310 = vmax.f32 %v12174, 0.0
      %v12311 = vmax.f32 %v12175, 0.0
      %v12312 = vmax.f32 %v12176, 0.0
      %v12313 = vmax.f32 %v12177, 0.0
      %v12314 = vmax.f32 %v12178, 0.0
      %v12315 = vmax.f32 %v12179, 0.0
      %v12316 = vmax.f32 %v12180, 0.0
      %v12317 = vmax.f32 %v12181, 0.0
      %v12318 = vmax.f32 %v12182, 0.0
      %v12319 = vmax.f32 %v12183, 0.0
      %v12320 = vmax.f32 %v12184, 0.0
      %v12321 = vmax.f32 %v12185, 0.0
      %v12322 = vmax.f32 %v12186, 0.0
      %v12323 = vmax.f32 %v12187, 0.0
      %v12324 = vmax.f32 %v12188, 0.0
      %v12325 = vmax.f32 %v12189, 0.0
      %v12326 = vmax.f32 %v12190, 0.0
      %v12327 = vmax.f32 %v12191, 0.0
      %v12328 = vmax.f32 %v12192, 0.0
      %v12329 = vmax.f32 %v12193, 0.0
      %v12330 = vmax.f32 %v12194, 0.0
      %v12331 = vmax.f32 %v12195, 0.0
      %v12332 = vmax.f32 %v12196, 0.0
      %v12333 = vmax.f32 %v12197, 0.0
      %v12334 = vmax.f32 %v12198, 0.0
      %v12335 = vmax.f32 %v12199, 0.0
      %v12336 = vmax.f32 %v12200, 0.0
      %v12337 = vmax.f32 %v12201, 0.0
      %v12338 = vmax.f32 %v12202, 0.0
      %v12339 = vmax.f32 %v12203, 0.0
      %v12340 = vmax.f32 %v12204, 0.0
      %v12341 = vmax.f32 %v12205, 0.0
      %v12342 = vmax.f32 %v12206, 0.0
      %v12343 = vmax.f32 %v12207, 0.0
      %v12344 = vmax.f32 %v12208, 0.0
      %v12345 = vmax.f32 %v12209, 0.0
      %v12346 = vmax.f32 %v12210, 0.0
      %v12347 = vmax.f32 %v12211, 0.0
      %v12348 = vmax.f32 %v12212, 0.0
      %v12349 = vpack.c.bf16 %v12214, %v12213
      %v12350 = vpack.c.bf16 %v12216, %v12215
      %v12351 = vpack.c.bf16 %v12218, %v12217
      %v12352 = vpack.c.bf16 %v12220, %v12219
      %v12353 = vpack.c.bf16 %v12222, %v12221
      %v12354 = vpack.c.bf16 %v12224, %v12223
      %v12355 = vpack.c.bf16 %v12226, %v12225
      %v12356 = vpack.c.bf16 %v12228, %v12227
      %v12357 = vpack.c.bf16 %v12230, %v12229
      %v12358 = vpack.c.bf16 %v12232, %v12231
      %v12359 = vpack.c.bf16 %v12234, %v12233
      %v12360 = vpack.c.bf16 %v12236, %v12235
      %v12361 = vpack.c.bf16 %v12238, %v12237
      %v12362 = vpack.c.bf16 %v12240, %v12239
      %v12363 = vpack.c.bf16 %v12242, %v12241
      %v12364 = vpack.c.bf16 %v12244, %v12243
      %v12365 = vpack.c.bf16 %v12246, %v12245
      %v12366 = vpack.c.bf16 %v12248, %v12247
      %v12367 = vpack.c.bf16 %v12250, %v12249
      %v12368 = vpack.c.bf16 %v12252, %v12251
      %v12369 = vpack.c.bf16 %v12254, %v12253
      %v12370 = vpack.c.bf16 %v12256, %v12255
      %v12371 = vpack.c.bf16 %v12258, %v12257
      %v12372 = vpack.c.bf16 %v12260, %v12259
      %v12373 = vpack.c.bf16 %v12262, %v12261
      %v12374 = vpack.c.bf16 %v12264, %v12263
      %v12375 = vpack.c.bf16 %v12266, %v12265
      %v12376 = vpack.c.bf16 %v12268, %v12267
      %v12377 = vpack.c.bf16 %v12270, %v12269
      %v12378 = vpack.c.bf16 %v12272, %v12271
      %v12379 = vpack.c.bf16 %v12274, %v12273
      %v12380 = vpack.c.bf16 %v12276, %v12275
      %v12381 = vpack.c.bf16 %v12278, %v12277
      %v12382 = vpack.c.bf16 %v12280, %v12279
      %v12383 = vpack.c.bf16 %v12282, %v12281
      %v12384 = vpack.c.bf16 %v12284, %v12283
      %v12385 = vpack.c.bf16 %v12286, %v12285
      %v12386 = vpack.c.bf16 %v12288, %v12287
      %v12387 = vpack.c.bf16 %v12290, %v12289
      %v12388 = vpack.c.bf16 %v12292, %v12291
      %v12389 = vpack.c.bf16 %v12294, %v12293
      %v12390 = vpack.c.bf16 %v12296, %v12295
      %v12391 = vpack.c.bf16 %v12298, %v12297
      %v12392 = vpack.c.bf16 %v12300, %v12299
      %v12393 = vpack.c.bf16 %v12302, %v12301
      %v12394 = vpack.c.bf16 %v12304, %v12303
      %v12395 = vpack.c.bf16 %v12306, %v12305
      %v12396 = vpack.c.bf16 %v12308, %v12307
      %v12397 = vpack.c.bf16 %v12310, %v12309
      %v12398 = vpack.c.bf16 %v12312, %v12311
      %v12399 = vpack.c.bf16 %v12314, %v12313
      %v12400 = vpack.c.bf16 %v12316, %v12315
      %v12401 = vpack.c.bf16 %v12318, %v12317
      %v12402 = vpack.c.bf16 %v12320, %v12319
      %v12403 = vpack.c.bf16 %v12322, %v12321
      %v12404 = vpack.c.bf16 %v12324, %v12323
      %v12405 = vpack.c.bf16 %v12326, %v12325
      %v12406 = vpack.c.bf16 %v12328, %v12327
      %v12407 = vpack.c.bf16 %v12330, %v12329
      %v12408 = vpack.c.bf16 %v12332, %v12331
      %v12409 = vpack.c.bf16 %v12334, %v12333
      %v12410 = vpack.c.bf16 %v12336, %v12335
      %v12411 = vpack.c.bf16 %v12338, %v12337
      %v12412 = vpack.c.bf16 %v12340, %v12339
      %v12413 = vpack.c.bf16 %v12342, %v12341
      %v12414 = vpack.c.bf16 %v12344, %v12343
      %v12415 = vpack.c.bf16 %v12346, %v12345
      %v12416 = vpack.c.bf16 %v12348, %v12347
      %v12485 = vunpack.c.l.b16 %v12349
      %v12486 = vunpack.c.h.b16 %v12349
      %v12487 = vunpack.c.l.b16 %v12350
      %v12488 = vunpack.c.h.b16 %v12350
      %v12489 = vunpack.c.l.b16 %v12351
      %v12490 = vunpack.c.h.b16 %v12351
      %v12491 = vunpack.c.l.b16 %v12352
      %v12492 = vunpack.c.h.b16 %v12352
      %v12493 = vunpack.c.l.b16 %v12353
      %v12494 = vunpack.c.h.b16 %v12353
      %v12495 = vunpack.c.l.b16 %v12354
      %v12496 = vunpack.c.h.b16 %v12354
      %v12497 = vunpack.c.l.b16 %v12355
      %v12498 = vunpack.c.h.b16 %v12355
      %v12499 = vunpack.c.l.b16 %v12356
      %v12500 = vunpack.c.h.b16 %v12356
      %v12501 = vunpack.c.l.b16 %v12357
      %v12502 = vunpack.c.h.b16 %v12357
      %v12503 = vunpack.c.l.b16 %v12358
      %v12504 = vunpack.c.h.b16 %v12358
      %v12505 = vunpack.c.l.b16 %v12359
      %v12506 = vunpack.c.h.b16 %v12359
      %v12507 = vunpack.c.l.b16 %v12360
      %v12508 = vunpack.c.h.b16 %v12360
      %v12509 = vunpack.c.l.b16 %v12361
      %v12510 = vunpack.c.h.b16 %v12361
      %v12511 = vunpack.c.l.b16 %v12362
      %v12512 = vunpack.c.h.b16 %v12362
      %v12513 = vunpack.c.l.b16 %v12363
      %v12514 = vunpack.c.h.b16 %v12363
      %v12515 = vunpack.c.l.b16 %v12364
      %v12516 = vunpack.c.h.b16 %v12364
      %v12517 = vunpack.c.l.b16 %v12365
      %v12518 = vunpack.c.h.b16 %v12365
      %v12519 = vunpack.c.l.b16 %v12366
      %v12520 = vunpack.c.h.b16 %v12366
      %v12521 = vunpack.c.l.b16 %v12367
      %v12522 = vunpack.c.h.b16 %v12367
      %v12523 = vunpack.c.l.b16 %v12368
      %v12524 = vunpack.c.h.b16 %v12368
      %v12525 = vunpack.c.l.b16 %v12369
      %v12526 = vunpack.c.h.b16 %v12369
      %v12527 = vunpack.c.l.b16 %v12370
      %v12528 = vunpack.c.h.b16 %v12370
      %v12529 = vunpack.c.l.b16 %v12371
      %v12530 = vunpack.c.h.b16 %v12371
      %v12531 = vunpack.c.l.b16 %v12372
      %v12532 = vunpack.c.h.b16 %v12372
      %v12533 = vunpack.c.l.b16 %v12373
      %v12534 = vunpack.c.h.b16 %v12373
      %v12535 = vunpack.c.l.b16 %v12374
      %v12536 = vunpack.c.h.b16 %v12374
      %v12537 = vunpack.c.l.b16 %v12375
      %v12538 = vunpack.c.h.b16 %v12375
      %v12539 = vunpack.c.l.b16 %v12376
      %v12540 = vunpack.c.h.b16 %v12376
      %v12541 = vunpack.c.l.b16 %v12377
      %v12542 = vunpack.c.h.b16 %v12377
      %v12543 = vunpack.c.l.b16 %v12378
      %v12544 = vunpack.c.h.b16 %v12378
      %v12545 = vunpack.c.l.b16 %v12379
      %v12546 = vunpack.c.h.b16 %v12379
      %v12547 = vunpack.c.l.b16 %v12380
      %v12548 = vunpack.c.h.b16 %v12380
      %v12549 = vunpack.c.l.b16 %v12381
      %v12550 = vunpack.c.h.b16 %v12381
      %v12551 = vunpack.c.l.b16 %v12382
      %v12552 = vunpack.c.h.b16 %v12382
      %v12553 = vunpack.c.l.b16 %v12383
      %v12554 = vunpack.c.h.b16 %v12383
      %v12555 = vunpack.c.l.b16 %v12384
      %v12556 = vunpack.c.h.b16 %v12384
      %v12557 = vunpack.c.l.b16 %v12385
      %v12558 = vunpack.c.h.b16 %v12385
      %v12559 = vunpack.c.l.b16 %v12386
      %v12560 = vunpack.c.h.b16 %v12386
      %v12561 = vunpack.c.l.b16 %v12387
      %v12562 = vunpack.c.h.b16 %v12387
      %v12563 = vunpack.c.l.b16 %v12388
      %v12564 = vunpack.c.h.b16 %v12388
      %v12565 = vunpack.c.l.b16 %v12389
      %v12566 = vunpack.c.h.b16 %v12389
      %v12567 = vunpack.c.l.b16 %v12390
      %v12568 = vunpack.c.h.b16 %v12390
      %v12569 = vunpack.c.l.b16 %v12391
      %v12570 = vunpack.c.h.b16 %v12391
      %v12571 = vunpack.c.l.b16 %v12392
      %v12572 = vunpack.c.h.b16 %v12392
      %v12573 = vunpack.c.l.b16 %v12393
      %v12574 = vunpack.c.h.b16 %v12393
      %v12575 = vunpack.c.l.b16 %v12394
      %v12576 = vunpack.c.h.b16 %v12394
      %v12577 = vunpack.c.l.b16 %v12395
      %v12578 = vunpack.c.h.b16 %v12395
      %v12579 = vunpack.c.l.b16 %v12396
      %v12580 = vunpack.c.h.b16 %v12396
      %v12581 = vunpack.c.l.b16 %v12397
      %v12582 = vunpack.c.h.b16 %v12397
      %v12583 = vunpack.c.l.b16 %v12398
      %v12584 = vunpack.c.h.b16 %v12398
      %v12585 = vunpack.c.l.b16 %v12399
      %v12586 = vunpack.c.h.b16 %v12399
      %v12587 = vunpack.c.l.b16 %v12400
      %v12588 = vunpack.c.h.b16 %v12400
      %v12589 = vunpack.c.l.b16 %v12401
      %v12590 = vunpack.c.h.b16 %v12401
      %v12591 = vunpack.c.l.b16 %v12402
      %v12592 = vunpack.c.h.b16 %v12402
      %v12593 = vunpack.c.l.b16 %v12403
      %v12594 = vunpack.c.h.b16 %v12403
      %v12595 = vunpack.c.l.b16 %v12404
      %v12596 = vunpack.c.h.b16 %v12404
      %v12597 = vunpack.c.l.b16 %v12405
      %v12598 = vunpack.c.h.b16 %v12405
      %v12599 = vunpack.c.l.b16 %v12406
      %v12600 = vunpack.c.h.b16 %v12406
      %v12601 = vunpack.c.l.b16 %v12407
      %v12602 = vunpack.c.h.b16 %v12407
      %v12603 = vunpack.c.l.b16 %v12408
      %v12604 = vunpack.c.h.b16 %v12408
      %v12605 = vunpack.c.l.b16 %v12409
      %v12606 = vunpack.c.h.b16 %v12409
      %v12607 = vunpack.c.l.b16 %v12410
      %v12608 = vunpack.c.h.b16 %v12410
      %v12609 = vunpack.c.l.b16 %v12411
      %v12610 = vunpack.c.h.b16 %v12411
      %v12611 = vunpack.c.l.b16 %v12412
      %v12612 = vunpack.c.h.b16 %v12412
      %v12613 = vunpack.c.l.b16 %v12413
      %v12614 = vunpack.c.h.b16 %v12413
      %v12615 = vunpack.c.l.b16 %v12414
      %v12616 = vunpack.c.h.b16 %v12414
      %v12617 = vunpack.c.l.b16 %v12415
      %v12618 = vunpack.c.h.b16 %v12415
      %v12619 = vunpack.c.l.b16 %v12416
      %v12620 = vunpack.c.h.b16 %v12416
      %v12621 = vpack.c.b16 %v12485, %v12485
      %v12622 = vpack.c.b16 %v12486, %v12486
      %v12623 = vpack.c.b16 %v12487, %v12487
      %v12624 = vpack.c.b16 %v12488, %v12488
      %v12625 = vpack.c.b16 %v12489, %v12489
      %v12626 = vpack.c.b16 %v12490, %v12490
      %v12627 = vpack.c.b16 %v12491, %v12491
      %v12628 = vpack.c.b16 %v12492, %v12492
      %v12629 = vpack.c.b16 %v12493, %v12493
      %v12630 = vpack.c.b16 %v12494, %v12494
      %v12631 = vpack.c.b16 %v12495, %v12495
      %v12632 = vpack.c.b16 %v12496, %v12496
      %v12633 = vpack.c.b16 %v12497, %v12497
      %v12634 = vpack.c.b16 %v12498, %v12498
      %v12635 = vpack.c.b16 %v12499, %v12499
      %v12636 = vpack.c.b16 %v12500, %v12500
      %v12637 = vpack.c.b16 %v12501, %v12501
      %v12638 = vpack.c.b16 %v12502, %v12502
      %v12639 = vpack.c.b16 %v12503, %v12503
      %v12640 = vpack.c.b16 %v12504, %v12504
      %v12641 = vpack.c.b16 %v12505, %v12505
      %v12642 = vpack.c.b16 %v12506, %v12506
      %v12643 = vpack.c.b16 %v12507, %v12507
      %v12644 = vpack.c.b16 %v12508, %v12508
      %v12645 = vpack.c.b16 %v12509, %v12509
      %v12646 = vpack.c.b16 %v12510, %v12510
      %v12647 = vpack.c.b16 %v12511, %v12511
      %v12648 = vpack.c.b16 %v12512, %v12512
      %v12649 = vpack.c.b16 %v12513, %v12513
      %v12650 = vpack.c.b16 %v12514, %v12514
      %v12651 = vpack.c.b16 %v12515, %v12515
      %v12652 = vpack.c.b16 %v12516, %v12516
      %v12653 = vpack.c.b16 %v12517, %v12517
      %v12654 = vpack.c.b16 %v12518, %v12518
      %v12655 = vpack.c.b16 %v12519, %v12519
      %v12656 = vpack.c.b16 %v12520, %v12520
      %v12657 = vpack.c.b16 %v12521, %v12521
      %v12658 = vpack.c.b16 %v12522, %v12522
      %v12659 = vpack.c.b16 %v12523, %v12523
      %v12660 = vpack.c.b16 %v12524, %v12524
      %v12661 = vpack.c.b16 %v12525, %v12525
      %v12662 = vpack.c.b16 %v12526, %v12526
      %v12663 = vpack.c.b16 %v12527, %v12527
      %v12664 = vpack.c.b16 %v12528, %v12528
      %v12665 = vpack.c.b16 %v12529, %v12529
      %v12666 = vpack.c.b16 %v12530, %v12530
      %v12667 = vpack.c.b16 %v12531, %v12531
      %v12668 = vpack.c.b16 %v12532, %v12532
      %v12669 = vpack.c.b16 %v12533, %v12533
      %v12670 = vpack.c.b16 %v12534, %v12534
      %v12671 = vpack.c.b16 %v12535, %v12535
      %v12672 = vpack.c.b16 %v12536, %v12536
      %v12673 = vpack.c.b16 %v12537, %v12537
      %v12674 = vpack.c.b16 %v12538, %v12538
      %v12675 = vpack.c.b16 %v12539, %v12539
      %v12676 = vpack.c.b16 %v12540, %v12540
      %v12677 = vpack.c.b16 %v12541, %v12541
      %v12678 = vpack.c.b16 %v12542, %v12542
      %v12679 = vpack.c.b16 %v12543, %v12543
      %v12680 = vpack.c.b16 %v12544, %v12544
      %v12681 = vpack.c.b16 %v12545, %v12545
      %v12682 = vpack.c.b16 %v12546, %v12546
      %v12683 = vpack.c.b16 %v12547, %v12547
      %v12684 = vpack.c.b16 %v12548, %v12548
      %v12685 = vpack.c.b16 %v12549, %v12549
      %v12686 = vpack.c.b16 %v12550, %v12550
      %v12687 = vpack.c.b16 %v12551, %v12551
      %v12688 = vpack.c.b16 %v12552, %v12552
      %v12689 = vpack.c.b16 %v12553, %v12553
      %v12690 = vpack.c.b16 %v12554, %v12554
      %v12691 = vpack.c.b16 %v12555, %v12555
      %v12692 = vpack.c.b16 %v12556, %v12556
      %v12693 = vpack.c.b16 %v12557, %v12557
      %v12694 = vpack.c.b16 %v12558, %v12558
      %v12695 = vpack.c.b16 %v12559, %v12559
      %v12696 = vpack.c.b16 %v12560, %v12560
      %v12697 = vpack.c.b16 %v12561, %v12561
      %v12698 = vpack.c.b16 %v12562, %v12562
      %v12699 = vpack.c.b16 %v12563, %v12563
      %v12700 = vpack.c.b16 %v12564, %v12564
      %v12701 = vpack.c.b16 %v12565, %v12565
      %v12702 = vpack.c.b16 %v12566, %v12566
      %v12703 = vpack.c.b16 %v12567, %v12567
      %v12704 = vpack.c.b16 %v12568, %v12568
      %v12705 = vpack.c.b16 %v12569, %v12569
      %v12706 = vpack.c.b16 %v12570, %v12570
      %v12707 = vpack.c.b16 %v12571, %v12571
      %v12708 = vpack.c.b16 %v12572, %v12572
      %v12709 = vpack.c.b16 %v12573, %v12573
      %v12710 = vpack.c.b16 %v12574, %v12574
      %v12711 = vpack.c.b16 %v12575, %v12575
      %v12712 = vpack.c.b16 %v12576, %v12576
      %v12713 = vpack.c.b16 %v12577, %v12577
      %v12714 = vpack.c.b16 %v12578, %v12578
      %v12715 = vpack.c.b16 %v12579, %v12579
      %v12716 = vpack.c.b16 %v12580, %v12580
      %v12717 = vpack.c.b16 %v12581, %v12581
      %v12718 = vpack.c.b16 %v12582, %v12582
      %v12719 = vpack.c.b16 %v12583, %v12583
      %v12720 = vpack.c.b16 %v12584, %v12584
      %v12721 = vpack.c.b16 %v12585, %v12585
      %v12722 = vpack.c.b16 %v12586, %v12586
      %v12723 = vpack.c.b16 %v12587, %v12587
      %v12724 = vpack.c.b16 %v12588, %v12588
      %v12725 = vpack.c.b16 %v12589, %v12589
      %v12726 = vpack.c.b16 %v12590, %v12590
      %v12727 = vpack.c.b16 %v12591, %v12591
      %v12728 = vpack.c.b16 %v12592, %v12592
      %v12729 = vpack.c.b16 %v12593, %v12593
      %v12730 = vpack.c.b16 %v12594, %v12594
      %v12731 = vpack.c.b16 %v12595, %v12595
      %v12732 = vpack.c.b16 %v12596, %v12596
      %v12733 = vpack.c.b16 %v12597, %v12597
      %v12734 = vpack.c.b16 %v12598, %v12598
      %v12735 = vpack.c.b16 %v12599, %v12599
      %v12736 = vpack.c.b16 %v12600, %v12600
      %v12737 = vpack.c.b16 %v12601, %v12601
      %v12738 = vpack.c.b16 %v12602, %v12602
      %v12739 = vpack.c.b16 %v12603, %v12603
      %v12740 = vpack.c.b16 %v12604, %v12604
      %v12741 = vpack.c.b16 %v12605, %v12605
      %v12742 = vpack.c.b16 %v12606, %v12606
      %v12743 = vpack.c.b16 %v12607, %v12607
      %v12744 = vpack.c.b16 %v12608, %v12608
      %v12745 = vpack.c.b16 %v12609, %v12609
      %v12746 = vpack.c.b16 %v12610, %v12610
      %v12747 = vpack.c.b16 %v12611, %v12611
      %v12748 = vpack.c.b16 %v12612, %v12612
      %v12749 = vpack.c.b16 %v12613, %v12613
      %v12750 = vpack.c.b16 %v12614, %v12614
      %v12751 = vpack.c.b16 %v12615, %v12615
      %v12752 = vpack.c.b16 %v12616, %v12616
      %v12753 = vpack.c.b16 %v12617, %v12617
      %v12754 = vpack.c.b16 %v12618, %v12618
      %v12755 = vpack.c.b16 %v12619, %v12619
      %v12756 = vpack.c.b16 %v12620, %v12620
      %vm12893 = vcmask 519168
      %12894 = vst.msk [vmem:[%s170] sm:$0xf] %vm12893, %v12621
      %12895 = vst.msk [vmem:[%s170 + $0x4] sm:$0xf] %vm12893, %v12622
      %12896 = vst.msk [vmem:[%s170 + $0x8] sm:$0xf] %vm12893, %v12623
      %12897 = vst.msk [vmem:[%s170 + $0xc] sm:$0xf] %vm12893, %v12624
      %12898 = vst.msk [vmem:[%s170 + $0x10] sm:$0xf] %vm12893, %v12625
      %12899 = vst.msk [vmem:[%s170 + $0x14] sm:$0xf] %vm12893, %v12626
      %12900 = vst.msk [vmem:[%s170 + $0x18] sm:$0xf] %vm12893, %v12627
      %12901 = vst.msk [vmem:[%s170 + $0x1c] sm:$0xf] %vm12893, %v12628
      %12902 = vst.msk [vmem:[%s170 + $0x20] sm:$0xf] %vm12893, %v12629
      %12903 = vst.msk [vmem:[%s170 + $0x24] sm:$0xf] %vm12893, %v12630
      %12904 = vst.msk [vmem:[%s170 + $0x28] sm:$0xf] %vm12893, %v12631
      %12905 = vst.msk [vmem:[%s170 + $0x2c] sm:$0xf] %vm12893, %v12632
      %12906 = vst.msk [vmem:[%s170 + $0x30] sm:$0xf] %vm12893, %v12633
      %12907 = vst.msk [vmem:[%s170 + $0x34] sm:$0xf] %vm12893, %v12634
      %12908 = vst.msk [vmem:[%s170 + $0x38] sm:$0xf] %vm12893, %v12635
      %12909 = vst.msk [vmem:[%s170 + $0x3c] sm:$0xf] %vm12893, %v12636
      %12910 = vst.msk [vmem:[%s170 + $0x40] sm:$0xf] %vm12893, %v12637
      %12911 = vst.msk [vmem:[%s170 + $0x44] sm:$0xf] %vm12893, %v12638
      %12912 = vst.msk [vmem:[%s170 + $0x48] sm:$0xf] %vm12893, %v12639
      %12913 = vst.msk [vmem:[%s170 + $0x4c] sm:$0xf] %vm12893, %v12640
      %12914 = vst.msk [vmem:[%s170 + $0x50] sm:$0xf] %vm12893, %v12641
      %12915 = vst.msk [vmem:[%s170 + $0x54] sm:$0xf] %vm12893, %v12642
      %12916 = vst.msk [vmem:[%s170 + $0x58] sm:$0xf] %vm12893, %v12643
      %12917 = vst.msk [vmem:[%s170 + $0x5c] sm:$0xf] %vm12893, %v12644
      %12918 = vst.msk [vmem:[%s170 + $0x60] sm:$0xf] %vm12893, %v12645
      %12919 = vst.msk [vmem:[%s170 + $0x64] sm:$0xf] %vm12893, %v12646
      %12920 = vst.msk [vmem:[%s170 + $0x68] sm:$0xf] %vm12893, %v12647
      %12921 = vst.msk [vmem:[%s170 + $0x6c] sm:$0xf] %vm12893, %v12648
      %12922 = vst.msk [vmem:[%s170 + $0x70] sm:$0xf] %vm12893, %v12649
      %12923 = vst.msk [vmem:[%s170 + $0x74] sm:$0xf] %vm12893, %v12650
      %12924 = vst.msk [vmem:[%s170 + $0x78] sm:$0xf] %vm12893, %v12651
      %12925 = vst.msk [vmem:[%s170 + $0x7c] sm:$0xf] %vm12893, %v12652
      %12926 = vst.msk [vmem:[%s170 + $0x80] sm:$0xf] %vm12893, %v12653
      %12927 = vst.msk [vmem:[%s170 + $0x84] sm:$0xf] %vm12893, %v12654
      %12928 = vst.msk [vmem:[%s170 + $0x88] sm:$0xf] %vm12893, %v12655
      %12929 = vst.msk [vmem:[%s170 + $0x8c] sm:$0xf] %vm12893, %v12656
      %12930 = vst.msk [vmem:[%s170 + $0x90] sm:$0xf] %vm12893, %v12657
      %12931 = vst.msk [vmem:[%s170 + $0x94] sm:$0xf] %vm12893, %v12658
      %12932 = vst.msk [vmem:[%s170 + $0x98] sm:$0xf] %vm12893, %v12659
      %12933 = vst.msk [vmem:[%s170 + $0x9c] sm:$0xf] %vm12893, %v12660
      %12934 = vst.msk [vmem:[%s170 + $0xa0] sm:$0xf] %vm12893, %v12661
      %12935 = vst.msk [vmem:[%s170 + $0xa4] sm:$0xf] %vm12893, %v12662
      %12936 = vst.msk [vmem:[%s170 + $0xa8] sm:$0xf] %vm12893, %v12663
      %12937 = vst.msk [vmem:[%s170 + $0xac] sm:$0xf] %vm12893, %v12664
      %12938 = vst.msk [vmem:[%s170 + $0xb0] sm:$0xf] %vm12893, %v12665
      %12939 = vst.msk [vmem:[%s170 + $0xb4] sm:$0xf] %vm12893, %v12666
      %12940 = vst.msk [vmem:[%s170 + $0xb8] sm:$0xf] %vm12893, %v12667
      %12941 = vst.msk [vmem:[%s170 + $0xbc] sm:$0xf] %vm12893, %v12668
      %12942 = vst.msk [vmem:[%s170 + $0xc0] sm:$0xf] %vm12893, %v12669
      %12943 = vst.msk [vmem:[%s170 + $0xc4] sm:$0xf] %vm12893, %v12670
      %12944 = vst.msk [vmem:[%s170 + $0xc8] sm:$0xf] %vm12893, %v12671
      %12945 = vst.msk [vmem:[%s170 + $0xcc] sm:$0xf] %vm12893, %v12672
      %12946 = vst.msk [vmem:[%s170 + $0xd0] sm:$0xf] %vm12893, %v12673
      %12947 = vst.msk [vmem:[%s170 + $0xd4] sm:$0xf] %vm12893, %v12674
      %12948 = vst.msk [vmem:[%s170 + $0xd8] sm:$0xf] %vm12893, %v12675
      %12949 = vst.msk [vmem:[%s170 + $0xdc] sm:$0xf] %vm12893, %v12676
      %12950 = vst.msk [vmem:[%s170 + $0xe0] sm:$0xf] %vm12893, %v12677
      %12951 = vst.msk [vmem:[%s170 + $0xe4] sm:$0xf] %vm12893, %v12678
      %12952 = vst.msk [vmem:[%s170 + $0xe8] sm:$0xf] %vm12893, %v12679
      %12953 = vst.msk [vmem:[%s170 + $0xec] sm:$0xf] %vm12893, %v12680
      %12954 = vst.msk [vmem:[%s170 + $0xf0] sm:$0xf] %vm12893, %v12681
      %12955 = vst.msk [vmem:[%s170 + $0xf4] sm:$0xf] %vm12893, %v12682
      %12956 = vst.msk [vmem:[%s170 + $0xf8] sm:$0xf] %vm12893, %v12683
      %12957 = vst.msk [vmem:[%s170 + $0xfc] sm:$0xf] %vm12893, %v12684
      %12958 = vst.msk [vmem:[%s170 + $0x100] sm:$0xf] %vm12893, %v12685
      %12959 = vst.msk [vmem:[%s170 + $0x104] sm:$0xf] %vm12893, %v12686
      %12960 = vst.msk [vmem:[%s170 + $0x108] sm:$0xf] %vm12893, %v12687
      %12961 = vst.msk [vmem:[%s170 + $0x10c] sm:$0xf] %vm12893, %v12688
      %12962 = vst.msk [vmem:[%s170 + $0x110] sm:$0xf] %vm12893, %v12689
      %12963 = vst.msk [vmem:[%s170 + $0x114] sm:$0xf] %vm12893, %v12690
      %12964 = vst.msk [vmem:[%s170 + $0x118] sm:$0xf] %vm12893, %v12691
      %12965 = vst.msk [vmem:[%s170 + $0x11c] sm:$0xf] %vm12893, %v12692
      %12966 = vst.msk [vmem:[%s170 + $0x120] sm:$0xf] %vm12893, %v12693
      %12967 = vst.msk [vmem:[%s170 + $0x124] sm:$0xf] %vm12893, %v12694
      %12968 = vst.msk [vmem:[%s170 + $0x128] sm:$0xf] %vm12893, %v12695
      %12969 = vst.msk [vmem:[%s170 + $0x12c] sm:$0xf] %vm12893, %v12696
      %12970 = vst.msk [vmem:[%s170 + $0x130] sm:$0xf] %vm12893, %v12697
      %12971 = vst.msk [vmem:[%s170 + $0x134] sm:$0xf] %vm12893, %v12698
      %12972 = vst.msk [vmem:[%s170 + $0x138] sm:$0xf] %vm12893, %v12699
      %12973 = vst.msk [vmem:[%s170 + $0x13c] sm:$0xf] %vm12893, %v12700
      %12974 = vst.msk [vmem:[%s170 + $0x140] sm:$0xf] %vm12893, %v12701
      %12975 = vst.msk [vmem:[%s170 + $0x144] sm:$0xf] %vm12893, %v12702
      %12976 = vst.msk [vmem:[%s170 + $0x148] sm:$0xf] %vm12893, %v12703
      %12977 = vst.msk [vmem:[%s170 + $0x14c] sm:$0xf] %vm12893, %v12704
      %12978 = vst.msk [vmem:[%s170 + $0x150] sm:$0xf] %vm12893, %v12705
      %12979 = vst.msk [vmem:[%s170 + $0x154] sm:$0xf] %vm12893, %v12706
      %12980 = vst.msk [vmem:[%s170 + $0x158] sm:$0xf] %vm12893, %v12707
      %12981 = vst.msk [vmem:[%s170 + $0x15c] sm:$0xf] %vm12893, %v12708
      %12982 = vst.msk [vmem:[%s170 + $0x160] sm:$0xf] %vm12893, %v12709
      %12983 = vst.msk [vmem:[%s170 + $0x164] sm:$0xf] %vm12893, %v12710
      %12984 = vst.msk [vmem:[%s170 + $0x168] sm:$0xf] %vm12893, %v12711
      %12985 = vst.msk [vmem:[%s170 + $0x16c] sm:$0xf] %vm12893, %v12712
      %12986 = vst.msk [vmem:[%s170 + $0x170] sm:$0xf] %vm12893, %v12713
      %12987 = vst.msk [vmem:[%s170 + $0x174] sm:$0xf] %vm12893, %v12714
      %12988 = vst.msk [vmem:[%s170 + $0x178] sm:$0xf] %vm12893, %v12715
      %12989 = vst.msk [vmem:[%s170 + $0x17c] sm:$0xf] %vm12893, %v12716
      %12990 = vst.msk [vmem:[%s170 + $0x180] sm:$0xf] %vm12893, %v12717
      %12991 = vst.msk [vmem:[%s170 + $0x184] sm:$0xf] %vm12893, %v12718
      %12992 = vst.msk [vmem:[%s170 + $0x188] sm:$0xf] %vm12893, %v12719
      %12993 = vst.msk [vmem:[%s170 + $0x18c] sm:$0xf] %vm12893, %v12720
      %12994 = vst.msk [vmem:[%s170 + $0x190] sm:$0xf] %vm12893, %v12721
      %12995 = vst.msk [vmem:[%s170 + $0x194] sm:$0xf] %vm12893, %v12722
      %12996 = vst.msk [vmem:[%s170 + $0x198] sm:$0xf] %vm12893, %v12723
      %12997 = vst.msk [vmem:[%s170 + $0x19c] sm:$0xf] %vm12893, %v12724
      %12998 = vst.msk [vmem:[%s170 + $0x1a0] sm:$0xf] %vm12893, %v12725
      %12999 = vst.msk [vmem:[%s170 + $0x1a4] sm:$0xf] %vm12893, %v12726
      %13000 = vst.msk [vmem:[%s170 + $0x1a8] sm:$0xf] %vm12893, %v12727
      %13001 = vst.msk [vmem:[%s170 + $0x1ac] sm:$0xf] %vm12893, %v12728
      %13002 = vst.msk [vmem:[%s170 + $0x1b0] sm:$0xf] %vm12893, %v12729
      %13003 = vst.msk [vmem:[%s170 + $0x1b4] sm:$0xf] %vm12893, %v12730
      %13004 = vst.msk [vmem:[%s170 + $0x1b8] sm:$0xf] %vm12893, %v12731
      %13005 = vst.msk [vmem:[%s170 + $0x1bc] sm:$0xf] %vm12893, %v12732
      %13006 = vst.msk [vmem:[%s170 + $0x1c0] sm:$0xf] %vm12893, %v12733
      %13007 = vst.msk [vmem:[%s170 + $0x1c4] sm:$0xf] %vm12893, %v12734
      %13008 = vst.msk [vmem:[%s170 + $0x1c8] sm:$0xf] %vm12893, %v12735
      %13009 = vst.msk [vmem:[%s170 + $0x1cc] sm:$0xf] %vm12893, %v12736
      %13010 = vst.msk [vmem:[%s170 + $0x1d0] sm:$0xf] %vm12893, %v12737
      %13011 = vst.msk [vmem:[%s170 + $0x1d4] sm:$0xf] %vm12893, %v12738
      %13012 = vst.msk [vmem:[%s170 + $0x1d8] sm:$0xf] %vm12893, %v12739
      %13013 = vst.msk [vmem:[%s170 + $0x1dc] sm:$0xf] %vm12893, %v12740
      %13014 = vst.msk [vmem:[%s170 + $0x1e0] sm:$0xf] %vm12893, %v12741
      %13015 = vst.msk [vmem:[%s170 + $0x1e4] sm:$0xf] %vm12893, %v12742
      %13016 = vst.msk [vmem:[%s170 + $0x1e8] sm:$0xf] %vm12893, %v12743
      %13017 = vst.msk [vmem:[%s170 + $0x1ec] sm:$0xf] %vm12893, %v12744
      %13018 = vst.msk [vmem:[%s170 + $0x1f0] sm:$0xf] %vm12893, %v12745
      %13019 = vst.msk [vmem:[%s170 + $0x1f4] sm:$0xf] %vm12893, %v12746
      %13020 = vst.msk [vmem:[%s170 + $0x1f8] sm:$0xf] %vm12893, %v12747
      %13021 = vst.msk [vmem:[%s170 + $0x1fc] sm:$0xf] %vm12893, %v12748
      %13022 = vst.msk [vmem:[%s170 + $0x200] sm:$0xf] %vm12893, %v12749
      %13023 = vst.msk [vmem:[%s170 + $0x204] sm:$0xf] %vm12893, %v12750
      %13024 = vst.msk [vmem:[%s170 + $0x208] sm:$0xf] %vm12893, %v12751
      %13025 = vst.msk [vmem:[%s170 + $0x20c] sm:$0xf] %vm12893, %v12752
      %13026 = vst.msk [vmem:[%s170 + $0x210] sm:$0xf] %vm12893, %v12753
      %13027 = vst.msk [vmem:[%s170 + $0x214] sm:$0xf] %vm12893, %v12754
      %13028 = vst.msk [vmem:[%s170 + $0x218] sm:$0xf] %vm12893, %v12755
      %13029 = vst.msk [vmem:[%s170 + $0x21c] sm:$0xf] %vm12893, %v12756
      %p13030 = scmp.lt.s32.totalorder %s14, 1
      %s13031 = scalar_select %p13030, %s14, 1
      %s13032 = smul.addr %s13031, 136
      %s13033 = smul.addr %s13032, 4
      %s13034 = scalar_lea.vmem %s3, %s13033
      // Predicated region
      $region33: #{_conv3x3.1} parent=31 // pred_check
        %p13035 = pneg %p100
      $region34: #{_conv3x3.1} parent=31 // pred_check_branch
        %13037 = sbr.rel (%p13035) target = $region36
      $region35: #{_conv3x3.1} parent=31 // pred_region
        _
      $region36: #{_conv3x3.1} parent=31 // pred_fallthru
        _
    $region32: #{_conv3x3.1} parent=5 // pred_fallthru
      _
    %p13038 = scmp.le.s32.totalorder 2, %s9
    // Predicated region
    $region37: #{_conv3x3.1} parent=5 // pred_check
      %p13039 = pneg %p13038
    $region38: #{_conv3x3.1} parent=5 // pred_check_branch
      %13041 = sbr.rel (%p13039) target = $region40
    $region39: #{_conv3x3.1} parent=5 // pred_region
      %s13042 = ssub.s32 %s9, 2
      // Predicated region
      $region41: #{_conv3x3.1} parent=39 // pred_check
        %p13043 = pneg %p106
      $region42: #{_conv3x3.1} parent=39 // pred_check_branch
        %13045 = sbr.rel (%p13043) target = $region44
      $region43: #{_conv3x3.1} parent=39 // pred_region
        %p13046 = scmp.lt.s32.totalorder %s15, 1
        %s13047 = scalar_select %p13046, %s15, 1
        %s13048 = smul.addr %s13047, 136
        %s13049 = smul.addr %s13048, 4
        %s13050 = scalar_lea.vmem %s3, %s13049
      $region44: #{_conv3x3.1} parent=39 // pred_fallthru
        _
    $region40: #{_conv3x3.1} parent=5 // pred_fallthru
      _
  $region6: #{_conv3x3.1} parent=0 // loop_footer
    %s13 = sadd.s32 1, %s9
  $region7: #{_conv3x3.1} parent=0 // loop_footer_branch
    %8 = sbr.rel target = $region3
  $region8: #{_conv3x3.1} parent=0 // loop_exit
    _

</llo_original>
